<compile_context>
chip_gen: v7x
topology: tpu7x:2x2x1
jax: 0.10.0
libtpu: 0.0.40
codegen_flags: <defaults>
</compile_context>

<pallas_src>
import functools

import jax
import jax.numpy as jnp
from jax.experimental import pallas as pl
from jax.experimental.pallas import tpu as pltpu

DECODER_CHANNELS = 64          # C: working channel width (Cin=3 / Cout=info zero-padded to C)
DECODER_BLOCKS = 7
BN_EPS = 1e-5
OUT_PAD = 128                  # lane-dense padded width of the final linear output


# ------------------------------ fused kernel ------------------------------- #

def decoder_fused_kernel(x_ref, w_ref, scale_ref, bias_ref, lw_ref, lb_ref,
                         o_ref, buf_a, buf_b, *, H, W):
    """Whole HiDDeN decoder for one image, fully resident in VMEM.

    x_ref:     (1, (H+2)*W, C) f32   input (zero halo rows, zero-padded channels)
    w_ref:     (L, 3C, 3C)     bf16  per-layer weights; rows = [kx0|kx1|kx2] x Cin,
                                     output-column block ky = the ky-th tap's slab
    scale_ref: (L, 1, C)       f32   folded BatchNorm scale (conv bias folded in)
    bias_ref:  (L, 1, C)       f32   folded BatchNorm bias
    lw_ref:    (C, OUT_PAD)    f32   zero-padded (transposed) linear weight
    lb_ref:    (1, OUT_PAD)    f32   zero-padded linear bias
    o_ref:     (1, 1, OUT_PAD) f32   lane-dense output row for this image
    buf_a/b:   ((H+2)*W, C)    f32   ping-pong activation buffers (halo rows kept zero)
    """
    C = buf_a.shape[-1]
    HP = H + 2
    HPW = HP * W
    HW = H * W
    L = w_ref.shape[0]

    # Zero the halo rows once: scratch persists across grid steps and the conv stores
    # below only ever rewrite rows [W, W + HW), so this is only needed on step 0.
    @pl.when(pl.program_id(0) == 0)
    def _():
        halo = jnp.zeros((W, C), jnp.float32)
        buf_a[0:W, :] = halo
        buf_a[HPW - W:HPW, :] = halo
        buf_b[0:W, :] = halo
        buf_b[HPW - W:HPW, :] = halo

    # Column-within-row masks killing the wrap-around of the width rolls, built directly
    # on the flat (HPW, C) shape (pure VPU iota + mod, no reshape relayout).
    row = jax.lax.broadcasted_iota(jnp.int32, (HPW, C), 0)
    col = (row & (W - 1)) if (W & (W - 1)) == 0 else (row % W)
    has_left = col != 0
    has_right = col != (W - 1)

    def conv_bn_relu(src_ref, layer):
        """3x3 conv (stride 1, pad 1) + folded BN + ReLU as ONE MXU matmul (K=3C, N=3C)."""
        x32 = src_ref[...].reshape(HPW, C)                            # f32
        # Width (kx) shifts: roll stays in f32 (packed-bf16 sublane roll lowers poorly);
        # the selects and the 192-lane concat run in bf16 to halve the relayout traffic.
        x = x32.astype(jnp.bfloat16)
        xl = jnp.where(has_left, pltpu.roll(x32, 1, 0).astype(jnp.bfloat16), 0.0)       # col j-1 (kx=0)
        xr = jnp.where(has_right, pltpu.roll(x32, HPW - 1, 0).astype(jnp.bfloat16), 0.0)  # col j+1 (kx=2)
        big = jnp.concatenate([xl, x, xr], axis=-1)                   # (HPW, 3C) bf16
        # Single MXU matmul; output-column block ky holds the ky-tap partial sums.
        y = jnp.dot(big, w_ref[layer], preferred_element_type=jnp.float32)   # (HPW, 3C) f32
        acc = (y[0:HW, 0:C]
               + y[W:W + HW, C:2 * C]
               + y[2 * W:2 * W + HW, 2 * C:3 * C])                    # (HW, C) f32
        return jnp.maximum(acc * scale_ref[layer] + bias_ref[layer], 0.0)

    # Layer l reads srcs[l]; layers 0..L-2 write the next ping-pong buffer.
    srcs = [x_ref] + [buf_a if l % 2 == 1 else buf_b for l in range(1, L)]
    for layer in range(L - 1):
        srcs[layer + 1][W:W + HW, :] = conv_bn_relu(srcs[layer], layer)

    # Last conv block fused with AdaptiveAvgPool2d((1,1)) + Linear epilogue (f32).
    y = conv_bn_relu(srcs[L - 1], L - 1)                              # (HW, C)
    pooled = jnp.sum(y, axis=0, keepdims=True) * (1.0 / HW)           # (1, C)
    out = jnp.dot(pooled, lw_ref[...], preferred_element_type=jnp.float32) + lb_ref[...]
    o_ref[...] = out.reshape(o_ref.shape)


# ---------------------------- parameter packing ----------------------------- #

def pack_params(blocks, linear, info_size):
    """Pack per-block params into kernel-ready, channel-padded, MXU-friendly arrays."""
    C = DECODER_CHANNELS
    w_all, s_all, b_all = [], [], []
    for blk in blocks:
        w = blk["w_hwio"]                                      # (3, 3, cin, cout)
        cin, cout = w.shape[2], w.shape[3]
        w = jnp.pad(w, ((0, 0), (0, 0), (0, C - cin), (0, C - cout)))
        w3 = w.reshape(3, 3 * C, C)                            # (ky, kx*cin, cout)
        # Fold ky into the matmul N dimension: columns [ky*C:(ky+1)*C] hold the ky-th slab.
        w_all.append(jnp.concatenate([w3[0], w3[1], w3[2]], axis=-1))   # (3C, 3C)
        s_all.append(jnp.pad(blk["scale"], (0, C - cout)))     # padded channels -> scale 0
        b_all.append(jnp.pad(blk["bias"], (0, C - cout)))      # padded channels -> bias 0
    L = len(blocks)
    w_packed = jnp.stack(w_all).astype(jnp.bfloat16)           # (L, 3C, 3C)
    scale_packed = jnp.stack(s_all).reshape(L, 1, C).astype(jnp.float32)
    bias_packed = jnp.stack(b_all).reshape(L, 1, C).astype(jnp.float32)
    lw, lb = linear                                            # (info, info), (info,)
    lw_packed = jnp.zeros((C, OUT_PAD), jnp.float32).at[:info_size, :info_size].set(lw.T)
    lb_packed = jnp.zeros((1, OUT_PAD), jnp.float32).at[0, :info_size].set(lb)
    return w_packed, scale_packed, bias_packed, lw_packed, lb_packed


def make_decoder(blocks, linear, info_size):
    C = DECODER_CHANNELS
    w_p, s_p, b_p, lw_p, lb_p = pack_params(blocks, linear, info_size)
    L = w_p.shape[0]

    def forward(x_nchw):
        # NCHW -> NHWC, zero-pad channels to C, zero-pad H with 1 halo row each side, flatten rows.
        x = jnp.transpose(x_nchw, (0, 2, 3, 1)).astype(jnp.float32)
        n, h, wd, cin = x.shape
        hp = h + 2
        x = jnp.pad(x, ((0, 0), (1, 1), (0, 0), (0, C - cin)))
        x = x.reshape(n, hp * wd, C)

        kernel = functools.partial(decoder_fused_kernel, H=h, W=wd)
        out = pl.pallas_call(
            kernel,
            out_shape=jax.ShapeDtypeStruct((n, 1, OUT_PAD), jnp.float32),
            grid=(n,),                      # batch grid; "parallel" -> megacore sharding on v7x
            in_specs=[
                pl.BlockSpec((1, hp * wd, C), lambda i: (i, 0, 0)),        # this image
                pl.BlockSpec((L, 3 * C, 3 * C), lambda i: (0, 0, 0)),      # all conv weights, resident
                pl.BlockSpec((L, 1, C), lambda i: (0, 0, 0)),              # folded BN scale
                pl.BlockSpec((L, 1, C), lambda i: (0, 0, 0)),              # folded BN bias
                pl.BlockSpec((C, OUT_PAD), lambda i: (0, 0)),              # linear weight (padded)
                pl.BlockSpec((1, OUT_PAD), lambda i: (0, 0)),              # linear bias (padded)
            ],
            out_specs=pl.BlockSpec((1, 1, OUT_PAD), lambda i: (i, 0, 0)),
            scratch_shapes=[pltpu.VMEM((hp * wd, C), jnp.float32),
                            pltpu.VMEM((hp * wd, C), jnp.float32)],
            compiler_params=pltpu.CompilerParams(
                dimension_semantics=("parallel",)),
        )(x, w_p, s_p, b_p, lw_p, lb_p)
        return out.reshape(n, OUT_PAD)[:, :info_size]

    return forward


# ------------------------- deterministic parameters ------------------------ #

def init_params(key, info_size):
    ch = [(3, DECODER_CHANNELS)]
    ch += [(DECODER_CHANNELS, DECODER_CHANNELS)] * (DECODER_BLOCKS - 1)
    ch += [(DECODER_CHANNELS, info_size)]
    blocks = []
    for cin, cout in ch:
        key, k1, k2, k3, k4, k5, k6 = jax.random.split(key, 7)
        fan_in = 9 * cin
        w = jax.random.normal(k1, (3, 3, cin, cout), jnp.float32) * jnp.sqrt(2.0 / fan_in)
        b = 0.05 * jax.random.normal(k2, (cout,), jnp.float32)
        gamma = 1.0 + 0.1 * jax.random.normal(k3, (cout,), jnp.float32)
        beta = 0.1 * jax.random.normal(k4, (cout,), jnp.float32)
        rmean = 0.1 * jax.random.normal(k5, (cout,), jnp.float32)
        rvar = jax.random.uniform(k6, (cout,), jnp.float32, minval=0.5, maxval=1.5)
        # fold inference-mode BN (+ conv bias) into per-channel scale/bias
        scale = gamma / jnp.sqrt(rvar + BN_EPS)
        bias = beta + (b - rmean) * scale
        blocks.append(dict(w_hwio=w, scale=scale, bias=bias))
    key, kl1, kl2 = jax.random.split(key, 3)
    lw = jax.random.normal(kl1, (info_size, info_size), jnp.float32) / jnp.sqrt(info_size)
    lb = 0.05 * jax.random.normal(kl2, (info_size,), jnp.float32)
    return blocks, (lw, lb)


# ------------------------------ pure-JAX ref ------------------------------- #

def decoder_ref(x_nhwc, blocks, linear):
    x = x_nhwc
    for blk in blocks:
        y = jax.lax.conv_general_dilated(
            x, blk["w_hwio"], window_strides=(1, 1), padding="SAME",
            dimension_numbers=("NHWC", "HWIO", "NHWC"))
        x = jnp.maximum(y * blk["scale"] + blk["bias"], 0.0)
    pooled = jnp.mean(x, axis=(1, 2))
    lw, lb = linear
    return pooled @ lw.T + lb


# ----------------------------------- main ----------------------------------- #

if __name__ == "__main__":
    info_size = 8
    N, H, W = 2, 16, 16

    key = jax.random.PRNGKey(0)
    key, kx = jax.random.split(key)
    x_nchw = jax.random.normal(kx, (N, 3, H, W), jnp.float32)   # PyTorch-style NCHW input

    blocks, linear = init_params(key, info_size)

    decoder = make_decoder(blocks, linear, info_size)
    out = jax.jit(decoder)(x_nchw)
    out = jax.block_until_ready(out)

    x_nhwc = jnp.transpose(x_nchw, (0, 2, 3, 1))
    ref = decoder_ref(x_nhwc, blocks, linear)
    assert out.shape == (N, info_size), out.shape
    assert jnp.allclose(out, ref, rtol=5e-2, atol=5e-2), (out, ref)

    print("KERNEL_OK")
</pallas_src>

<mosaic_0001>
module attributes {stable_mosaic.version = 11 : i64} {
  func.func @decoder_fused_kernel(%arg0: i32, %arg1: memref<1x288x64xf32, #tpu.memory_space<vmem>>, %arg2: memref<8x192x192xbf16, #tpu.memory_space<vmem>>, %arg3: memref<8x1x64xf32, #tpu.memory_space<vmem>>, %arg4: memref<8x1x64xf32, #tpu.memory_space<vmem>>, %arg5: memref<64x128xf32, #tpu.memory_space<vmem>>, %arg6: memref<1x128xf32, #tpu.memory_space<vmem>>, %arg7: memref<1x1x128xf32, #tpu.memory_space<vmem>>, %arg8: memref<288x64xf32, #tpu.memory_space<vmem>>, %arg9: memref<288x64xf32, #tpu.memory_space<vmem>>) attributes {dimension_semantics = [#tpu.dimension_semantics<parallel>], iteration_bounds = array<i64: 2>, scalar_prefetch = 0 : i64, scratch_operands = 2 : i64, tpu.core_type = #tpu.core_type<tc>, window_params = [{transform_indices = @transform_0, window_bounds = array<i64: 1, 288, 64>}, {pipeline_mode = #tpu.pipeline_mode<synchronous>, transform_indices = @transform_1, window_bounds = array<i64: 8, 192, 192>}, {pipeline_mode = #tpu.pipeline_mode<synchronous>, transform_indices = @transform_2, window_bounds = array<i64: 8, 1, 64>}, {pipeline_mode = #tpu.pipeline_mode<synchronous>, transform_indices = @transform_3, window_bounds = array<i64: 8, 1, 64>}, {pipeline_mode = #tpu.pipeline_mode<synchronous>, transform_indices = @transform_4, window_bounds = array<i64: 64, 128>}, {pipeline_mode = #tpu.pipeline_mode<synchronous>, transform_indices = @transform_5, window_bounds = array<i64: 1, 128>}, {transform_indices = @transform_6, window_bounds = array<i64: 1, 1, 128>}]} {
    %c0_i32 = arith.constant 0 : i32
    %0 = arith.cmpi eq, %arg0, %c0_i32 : i32
    %1 = arith.extui %0 : i1 to i32
    %c0_i32_0 = arith.constant 0 : i32
    %2 = arith.cmpi ne, %1, %c0_i32_0 : i32
    scf.if %2 {
      %cst_152 = arith.constant 0.000000e+00 : f32
      %276 = vector.broadcast %cst_152 : f32 to vector<16x64xf32>
      %c0_153 = arith.constant 0 : index
      %c0_154 = arith.constant 0 : index
      %277 = vector.load %arg8[%c0_153, %c0_154] : memref<288x64xf32, #tpu.memory_space<vmem>>, vector<16x64xf32>
      tpu.vector_store %arg8[%c0_153, %c0_154], %276 {strides = array<i32>} : memref<288x64xf32, #tpu.memory_space<vmem>>, vector<16x64xf32>,
      %c272 = arith.constant 272 : index
      %c0_155 = arith.constant 0 : index
      %278 = vector.load %arg8[%c272, %c0_155] : memref<288x64xf32, #tpu.memory_space<vmem>>, vector<16x64xf32>
      tpu.vector_store %arg8[%c272, %c0_155], %276 {strides = array<i32>} : memref<288x64xf32, #tpu.memory_space<vmem>>, vector<16x64xf32>,
      %c0_156 = arith.constant 0 : index
      %c0_157 = arith.constant 0 : index
      %279 = vector.load %arg9[%c0_156, %c0_157] : memref<288x64xf32, #tpu.memory_space<vmem>>, vector<16x64xf32>
      tpu.vector_store %arg9[%c0_156, %c0_157], %276 {strides = array<i32>} : memref<288x64xf32, #tpu.memory_space<vmem>>, vector<16x64xf32>,
      %c272_158 = arith.constant 272 : index
      %c0_159 = arith.constant 0 : index
      %280 = vector.load %arg9[%c272_158, %c0_159] : memref<288x64xf32, #tpu.memory_space<vmem>>, vector<16x64xf32>
      tpu.vector_store %arg9[%c272_158, %c0_159], %276 {strides = array<i32>} : memref<288x64xf32, #tpu.memory_space<vmem>>, vector<16x64xf32>,
    } else {
    }
    %3 = tpu.iota {dimensions = array<i32: 0>} : vector<288x64xi32>
    %c15_i32 = arith.constant 15 : i32
    %4 = vector.broadcast %c15_i32 : i32 to vector<288x64xi32>
    %5 = arith.andi %3, %4 : vector<288x64xi32>
    %c0_i32_1 = arith.constant 0 : i32
    %6 = vector.broadcast %c0_i32_1 : i32 to vector<288x64xi32>
    %7 = arith.cmpi ne, %5, %6 : vector<288x64xi32>
    %c15_i32_2 = arith.constant 15 : i32
    %8 = vector.broadcast %c15_i32_2 : i32 to vector<288x64xi32>
    %9 = arith.cmpi ne, %5, %8 : vector<288x64xi32>
    %c0 = arith.constant 0 : index
    %c0_3 = arith.constant 0 : index
    %c0_4 = arith.constant 0 : index
    %10 = vector.load %arg1[%c0, %c0_3, %c0_4] : memref<1x288x64xf32, #tpu.memory_space<vmem>>, vector<1x288x64xf32>
    %11 = vector.shape_cast %10 : vector<1x288x64xf32> to vector<288x64xf32>
    %12 = arith.truncf %11 : vector<288x64xf32> to vector<288x64xbf16>
    %c1_i32 = arith.constant 1 : i32
    %13 = tpu.dynamic_rotate %11 by %c1_i32 dim 0 : vector<288x64xf32>, i32 -> vector<288x64xf32>
    %14 = arith.truncf %13 : vector<288x64xf32> to vector<288x64xbf16>
    %cst = arith.constant 0.000000e+00 : f32
    %15 = arith.truncf %cst : f32 to bf16
    %16 = vector.broadcast %15 : bf16 to vector<288x64xbf16>
    %17 = arith.select %7, %14, %16 : vector<288x64xi1>, vector<288x64xbf16>
    %c287_i32 = arith.constant 287 : i32
    %18 = tpu.dynamic_rotate %11 by %c287_i32 dim 0 : vector<288x64xf32>, i32 -> vector<288x64xf32>
    %19 = arith.truncf %18 : vector<288x64xf32> to vector<288x64xbf16>
    %cst_5 = arith.constant 0.000000e+00 : f32
    %20 = arith.truncf %cst_5 : f32 to bf16
    %21 = vector.broadcast %20 : bf16 to vector<288x64xbf16>
    %22 = arith.select %9, %19, %21 : vector<288x64xi1>, vector<288x64xbf16>
    %23 = tpu.concatenate %17, %12, %22 in 1 : vector<288x64xbf16>, vector<288x64xbf16>, vector<288x64xbf16> -> vector<288x192xbf16>
    %c0_6 = arith.constant 0 : index
    %c0_7 = arith.constant 0 : index
    %c0_8 = arith.constant 0 : index
    %24 = vector.load %arg2[%c0_6, %c0_7, %c0_8] : memref<8x192x192xbf16, #tpu.memory_space<vmem>>, vector<1x192x192xbf16>
    %25 = vector.shape_cast %24 : vector<1x192x192xbf16> to vector<192x192xbf16>
    %cst_9 = arith.constant dense<0.000000e+00> : vector<288x192xf32>
    %26 = tpu.matmul %23, %25, %cst_9 {dimension_numbers = #tpu.dot_dimension_numbers<[1], [0], [0], [1], [0, 0, 1, 1], [], []>} : vector<288x192xbf16>, vector<192x192xbf16>, vector<288x192xf32> -> vector<288x192xf32>
    %27 = vector.extract_strided_slice %26 {offsets = [0, 0], sizes = [256, 64], strides = [1, 1]} : vector<288x192xf32> to vector<256x64xf32>
    %28 = vector.extract_strided_slice %26 {offsets = [16, 64], sizes = [256, 64], strides = [1, 1]} : vector<288x192xf32> to vector<256x64xf32>
    %29 = arith.addf %27, %28 : vector<256x64xf32>
    %30 = vector.extract_strided_slice %26 {offsets = [32, 128], sizes = [256, 64], strides = [1, 1]} : vector<288x192xf32> to vector<256x64xf32>
    %31 = arith.addf %29, %30 : vector<256x64xf32>
    %c0_10 = arith.constant 0 : index
    %c0_11 = arith.constant 0 : index
    %c0_12 = arith.constant 0 : index
    %32 = vector.load %arg3[%c0_10, %c0_11, %c0_12] : memref<8x1x64xf32, #tpu.memory_space<vmem>>, vector<1x1x64xf32>
    %33 = vector.shape_cast %32 : vector<1x1x64xf32> to vector<1x64xf32>
    %34 = vector.broadcast %33 : vector<1x64xf32> to vector<256x64xf32>
    %35 = arith.mulf %31, %34 : vector<256x64xf32>
    %c0_13 = arith.constant 0 : index
    %c0_14 = arith.constant 0 : index
    %c0_15 = arith.constant 0 : index
    %36 = vector.load %arg4[%c0_13, %c0_14, %c0_15] : memref<8x1x64xf32, #tpu.memory_space<vmem>>, vector<1x1x64xf32>
    %37 = vector.shape_cast %36 : vector<1x1x64xf32> to vector<1x64xf32>
    %38 = vector.broadcast %37 : vector<1x64xf32> to vector<256x64xf32>
    %39 = arith.addf %35, %38 : vector<256x64xf32>
    %cst_16 = arith.constant 0.000000e+00 : f32
    %40 = vector.broadcast %cst_16 : f32 to vector<256x64xf32>
    %41 = arith.maximumf %39, %40 : vector<256x64xf32>
    %c16 = arith.constant 16 : index
    %c0_17 = arith.constant 0 : index
    %42 = vector.load %arg8[%c16, %c0_17] : memref<288x64xf32, #tpu.memory_space<vmem>>, vector<256x64xf32>
    tpu.vector_store %arg8[%c16, %c0_17], %41 {strides = array<i32>} : memref<288x64xf32, #tpu.memory_space<vmem>>, vector<256x64xf32>,
    %c0_18 = arith.constant 0 : index
    %c0_19 = arith.constant 0 : index
    %43 = vector.load %arg8[%c0_18, %c0_19] : memref<288x64xf32, #tpu.memory_space<vmem>>, vector<288x64xf32>
    %44 = arith.truncf %43 : vector<288x64xf32> to vector<288x64xbf16>
    %c1_i32_20 = arith.constant 1 : i32
    %45 = tpu.dynamic_rotate %43 by %c1_i32_20 dim 0 : vector<288x64xf32>, i32 -> vector<288x64xf32>
    %46 = arith.truncf %45 : vector<288x64xf32> to vector<288x64xbf16>
    %cst_21 = arith.constant 0.000000e+00 : f32
    %47 = arith.truncf %cst_21 : f32 to bf16
    %48 = vector.broadcast %47 : bf16 to vector<288x64xbf16>
    %49 = arith.select %7, %46, %48 : vector<288x64xi1>, vector<288x64xbf16>
    %c287_i32_22 = arith.constant 287 : i32
    %50 = tpu.dynamic_rotate %43 by %c287_i32_22 dim 0 : vector<288x64xf32>, i32 -> vector<288x64xf32>
    %51 = arith.truncf %50 : vector<288x64xf32> to vector<288x64xbf16>
    %cst_23 = arith.constant 0.000000e+00 : f32
    %52 = arith.truncf %cst_23 : f32 to bf16
    %53 = vector.broadcast %52 : bf16 to vector<288x64xbf16>
    %54 = arith.select %9, %51, %53 : vector<288x64xi1>, vector<288x64xbf16>
    %55 = tpu.concatenate %49, %44, %54 in 1 : vector<288x64xbf16>, vector<288x64xbf16>, vector<288x64xbf16> -> vector<288x192xbf16>
    %c1 = arith.constant 1 : index
    %c0_24 = arith.constant 0 : index
    %c0_25 = arith.constant 0 : index
    %56 = vector.load %arg2[%c1, %c0_24, %c0_25] : memref<8x192x192xbf16, #tpu.memory_space<vmem>>, vector<1x192x192xbf16>
    %57 = vector.shape_cast %56 : vector<1x192x192xbf16> to vector<192x192xbf16>
    %cst_26 = arith.constant dense<0.000000e+00> : vector<288x192xf32>
    %58 = tpu.matmul %55, %57, %cst_26 {dimension_numbers = #tpu.dot_dimension_numbers<[1], [0], [0], [1], [0, 0, 1, 1], [], []>} : vector<288x192xbf16>, vector<192x192xbf16>, vector<288x192xf32> -> vector<288x192xf32>
    %59 = vector.extract_strided_slice %58 {offsets = [0, 0], sizes = [256, 64], strides = [1, 1]} : vector<288x192xf32> to vector<256x64xf32>
    %60 = vector.extract_strided_slice %58 {offsets = [16, 64], sizes = [256, 64], strides = [1, 1]} : vector<288x192xf32> to vector<256x64xf32>
    %61 = arith.addf %59, %60 : vector<256x64xf32>
    %62 = vector.extract_strided_slice %58 {offsets = [32, 128], sizes = [256, 64], strides = [1, 1]} : vector<288x192xf32> to vector<256x64xf32>
    %63 = arith.addf %61, %62 : vector<256x64xf32>
    %c1_27 = arith.constant 1 : index
    %c0_28 = arith.constant 0 : index
    %c0_29 = arith.constant 0 : index
    %64 = vector.load %arg3[%c1_27, %c0_28, %c0_29] : memref<8x1x64xf32, #tpu.memory_space<vmem>>, vector<1x1x64xf32>
    %65 = vector.shape_cast %64 : vector<1x1x64xf32> to vector<1x64xf32>
    %66 = vector.broadcast %65 : vector<1x64xf32> to vector<256x64xf32>
    %67 = arith.mulf %63, %66 : vector<256x64xf32>
    %c1_30 = arith.constant 1 : index
    %c0_31 = arith.constant 0 : index
    %c0_32 = arith.constant 0 : index
    %68 = vector.load %arg4[%c1_30, %c0_31, %c0_32] : memref<8x1x64xf32, #tpu.memory_space<vmem>>, vector<1x1x64xf32>
    %69 = vector.shape_cast %68 : vector<1x1x64xf32> to vector<1x64xf32>
    %70 = vector.broadcast %69 : vector<1x64xf32> to vector<256x64xf32>
    %71 = arith.addf %67, %70 : vector<256x64xf32>
    %cst_33 = arith.constant 0.000000e+00 : f32
    %72 = vector.broadcast %cst_33 : f32 to vector<256x64xf32>
    %73 = arith.maximumf %71, %72 : vector<256x64xf32>
    %c16_34 = arith.constant 16 : index
    %c0_35 = arith.constant 0 : index
    %74 = vector.load %arg9[%c16_34, %c0_35] : memref<288x64xf32, #tpu.memory_space<vmem>>, vector<256x64xf32>
    tpu.vector_store %arg9[%c16_34, %c0_35], %73 {strides = array<i32>} : memref<288x64xf32, #tpu.memory_space<vmem>>, vector<256x64xf32>,
    %c0_36 = arith.constant 0 : index
    %c0_37 = arith.constant 0 : index
    %75 = vector.load %arg9[%c0_36, %c0_37] : memref<288x64xf32, #tpu.memory_space<vmem>>, vector<288x64xf32>
    %76 = arith.truncf %75 : vector<288x64xf32> to vector<288x64xbf16>
    %c1_i32_38 = arith.constant 1 : i32
    %77 = tpu.dynamic_rotate %75 by %c1_i32_38 dim 0 : vector<288x64xf32>, i32 -> vector<288x64xf32>
    %78 = arith.truncf %77 : vector<288x64xf32> to vector<288x64xbf16>
    %cst_39 = arith.constant 0.000000e+00 : f32
    %79 = arith.truncf %cst_39 : f32 to bf16
    %80 = vector.broadcast %79 : bf16 to vector<288x64xbf16>
    %81 = arith.select %7, %78, %80 : vector<288x64xi1>, vector<288x64xbf16>
    %c287_i32_40 = arith.constant 287 : i32
    %82 = tpu.dynamic_rotate %75 by %c287_i32_40 dim 0 : vector<288x64xf32>, i32 -> vector<288x64xf32>
    %83 = arith.truncf %82 : vector<288x64xf32> to vector<288x64xbf16>
    %cst_41 = arith.constant 0.000000e+00 : f32
    %84 = arith.truncf %cst_41 : f32 to bf16
    %85 = vector.broadcast %84 : bf16 to vector<288x64xbf16>
    %86 = arith.select %9, %83, %85 : vector<288x64xi1>, vector<288x64xbf16>
    %87 = tpu.concatenate %81, %76, %86 in 1 : vector<288x64xbf16>, vector<288x64xbf16>, vector<288x64xbf16> -> vector<288x192xbf16>
    %c2 = arith.constant 2 : index
    %c0_42 = arith.constant 0 : index
    %c0_43 = arith.constant 0 : index
    %88 = vector.load %arg2[%c2, %c0_42, %c0_43] : memref<8x192x192xbf16, #tpu.memory_space<vmem>>, vector<1x192x192xbf16>
    %89 = vector.shape_cast %88 : vector<1x192x192xbf16> to vector<192x192xbf16>
    %cst_44 = arith.constant dense<0.000000e+00> : vector<288x192xf32>
    %90 = tpu.matmul %87, %89, %cst_44 {dimension_numbers = #tpu.dot_dimension_numbers<[1], [0], [0], [1], [0, 0, 1, 1], [], []>} : vector<288x192xbf16>, vector<192x192xbf16>, vector<288x192xf32> -> vector<288x192xf32>
    %91 = vector.extract_strided_slice %90 {offsets = [0, 0], sizes = [256, 64], strides = [1, 1]} : vector<288x192xf32> to vector<256x64xf32>
    %92 = vector.extract_strided_slice %90 {offsets = [16, 64], sizes = [256, 64], strides = [1, 1]} : vector<288x192xf32> to vector<256x64xf32>
    %93 = arith.addf %91, %92 : vector<256x64xf32>
    %94 = vector.extract_strided_slice %90 {offsets = [32, 128], sizes = [256, 64], strides = [1, 1]} : vector<288x192xf32> to vector<256x64xf32>
    %95 = arith.addf %93, %94 : vector<256x64xf32>
    %c2_45 = arith.constant 2 : index
    %c0_46 = arith.constant 0 : index
    %c0_47 = arith.constant 0 : index
    %96 = vector.load %arg3[%c2_45, %c0_46, %c0_47] : memref<8x1x64xf32, #tpu.memory_space<vmem>>, vector<1x1x64xf32>
    %97 = vector.shape_cast %96 : vector<1x1x64xf32> to vector<1x64xf32>
    %98 = vector.broadcast %97 : vector<1x64xf32> to vector<256x64xf32>
    %99 = arith.mulf %95, %98 : vector<256x64xf32>
    %c2_48 = arith.constant 2 : index
    %c0_49 = arith.constant 0 : index
    %c0_50 = arith.constant 0 : index
    %100 = vector.load %arg4[%c2_48, %c0_49, %c0_50] : memref<8x1x64xf32, #tpu.memory_space<vmem>>, vector<1x1x64xf32>
    %101 = vector.shape_cast %100 : vector<1x1x64xf32> to vector<1x64xf32>
    %102 = vector.broadcast %101 : vector<1x64xf32> to vector<256x64xf32>
    %103 = arith.addf %99, %102 : vector<256x64xf32>
    %cst_51 = arith.constant 0.000000e+00 : f32
    %104 = vector.broadcast %cst_51 : f32 to vector<256x64xf32>
    %105 = arith.maximumf %103, %104 : vector<256x64xf32>
    %c16_52 = arith.constant 16 : index
    %c0_53 = arith.constant 0 : index
    %106 = vector.load %arg8[%c16_52, %c0_53] : memref<288x64xf32, #tpu.memory_space<vmem>>, vector<256x64xf32>
    tpu.vector_store %arg8[%c16_52, %c0_53], %105 {strides = array<i32>} : memref<288x64xf32, #tpu.memory_space<vmem>>, vector<256x64xf32>,
    %c0_54 = arith.constant 0 : index
    %c0_55 = arith.constant 0 : index
    %107 = vector.load %arg8[%c0_54, %c0_55] : memref<288x64xf32, #tpu.memory_space<vmem>>, vector<288x64xf32>
    %108 = arith.truncf %107 : vector<288x64xf32> to vector<288x64xbf16>
    %c1_i32_56 = arith.constant 1 : i32
    %109 = tpu.dynamic_rotate %107 by %c1_i32_56 dim 0 : vector<288x64xf32>, i32 -> vector<288x64xf32>
    %110 = arith.truncf %109 : vector<288x64xf32> to vector<288x64xbf16>
    %cst_57 = arith.constant 0.000000e+00 : f32
    %111 = arith.truncf %cst_57 : f32 to bf16
    %112 = vector.broadcast %111 : bf16 to vector<288x64xbf16>
    %113 = arith.select %7, %110, %112 : vector<288x64xi1>, vector<288x64xbf16>
    %c287_i32_58 = arith.constant 287 : i32
    %114 = tpu.dynamic_rotate %107 by %c287_i32_58 dim 0 : vector<288x64xf32>, i32 -> vector<288x64xf32>
    %115 = arith.truncf %114 : vector<288x64xf32> to vector<288x64xbf16>
    %cst_59 = arith.constant 0.000000e+00 : f32
    %116 = arith.truncf %cst_59 : f32 to bf16
    %117 = vector.broadcast %116 : bf16 to vector<288x64xbf16>
    %118 = arith.select %9, %115, %117 : vector<288x64xi1>, vector<288x64xbf16>
    %119 = tpu.concatenate %113, %108, %118 in 1 : vector<288x64xbf16>, vector<288x64xbf16>, vector<288x64xbf16> -> vector<288x192xbf16>
    %c3 = arith.constant 3 : index
    %c0_60 = arith.constant 0 : index
    %c0_61 = arith.constant 0 : index
    %120 = vector.load %arg2[%c3, %c0_60, %c0_61] : memref<8x192x192xbf16, #tpu.memory_space<vmem>>, vector<1x192x192xbf16>
    %121 = vector.shape_cast %120 : vector<1x192x192xbf16> to vector<192x192xbf16>
    %cst_62 = arith.constant dense<0.000000e+00> : vector<288x192xf32>
    %122 = tpu.matmul %119, %121, %cst_62 {dimension_numbers = #tpu.dot_dimension_numbers<[1], [0], [0], [1], [0, 0, 1, 1], [], []>} : vector<288x192xbf16>, vector<192x192xbf16>, vector<288x192xf32> -> vector<288x192xf32>
    %123 = vector.extract_strided_slice %122 {offsets = [0, 0], sizes = [256, 64], strides = [1, 1]} : vector<288x192xf32> to vector<256x64xf32>
    %124 = vector.extract_strided_slice %122 {offsets = [16, 64], sizes = [256, 64], strides = [1, 1]} : vector<288x192xf32> to vector<256x64xf32>
    %125 = arith.addf %123, %124 : vector<256x64xf32>
    %126 = vector.extract_strided_slice %122 {offsets = [32, 128], sizes = [256, 64], strides = [1, 1]} : vector<288x192xf32> to vector<256x64xf32>
    %127 = arith.addf %125, %126 : vector<256x64xf32>
    %c3_63 = arith.constant 3 : index
    %c0_64 = arith.constant 0 : index
    %c0_65 = arith.constant 0 : index
    %128 = vector.load %arg3[%c3_63, %c0_64, %c0_65] : memref<8x1x64xf32, #tpu.memory_space<vmem>>, vector<1x1x64xf32>
    %129 = vector.shape_cast %128 : vector<1x1x64xf32> to vector<1x64xf32>
    %130 = vector.broadcast %129 : vector<1x64xf32> to vector<256x64xf32>
    %131 = arith.mulf %127, %130 : vector<256x64xf32>
    %c3_66 = arith.constant 3 : index
    %c0_67 = arith.constant 0 : index
    %c0_68 = arith.constant 0 : index
    %132 = vector.load %arg4[%c3_66, %c0_67, %c0_68] : memref<8x1x64xf32, #tpu.memory_space<vmem>>, vector<1x1x64xf32>
    %133 = vector.shape_cast %132 : vector<1x1x64xf32> to vector<1x64xf32>
    %134 = vector.broadcast %133 : vector<1x64xf32> to vector<256x64xf32>
    %135 = arith.addf %131, %134 : vector<256x64xf32>
    %cst_69 = arith.constant 0.000000e+00 : f32
    %136 = vector.broadcast %cst_69 : f32 to vector<256x64xf32>
    %137 = arith.maximumf %135, %136 : vector<256x64xf32>
    %c16_70 = arith.constant 16 : index
    %c0_71 = arith.constant 0 : index
    %138 = vector.load %arg9[%c16_70, %c0_71] : memref<288x64xf32, #tpu.memory_space<vmem>>, vector<256x64xf32>
    tpu.vector_store %arg9[%c16_70, %c0_71], %137 {strides = array<i32>} : memref<288x64xf32, #tpu.memory_space<vmem>>, vector<256x64xf32>,
    %c0_72 = arith.constant 0 : index
    %c0_73 = arith.constant 0 : index
    %139 = vector.load %arg9[%c0_72, %c0_73] : memref<288x64xf32, #tpu.memory_space<vmem>>, vector<288x64xf32>
    %140 = arith.truncf %139 : vector<288x64xf32> to vector<288x64xbf16>
    %c1_i32_74 = arith.constant 1 : i32
    %141 = tpu.dynamic_rotate %139 by %c1_i32_74 dim 0 : vector<288x64xf32>, i32 -> vector<288x64xf32>
    %142 = arith.truncf %141 : vector<288x64xf32> to vector<288x64xbf16>
    %cst_75 = arith.constant 0.000000e+00 : f32
    %143 = arith.truncf %cst_75 : f32 to bf16
    %144 = vector.broadcast %143 : bf16 to vector<288x64xbf16>
    %145 = arith.select %7, %142, %144 : vector<288x64xi1>, vector<288x64xbf16>
    %c287_i32_76 = arith.constant 287 : i32
    %146 = tpu.dynamic_rotate %139 by %c287_i32_76 dim 0 : vector<288x64xf32>, i32 -> vector<288x64xf32>
    %147 = arith.truncf %146 : vector<288x64xf32> to vector<288x64xbf16>
    %cst_77 = arith.constant 0.000000e+00 : f32
    %148 = arith.truncf %cst_77 : f32 to bf16
    %149 = vector.broadcast %148 : bf16 to vector<288x64xbf16>
    %150 = arith.select %9, %147, %149 : vector<288x64xi1>, vector<288x64xbf16>
    %151 = tpu.concatenate %145, %140, %150 in 1 : vector<288x64xbf16>, vector<288x64xbf16>, vector<288x64xbf16> -> vector<288x192xbf16>
    %c4 = arith.constant 4 : index
    %c0_78 = arith.constant 0 : index
    %c0_79 = arith.constant 0 : index
    %152 = vector.load %arg2[%c4, %c0_78, %c0_79] : memref<8x192x192xbf16, #tpu.memory_space<vmem>>, vector<1x192x192xbf16>
    %153 = vector.shape_cast %152 : vector<1x192x192xbf16> to vector<192x192xbf16>
    %cst_80 = arith.constant dense<0.000000e+00> : vector<288x192xf32>
    %154 = tpu.matmul %151, %153, %cst_80 {dimension_numbers = #tpu.dot_dimension_numbers<[1], [0], [0], [1], [0, 0, 1, 1], [], []>} : vector<288x192xbf16>, vector<192x192xbf16>, vector<288x192xf32> -> vector<288x192xf32>
    %155 = vector.extract_strided_slice %154 {offsets = [0, 0], sizes = [256, 64], strides = [1, 1]} : vector<288x192xf32> to vector<256x64xf32>
    %156 = vector.extract_strided_slice %154 {offsets = [16, 64], sizes = [256, 64], strides = [1, 1]} : vector<288x192xf32> to vector<256x64xf32>
    %157 = arith.addf %155, %156 : vector<256x64xf32>
    %158 = vector.extract_strided_slice %154 {offsets = [32, 128], sizes = [256, 64], strides = [1, 1]} : vector<288x192xf32> to vector<256x64xf32>
    %159 = arith.addf %157, %158 : vector<256x64xf32>
    %c4_81 = arith.constant 4 : index
    %c0_82 = arith.constant 0 : index
    %c0_83 = arith.constant 0 : index
    %160 = vector.load %arg3[%c4_81, %c0_82, %c0_83] : memref<8x1x64xf32, #tpu.memory_space<vmem>>, vector<1x1x64xf32>
    %161 = vector.shape_cast %160 : vector<1x1x64xf32> to vector<1x64xf32>
    %162 = vector.broadcast %161 : vector<1x64xf32> to vector<256x64xf32>
    %163 = arith.mulf %159, %162 : vector<256x64xf32>
    %c4_84 = arith.constant 4 : index
    %c0_85 = arith.constant 0 : index
    %c0_86 = arith.constant 0 : index
    %164 = vector.load %arg4[%c4_84, %c0_85, %c0_86] : memref<8x1x64xf32, #tpu.memory_space<vmem>>, vector<1x1x64xf32>
    %165 = vector.shape_cast %164 : vector<1x1x64xf32> to vector<1x64xf32>
    %166 = vector.broadcast %165 : vector<1x64xf32> to vector<256x64xf32>
    %167 = arith.addf %163, %166 : vector<256x64xf32>
    %cst_87 = arith.constant 0.000000e+00 : f32
    %168 = vector.broadcast %cst_87 : f32 to vector<256x64xf32>
    %169 = arith.maximumf %167, %168 : vector<256x64xf32>
    %c16_88 = arith.constant 16 : index
    %c0_89 = arith.constant 0 : index
    %170 = vector.load %arg8[%c16_88, %c0_89] : memref<288x64xf32, #tpu.memory_space<vmem>>, vector<256x64xf32>
    tpu.vector_store %arg8[%c16_88, %c0_89], %169 {strides = array<i32>} : memref<288x64xf32, #tpu.memory_space<vmem>>, vector<256x64xf32>,
    %c0_90 = arith.constant 0 : index
    %c0_91 = arith.constant 0 : index
    %171 = vector.load %arg8[%c0_90, %c0_91] : memref<288x64xf32, #tpu.memory_space<vmem>>, vector<288x64xf32>
    %172 = arith.truncf %171 : vector<288x64xf32> to vector<288x64xbf16>
    %c1_i32_92 = arith.constant 1 : i32
    %173 = tpu.dynamic_rotate %171 by %c1_i32_92 dim 0 : vector<288x64xf32>, i32 -> vector<288x64xf32>
    %174 = arith.truncf %173 : vector<288x64xf32> to vector<288x64xbf16>
    %cst_93 = arith.constant 0.000000e+00 : f32
    %175 = arith.truncf %cst_93 : f32 to bf16
    %176 = vector.broadcast %175 : bf16 to vector<288x64xbf16>
    %177 = arith.select %7, %174, %176 : vector<288x64xi1>, vector<288x64xbf16>
    %c287_i32_94 = arith.constant 287 : i32
    %178 = tpu.dynamic_rotate %171 by %c287_i32_94 dim 0 : vector<288x64xf32>, i32 -> vector<288x64xf32>
    %179 = arith.truncf %178 : vector<288x64xf32> to vector<288x64xbf16>
    %cst_95 = arith.constant 0.000000e+00 : f32
    %180 = arith.truncf %cst_95 : f32 to bf16
    %181 = vector.broadcast %180 : bf16 to vector<288x64xbf16>
    %182 = arith.select %9, %179, %181 : vector<288x64xi1>, vector<288x64xbf16>
    %183 = tpu.concatenate %177, %172, %182 in 1 : vector<288x64xbf16>, vector<288x64xbf16>, vector<288x64xbf16> -> vector<288x192xbf16>
    %c5 = arith.constant 5 : index
    %c0_96 = arith.constant 0 : index
    %c0_97 = arith.constant 0 : index
    %184 = vector.load %arg2[%c5, %c0_96, %c0_97] : memref<8x192x192xbf16, #tpu.memory_space<vmem>>, vector<1x192x192xbf16>
    %185 = vector.shape_cast %184 : vector<1x192x192xbf16> to vector<192x192xbf16>
    %cst_98 = arith.constant dense<0.000000e+00> : vector<288x192xf32>
    %186 = tpu.matmul %183, %185, %cst_98 {dimension_numbers = #tpu.dot_dimension_numbers<[1], [0], [0], [1], [0, 0, 1, 1], [], []>} : vector<288x192xbf16>, vector<192x192xbf16>, vector<288x192xf32> -> vector<288x192xf32>
    %187 = vector.extract_strided_slice %186 {offsets = [0, 0], sizes = [256, 64], strides = [1, 1]} : vector<288x192xf32> to vector<256x64xf32>
    %188 = vector.extract_strided_slice %186 {offsets = [16, 64], sizes = [256, 64], strides = [1, 1]} : vector<288x192xf32> to vector<256x64xf32>
    %189 = arith.addf %187, %188 : vector<256x64xf32>
    %190 = vector.extract_strided_slice %186 {offsets = [32, 128], sizes = [256, 64], strides = [1, 1]} : vector<288x192xf32> to vector<256x64xf32>
    %191 = arith.addf %189, %190 : vector<256x64xf32>
    %c5_99 = arith.constant 5 : index
    %c0_100 = arith.constant 0 : index
    %c0_101 = arith.constant 0 : index
    %192 = vector.load %arg3[%c5_99, %c0_100, %c0_101] : memref<8x1x64xf32, #tpu.memory_space<vmem>>, vector<1x1x64xf32>
    %193 = vector.shape_cast %192 : vector<1x1x64xf32> to vector<1x64xf32>
    %194 = vector.broadcast %193 : vector<1x64xf32> to vector<256x64xf32>
    %195 = arith.mulf %191, %194 : vector<256x64xf32>
    %c5_102 = arith.constant 5 : index
    %c0_103 = arith.constant 0 : index
    %c0_104 = arith.constant 0 : index
    %196 = vector.load %arg4[%c5_102, %c0_103, %c0_104] : memref<8x1x64xf32, #tpu.memory_space<vmem>>, vector<1x1x64xf32>
    %197 = vector.shape_cast %196 : vector<1x1x64xf32> to vector<1x64xf32>
    %198 = vector.broadcast %197 : vector<1x64xf32> to vector<256x64xf32>
    %199 = arith.addf %195, %198 : vector<256x64xf32>
    %cst_105 = arith.constant 0.000000e+00 : f32
    %200 = vector.broadcast %cst_105 : f32 to vector<256x64xf32>
    %201 = arith.maximumf %199, %200 : vector<256x64xf32>
    %c16_106 = arith.constant 16 : index
    %c0_107 = arith.constant 0 : index
    %202 = vector.load %arg9[%c16_106, %c0_107] : memref<288x64xf32, #tpu.memory_space<vmem>>, vector<256x64xf32>
    tpu.vector_store %arg9[%c16_106, %c0_107], %201 {strides = array<i32>} : memref<288x64xf32, #tpu.memory_space<vmem>>, vector<256x64xf32>,
    %c0_108 = arith.constant 0 : index
    %c0_109 = arith.constant 0 : index
    %203 = vector.load %arg9[%c0_108, %c0_109] : memref<288x64xf32, #tpu.memory_space<vmem>>, vector<288x64xf32>
    %204 = arith.truncf %203 : vector<288x64xf32> to vector<288x64xbf16>
    %c1_i32_110 = arith.constant 1 : i32
    %205 = tpu.dynamic_rotate %203 by %c1_i32_110 dim 0 : vector<288x64xf32>, i32 -> vector<288x64xf32>
    %206 = arith.truncf %205 : vector<288x64xf32> to vector<288x64xbf16>
    %cst_111 = arith.constant 0.000000e+00 : f32
    %207 = arith.truncf %cst_111 : f32 to bf16
    %208 = vector.broadcast %207 : bf16 to vector<288x64xbf16>
    %209 = arith.select %7, %206, %208 : vector<288x64xi1>, vector<288x64xbf16>
    %c287_i32_112 = arith.constant 287 : i32
    %210 = tpu.dynamic_rotate %203 by %c287_i32_112 dim 0 : vector<288x64xf32>, i32 -> vector<288x64xf32>
    %211 = arith.truncf %210 : vector<288x64xf32> to vector<288x64xbf16>
    %cst_113 = arith.constant 0.000000e+00 : f32
    %212 = arith.truncf %cst_113 : f32 to bf16
    %213 = vector.broadcast %212 : bf16 to vector<288x64xbf16>
    %214 = arith.select %9, %211, %213 : vector<288x64xi1>, vector<288x64xbf16>
    %215 = tpu.concatenate %209, %204, %214 in 1 : vector<288x64xbf16>, vector<288x64xbf16>, vector<288x64xbf16> -> vector<288x192xbf16>
    %c6 = arith.constant 6 : index
    %c0_114 = arith.constant 0 : index
    %c0_115 = arith.constant 0 : index
    %216 = vector.load %arg2[%c6, %c0_114, %c0_115] : memref<8x192x192xbf16, #tpu.memory_space<vmem>>, vector<1x192x192xbf16>
    %217 = vector.shape_cast %216 : vector<1x192x192xbf16> to vector<192x192xbf16>
    %cst_116 = arith.constant dense<0.000000e+00> : vector<288x192xf32>
    %218 = tpu.matmul %215, %217, %cst_116 {dimension_numbers = #tpu.dot_dimension_numbers<[1], [0], [0], [1], [0, 0, 1, 1], [], []>} : vector<288x192xbf16>, vector<192x192xbf16>, vector<288x192xf32> -> vector<288x192xf32>
    %219 = vector.extract_strided_slice %218 {offsets = [0, 0], sizes = [256, 64], strides = [1, 1]} : vector<288x192xf32> to vector<256x64xf32>
    %220 = vector.extract_strided_slice %218 {offsets = [16, 64], sizes = [256, 64], strides = [1, 1]} : vector<288x192xf32> to vector<256x64xf32>
    %221 = arith.addf %219, %220 : vector<256x64xf32>
    %222 = vector.extract_strided_slice %218 {offsets = [32, 128], sizes = [256, 64], strides = [1, 1]} : vector<288x192xf32> to vector<256x64xf32>
    %223 = arith.addf %221, %222 : vector<256x64xf32>
    %c6_117 = arith.constant 6 : index
    %c0_118 = arith.constant 0 : index
    %c0_119 = arith.constant 0 : index
    %224 = vector.load %arg3[%c6_117, %c0_118, %c0_119] : memref<8x1x64xf32, #tpu.memory_space<vmem>>, vector<1x1x64xf32>
    %225 = vector.shape_cast %224 : vector<1x1x64xf32> to vector<1x64xf32>
    %226 = vector.broadcast %225 : vector<1x64xf32> to vector<256x64xf32>
    %227 = arith.mulf %223, %226 : vector<256x64xf32>
    %c6_120 = arith.constant 6 : index
    %c0_121 = arith.constant 0 : index
    %c0_122 = arith.constant 0 : index
    %228 = vector.load %arg4[%c6_120, %c0_121, %c0_122] : memref<8x1x64xf32, #tpu.memory_space<vmem>>, vector<1x1x64xf32>
    %229 = vector.shape_cast %228 : vector<1x1x64xf32> to vector<1x64xf32>
    %230 = vector.broadcast %229 : vector<1x64xf32> to vector<256x64xf32>
    %231 = arith.addf %227, %230 : vector<256x64xf32>
    %cst_123 = arith.constant 0.000000e+00 : f32
    %232 = vector.broadcast %cst_123 : f32 to vector<256x64xf32>
    %233 = arith.maximumf %231, %232 : vector<256x64xf32>
    %c16_124 = arith.constant 16 : index
    %c0_125 = arith.constant 0 : index
    %234 = vector.load %arg8[%c16_124, %c0_125] : memref<288x64xf32, #tpu.memory_space<vmem>>, vector<256x64xf32>
    tpu.vector_store %arg8[%c16_124, %c0_125], %233 {strides = array<i32>} : memref<288x64xf32, #tpu.memory_space<vmem>>, vector<256x64xf32>,
    %c0_126 = arith.constant 0 : index
    %c0_127 = arith.constant 0 : index
    %235 = vector.load %arg8[%c0_126, %c0_127] : memref<288x64xf32, #tpu.memory_space<vmem>>, vector<288x64xf32>
    %236 = arith.truncf %235 : vector<288x64xf32> to vector<288x64xbf16>
    %c1_i32_128 = arith.constant 1 : i32
    %237 = tpu.dynamic_rotate %235 by %c1_i32_128 dim 0 : vector<288x64xf32>, i32 -> vector<288x64xf32>
    %238 = arith.truncf %237 : vector<288x64xf32> to vector<288x64xbf16>
    %cst_129 = arith.constant 0.000000e+00 : f32
    %239 = arith.truncf %cst_129 : f32 to bf16
    %240 = vector.broadcast %239 : bf16 to vector<288x64xbf16>
    %241 = arith.select %7, %238, %240 : vector<288x64xi1>, vector<288x64xbf16>
    %c287_i32_130 = arith.constant 287 : i32
    %242 = tpu.dynamic_rotate %235 by %c287_i32_130 dim 0 : vector<288x64xf32>, i32 -> vector<288x64xf32>
    %243 = arith.truncf %242 : vector<288x64xf32> to vector<288x64xbf16>
    %cst_131 = arith.constant 0.000000e+00 : f32
    %244 = arith.truncf %cst_131 : f32 to bf16
    %245 = vector.broadcast %244 : bf16 to vector<288x64xbf16>
    %246 = arith.select %9, %243, %245 : vector<288x64xi1>, vector<288x64xbf16>
    %247 = tpu.concatenate %241, %236, %246 in 1 : vector<288x64xbf16>, vector<288x64xbf16>, vector<288x64xbf16> -> vector<288x192xbf16>
    %c7 = arith.constant 7 : index
    %c0_132 = arith.constant 0 : index
    %c0_133 = arith.constant 0 : index
    %248 = vector.load %arg2[%c7, %c0_132, %c0_133] : memref<8x192x192xbf16, #tpu.memory_space<vmem>>, vector<1x192x192xbf16>
    %249 = vector.shape_cast %248 : vector<1x192x192xbf16> to vector<192x192xbf16>
    %cst_134 = arith.constant dense<0.000000e+00> : vector<288x192xf32>
    %250 = tpu.matmul %247, %249, %cst_134 {dimension_numbers = #tpu.dot_dimension_numbers<[1], [0], [0], [1], [0, 0, 1, 1], [], []>} : vector<288x192xbf16>, vector<192x192xbf16>, vector<288x192xf32> -> vector<288x192xf32>
    %251 = vector.extract_strided_slice %250 {offsets = [0, 0], sizes = [256, 64], strides = [1, 1]} : vector<288x192xf32> to vector<256x64xf32>
    %252 = vector.extract_strided_slice %250 {offsets = [16, 64], sizes = [256, 64], strides = [1, 1]} : vector<288x192xf32> to vector<256x64xf32>
    %253 = arith.addf %251, %252 : vector<256x64xf32>
    %254 = vector.extract_strided_slice %250 {offsets = [32, 128], sizes = [256, 64], strides = [1, 1]} : vector<288x192xf32> to vector<256x64xf32>
    %255 = arith.addf %253, %254 : vector<256x64xf32>
    %c7_135 = arith.constant 7 : index
    %c0_136 = arith.constant 0 : index
    %c0_137 = arith.constant 0 : index
    %256 = vector.load %arg3[%c7_135, %c0_136, %c0_137] : memref<8x1x64xf32, #tpu.memory_space<vmem>>, vector<1x1x64xf32>
    %257 = vector.shape_cast %256 : vector<1x1x64xf32> to vector<1x64xf32>
    %258 = vector.broadcast %257 : vector<1x64xf32> to vector<256x64xf32>
    %259 = arith.mulf %255, %258 : vector<256x64xf32>
    %c7_138 = arith.constant 7 : index
    %c0_139 = arith.constant 0 : index
    %c0_140 = arith.constant 0 : index
    %260 = vector.load %arg4[%c7_138, %c0_139, %c0_140] : memref<8x1x64xf32, #tpu.memory_space<vmem>>, vector<1x1x64xf32>
    %261 = vector.shape_cast %260 : vector<1x1x64xf32> to vector<1x64xf32>
    %262 = vector.broadcast %261 : vector<1x64xf32> to vector<256x64xf32>
    %263 = arith.addf %259, %262 : vector<256x64xf32>
    %cst_141 = arith.constant 0.000000e+00 : f32
    %264 = vector.broadcast %cst_141 : f32 to vector<256x64xf32>
    %265 = arith.maximumf %263, %264 : vector<256x64xf32>
    %cst_142 = arith.constant dense<0.000000e+00> : vector<64xf32>
    %266 = vector.multi_reduction <add>, %265, %cst_142 [0] : vector<256x64xf32> to vector<64xf32>
    %267 = vector.shape_cast %266 : vector<64xf32> to vector<1x64xf32>
    %cst_143 = arith.constant 3.906250e-03 : f32
    %268 = vector.broadcast %cst_143 : f32 to vector<1x64xf32>
    %269 = arith.mulf %267, %268 : vector<1x64xf32>
    %c0_144 = arith.constant 0 : index
    %c0_145 = arith.constant 0 : index
    %270 = vector.load %arg5[%c0_144, %c0_145] : memref<64x128xf32, #tpu.memory_space<vmem>>, vector<64x128xf32>
    %cst_146 = arith.constant dense<0.000000e+00> : vector<1x128xf32>
    %271 = tpu.matmul %269, %270, %cst_146 {dimension_numbers = #tpu.dot_dimension_numbers<[1], [0], [0], [1], [0, 0, 1, 1], [], []>} : vector<1x64xf32>, vector<64x128xf32>, vector<1x128xf32> -> vector<1x128xf32>
    %c0_147 = arith.constant 0 : index
    %c0_148 = arith.constant 0 : index
    %272 = vector.load %arg6[%c0_147, %c0_148] : memref<1x128xf32, #tpu.memory_space<vmem>>, vector<1x128xf32>
    %273 = arith.addf %271, %272 : vector<1x128xf32>
    %274 = vector.shape_cast %273 : vector<1x128xf32> to vector<1x1x128xf32>
    %c0_149 = arith.constant 0 : index
    %c0_150 = arith.constant 0 : index
    %c0_151 = arith.constant 0 : index
    %275 = vector.load %arg7[%c0_149, %c0_150, %c0_151] : memref<1x1x128xf32, #tpu.memory_space<vmem>>, vector<1x1x128xf32>
    tpu.vector_store %arg7[%c0_149, %c0_150, %c0_151], %274 {strides = array<i32>} : memref<1x1x128xf32, #tpu.memory_space<vmem>>, vector<1x1x128xf32>,
    return
  }
  func.func @transform_0(%arg0: i32) -> (i32, i32, i32) {
    %c0_i32 = arith.constant 0 : i32
    %c0_i32_0 = arith.constant 0 : i32
    %c0_i32_1 = arith.constant 0 : i32
    return %arg0, %c0_i32, %c0_i32_0 : i32, i32, i32
  }
  func.func @transform_1(%arg0: i32) -> (i32, i32, i32) {
    %c0_i32 = arith.constant 0 : i32
    %c0_i32_0 = arith.constant 0 : i32
    %c0_i32_1 = arith.constant 0 : i32
    %c0_i32_2 = arith.constant 0 : i32
    return %c0_i32, %c0_i32_0, %c0_i32_1 : i32, i32, i32
  }
  func.func @transform_2(%arg0: i32) -> (i32, i32, i32) {
    %c0_i32 = arith.constant 0 : i32
    %c0_i32_0 = arith.constant 0 : i32
    %c0_i32_1 = arith.constant 0 : i32
    %c0_i32_2 = arith.constant 0 : i32
    return %c0_i32, %c0_i32_0, %c0_i32_1 : i32, i32, i32
  }
  func.func @transform_3(%arg0: i32) -> (i32, i32, i32) {
    %c0_i32 = arith.constant 0 : i32
    %c0_i32_0 = arith.constant 0 : i32
    %c0_i32_1 = arith.constant 0 : i32
    %c0_i32_2 = arith.constant 0 : i32
    return %c0_i32, %c0_i32_0, %c0_i32_1 : i32, i32, i32
  }
  func.func @transform_4(%arg0: i32) -> (i32, i32) {
    %c0_i32 = arith.constant 0 : i32
    %c0_i32_0 = arith.constant 0 : i32
    %c0_i32_1 = arith.constant 0 : i32
    return %c0_i32, %c0_i32_0 : i32, i32
  }
  func.func @transform_5(%arg0: i32) -> (i32, i32) {
    %c0_i32 = arith.constant 0 : i32
    %c0_i32_0 = arith.constant 0 : i32
    %c0_i32_1 = arith.constant 0 : i32
    return %c0_i32, %c0_i32_0 : i32, i32
  }
  func.func @transform_6(%arg0: i32) -> (i32, i32, i32) {
    %c0_i32 = arith.constant 0 : i32
    %c0_i32_0 = arith.constant 0 : i32
    %c0_i32_1 = arith.constant 0 : i32
    return %arg0, %c0_i32, %c0_i32_0 : i32, i32, i32
  }
}

</mosaic_0001>

<llo_original>
// kernel: forward.1
$region0: #{forward.1}
  #allocation0 [shape = 'u32[]', space=smem, size = 0x4, offset = 0x4, fixed_abs, tag = 'smem constant byte address 0x4 - core index']
  #allocation1 [shape = 'u32[144,128]{1,0:T(1,128)}', space=vmem, size = 0x12000, scoped, tag = 'internal scratch']
  #allocation2 [shape = 'f32[288,64]{1,0:T(8,128)}', space=vmem, size = 0x24000, scoped, tag = 'scratch operand']
  #allocation3 [shape = 'f32[288,64]{1,0:T(8,128)}', space=vmem, size = 0x24000, scoped, tag = 'scratch operand']
  %s0 = inlined_call_operand.vmem [shape: f32[2,288,64], index: 0, kind: input, shape index: {}]
  %s1 = inlined_call_operand.vmem [shape: bf16[8,192,192], index: 1, kind: input, shape index: {}]
  %s2 = inlined_call_operand.vmem [shape: f32[8,1,64], index: 2, kind: input, shape index: {}]
  %s3 = inlined_call_operand.vmem [shape: f32[8,1,64], index: 3, kind: input, shape index: {}]
  %s4 = inlined_call_operand.vmem [shape: f32[64,128], index: 4, kind: input, shape index: {}]
  %s5 = inlined_call_operand.vmem [shape: f32[1,128], index: 5, kind: input, shape index: {}]
  %s6 = inlined_call_operand.hbm [shape: f32[2,1,128], index: 6, kind: output, shape index: {}]
  %s7 = sld [smem:[#allocation0]]
  $region61: #{forward.1} parent=0
    _
  %s9 = ssub.s32 1, %s7
  %s10 = scalar_select 0, %s9, %s7
  $region1: #{forward.1} parent=0
    #allocation4 [shape = 'u8[1024]{0}', space=vmem, size = 0x400, scoped, tag = 'output window, operand 0']
    #allocation5 [shape = 's32[2]{0}', space=sflag, size = 0x8, scoped, tag = 'scoped memory for forward.1']
    %11 = vsyncpa [#allocation5], 0
    %s12 = scalar_lea.sflag [#allocation5], 1
    %13 = vsyncpa %s12, 0
    loop: start=0, step=1, limit=4
    $region2: #{forward.1} parent=1 // loop_pre_header
      _
    $region3: #{forward.1} parent=1 // loop_header
      %s15 = sphi 0, %s19
      %p16 = scmp.ge.s32.totalorder %s15, 4
      %s25 = sphi 0, %s27
      %s28 = sphi 0, %s25
      %s29 = sphi 0, %s28
      %s45 = sphi 0, %s29
      %s49 = sphi 0, %s49
      %s51 = sphi 0, %s49
      %s52 = sphi 0, %s51
      %s66 = sphi 0, %s52
      %s70 = sphi 0, %s70
      %s72 = sphi 0, %s70
      %s73 = sphi 0, %s72
      %s87 = sphi 0, %s73
      %s91 = sphi 0, %s91
      %s93 = sphi 0, %s91
      %s94 = sphi 0, %s93
      %s108 = sphi 0, %s94
      %s112 = sphi 0, %s112
      %s114 = sphi 0, %s112
      %s115 = sphi 0, %s114
      %s129 = sphi 0, %s115
      %s133 = sphi 0, %s133
      %s135 = sphi 0, %s133
      %s136 = sphi 0, %s135
      %s150 = sphi 0, %s136
      %s156 = sphi 0, %s158
      %s159 = sphi 0, %s156
      %s160 = sphi 0, %s159
      %s176 = sphi 0, %s160
    $region4: #{forward.1} parent=1 // loop_header_branch
      %18 = sbr.rel (%p16) target = $region8
    $region5: #{forward.1} parent=1 // loop_body
      %s20 = ssub.s32 %s15, 1
      %s21 = ssub.s32 %s15, 2
      %s22 = sadd.s32 %s15, 1
      %s23 = ssub.s32 %s15, %s22
      %p24 = scmp.eq.s32.totalorder %s23, 0
      %s26 = sadd.s32 %s25, 1
      %s27 = scalar_select %p24, %s25, %s26
      %p30 = pneg %p24
      %p31 = scmp.eq.s32.totalorder %s15, 1
      %p32 = por %p30, %p31
      %p33 = scmp.ne.s32.totalorder %s25, %s28
      %p34 = scmp.eq.s32.totalorder %s15, 0
      %p35 = por %p33, %p34
      %p36 = scmp.ne.s32.totalorder %s25, %s28
      %p37 = scmp.eq.s32.totalorder %s20, 1
      %p38 = por %p36, %p37
      %p39 = scmp.ne.s32.totalorder %s28, %s29
      %p40 = scmp.eq.s32.totalorder %s20, 0
      %p41 = por %p39, %p40
      %p42 = scmp.ne.s32.totalorder %s28, %s29
      %p43 = scmp.eq.s32.totalorder %s21, 1
      %p44 = por %p42, %p43
      %p46 = scmp.ne.s32.totalorder %s29, %s45
      %p47 = scmp.eq.s32.totalorder %s21, 0
      %p48 = por %p46, %p47
      %s50 = sadd.s32 %s49, 1
      %p53 = scmp.eq.s32.totalorder %s15, 1
      %p54 = scmp.ne.s32.totalorder %s49, %s51
      %p55 = scmp.eq.s32.totalorder %s15, 0
      %p56 = por %p54, %p55
      %p57 = scmp.ne.s32.totalorder %s49, %s51
      %p58 = scmp.eq.s32.totalorder %s20, 1
      %p59 = por %p57, %p58
      %p60 = scmp.ne.s32.totalorder %s51, %s52
      %p61 = scmp.eq.s32.totalorder %s20, 0
      %p62 = por %p60, %p61
      %p63 = scmp.ne.s32.totalorder %s51, %s52
      %p64 = scmp.eq.s32.totalorder %s21, 1
      %p65 = por %p63, %p64
      %p67 = scmp.ne.s32.totalorder %s52, %s66
      %p68 = scmp.eq.s32.totalorder %s21, 0
      %p69 = por %p67, %p68
      %s71 = sadd.s32 %s70, 1
      %p74 = scmp.eq.s32.totalorder %s15, 1
      %p75 = scmp.ne.s32.totalorder %s70, %s72
      %p76 = scmp.eq.s32.totalorder %s15, 0
      %p77 = por %p75, %p76
      %p78 = scmp.ne.s32.totalorder %s70, %s72
      %p79 = scmp.eq.s32.totalorder %s20, 1
      %p80 = por %p78, %p79
      %p81 = scmp.ne.s32.totalorder %s72, %s73
      %p82 = scmp.eq.s32.totalorder %s20, 0
      %p83 = por %p81, %p82
      %p84 = scmp.ne.s32.totalorder %s72, %s73
      %p85 = scmp.eq.s32.totalorder %s21, 1
      %p86 = por %p84, %p85
      %p88 = scmp.ne.s32.totalorder %s73, %s87
      %p89 = scmp.eq.s32.totalorder %s21, 0
      %p90 = por %p88, %p89
      %s92 = sadd.s32 %s91, 1
      %p95 = scmp.eq.s32.totalorder %s15, 1
      %p96 = scmp.ne.s32.totalorder %s91, %s93
      %p97 = scmp.eq.s32.totalorder %s15, 0
      %p98 = por %p96, %p97
      %p99 = scmp.ne.s32.totalorder %s91, %s93
      %p100 = scmp.eq.s32.totalorder %s20, 1
      %p101 = por %p99, %p100
      %p102 = scmp.ne.s32.totalorder %s93, %s94
      %p103 = scmp.eq.s32.totalorder %s20, 0
      %p104 = por %p102, %p103
      %p105 = scmp.ne.s32.totalorder %s93, %s94
      %p106 = scmp.eq.s32.totalorder %s21, 1
      %p107 = por %p105, %p106
      %p109 = scmp.ne.s32.totalorder %s94, %s108
      %p110 = scmp.eq.s32.totalorder %s21, 0
      %p111 = por %p109, %p110
      %s113 = sadd.s32 %s112, 1
      %p116 = scmp.eq.s32.totalorder %s15, 1
      %p117 = scmp.ne.s32.totalorder %s112, %s114
      %p118 = scmp.eq.s32.totalorder %s15, 0
      %p119 = por %p117, %p118
      %p120 = scmp.ne.s32.totalorder %s112, %s114
      %p121 = scmp.eq.s32.totalorder %s20, 1
      %p122 = por %p120, %p121
      %p123 = scmp.ne.s32.totalorder %s114, %s115
      %p124 = scmp.eq.s32.totalorder %s20, 0
      %p125 = por %p123, %p124
      %p126 = scmp.ne.s32.totalorder %s114, %s115
      %p127 = scmp.eq.s32.totalorder %s21, 1
      %p128 = por %p126, %p127
      %p130 = scmp.ne.s32.totalorder %s115, %s129
      %p131 = scmp.eq.s32.totalorder %s21, 0
      %p132 = por %p130, %p131
      %s134 = sadd.s32 %s133, 1
      %p137 = scmp.eq.s32.totalorder %s15, 1
      %p138 = scmp.ne.s32.totalorder %s133, %s135
      %p139 = scmp.eq.s32.totalorder %s15, 0
      %p140 = por %p138, %p139
      %p141 = scmp.ne.s32.totalorder %s133, %s135
      %p142 = scmp.eq.s32.totalorder %s20, 1
      %p143 = por %p141, %p142
      %p144 = scmp.ne.s32.totalorder %s135, %s136
      %p145 = scmp.eq.s32.totalorder %s20, 0
      %p146 = por %p144, %p145
      %p147 = scmp.ne.s32.totalorder %s135, %s136
      %p148 = scmp.eq.s32.totalorder %s21, 1
      %p149 = por %p147, %p148
      %p151 = scmp.ne.s32.totalorder %s136, %s150
      %p152 = scmp.eq.s32.totalorder %s21, 0
      %p153 = por %p151, %p152
      %s154 = ssub.s32 %s15, %s22
      %p155 = scmp.eq.s32.totalorder %s154, 0
      %s157 = sadd.s32 %s156, 1
      %s158 = scalar_select %p155, %s156, %s157
      %p161 = pneg %p155
      %p162 = scmp.eq.s32.totalorder %s15, 1
      %p163 = por %p161, %p162
      %p164 = scmp.ne.s32.totalorder %s156, %s159
      %p165 = scmp.eq.s32.totalorder %s15, 0
      %p166 = por %p164, %p165
      %p167 = scmp.ne.s32.totalorder %s156, %s159
      %p168 = scmp.eq.s32.totalorder %s20, 1
      %p169 = por %p167, %p168
      %p170 = scmp.ne.s32.totalorder %s159, %s160
      %p171 = scmp.eq.s32.totalorder %s20, 0
      %p172 = por %p170, %p171
      %p173 = scmp.ne.s32.totalorder %s159, %s160
      %p174 = scmp.eq.s32.totalorder %s21, 1
      %p175 = por %p173, %p174
      %p177 = scmp.ne.s32.totalorder %s160, %s176
      %p178 = scmp.eq.s32.totalorder %s21, 0
      %p179 = por %p177, %p178
      %p180 = scmp.le.s32.totalorder 1, %s15
      %p181 = scmp.lt.s32.totalorder %s15, 3
      %p182 = pnand %p180, %p181
      %p183 = pneg %p182
      // Predicated region
      $region9: #{forward.1} parent=5 // pred_check
        _
      $region10: #{forward.1} parent=5 // pred_check_branch
        %185 = sbr.rel (%p182) target = $region12
      $region11: #{forward.1} parent=5 // pred_region
        %s186 = ssub.s32 %s15, 1
        // Predicated region
        $region13: #{forward.1} parent=11 // pred_check
          %p187 = pneg %p62
        $region14: #{forward.1} parent=11 // pred_check_branch
          %189 = sbr.rel (%p187) target = $region16
        $region15: #{forward.1} parent=11 // pred_region
          _
        $region16: #{forward.1} parent=11 // pred_fallthru
          _
        // Predicated region
        $region17: #{forward.1} parent=11 // pred_check
          %p190 = pneg %p83
        $region18: #{forward.1} parent=11 // pred_check_branch
          %192 = sbr.rel (%p190) target = $region20
        $region19: #{forward.1} parent=11 // pred_region
          _
        $region20: #{forward.1} parent=11 // pred_fallthru
          _
        // Predicated region
        $region21: #{forward.1} parent=11 // pred_check
          %p193 = pneg %p104
        $region22: #{forward.1} parent=11 // pred_check_branch
          %195 = sbr.rel (%p193) target = $region24
        $region23: #{forward.1} parent=11 // pred_region
          _
        $region24: #{forward.1} parent=11 // pred_fallthru
          _
        // Predicated region
        $region25: #{forward.1} parent=11 // pred_check
          %p196 = pneg %p125
        $region26: #{forward.1} parent=11 // pred_check_branch
          %198 = sbr.rel (%p196) target = $region28
        $region27: #{forward.1} parent=11 // pred_region
          _
        $region28: #{forward.1} parent=11 // pred_fallthru
          _
        // Predicated region
        $region29: #{forward.1} parent=11 // pred_check
          %p199 = pneg %p146
        $region30: #{forward.1} parent=11 // pred_check_branch
          %201 = sbr.rel (%p199) target = $region32
        $region31: #{forward.1} parent=11 // pred_region
          _
        $region32: #{forward.1} parent=11 // pred_fallthru
          _
      $region12: #{forward.1} parent=5 // pred_fallthru
        _
      %p202 = scmp.lt.s32.totalorder %s15, 2
      // Predicated region
      $region33: #{forward.1} parent=5 // pred_check
        %p203 = pneg %p202
      $region34: #{forward.1} parent=5 // pred_check_branch
        %205 = sbr.rel (%p203) target = $region36
      $region35: #{forward.1} parent=5 // pred_region
        // Predicated region
        $region37: #{forward.1} parent=35 // pred_check
          %p206 = pneg %p35
        $region38: #{forward.1} parent=35 // pred_check_branch
          %208 = sbr.rel (%p206) target = $region40
        $region39: #{forward.1} parent=35 // pred_region
          %p209 = scmp.lt.s32.totalorder %s15, 1
          %s210 = scalar_select %p209, %s15, 1
          %s211 = smul.addr %s210, 36
          %s212 = smul.addr %s211, 8
          %s213 = scalar_lea.vmem %s0, %s212
        $region40: #{forward.1} parent=35 // pred_fallthru
          _
      $region36: #{forward.1} parent=5 // pred_fallthru
        _
      %p214 = scmp.le.s32.totalorder 1, %s15
      %p215 = scmp.lt.s32.totalorder %s15, 3
      %p216 = pnand %p214, %p215
      %p217 = pneg %p216
      // Predicated region
      $region41: #{forward.1} parent=5 // pred_check
        _
      $region42: #{forward.1} parent=5 // pred_check_branch
        %219 = sbr.rel (%p216) target = $region44
      $region43: #{forward.1} parent=5 // pred_region
        %s220 = ssub.s32 %s15, 1
        %p221 = scmp.lt.s32.totalorder %s20, 1
        %s222 = scalar_select %p221, %s20, 1
        %s223 = smul.addr %s222, 36
        %s224 = smul.addr %s223, 8
        %s225 = scalar_lea.vmem %s0, %s224
        %p226 = pneg %p41
        %p227 = pneg %p38
        %p228 = pneg %p62
        %p229 = pneg %p59
        %p230 = pneg %p83
        %p231 = pneg %p80
        %p232 = pneg %p104
        %p233 = pneg %p101
        %p234 = pneg %p125
        %p235 = pneg %p122
        %p236 = pneg %p146
        %p237 = pneg %p143
        %p238 = pneg %p172
        %p239 = pneg %p169
        %s240 = sand.u32 %s159, 1
        %s241 = scalar_lea.sflag [#allocation5], %s240
        %s242 = sand.u32 %s159, 1
        %s243 = scalar_lea.vmem [#allocation4], %s242
        %p244 = scmp.lt.s32.totalorder %s20, 1
        %s245 = scalar_select %p244, %s20, 1
        %s246 = smul.addr %s245, 36
        %s247 = smul.addr %s246, 8
        %s248 = scalar_lea.vmem %s0, %s247
        %p252 = scmp.eq.s32.totalorder %s20, 0
        // Predicated region
        $region45: #{forward.1} parent=43 // pred_check
          %p253 = pneg %p252
        $region46: #{forward.1} parent=43 // pred_check_branch
          %255 = sbr.rel (%p253) target = $region48
        $region47: #{forward.1} parent=43 // pred_region
          %vm256 = vcmask 523264
          %257 = vst.msk [vmem:[#allocation2] sm:$0xff] %vm256, 0.0
          %258 = vst.msk [vmem:[#allocation2 + $0x8] sm:$0xff] %vm256, 0.0
          %259 = vst.msk [vmem:[#allocation2 + $0x110] sm:$0xff] %vm256, 0.0
          %260 = vst.msk [vmem:[#allocation2 + $0x118] sm:$0xff] %vm256, 0.0
          %261 = vst.msk [vmem:[#allocation3] sm:$0xff] %vm256, 0.0
          %262 = vst.msk [vmem:[#allocation3 + $0x8] sm:$0xff] %vm256, 0.0
          %263 = vst.msk [vmem:[#allocation3 + $0x110] sm:$0xff] %vm256, 0.0
          %264 = vst.msk [vmem:[#allocation3 + $0x118] sm:$0xff] %vm256, 0.0
        $region48: #{forward.1} parent=43 // pred_fallthru
          _
        %v265 = vlaneseq
        %v266 = vshrl.u32 %v265, 7
        %v267 = vadd.s32 %v266, 8
        %v268 = vadd.s32 %v266, 16
        %v269 = vadd.s32 %v266, 24
        %v270 = vadd.s32 %v266, 32
        %v271 = vadd.s32 %v266, 40
        %v272 = vadd.s32 %v266, 48
        %v273 = vadd.s32 %v266, 56
        %v274 = vadd.s32 %v266, 64
        %v275 = vadd.s32 %v266, 72
        %v276 = vadd.s32 %v266, 80
        %v277 = vadd.s32 %v266, 88
        %v278 = vadd.s32 %v266, 96
        %v279 = vadd.s32 %v266, 104
        %v280 = vadd.s32 %v266, 112
        %v281 = vadd.s32 %v266, 120
        %v282 = vadd.s32 %v266, 128
        %v283 = vadd.s32 %v266, 136
        %v284 = vadd.s32 %v266, 144
        %v285 = vadd.s32 %v266, 152
        %v286 = vadd.s32 %v266, 160
        %v287 = vadd.s32 %v266, 168
        %v288 = vadd.s32 %v266, 176
        %v289 = vadd.s32 %v266, 184
        %v290 = vadd.s32 %v266, 192
        %v291 = vadd.s32 %v266, 200
        %v292 = vadd.s32 %v266, 208
        %v293 = vadd.s32 %v266, 216
        %v294 = vadd.s32 %v266, 224
        %v295 = vadd.s32 %v266, 232
        %v296 = vadd.s32 %v266, 240
        %v297 = vadd.s32 %v266, 248
        %v298 = vadd.s32 %v266, 256
        %v299 = vadd.s32 %v266, 264
        %v300 = vadd.s32 %v266, 272
        %v301 = vadd.s32 %v266, 280
        %v302 = vand.u32 %v266, 15
        %v303 = vand.u32 %v267, 15
        %v304 = vand.u32 %v268, 15
        %v305 = vand.u32 %v269, 15
        %v306 = vand.u32 %v270, 15
        %v307 = vand.u32 %v271, 15
        %v308 = vand.u32 %v272, 15
        %v309 = vand.u32 %v273, 15
        %v310 = vand.u32 %v274, 15
        %v311 = vand.u32 %v275, 15
        %v312 = vand.u32 %v276, 15
        %v313 = vand.u32 %v277, 15
        %v314 = vand.u32 %v278, 15
        %v315 = vand.u32 %v279, 15
        %v316 = vand.u32 %v280, 15
        %v317 = vand.u32 %v281, 15
        %v318 = vand.u32 %v282, 15
        %v319 = vand.u32 %v283, 15
        %v320 = vand.u32 %v284, 15
        %v321 = vand.u32 %v285, 15
        %v322 = vand.u32 %v286, 15
        %v323 = vand.u32 %v287, 15
        %v324 = vand.u32 %v288, 15
        %v325 = vand.u32 %v289, 15
        %v326 = vand.u32 %v290, 15
        %v327 = vand.u32 %v291, 15
        %v328 = vand.u32 %v292, 15
        %v329 = vand.u32 %v293, 15
        %v330 = vand.u32 %v294, 15
        %v331 = vand.u32 %v295, 15
        %v332 = vand.u32 %v296, 15
        %v333 = vand.u32 %v297, 15
        %v334 = vand.u32 %v298, 15
        %v335 = vand.u32 %v299, 15
        %v336 = vand.u32 %v300, 15
        %v337 = vand.u32 %v301, 15
        %vm338 = vcmp.ne.s32.totalorder %v302, 0
        %vm339 = vcmp.ne.s32.totalorder %v303, 0
        %vm340 = vcmp.ne.s32.totalorder %v304, 0
        %vm341 = vcmp.ne.s32.totalorder %v305, 0
        %vm342 = vcmp.ne.s32.totalorder %v306, 0
        %vm343 = vcmp.ne.s32.totalorder %v307, 0
        %vm344 = vcmp.ne.s32.totalorder %v308, 0
        %vm345 = vcmp.ne.s32.totalorder %v309, 0
        %vm346 = vcmp.ne.s32.totalorder %v310, 0
        %vm347 = vcmp.ne.s32.totalorder %v311, 0
        %vm348 = vcmp.ne.s32.totalorder %v312, 0
        %vm349 = vcmp.ne.s32.totalorder %v313, 0
        %vm350 = vcmp.ne.s32.totalorder %v314, 0
        %vm351 = vcmp.ne.s32.totalorder %v315, 0
        %vm352 = vcmp.ne.s32.totalorder %v316, 0
        %vm353 = vcmp.ne.s32.totalorder %v317, 0
        %vm354 = vcmp.ne.s32.totalorder %v318, 0
        %vm355 = vcmp.ne.s32.totalorder %v319, 0
        %vm356 = vcmp.ne.s32.totalorder %v320, 0
        %vm357 = vcmp.ne.s32.totalorder %v321, 0
        %vm358 = vcmp.ne.s32.totalorder %v322, 0
        %vm359 = vcmp.ne.s32.totalorder %v323, 0
        %vm360 = vcmp.ne.s32.totalorder %v324, 0
        %vm361 = vcmp.ne.s32.totalorder %v325, 0
        %vm362 = vcmp.ne.s32.totalorder %v326, 0
        %vm363 = vcmp.ne.s32.totalorder %v327, 0
        %vm364 = vcmp.ne.s32.totalorder %v328, 0
        %vm365 = vcmp.ne.s32.totalorder %v329, 0
        %vm366 = vcmp.ne.s32.totalorder %v330, 0
        %vm367 = vcmp.ne.s32.totalorder %v331, 0
        %vm368 = vcmp.ne.s32.totalorder %v332, 0
        %vm369 = vcmp.ne.s32.totalorder %v333, 0
        %vm370 = vcmp.ne.s32.totalorder %v334, 0
        %vm371 = vcmp.ne.s32.totalorder %v335, 0
        %vm372 = vcmp.ne.s32.totalorder %v336, 0
        %vm373 = vcmp.ne.s32.totalorder %v337, 0
        %vm374 = vcmp.ne.s32.totalorder %v302, 15
        %vm375 = vcmp.ne.s32.totalorder %v303, 15
        %vm376 = vcmp.ne.s32.totalorder %v304, 15
        %vm377 = vcmp.ne.s32.totalorder %v305, 15
        %vm378 = vcmp.ne.s32.totalorder %v306, 15
        %vm379 = vcmp.ne.s32.totalorder %v307, 15
        %vm380 = vcmp.ne.s32.totalorder %v308, 15
        %vm381 = vcmp.ne.s32.totalorder %v309, 15
        %vm382 = vcmp.ne.s32.totalorder %v310, 15
        %vm383 = vcmp.ne.s32.totalorder %v311, 15
        %vm384 = vcmp.ne.s32.totalorder %v312, 15
        %vm385 = vcmp.ne.s32.totalorder %v313, 15
        %vm386 = vcmp.ne.s32.totalorder %v314, 15
        %vm387 = vcmp.ne.s32.totalorder %v315, 15
        %vm388 = vcmp.ne.s32.totalorder %v316, 15
        %vm389 = vcmp.ne.s32.totalorder %v317, 15
        %vm390 = vcmp.ne.s32.totalorder %v318, 15
        %vm391 = vcmp.ne.s32.totalorder %v319, 15
        %vm392 = vcmp.ne.s32.totalorder %v320, 15
        %vm393 = vcmp.ne.s32.totalorder %v321, 15
        %vm394 = vcmp.ne.s32.totalorder %v322, 15
        %vm395 = vcmp.ne.s32.totalorder %v323, 15
        %vm396 = vcmp.ne.s32.totalorder %v324, 15
        %vm397 = vcmp.ne.s32.totalorder %v325, 15
        %vm398 = vcmp.ne.s32.totalorder %v326, 15
        %vm399 = vcmp.ne.s32.totalorder %v327, 15
        %vm400 = vcmp.ne.s32.totalorder %v328, 15
        %vm401 = vcmp.ne.s32.totalorder %v329, 15
        %vm402 = vcmp.ne.s32.totalorder %v330, 15
        %vm403 = vcmp.ne.s32.totalorder %v331, 15
        %vm404 = vcmp.ne.s32.totalorder %v332, 15
        %vm405 = vcmp.ne.s32.totalorder %v333, 15
        %vm406 = vcmp.ne.s32.totalorder %v334, 15
        %vm407 = vcmp.ne.s32.totalorder %v335, 15
        %vm408 = vcmp.ne.s32.totalorder %v336, 15
        %vm409 = vcmp.ne.s32.totalorder %v337, 15
        %v410 = vld [vmem:[%s248] sm:$0xff]
        %v411 = vld [vmem:[%s248 + $0x8] sm:$0xff]
        %v412 = vld [vmem:[%s248 + $0x10] sm:$0xff]
        %v413 = vld [vmem:[%s248 + $0x18] sm:$0xff]
        %v414 = vld [vmem:[%s248 + $0x20] sm:$0xff]
        %v415 = vld [vmem:[%s248 + $0x28] sm:$0xff]
        %v416 = vld [vmem:[%s248 + $0x30] sm:$0xff]
        %v417 = vld [vmem:[%s248 + $0x38] sm:$0xff]
        %v418 = vld [vmem:[%s248 + $0x40] sm:$0xff]
        %v419 = vld [vmem:[%s248 + $0x48] sm:$0xff]
        %v420 = vld [vmem:[%s248 + $0x50] sm:$0xff]
        %v421 = vld [vmem:[%s248 + $0x58] sm:$0xff]
        %v422 = vld [vmem:[%s248 + $0x60] sm:$0xff]
        %v423 = vld [vmem:[%s248 + $0x68] sm:$0xff]
        %v424 = vld [vmem:[%s248 + $0x70] sm:$0xff]
        %v425 = vld [vmem:[%s248 + $0x78] sm:$0xff]
        %v426 = vld [vmem:[%s248 + $0x80] sm:$0xff]
        %v427 = vld [vmem:[%s248 + $0x88] sm:$0xff]
        %v428 = vld [vmem:[%s248 + $0x90] sm:$0xff]
        %v429 = vld [vmem:[%s248 + $0x98] sm:$0xff]
        %v430 = vld [vmem:[%s248 + $0xa0] sm:$0xff]
        %v431 = vld [vmem:[%s248 + $0xa8] sm:$0xff]
        %v432 = vld [vmem:[%s248 + $0xb0] sm:$0xff]
        %v433 = vld [vmem:[%s248 + $0xb8] sm:$0xff]
        %v434 = vld [vmem:[%s248 + $0xc0] sm:$0xff]
        %v435 = vld [vmem:[%s248 + $0xc8] sm:$0xff]
        %v436 = vld [vmem:[%s248 + $0xd0] sm:$0xff]
        %v437 = vld [vmem:[%s248 + $0xd8] sm:$0xff]
        %v438 = vld [vmem:[%s248 + $0xe0] sm:$0xff]
        %v439 = vld [vmem:[%s248 + $0xe8] sm:$0xff]
        %v440 = vld [vmem:[%s248 + $0xf0] sm:$0xff]
        %v441 = vld [vmem:[%s248 + $0xf8] sm:$0xff]
        %v442 = vld [vmem:[%s248 + $0x100] sm:$0xff]
        %v443 = vld [vmem:[%s248 + $0x108] sm:$0xff]
        %v444 = vld [vmem:[%s248 + $0x110] sm:$0xff]
        %v445 = vld [vmem:[%s248 + $0x118] sm:$0xff]
        %v446 = vpack.c.bf16 %v411, %v410
        %v447 = vpack.c.bf16 %v413, %v412
        %v448 = vpack.c.bf16 %v415, %v414
        %v449 = vpack.c.bf16 %v417, %v416
        %v450 = vpack.c.bf16 %v419, %v418
        %v451 = vpack.c.bf16 %v421, %v420
        %v452 = vpack.c.bf16 %v423, %v422
        %v453 = vpack.c.bf16 %v425, %v424
        %v454 = vpack.c.bf16 %v427, %v426
        %v455 = vpack.c.bf16 %v429, %v428
        %v456 = vpack.c.bf16 %v431, %v430
        %v457 = vpack.c.bf16 %v433, %v432
        %v458 = vpack.c.bf16 %v435, %v434
        %v459 = vpack.c.bf16 %v437, %v436
        %v460 = vpack.c.bf16 %v439, %v438
        %v461 = vpack.c.bf16 %v441, %v440
        %v462 = vpack.c.bf16 %v443, %v442
        %v463 = vpack.c.bf16 %v445, %v444
        %v464 = vrot.slane %v410, 7
        %v465 = vrot.slane %v411, 7
        %v466 = vrot.slane %v412, 7
        %v467 = vrot.slane %v413, 7
        %v468 = vrot.slane %v414, 7
        %v469 = vrot.slane %v415, 7
        %v470 = vrot.slane %v416, 7
        %v471 = vrot.slane %v417, 7
        %v472 = vrot.slane %v418, 7
        %v473 = vrot.slane %v419, 7
        %v474 = vrot.slane %v420, 7
        %v475 = vrot.slane %v421, 7
        %v476 = vrot.slane %v422, 7
        %v477 = vrot.slane %v423, 7
        %v478 = vrot.slane %v424, 7
        %v479 = vrot.slane %v425, 7
        %v480 = vrot.slane %v426, 7
        %v481 = vrot.slane %v427, 7
        %v482 = vrot.slane %v428, 7
        %v483 = vrot.slane %v429, 7
        %v484 = vrot.slane %v430, 7
        %v485 = vrot.slane %v431, 7
        %v486 = vrot.slane %v432, 7
        %v487 = vrot.slane %v433, 7
        %v488 = vrot.slane %v434, 7
        %v489 = vrot.slane %v435, 7
        %v490 = vrot.slane %v436, 7
        %v491 = vrot.slane %v437, 7
        %v492 = vrot.slane %v438, 7
        %v493 = vrot.slane %v439, 7
        %v494 = vrot.slane %v440, 7
        %v495 = vrot.slane %v441, 7
        %v496 = vrot.slane %v442, 7
        %v497 = vrot.slane %v443, 7
        %v498 = vrot.slane %v444, 7
        %v499 = vrot.slane %v445, 7
        %vm500 = vcmp.lt.s32.totalorder %v266, 1
        %v501 = vsel %vm500, %v498, %v499
        %v502 = vsel %vm500, %v497, %v498
        %v503 = vsel %vm500, %v496, %v497
        %v504 = vsel %vm500, %v495, %v496
        %v505 = vsel %vm500, %v494, %v495
        %v506 = vsel %vm500, %v493, %v494
        %v507 = vsel %vm500, %v492, %v493
        %v508 = vsel %vm500, %v491, %v492
        %v509 = vsel %vm500, %v490, %v491
        %v510 = vsel %vm500, %v489, %v490
        %v511 = vsel %vm500, %v488, %v489
        %v512 = vsel %vm500, %v487, %v488
        %v513 = vsel %vm500, %v486, %v487
        %v514 = vsel %vm500, %v485, %v486
        %v515 = vsel %vm500, %v484, %v485
        %v516 = vsel %vm500, %v483, %v484
        %v517 = vsel %vm500, %v482, %v483
        %v518 = vsel %vm500, %v481, %v482
        %v519 = vsel %vm500, %v480, %v481
        %v520 = vsel %vm500, %v479, %v480
        %v521 = vsel %vm500, %v478, %v479
        %v522 = vsel %vm500, %v477, %v478
        %v523 = vsel %vm500, %v476, %v477
        %v524 = vsel %vm500, %v475, %v476
        %v525 = vsel %vm500, %v474, %v475
        %v526 = vsel %vm500, %v473, %v474
        %v527 = vsel %vm500, %v472, %v473
        %v528 = vsel %vm500, %v471, %v472
        %v529 = vsel %vm500, %v470, %v471
        %v530 = vsel %vm500, %v469, %v470
        %v531 = vsel %vm500, %v468, %v469
        %v532 = vsel %vm500, %v467, %v468
        %v533 = vsel %vm500, %v466, %v467
        %v534 = vsel %vm500, %v465, %v466
        %v535 = vsel %vm500, %v464, %v465
        %v536 = vsel %vm500, %v499, %v464
        %v537 = vpack.c.bf16 %v535, %v536
        %v538 = vpack.c.bf16 %v533, %v534
        %v539 = vpack.c.bf16 %v531, %v532
        %v540 = vpack.c.bf16 %v529, %v530
        %v541 = vpack.c.bf16 %v527, %v528
        %v542 = vpack.c.bf16 %v525, %v526
        %v543 = vpack.c.bf16 %v523, %v524
        %v544 = vpack.c.bf16 %v521, %v522
        %v545 = vpack.c.bf16 %v519, %v520
        %v546 = vpack.c.bf16 %v517, %v518
        %v547 = vpack.c.bf16 %v515, %v516
        %v548 = vpack.c.bf16 %v513, %v514
        %v549 = vpack.c.bf16 %v511, %v512
        %v550 = vpack.c.bf16 %v509, %v510
        %v551 = vpack.c.bf16 %v507, %v508
        %v552 = vpack.c.bf16 %v505, %v506
        %v553 = vpack.c.bf16 %v503, %v504
        %v554 = vpack.c.bf16 %v501, %v502
        %vm555 = vmpackc.low %vm338, %vm338
        %vm556 = vmpackc.low %vm339, %vm339
        %vm557 = vmpackc.low %vm340, %vm340
        %vm558 = vmpackc.low %vm341, %vm341
        %vm559 = vmpackc.low %vm342, %vm342
        %vm560 = vmpackc.low %vm343, %vm343
        %vm561 = vmpackc.low %vm344, %vm344
        %vm562 = vmpackc.low %vm345, %vm345
        %vm563 = vmpackc.low %vm346, %vm346
        %vm564 = vmpackc.low %vm347, %vm347
        %vm565 = vmpackc.low %vm348, %vm348
        %vm566 = vmpackc.low %vm349, %vm349
        %vm567 = vmpackc.low %vm350, %vm350
        %vm568 = vmpackc.low %vm351, %vm351
        %vm569 = vmpackc.low %vm352, %vm352
        %vm570 = vmpackc.low %vm353, %vm353
        %vm571 = vmpackc.low %vm354, %vm354
        %vm572 = vmpackc.low %vm355, %vm355
        %vm573 = vmpackc.low %vm356, %vm356
        %vm574 = vmpackc.low %vm357, %vm357
        %vm575 = vmpackc.low %vm358, %vm358
        %vm576 = vmpackc.low %vm359, %vm359
        %vm577 = vmpackc.low %vm360, %vm360
        %vm578 = vmpackc.low %vm361, %vm361
        %vm579 = vmpackc.low %vm362, %vm362
        %vm580 = vmpackc.low %vm363, %vm363
        %vm581 = vmpackc.low %vm364, %vm364
        %vm582 = vmpackc.low %vm365, %vm365
        %vm583 = vmpackc.low %vm366, %vm366
        %vm584 = vmpackc.low %vm367, %vm367
        %vm585 = vmpackc.low %vm368, %vm368
        %vm586 = vmpackc.low %vm369, %vm369
        %vm587 = vmpackc.low %vm370, %vm370
        %vm588 = vmpackc.low %vm371, %vm371
        %vm589 = vmpackc.low %vm372, %vm372
        %vm590 = vmpackc.low %vm373, %vm373
        %v591 = vsel %vm555, 65537, 0
        %v592 = vsel %vm556, 65537, 0
        %v593 = vsel %vm557, 65537, 0
        %v594 = vsel %vm558, 65537, 0
        %v595 = vsel %vm559, 65537, 0
        %v596 = vsel %vm560, 65537, 0
        %v597 = vsel %vm561, 65537, 0
        %v598 = vsel %vm562, 65537, 0
        %v599 = vsel %vm563, 65537, 0
        %v600 = vsel %vm564, 65537, 0
        %v601 = vsel %vm565, 65537, 0
        %v602 = vsel %vm566, 65537, 0
        %v603 = vsel %vm567, 65537, 0
        %v604 = vsel %vm568, 65537, 0
        %v605 = vsel %vm569, 65537, 0
        %v606 = vsel %vm570, 65537, 0
        %v607 = vsel %vm571, 65537, 0
        %v608 = vsel %vm572, 65537, 0
        %v609 = vsel %vm573, 65537, 0
        %v610 = vsel %vm574, 65537, 0
        %v611 = vsel %vm575, 65537, 0
        %v612 = vsel %vm576, 65537, 0
        %v613 = vsel %vm577, 65537, 0
        %v614 = vsel %vm578, 65537, 0
        %v615 = vsel %vm579, 65537, 0
        %v616 = vsel %vm580, 65537, 0
        %v617 = vsel %vm581, 65537, 0
        %v618 = vsel %vm582, 65537, 0
        %v619 = vsel %vm583, 65537, 0
        %v620 = vsel %vm584, 65537, 0
        %v621 = vsel %vm585, 65537, 0
        %v622 = vsel %vm586, 65537, 0
        %v623 = vsel %vm587, 65537, 0
        %v624 = vsel %vm588, 65537, 0
        %v625 = vsel %vm589, 65537, 0
        %v626 = vsel %vm590, 65537, 0
        %v627 = vunpack.c.l.b16 %v591
        %v628 = vunpack.c.l.b16 %v592
        %v629 = vunpack.c.l.b16 %v593
        %v630 = vunpack.c.l.b16 %v594
        %v631 = vunpack.c.l.b16 %v595
        %v632 = vunpack.c.l.b16 %v596
        %v633 = vunpack.c.l.b16 %v597
        %v634 = vunpack.c.l.b16 %v598
        %v635 = vunpack.c.l.b16 %v599
        %v636 = vunpack.c.l.b16 %v600
        %v637 = vunpack.c.l.b16 %v601
        %v638 = vunpack.c.l.b16 %v602
        %v639 = vunpack.c.l.b16 %v603
        %v640 = vunpack.c.l.b16 %v604
        %v641 = vunpack.c.l.b16 %v605
        %v642 = vunpack.c.l.b16 %v606
        %v643 = vunpack.c.l.b16 %v607
        %v644 = vunpack.c.l.b16 %v608
        %v645 = vunpack.c.l.b16 %v609
        %v646 = vunpack.c.l.b16 %v610
        %v647 = vunpack.c.l.b16 %v611
        %v648 = vunpack.c.l.b16 %v612
        %v649 = vunpack.c.l.b16 %v613
        %v650 = vunpack.c.l.b16 %v614
        %v651 = vunpack.c.l.b16 %v615
        %v652 = vunpack.c.l.b16 %v616
        %v653 = vunpack.c.l.b16 %v617
        %v654 = vunpack.c.l.b16 %v618
        %v655 = vunpack.c.l.b16 %v619
        %v656 = vunpack.c.l.b16 %v620
        %v657 = vunpack.c.l.b16 %v621
        %v658 = vunpack.c.l.b16 %v622
        %v659 = vunpack.c.l.b16 %v623
        %v660 = vunpack.c.l.b16 %v624
        %v661 = vunpack.c.l.b16 %v625
        %v662 = vunpack.c.l.b16 %v626
        %v663 = vpack.c.b16 %v628, %v627
        %v664 = vpack.c.b16 %v630, %v629
        %v665 = vpack.c.b16 %v632, %v631
        %v666 = vpack.c.b16 %v634, %v633
        %v667 = vpack.c.b16 %v636, %v635
        %v668 = vpack.c.b16 %v638, %v637
        %v669 = vpack.c.b16 %v640, %v639
        %v670 = vpack.c.b16 %v642, %v641
        %v671 = vpack.c.b16 %v644, %v643
        %v672 = vpack.c.b16 %v646, %v645
        %v673 = vpack.c.b16 %v648, %v647
        %v674 = vpack.c.b16 %v650, %v649
        %v675 = vpack.c.b16 %v652, %v651
        %v676 = vpack.c.b16 %v654, %v653
        %v677 = vpack.c.b16 %v656, %v655
        %v678 = vpack.c.b16 %v658, %v657
        %v679 = vpack.c.b16 %v660, %v659
        %v680 = vpack.c.b16 %v662, %v661
        %vm681 = vcmp.ne.s16.totalorder %v663, 0
        %vm682 = vcmp.ne.s16.totalorder %v664, 0
        %vm683 = vcmp.ne.s16.totalorder %v665, 0
        %vm684 = vcmp.ne.s16.totalorder %v666, 0
        %vm685 = vcmp.ne.s16.totalorder %v667, 0
        %vm686 = vcmp.ne.s16.totalorder %v668, 0
        %vm687 = vcmp.ne.s16.totalorder %v669, 0
        %vm688 = vcmp.ne.s16.totalorder %v670, 0
        %vm689 = vcmp.ne.s16.totalorder %v671, 0
        %vm690 = vcmp.ne.s16.totalorder %v672, 0
        %vm691 = vcmp.ne.s16.totalorder %v673, 0
        %vm692 = vcmp.ne.s16.totalorder %v674, 0
        %vm693 = vcmp.ne.s16.totalorder %v675, 0
        %vm694 = vcmp.ne.s16.totalorder %v676, 0
        %vm695 = vcmp.ne.s16.totalorder %v677, 0
        %vm696 = vcmp.ne.s16.totalorder %v678, 0
        %vm697 = vcmp.ne.s16.totalorder %v679, 0
        %vm698 = vcmp.ne.s16.totalorder %v680, 0
        %v699 = vsel %vm681, %v537, 0
        %v700 = vsel %vm682, %v538, 0
        %v701 = vsel %vm683, %v539, 0
        %v702 = vsel %vm684, %v540, 0
        %v703 = vsel %vm685, %v541, 0
        %v704 = vsel %vm686, %v542, 0
        %v705 = vsel %vm687, %v543, 0
        %v706 = vsel %vm688, %v544, 0
        %v707 = vsel %vm689, %v545, 0
        %v708 = vsel %vm690, %v546, 0
        %v709 = vsel %vm691, %v547, 0
        %v710 = vsel %vm692, %v548, 0
        %v711 = vsel %vm693, %v549, 0
        %v712 = vsel %vm694, %v550, 0
        %v713 = vsel %vm695, %v551, 0
        %v714 = vsel %vm696, %v552, 0
        %v715 = vsel %vm697, %v553, 0
        %v716 = vsel %vm698, %v554, 0
        %v717 = vrot.slane %v410, 1
        %v718 = vrot.slane %v411, 1
        %v719 = vrot.slane %v412, 1
        %v720 = vrot.slane %v413, 1
        %v721 = vrot.slane %v414, 1
        %v722 = vrot.slane %v415, 1
        %v723 = vrot.slane %v416, 1
        %v724 = vrot.slane %v417, 1
        %v725 = vrot.slane %v418, 1
        %v726 = vrot.slane %v419, 1
        %v727 = vrot.slane %v420, 1
        %v728 = vrot.slane %v421, 1
        %v729 = vrot.slane %v422, 1
        %v730 = vrot.slane %v423, 1
        %v731 = vrot.slane %v424, 1
        %v732 = vrot.slane %v425, 1
        %v733 = vrot.slane %v426, 1
        %v734 = vrot.slane %v427, 1
        %v735 = vrot.slane %v428, 1
        %v736 = vrot.slane %v429, 1
        %v737 = vrot.slane %v430, 1
        %v738 = vrot.slane %v431, 1
        %v739 = vrot.slane %v432, 1
        %v740 = vrot.slane %v433, 1
        %v741 = vrot.slane %v434, 1
        %v742 = vrot.slane %v435, 1
        %v743 = vrot.slane %v436, 1
        %v744 = vrot.slane %v437, 1
        %v745 = vrot.slane %v438, 1
        %v746 = vrot.slane %v439, 1
        %v747 = vrot.slane %v440, 1
        %v748 = vrot.slane %v441, 1
        %v749 = vrot.slane %v442, 1
        %v750 = vrot.slane %v443, 1
        %v751 = vrot.slane %v444, 1
        %v752 = vrot.slane %v445, 1
        %vm753 = vcmp.lt.s32.totalorder %v266, 7
        %v754 = vsel %vm753, %v751, %v752
        %v755 = vsel %vm753, %v750, %v751
        %v756 = vsel %vm753, %v749, %v750
        %v757 = vsel %vm753, %v748, %v749
        %v758 = vsel %vm753, %v747, %v748
        %v759 = vsel %vm753, %v746, %v747
        %v760 = vsel %vm753, %v745, %v746
        %v761 = vsel %vm753, %v744, %v745
        %v762 = vsel %vm753, %v743, %v744
        %v763 = vsel %vm753, %v742, %v743
        %v764 = vsel %vm753, %v741, %v742
        %v765 = vsel %vm753, %v740, %v741
        %v766 = vsel %vm753, %v739, %v740
        %v767 = vsel %vm753, %v738, %v739
        %v768 = vsel %vm753, %v737, %v738
        %v769 = vsel %vm753, %v736, %v737
        %v770 = vsel %vm753, %v735, %v736
        %v771 = vsel %vm753, %v734, %v735
        %v772 = vsel %vm753, %v733, %v734
        %v773 = vsel %vm753, %v732, %v733
        %v774 = vsel %vm753, %v731, %v732
        %v775 = vsel %vm753, %v730, %v731
        %v776 = vsel %vm753, %v729, %v730
        %v777 = vsel %vm753, %v728, %v729
        %v778 = vsel %vm753, %v727, %v728
        %v779 = vsel %vm753, %v726, %v727
        %v780 = vsel %vm753, %v725, %v726
        %v781 = vsel %vm753, %v724, %v725
        %v782 = vsel %vm753, %v723, %v724
        %v783 = vsel %vm753, %v722, %v723
        %v784 = vsel %vm753, %v721, %v722
        %v785 = vsel %vm753, %v720, %v721
        %v786 = vsel %vm753, %v719, %v720
        %v787 = vsel %vm753, %v718, %v719
        %v788 = vsel %vm753, %v717, %v718
        %v789 = vsel %vm753, %v752, %v717
        %v790 = vpack.c.bf16 %v787, %v788
        %v791 = vpack.c.bf16 %v785, %v786
        %v792 = vpack.c.bf16 %v783, %v784
        %v793 = vpack.c.bf16 %v781, %v782
        %v794 = vpack.c.bf16 %v779, %v780
        %v795 = vpack.c.bf16 %v777, %v778
        %v796 = vpack.c.bf16 %v775, %v776
        %v797 = vpack.c.bf16 %v773, %v774
        %v798 = vpack.c.bf16 %v771, %v772
        %v799 = vpack.c.bf16 %v769, %v770
        %v800 = vpack.c.bf16 %v767, %v768
        %v801 = vpack.c.bf16 %v765, %v766
        %v802 = vpack.c.bf16 %v763, %v764
        %v803 = vpack.c.bf16 %v761, %v762
        %v804 = vpack.c.bf16 %v759, %v760
        %v805 = vpack.c.bf16 %v757, %v758
        %v806 = vpack.c.bf16 %v755, %v756
        %v807 = vpack.c.bf16 %v789, %v754
        %vm808 = vmpackc.low %vm374, %vm374
        %vm809 = vmpackc.low %vm375, %vm375
        %vm810 = vmpackc.low %vm376, %vm376
        %vm811 = vmpackc.low %vm377, %vm377
        %vm812 = vmpackc.low %vm378, %vm378
        %vm813 = vmpackc.low %vm379, %vm379
        %vm814 = vmpackc.low %vm380, %vm380
        %vm815 = vmpackc.low %vm381, %vm381
        %vm816 = vmpackc.low %vm382, %vm382
        %vm817 = vmpackc.low %vm383, %vm383
        %vm818 = vmpackc.low %vm384, %vm384
        %vm819 = vmpackc.low %vm385, %vm385
        %vm820 = vmpackc.low %vm386, %vm386
        %vm821 = vmpackc.low %vm387, %vm387
        %vm822 = vmpackc.low %vm388, %vm388
        %vm823 = vmpackc.low %vm389, %vm389
        %vm824 = vmpackc.low %vm390, %vm390
        %vm825 = vmpackc.low %vm391, %vm391
        %vm826 = vmpackc.low %vm392, %vm392
        %vm827 = vmpackc.low %vm393, %vm393
        %vm828 = vmpackc.low %vm394, %vm394
        %vm829 = vmpackc.low %vm395, %vm395
        %vm830 = vmpackc.low %vm396, %vm396
        %vm831 = vmpackc.low %vm397, %vm397
        %vm832 = vmpackc.low %vm398, %vm398
        %vm833 = vmpackc.low %vm399, %vm399
        %vm834 = vmpackc.low %vm400, %vm400
        %vm835 = vmpackc.low %vm401, %vm401
        %vm836 = vmpackc.low %vm402, %vm402
        %vm837 = vmpackc.low %vm403, %vm403
        %vm838 = vmpackc.low %vm404, %vm404
        %vm839 = vmpackc.low %vm405, %vm405
        %vm840 = vmpackc.low %vm406, %vm406
        %vm841 = vmpackc.low %vm407, %vm407
        %vm842 = vmpackc.low %vm408, %vm408
        %vm843 = vmpackc.low %vm409, %vm409
        %v844 = vsel %vm808, 65537, 0
        %v845 = vsel %vm809, 65537, 0
        %v846 = vsel %vm810, 65537, 0
        %v847 = vsel %vm811, 65537, 0
        %v848 = vsel %vm812, 65537, 0
        %v849 = vsel %vm813, 65537, 0
        %v850 = vsel %vm814, 65537, 0
        %v851 = vsel %vm815, 65537, 0
        %v852 = vsel %vm816, 65537, 0
        %v853 = vsel %vm817, 65537, 0
        %v854 = vsel %vm818, 65537, 0
        %v855 = vsel %vm819, 65537, 0
        %v856 = vsel %vm820, 65537, 0
        %v857 = vsel %vm821, 65537, 0
        %v858 = vsel %vm822, 65537, 0
        %v859 = vsel %vm823, 65537, 0
        %v860 = vsel %vm824, 65537, 0
        %v861 = vsel %vm825, 65537, 0
        %v862 = vsel %vm826, 65537, 0
        %v863 = vsel %vm827, 65537, 0
        %v864 = vsel %vm828, 65537, 0
        %v865 = vsel %vm829, 65537, 0
        %v866 = vsel %vm830, 65537, 0
        %v867 = vsel %vm831, 65537, 0
        %v868 = vsel %vm832, 65537, 0
        %v869 = vsel %vm833, 65537, 0
        %v870 = vsel %vm834, 65537, 0
        %v871 = vsel %vm835, 65537, 0
        %v872 = vsel %vm836, 65537, 0
        %v873 = vsel %vm837, 65537, 0
        %v874 = vsel %vm838, 65537, 0
        %v875 = vsel %vm839, 65537, 0
        %v876 = vsel %vm840, 65537, 0
        %v877 = vsel %vm841, 65537, 0
        %v878 = vsel %vm842, 65537, 0
        %v879 = vsel %vm843, 65537, 0
        %v880 = vunpack.c.l.b16 %v844
        %v881 = vunpack.c.l.b16 %v845
        %v882 = vunpack.c.l.b16 %v846
        %v883 = vunpack.c.l.b16 %v847
        %v884 = vunpack.c.l.b16 %v848
        %v885 = vunpack.c.l.b16 %v849
        %v886 = vunpack.c.l.b16 %v850
        %v887 = vunpack.c.l.b16 %v851
        %v888 = vunpack.c.l.b16 %v852
        %v889 = vunpack.c.l.b16 %v853
        %v890 = vunpack.c.l.b16 %v854
        %v891 = vunpack.c.l.b16 %v855
        %v892 = vunpack.c.l.b16 %v856
        %v893 = vunpack.c.l.b16 %v857
        %v894 = vunpack.c.l.b16 %v858
        %v895 = vunpack.c.l.b16 %v859
        %v896 = vunpack.c.l.b16 %v860
        %v897 = vunpack.c.l.b16 %v861
        %v898 = vunpack.c.l.b16 %v862
        %v899 = vunpack.c.l.b16 %v863
        %v900 = vunpack.c.l.b16 %v864
        %v901 = vunpack.c.l.b16 %v865
        %v902 = vunpack.c.l.b16 %v866
        %v903 = vunpack.c.l.b16 %v867
        %v904 = vunpack.c.l.b16 %v868
        %v905 = vunpack.c.l.b16 %v869
        %v906 = vunpack.c.l.b16 %v870
        %v907 = vunpack.c.l.b16 %v871
        %v908 = vunpack.c.l.b16 %v872
        %v909 = vunpack.c.l.b16 %v873
        %v910 = vunpack.c.l.b16 %v874
        %v911 = vunpack.c.l.b16 %v875
        %v912 = vunpack.c.l.b16 %v876
        %v913 = vunpack.c.l.b16 %v877
        %v914 = vunpack.c.l.b16 %v878
        %v915 = vunpack.c.l.b16 %v879
        %v916 = vpack.c.b16 %v881, %v880
        %v917 = vpack.c.b16 %v883, %v882
        %v918 = vpack.c.b16 %v885, %v884
        %v919 = vpack.c.b16 %v887, %v886
        %v920 = vpack.c.b16 %v889, %v888
        %v921 = vpack.c.b16 %v891, %v890
        %v922 = vpack.c.b16 %v893, %v892
        %v923 = vpack.c.b16 %v895, %v894
        %v924 = vpack.c.b16 %v897, %v896
        %v925 = vpack.c.b16 %v899, %v898
        %v926 = vpack.c.b16 %v901, %v900
        %v927 = vpack.c.b16 %v903, %v902
        %v928 = vpack.c.b16 %v905, %v904
        %v929 = vpack.c.b16 %v907, %v906
        %v930 = vpack.c.b16 %v909, %v908
        %v931 = vpack.c.b16 %v911, %v910
        %v932 = vpack.c.b16 %v913, %v912
        %v933 = vpack.c.b16 %v915, %v914
        %vm934 = vcmp.ne.s16.totalorder %v916, 0
        %vm935 = vcmp.ne.s16.totalorder %v917, 0
        %vm936 = vcmp.ne.s16.totalorder %v918, 0
        %vm937 = vcmp.ne.s16.totalorder %v919, 0
        %vm938 = vcmp.ne.s16.totalorder %v920, 0
        %vm939 = vcmp.ne.s16.totalorder %v921, 0
        %vm940 = vcmp.ne.s16.totalorder %v922, 0
        %vm941 = vcmp.ne.s16.totalorder %v923, 0
        %vm942 = vcmp.ne.s16.totalorder %v924, 0
        %vm943 = vcmp.ne.s16.totalorder %v925, 0
        %vm944 = vcmp.ne.s16.totalorder %v926, 0
        %vm945 = vcmp.ne.s16.totalorder %v927, 0
        %vm946 = vcmp.ne.s16.totalorder %v928, 0
        %vm947 = vcmp.ne.s16.totalorder %v929, 0
        %vm948 = vcmp.ne.s16.totalorder %v930, 0
        %vm949 = vcmp.ne.s16.totalorder %v931, 0
        %vm950 = vcmp.ne.s16.totalorder %v932, 0
        %vm951 = vcmp.ne.s16.totalorder %v933, 0
        %v952 = vsel %vm934, %v790, 0
        %v953 = vsel %vm935, %v791, 0
        %v954 = vsel %vm936, %v792, 0
        %v955 = vsel %vm937, %v793, 0
        %v956 = vsel %vm938, %v794, 0
        %v957 = vsel %vm939, %v795, 0
        %v958 = vsel %vm940, %v796, 0
        %v959 = vsel %vm941, %v797, 0
        %v960 = vsel %vm942, %v798, 0
        %v961 = vsel %vm943, %v799, 0
        %v962 = vsel %vm944, %v800, 0
        %v963 = vsel %vm945, %v801, 0
        %v964 = vsel %vm946, %v802, 0
        %v965 = vsel %vm947, %v803, 0
        %v966 = vsel %vm948, %v804, 0
        %v967 = vsel %vm949, %v805, 0
        %v968 = vsel %vm950, %v806, 0
        %v969 = vsel %vm951, %v807, 0
        %988 = vrot.lane.b32.xlu0 %v446, 64
        %v989 = vpop.permute.xlu0 %988
        %990 = vrot.lane.b32.xlu0 %v447, 64
        %v991 = vpop.permute.xlu0 %990
        %992 = vrot.lane.b32.xlu0 %v448, 64
        %v993 = vpop.permute.xlu0 %992
        %994 = vrot.lane.b32.xlu0 %v449, 64
        %v995 = vpop.permute.xlu0 %994
        %996 = vrot.lane.b32.xlu0 %v450, 64
        %v997 = vpop.permute.xlu0 %996
        %998 = vrot.lane.b32.xlu0 %v451, 64
        %v999 = vpop.permute.xlu0 %998
        %1000 = vrot.lane.b32.xlu0 %v452, 64
        %v1001 = vpop.permute.xlu0 %1000
        %1002 = vrot.lane.b32.xlu0 %v453, 64
        %v1003 = vpop.permute.xlu0 %1002
        %1004 = vrot.lane.b32.xlu0 %v454, 64
        %v1005 = vpop.permute.xlu0 %1004
        %1006 = vrot.lane.b32.xlu0 %v455, 64
        %v1007 = vpop.permute.xlu0 %1006
        %1008 = vrot.lane.b32.xlu0 %v456, 64
        %v1009 = vpop.permute.xlu0 %1008
        %1010 = vrot.lane.b32.xlu0 %v457, 64
        %v1011 = vpop.permute.xlu0 %1010
        %1012 = vrot.lane.b32.xlu0 %v458, 64
        %v1013 = vpop.permute.xlu0 %1012
        %1014 = vrot.lane.b32.xlu0 %v459, 64
        %v1015 = vpop.permute.xlu0 %1014
        %1016 = vrot.lane.b32.xlu0 %v460, 64
        %v1017 = vpop.permute.xlu0 %1016
        %1018 = vrot.lane.b32.xlu0 %v461, 64
        %v1019 = vpop.permute.xlu0 %1018
        %1020 = vrot.lane.b32.xlu0 %v462, 64
        %v1021 = vpop.permute.xlu0 %1020
        %1022 = vrot.lane.b32.xlu0 %v463, 64
        %v1023 = vpop.permute.xlu0 %1022
        %vm1024 = vcmask 523264
        %v1027 = vsel %vm1024, %v699, %v989
        %v1031 = vsel %vm1024, %v700, %v991
        %v1035 = vsel %vm1024, %v701, %v993
        %v1039 = vsel %vm1024, %v702, %v995
        %v1043 = vsel %vm1024, %v703, %v997
        %v1047 = vsel %vm1024, %v704, %v999
        %v1051 = vsel %vm1024, %v705, %v1001
        %v1055 = vsel %vm1024, %v706, %v1003
        %v1059 = vsel %vm1024, %v707, %v1005
        %v1063 = vsel %vm1024, %v708, %v1007
        %v1067 = vsel %vm1024, %v709, %v1009
        %v1071 = vsel %vm1024, %v710, %v1011
        %v1075 = vsel %vm1024, %v711, %v1013
        %v1079 = vsel %vm1024, %v712, %v1015
        %v1083 = vsel %vm1024, %v713, %v1017
        %v1087 = vsel %vm1024, %v714, %v1019
        %v1091 = vsel %vm1024, %v715, %v1021
        %v1095 = vsel %vm1024, %v716, %v1023
        %v1097 = vld [vmem:[%s1] sm:$0xff]
        %v1098 = vld [vmem:[%s1 + $0x8] sm:$0xff]
        %v1099 = vld [vmem:[%s1 + $0x10] sm:$0xff]
        %v1100 = vld [vmem:[%s1 + $0x18] sm:$0xff]
        %v1101 = vld [vmem:[%s1 + $0x20] sm:$0xff]
        %v1102 = vld [vmem:[%s1 + $0x28] sm:$0xff]
        %v1103 = vld [vmem:[%s1 + $0x30] sm:$0xff]
        %v1104 = vld [vmem:[%s1 + $0x38] sm:$0xff]
        %v1105 = vld [vmem:[%s1 + $0x40] sm:$0xff]
        %v1106 = vld [vmem:[%s1 + $0x48] sm:$0xff]
        %v1107 = vld [vmem:[%s1 + $0x50] sm:$0xff]
        %v1108 = vld [vmem:[%s1 + $0x58] sm:$0xff]
        %v1109 = vld [vmem:[%s1 + $0x60] sm:$0xff]
        %v1110 = vld [vmem:[%s1 + $0x68] sm:$0xff]
        %v1111 = vld [vmem:[%s1 + $0x70] sm:$0xff]
        %v1112 = vld [vmem:[%s1 + $0x78] sm:$0xff]
        %v1113 = vld [vmem:[%s1 + $0x80] sm:$0xff]
        %v1114 = vld [vmem:[%s1 + $0x88] sm:$0xff]
        %v1115 = vld [vmem:[%s1 + $0x90] sm:$0xff]
        %v1116 = vld [vmem:[%s1 + $0x98] sm:$0xff]
        %v1117 = vld [vmem:[%s1 + $0xa0] sm:$0xff]
        %v1118 = vld [vmem:[%s1 + $0xa8] sm:$0xff]
        %v1119 = vld [vmem:[%s1 + $0xb0] sm:$0xff]
        %v1120 = vld [vmem:[%s1 + $0xb8] sm:$0xff]
        %v1145 = vunpack.c.l.b16 %v1097
        %v1146 = vunpack.c.h.b16 %v1097
        %v1147 = vunpack.c.l.b16 %v1098
        %v1148 = vunpack.c.h.b16 %v1098
        %v1149 = vunpack.c.l.b16 %v1099
        %v1150 = vunpack.c.h.b16 %v1099
        %v1151 = vunpack.c.l.b16 %v1100
        %v1152 = vunpack.c.h.b16 %v1100
        %v1153 = vunpack.c.l.b16 %v1101
        %v1154 = vunpack.c.h.b16 %v1101
        %v1155 = vunpack.c.l.b16 %v1102
        %v1156 = vunpack.c.h.b16 %v1102
        %v1157 = vunpack.c.l.b16 %v1103
        %v1158 = vunpack.c.h.b16 %v1103
        %v1159 = vunpack.c.l.b16 %v1104
        %v1160 = vunpack.c.h.b16 %v1104
        %v1161 = vunpack.c.l.b16 %v1105
        %v1162 = vunpack.c.h.b16 %v1105
        %v1163 = vunpack.c.l.b16 %v1106
        %v1164 = vunpack.c.h.b16 %v1106
        %v1165 = vunpack.c.l.b16 %v1107
        %v1166 = vunpack.c.h.b16 %v1107
        %v1167 = vunpack.c.l.b16 %v1108
        %v1168 = vunpack.c.h.b16 %v1108
        %v1169 = vunpack.c.l.b16 %v1109
        %v1170 = vunpack.c.h.b16 %v1109
        %v1171 = vunpack.c.l.b16 %v1110
        %v1172 = vunpack.c.h.b16 %v1110
        %v1173 = vunpack.c.l.b16 %v1111
        %v1174 = vunpack.c.h.b16 %v1111
        %v1175 = vunpack.c.l.b16 %v1112
        %v1176 = vunpack.c.h.b16 %v1112
        %v1177 = vunpack.c.l.b16 %v1113
        %v1178 = vunpack.c.h.b16 %v1113
        %v1179 = vunpack.c.l.b16 %v1114
        %v1180 = vunpack.c.h.b16 %v1114
        %v1181 = vunpack.c.l.b16 %v1115
        %v1182 = vunpack.c.h.b16 %v1115
        %v1183 = vunpack.c.l.b16 %v1116
        %v1184 = vunpack.c.h.b16 %v1116
        %v1185 = vunpack.c.l.b16 %v1117
        %v1186 = vunpack.c.h.b16 %v1117
        %v1187 = vunpack.c.l.b16 %v1118
        %v1188 = vunpack.c.h.b16 %v1118
        %v1189 = vunpack.c.l.b16 %v1119
        %v1190 = vunpack.c.h.b16 %v1119
        %v1191 = vunpack.c.l.b16 %v1120
        %v1192 = vunpack.c.h.b16 %v1120
        %v1193 = vpack.c.b16 %v1147, %v1145
        %v1194 = vpack.c.b16 %v1148, %v1146
        %v1195 = vpack.c.b16 %v1151, %v1149
        %v1196 = vpack.c.b16 %v1152, %v1150
        %v1197 = vpack.c.b16 %v1155, %v1153
        %v1198 = vpack.c.b16 %v1156, %v1154
        %v1199 = vpack.c.b16 %v1159, %v1157
        %v1200 = vpack.c.b16 %v1160, %v1158
        %v1201 = vpack.c.b16 %v1163, %v1161
        %v1202 = vpack.c.b16 %v1164, %v1162
        %v1203 = vpack.c.b16 %v1167, %v1165
        %v1204 = vpack.c.b16 %v1168, %v1166
        %v1205 = vpack.c.b16 %v1171, %v1169
        %v1206 = vpack.c.b16 %v1172, %v1170
        %v1207 = vpack.c.b16 %v1175, %v1173
        %v1208 = vpack.c.b16 %v1176, %v1174
        %v1209 = vpack.c.b16 %v1179, %v1177
        %v1210 = vpack.c.b16 %v1180, %v1178
        %v1211 = vpack.c.b16 %v1183, %v1181
        %v1212 = vpack.c.b16 %v1184, %v1182
        %v1213 = vpack.c.b16 %v1187, %v1185
        %v1214 = vpack.c.b16 %v1188, %v1186
        %v1215 = vpack.c.b16 %v1191, %v1189
        %v1216 = vpack.c.b16 %v1192, %v1190
        %v1242 = vsel %vm1024, %v952, 0
        %v1245 = vsel %vm1024, %v953, 0
        %v1248 = vsel %vm1024, %v954, 0
        %v1251 = vsel %vm1024, %v955, 0
        %v1254 = vsel %vm1024, %v956, 0
        %v1257 = vsel %vm1024, %v957, 0
        %v1260 = vsel %vm1024, %v958, 0
        %v1263 = vsel %vm1024, %v959, 0
        %v1266 = vsel %vm1024, %v960, 0
        %v1269 = vsel %vm1024, %v961, 0
        %v1272 = vsel %vm1024, %v962, 0
        %v1275 = vsel %vm1024, %v963, 0
        %v1278 = vsel %vm1024, %v964, 0
        %v1281 = vsel %vm1024, %v965, 0
        %v1284 = vsel %vm1024, %v966, 0
        %v1287 = vsel %vm1024, %v967, 0
        %v1290 = vsel %vm1024, %v968, 0
        %v1293 = vsel %vm1024, %v969, 0
        %1295 = vmatprep.subr.bf16.mxu0 %v1194
        %1296 = vmatpush1.bf16.msra.mxu0 %v1193
        %1297 = vmatprep.subr.bf16.mxu0 %v1196
        %1298 = vmatpush1.bf16.msra.mxu0 %v1195
        %1299 = vmatprep.subr.bf16.mxu0 %v1198
        %1300 = vmatpush1.bf16.msra.mxu0 %v1197
        %1301 = vmatprep.subr.bf16.mxu0 %v1200
        %1302 = vmatpush1.bf16.msra.mxu0 %v1199
        %1303 = vmatprep.subr.bf16.mxu0 %v1202
        %1304 = vmatpush1.bf16.msra.mxu0 %v1201
        %1305 = vmatprep.subr.bf16.mxu0 %v1204
        %1306 = vmatpush1.bf16.msra.mxu0 %v1203
        %1307 = vmatprep.subr.bf16.mxu0 %v1206
        %1308 = vmatpush1.bf16.msra.mxu0 %v1205
        %1309 = vmatprep.subr.bf16.mxu0 %v1208
        %1310 = vmatpush1.bf16.msra.mxu0 %v1207
        %1311 = vmatprep.subr.bf16.mxu0 %v1210
        %1312 = vmatpush1.bf16.msra.mxu0 %v1209
        %1313 = vmatprep.subr.bf16.mxu0 %v1212
        %1314 = vmatpush1.bf16.msra.mxu0 %v1211
        %1315 = vmatprep.subr.bf16.mxu0 %v1214
        %1316 = vmatpush1.bf16.msra.mxu0 %v1213
        %1317 = vmatprep.subr.bf16.mxu0 %v1216
        %1318 = vmatpush1.bf16.msra.mxu0 %v1215
        %1319 = vmatprep.subr.bf16.mxu0 0
        %1320 = vmatpush1.bf16.msra.mxu0 0
        %1321 = vmatprep.subr.bf16.mxu0 0
        %1322 = vmatpush1.bf16.msra.mxu0 0
        %1323 = vmatprep.subr.bf16.mxu0 0
        %1324 = vmatpush1.bf16.msra.mxu0 0
        %1325 = vmatprep.subr.bf16.mxu0 0
        %1326 = vmatpush1.bf16.msra.mxu0 0
        %1327 = vmatprep.mubr.bf16.mxu0 %v1242
        %1328 = vmatmul.mubr.bf16.gmra.mrb[0].mxu0 %v1027
        %v1329 = vpop.f32.mrb[0].mxu0
        %v1330 = vadd.f32 0.0, %v1329
        %v1331 = vpop.f32.mrb[0].mxu0
        %v1332 = vpop.f32.mrb[0].mxu0
        %v1333 = vadd.f32 0.0, %v1332
        %v1334 = vpop.f32.mrb[0].mxu0
        %1335 = vmatprep.mubr.bf16.mxu0 %v1245
        %1336 = vmatmul.mubr.bf16.gmra.mrb[0].mxu0 %v1031
        %v1337 = vpop.f32.mrb[0].mxu0
        %v1338 = vadd.f32 0.0, %v1337
        %v1339 = vpop.f32.mrb[0].mxu0
        %v1340 = vpop.f32.mrb[0].mxu0
        %v1341 = vadd.f32 0.0, %v1340
        %v1342 = vpop.f32.mrb[0].mxu0
        %1343 = vmatprep.mubr.bf16.mxu0 %v1248
        %1344 = vmatmul.mubr.bf16.gmra.mrb[0].mxu0 %v1035
        %v1345 = vpop.f32.mrb[0].mxu0
        %v1346 = vadd.f32 0.0, %v1345
        %v1347 = vpop.f32.mrb[0].mxu0
        %v1348 = vadd.f32 0.0, %v1347
        %v1349 = vpop.f32.mrb[0].mxu0
        %v1350 = vadd.f32 0.0, %v1349
        %v1351 = vpop.f32.mrb[0].mxu0
        %v1352 = vadd.f32 0.0, %v1351
        %1353 = vmatprep.mubr.bf16.mxu0 %v1251
        %1354 = vmatmul.mubr.bf16.gmra.mrb[0].mxu0 %v1039
        %v1355 = vpop.f32.mrb[0].mxu0
        %v1356 = vadd.f32 0.0, %v1355
        %v1357 = vpop.f32.mrb[0].mxu0
        %v1358 = vadd.f32 0.0, %v1357
        %v1359 = vpop.f32.mrb[0].mxu0
        %v1360 = vadd.f32 0.0, %v1359
        %v1361 = vpop.f32.mrb[0].mxu0
        %v1362 = vadd.f32 0.0, %v1361
        %1363 = vmatprep.mubr.bf16.mxu0 %v1254
        %1364 = vmatmul.mubr.bf16.gmra.mrb[0].mxu0 %v1043
        %v1365 = vpop.f32.mrb[0].mxu0
        %v1366 = vadd.f32 0.0, %v1365
        %v1367 = vpop.f32.mrb[0].mxu0
        %v1368 = vadd.f32 0.0, %v1367
        %v1369 = vpop.f32.mrb[0].mxu0
        %v1370 = vadd.f32 0.0, %v1369
        %v1371 = vpop.f32.mrb[0].mxu0
        %v1372 = vadd.f32 0.0, %v1371
        %1373 = vmatprep.mubr.bf16.mxu0 %v1257
        %1374 = vmatmul.mubr.bf16.gmra.mrb[0].mxu0 %v1047
        %v1375 = vpop.f32.mrb[0].mxu0
        %v1376 = vadd.f32 0.0, %v1375
        %v1377 = vpop.f32.mrb[0].mxu0
        %v1378 = vadd.f32 0.0, %v1377
        %v1379 = vpop.f32.mrb[0].mxu0
        %v1380 = vadd.f32 0.0, %v1379
        %v1381 = vpop.f32.mrb[0].mxu0
        %v1382 = vadd.f32 0.0, %v1381
        %1383 = vmatprep.mubr.bf16.mxu0 %v1260
        %1384 = vmatmul.mubr.bf16.gmra.mrb[0].mxu0 %v1051
        %v1385 = vpop.f32.mrb[0].mxu0
        %v1386 = vadd.f32 0.0, %v1385
        %v1387 = vpop.f32.mrb[0].mxu0
        %v1388 = vadd.f32 0.0, %v1387
        %v1389 = vpop.f32.mrb[0].mxu0
        %v1390 = vadd.f32 0.0, %v1389
        %v1391 = vpop.f32.mrb[0].mxu0
        %v1392 = vadd.f32 0.0, %v1391
        %1393 = vmatprep.mubr.bf16.mxu0 %v1263
        %1394 = vmatmul.mubr.bf16.gmra.mrb[0].mxu0 %v1055
        %v1395 = vpop.f32.mrb[0].mxu0
        %v1396 = vadd.f32 0.0, %v1395
        %v1397 = vpop.f32.mrb[0].mxu0
        %v1398 = vadd.f32 0.0, %v1397
        %v1399 = vpop.f32.mrb[0].mxu0
        %v1400 = vadd.f32 0.0, %v1399
        %v1401 = vpop.f32.mrb[0].mxu0
        %v1402 = vadd.f32 0.0, %v1401
        %1403 = vmatprep.mubr.bf16.mxu0 %v1266
        %1404 = vmatmul.mubr.bf16.gmra.mrb[0].mxu0 %v1059
        %v1405 = vpop.f32.mrb[0].mxu0
        %v1406 = vadd.f32 0.0, %v1405
        %v1407 = vpop.f32.mrb[0].mxu0
        %v1408 = vadd.f32 0.0, %v1407
        %v1409 = vpop.f32.mrb[0].mxu0
        %v1410 = vadd.f32 0.0, %v1409
        %v1411 = vpop.f32.mrb[0].mxu0
        %v1412 = vadd.f32 0.0, %v1411
        %1413 = vmatprep.mubr.bf16.mxu0 %v1269
        %1414 = vmatmul.mubr.bf16.gmra.mrb[0].mxu0 %v1063
        %v1415 = vpop.f32.mrb[0].mxu0
        %v1416 = vadd.f32 0.0, %v1415
        %v1417 = vpop.f32.mrb[0].mxu0
        %v1418 = vadd.f32 0.0, %v1417
        %v1419 = vpop.f32.mrb[0].mxu0
        %v1420 = vadd.f32 0.0, %v1419
        %v1421 = vpop.f32.mrb[0].mxu0
        %v1422 = vadd.f32 0.0, %v1421
        %1423 = vmatprep.mubr.bf16.mxu0 %v1272
        %1424 = vmatmul.mubr.bf16.gmra.mrb[0].mxu0 %v1067
        %v1425 = vpop.f32.mrb[0].mxu0
        %v1426 = vadd.f32 0.0, %v1425
        %v1427 = vpop.f32.mrb[0].mxu0
        %v1428 = vadd.f32 0.0, %v1427
        %v1429 = vpop.f32.mrb[0].mxu0
        %v1430 = vadd.f32 0.0, %v1429
        %v1431 = vpop.f32.mrb[0].mxu0
        %v1432 = vadd.f32 0.0, %v1431
        %1433 = vmatprep.mubr.bf16.mxu0 %v1275
        %1434 = vmatmul.mubr.bf16.gmra.mrb[0].mxu0 %v1071
        %v1435 = vpop.f32.mrb[0].mxu0
        %v1436 = vadd.f32 0.0, %v1435
        %v1437 = vpop.f32.mrb[0].mxu0
        %v1438 = vadd.f32 0.0, %v1437
        %v1439 = vpop.f32.mrb[0].mxu0
        %v1440 = vadd.f32 0.0, %v1439
        %v1441 = vpop.f32.mrb[0].mxu0
        %v1442 = vadd.f32 0.0, %v1441
        %1443 = vmatprep.mubr.bf16.mxu0 %v1278
        %1444 = vmatmul.mubr.bf16.gmra.mrb[0].mxu0 %v1075
        %v1445 = vpop.f32.mrb[0].mxu0
        %v1446 = vadd.f32 0.0, %v1445
        %v1447 = vpop.f32.mrb[0].mxu0
        %v1448 = vadd.f32 0.0, %v1447
        %v1449 = vpop.f32.mrb[0].mxu0
        %v1450 = vadd.f32 0.0, %v1449
        %v1451 = vpop.f32.mrb[0].mxu0
        %v1452 = vadd.f32 0.0, %v1451
        %1453 = vmatprep.mubr.bf16.mxu0 %v1281
        %1454 = vmatmul.mubr.bf16.gmra.mrb[0].mxu0 %v1079
        %v1455 = vpop.f32.mrb[0].mxu0
        %v1456 = vadd.f32 0.0, %v1455
        %v1457 = vpop.f32.mrb[0].mxu0
        %v1458 = vadd.f32 0.0, %v1457
        %v1459 = vpop.f32.mrb[0].mxu0
        %v1460 = vadd.f32 0.0, %v1459
        %v1461 = vpop.f32.mrb[0].mxu0
        %v1462 = vadd.f32 0.0, %v1461
        %1463 = vmatprep.mubr.bf16.mxu0 %v1284
        %1464 = vmatmul.mubr.bf16.gmra.mrb[0].mxu0 %v1083
        %v1465 = vpop.f32.mrb[0].mxu0
        %v1466 = vadd.f32 0.0, %v1465
        %v1467 = vpop.f32.mrb[0].mxu0
        %v1468 = vadd.f32 0.0, %v1467
        %v1469 = vpop.f32.mrb[0].mxu0
        %v1470 = vadd.f32 0.0, %v1469
        %v1471 = vpop.f32.mrb[0].mxu0
        %v1472 = vadd.f32 0.0, %v1471
        %1473 = vmatprep.mubr.bf16.mxu0 %v1287
        %1474 = vmatmul.mubr.bf16.gmra.mrb[0].mxu0 %v1087
        %v1475 = vpop.f32.mrb[0].mxu0
        %v1476 = vadd.f32 0.0, %v1475
        %v1477 = vpop.f32.mrb[0].mxu0
        %v1478 = vadd.f32 0.0, %v1477
        %v1479 = vpop.f32.mrb[0].mxu0
        %v1480 = vadd.f32 0.0, %v1479
        %v1481 = vpop.f32.mrb[0].mxu0
        %v1482 = vadd.f32 0.0, %v1481
        %1483 = vmatprep.mubr.bf16.mxu0 %v1290
        %1484 = vmatmul.mubr.bf16.gmra.mrb[0].mxu0 %v1091
        %v1485 = vpop.f32.mrb[0].mxu0
        %v1486 = vadd.f32 0.0, %v1485
        %v1487 = vpop.f32.mrb[0].mxu0
        %v1488 = vadd.f32 0.0, %v1487
        %v1489 = vpop.f32.mrb[0].mxu0
        %v1490 = vadd.f32 0.0, %v1489
        %v1491 = vpop.f32.mrb[0].mxu0
        %v1492 = vadd.f32 0.0, %v1491
        %1493 = vmatprep.mubr.bf16.mxu0 %v1293
        %1494 = vmatmul.mubr.bf16.gmra.mrb[0].mxu0 %v1095
        %v1495 = vpop.f32.mrb[0].mxu0
        %v1496 = vpop.f32.mrb[0].mxu0
        %v1497 = vadd.f32 0.0, %v1496
        %v1498 = vpop.f32.mrb[0].mxu0
        %v1499 = vpop.f32.mrb[0].mxu0
        %v1500 = vadd.f32 0.0, %v1499
        %1501 = vdwg.mxu0
        %1534 = vrot.lane.b32.xlu0 %v1338, 64
        %v1535 = vpop.permute.xlu0 %1534
        %1536 = vrot.lane.b32.xlu0 %v1341, 64
        %v1537 = vpop.permute.xlu0 %1536
        %1538 = vrot.lane.b32.xlu0 %v1346, 64
        %v1539 = vpop.permute.xlu0 %1538
        %1540 = vrot.lane.b32.xlu0 %v1350, 64
        %v1541 = vpop.permute.xlu0 %1540
        %1542 = vrot.lane.b32.xlu0 %v1356, 64
        %v1543 = vpop.permute.xlu0 %1542
        %1544 = vrot.lane.b32.xlu0 %v1360, 64
        %v1545 = vpop.permute.xlu0 %1544
        %1546 = vrot.lane.b32.xlu0 %v1366, 64
        %v1547 = vpop.permute.xlu0 %1546
        %1548 = vrot.lane.b32.xlu0 %v1370, 64
        %v1549 = vpop.permute.xlu0 %1548
        %1550 = vrot.lane.b32.xlu0 %v1376, 64
        %v1551 = vpop.permute.xlu0 %1550
        %1552 = vrot.lane.b32.xlu0 %v1380, 64
        %v1553 = vpop.permute.xlu0 %1552
        %1554 = vrot.lane.b32.xlu0 %v1386, 64
        %v1555 = vpop.permute.xlu0 %1554
        %1556 = vrot.lane.b32.xlu0 %v1390, 64
        %v1557 = vpop.permute.xlu0 %1556
        %1558 = vrot.lane.b32.xlu0 %v1396, 64
        %v1559 = vpop.permute.xlu0 %1558
        %1560 = vrot.lane.b32.xlu0 %v1400, 64
        %v1561 = vpop.permute.xlu0 %1560
        %1562 = vrot.lane.b32.xlu0 %v1406, 64
        %v1563 = vpop.permute.xlu0 %1562
        %1564 = vrot.lane.b32.xlu0 %v1410, 64
        %v1565 = vpop.permute.xlu0 %1564
        %1566 = vrot.lane.b32.xlu0 %v1416, 64
        %v1567 = vpop.permute.xlu0 %1566
        %1568 = vrot.lane.b32.xlu0 %v1420, 64
        %v1569 = vpop.permute.xlu0 %1568
        %1570 = vrot.lane.b32.xlu0 %v1426, 64
        %v1571 = vpop.permute.xlu0 %1570
        %1572 = vrot.lane.b32.xlu0 %v1430, 64
        %v1573 = vpop.permute.xlu0 %1572
        %1574 = vrot.lane.b32.xlu0 %v1436, 64
        %v1575 = vpop.permute.xlu0 %1574
        %1576 = vrot.lane.b32.xlu0 %v1440, 64
        %v1577 = vpop.permute.xlu0 %1576
        %1578 = vrot.lane.b32.xlu0 %v1446, 64
        %v1579 = vpop.permute.xlu0 %1578
        %1580 = vrot.lane.b32.xlu0 %v1450, 64
        %v1581 = vpop.permute.xlu0 %1580
        %1582 = vrot.lane.b32.xlu0 %v1456, 64
        %v1583 = vpop.permute.xlu0 %1582
        %1584 = vrot.lane.b32.xlu0 %v1460, 64
        %v1585 = vpop.permute.xlu0 %1584
        %1586 = vrot.lane.b32.xlu0 %v1466, 64
        %v1587 = vpop.permute.xlu0 %1586
        %1588 = vrot.lane.b32.xlu0 %v1470, 64
        %v1589 = vpop.permute.xlu0 %1588
        %1590 = vrot.lane.b32.xlu0 %v1476, 64
        %v1591 = vpop.permute.xlu0 %1590
        %1592 = vrot.lane.b32.xlu0 %v1480, 64
        %v1593 = vpop.permute.xlu0 %1592
        %1594 = vrot.lane.b32.xlu0 %v1486, 64
        %v1595 = vpop.permute.xlu0 %1594
        %1596 = vrot.lane.b32.xlu0 %v1490, 64
        %v1597 = vpop.permute.xlu0 %1596
        %v1630 = vadd.f32 %v1330, %v1535
        %v1631 = vadd.f32 %v1333, %v1537
        %v1632 = vadd.f32 %v1338, %v1539
        %v1633 = vadd.f32 %v1341, %v1541
        %v1634 = vadd.f32 %v1346, %v1543
        %v1635 = vadd.f32 %v1350, %v1545
        %v1636 = vadd.f32 %v1356, %v1547
        %v1637 = vadd.f32 %v1360, %v1549
        %v1638 = vadd.f32 %v1366, %v1551
        %v1639 = vadd.f32 %v1370, %v1553
        %v1640 = vadd.f32 %v1376, %v1555
        %v1641 = vadd.f32 %v1380, %v1557
        %v1642 = vadd.f32 %v1386, %v1559
        %v1643 = vadd.f32 %v1390, %v1561
        %v1644 = vadd.f32 %v1396, %v1563
        %v1645 = vadd.f32 %v1400, %v1565
        %v1646 = vadd.f32 %v1406, %v1567
        %v1647 = vadd.f32 %v1410, %v1569
        %v1648 = vadd.f32 %v1416, %v1571
        %v1649 = vadd.f32 %v1420, %v1573
        %v1650 = vadd.f32 %v1426, %v1575
        %v1651 = vadd.f32 %v1430, %v1577
        %v1652 = vadd.f32 %v1436, %v1579
        %v1653 = vadd.f32 %v1440, %v1581
        %v1654 = vadd.f32 %v1446, %v1583
        %v1655 = vadd.f32 %v1450, %v1585
        %v1656 = vadd.f32 %v1456, %v1587
        %v1657 = vadd.f32 %v1460, %v1589
        %v1658 = vadd.f32 %v1466, %v1591
        %v1659 = vadd.f32 %v1470, %v1593
        %v1660 = vadd.f32 %v1476, %v1595
        %v1661 = vadd.f32 %v1480, %v1597
        %v1662 = vadd.f32 %v1630, %v1348
        %v1663 = vadd.f32 %v1631, %v1352
        %v1664 = vadd.f32 %v1632, %v1358
        %v1665 = vadd.f32 %v1633, %v1362
        %v1666 = vadd.f32 %v1634, %v1368
        %v1667 = vadd.f32 %v1635, %v1372
        %v1668 = vadd.f32 %v1636, %v1378
        %v1669 = vadd.f32 %v1637, %v1382
        %v1670 = vadd.f32 %v1638, %v1388
        %v1671 = vadd.f32 %v1639, %v1392
        %v1672 = vadd.f32 %v1640, %v1398
        %v1673 = vadd.f32 %v1641, %v1402
        %v1674 = vadd.f32 %v1642, %v1408
        %v1675 = vadd.f32 %v1643, %v1412
        %v1676 = vadd.f32 %v1644, %v1418
        %v1677 = vadd.f32 %v1645, %v1422
        %v1678 = vadd.f32 %v1646, %v1428
        %v1679 = vadd.f32 %v1647, %v1432
        %v1680 = vadd.f32 %v1648, %v1438
        %v1681 = vadd.f32 %v1649, %v1442
        %v1682 = vadd.f32 %v1650, %v1448
        %v1683 = vadd.f32 %v1651, %v1452
        %v1684 = vadd.f32 %v1652, %v1458
        %v1685 = vadd.f32 %v1653, %v1462
        %v1686 = vadd.f32 %v1654, %v1468
        %v1687 = vadd.f32 %v1655, %v1472
        %v1688 = vadd.f32 %v1656, %v1478
        %v1689 = vadd.f32 %v1657, %v1482
        %v1690 = vadd.f32 %v1658, %v1488
        %v1691 = vadd.f32 %v1659, %v1492
        %v1692 = vadd.f32 %v1660, %v1497
        %v1693 = vadd.f32 %v1661, %v1500
        %v1694 = vld [vmem:[%s2] sm:$0x1]
        %v1696 = vlaneseq
        %v1697 = vshrl.u32 %v1696, 7
        %v1698 = vsub.s32 0, %v1697
        %v1699 = vrot.slane %v1694, %v1698
        %v1701 = vmul.f32 %v1662, %v1699
        %v1702 = vmul.f32 %v1663, %v1699
        %v1703 = vmul.f32 %v1664, %v1699
        %v1704 = vmul.f32 %v1665, %v1699
        %v1705 = vmul.f32 %v1666, %v1699
        %v1706 = vmul.f32 %v1667, %v1699
        %v1707 = vmul.f32 %v1668, %v1699
        %v1708 = vmul.f32 %v1669, %v1699
        %v1709 = vmul.f32 %v1670, %v1699
        %v1710 = vmul.f32 %v1671, %v1699
        %v1711 = vmul.f32 %v1672, %v1699
        %v1712 = vmul.f32 %v1673, %v1699
        %v1713 = vmul.f32 %v1674, %v1699
        %v1714 = vmul.f32 %v1675, %v1699
        %v1715 = vmul.f32 %v1676, %v1699
        %v1716 = vmul.f32 %v1677, %v1699
        %v1717 = vmul.f32 %v1678, %v1699
        %v1718 = vmul.f32 %v1679, %v1699
        %v1719 = vmul.f32 %v1680, %v1699
        %v1720 = vmul.f32 %v1681, %v1699
        %v1721 = vmul.f32 %v1682, %v1699
        %v1722 = vmul.f32 %v1683, %v1699
        %v1723 = vmul.f32 %v1684, %v1699
        %v1724 = vmul.f32 %v1685, %v1699
        %v1725 = vmul.f32 %v1686, %v1699
        %v1726 = vmul.f32 %v1687, %v1699
        %v1727 = vmul.f32 %v1688, %v1699
        %v1728 = vmul.f32 %v1689, %v1699
        %v1729 = vmul.f32 %v1690, %v1699
        %v1730 = vmul.f32 %v1691, %v1699
        %v1731 = vmul.f32 %v1692, %v1699
        %v1732 = vmul.f32 %v1693, %v1699
        %v1733 = vld [vmem:[%s3] sm:$0x1]
        %v1735 = vlaneseq
        %v1736 = vshrl.u32 %v1735, 7
        %v1737 = vsub.s32 0, %v1736
        %v1738 = vrot.slane %v1733, %v1737
        %v1740 = vadd.f32 %v1701, %v1738
        %v1741 = vadd.f32 %v1702, %v1738
        %v1742 = vadd.f32 %v1703, %v1738
        %v1743 = vadd.f32 %v1704, %v1738
        %v1744 = vadd.f32 %v1705, %v1738
        %v1745 = vadd.f32 %v1706, %v1738
        %v1746 = vadd.f32 %v1707, %v1738
        %v1747 = vadd.f32 %v1708, %v1738
        %v1748 = vadd.f32 %v1709, %v1738
        %v1749 = vadd.f32 %v1710, %v1738
        %v1750 = vadd.f32 %v1711, %v1738
        %v1751 = vadd.f32 %v1712, %v1738
        %v1752 = vadd.f32 %v1713, %v1738
        %v1753 = vadd.f32 %v1714, %v1738
        %v1754 = vadd.f32 %v1715, %v1738
        %v1755 = vadd.f32 %v1716, %v1738
        %v1756 = vadd.f32 %v1717, %v1738
        %v1757 = vadd.f32 %v1718, %v1738
        %v1758 = vadd.f32 %v1719, %v1738
        %v1759 = vadd.f32 %v1720, %v1738
        %v1760 = vadd.f32 %v1721, %v1738
        %v1761 = vadd.f32 %v1722, %v1738
        %v1762 = vadd.f32 %v1723, %v1738
        %v1763 = vadd.f32 %v1724, %v1738
        %v1764 = vadd.f32 %v1725, %v1738
        %v1765 = vadd.f32 %v1726, %v1738
        %v1766 = vadd.f32 %v1727, %v1738
        %v1767 = vadd.f32 %v1728, %v1738
        %v1768 = vadd.f32 %v1729, %v1738
        %v1769 = vadd.f32 %v1730, %v1738
        %v1770 = vadd.f32 %v1731, %v1738
        %v1771 = vadd.f32 %v1732, %v1738
        %v1772 = vmax.f32 %v1740, 0.0
        %v1773 = vmax.f32 %v1741, 0.0
        %v1774 = vmax.f32 %v1742, 0.0
        %v1775 = vmax.f32 %v1743, 0.0
        %v1776 = vmax.f32 %v1744, 0.0
        %v1777 = vmax.f32 %v1745, 0.0
        %v1778 = vmax.f32 %v1746, 0.0
        %v1779 = vmax.f32 %v1747, 0.0
        %v1780 = vmax.f32 %v1748, 0.0
        %v1781 = vmax.f32 %v1749, 0.0
        %v1782 = vmax.f32 %v1750, 0.0
        %v1783 = vmax.f32 %v1751, 0.0
        %v1784 = vmax.f32 %v1752, 0.0
        %v1785 = vmax.f32 %v1753, 0.0
        %v1786 = vmax.f32 %v1754, 0.0
        %v1787 = vmax.f32 %v1755, 0.0
        %v1788 = vmax.f32 %v1756, 0.0
        %v1789 = vmax.f32 %v1757, 0.0
        %v1790 = vmax.f32 %v1758, 0.0
        %v1791 = vmax.f32 %v1759, 0.0
        %v1792 = vmax.f32 %v1760, 0.0
        %v1793 = vmax.f32 %v1761, 0.0
        %v1794 = vmax.f32 %v1762, 0.0
        %v1795 = vmax.f32 %v1763, 0.0
        %v1796 = vmax.f32 %v1764, 0.0
        %v1797 = vmax.f32 %v1765, 0.0
        %v1798 = vmax.f32 %v1766, 0.0
        %v1799 = vmax.f32 %v1767, 0.0
        %v1800 = vmax.f32 %v1768, 0.0
        %v1801 = vmax.f32 %v1769, 0.0
        %v1802 = vmax.f32 %v1770, 0.0
        %v1803 = vmax.f32 %v1771, 0.0
        %1804 = vst.msk [vmem:[#allocation2 + $0x10] sm:$0xff] %vm1024, %v1772
        %1805 = vst.msk [vmem:[#allocation2 + $0x18] sm:$0xff] %vm1024, %v1773
        %1806 = vst.msk [vmem:[#allocation2 + $0x20] sm:$0xff] %vm1024, %v1774
        %1807 = vst.msk [vmem:[#allocation2 + $0x28] sm:$0xff] %vm1024, %v1775
        %1808 = vst.msk [vmem:[#allocation2 + $0x30] sm:$0xff] %vm1024, %v1776
        %1809 = vst.msk [vmem:[#allocation2 + $0x38] sm:$0xff] %vm1024, %v1777
        %1810 = vst.msk [vmem:[#allocation2 + $0x40] sm:$0xff] %vm1024, %v1778
        %1811 = vst.msk [vmem:[#allocation2 + $0x48] sm:$0xff] %vm1024, %v1779
        %1812 = vst.msk [vmem:[#allocation2 + $0x50] sm:$0xff] %vm1024, %v1780
        %1813 = vst.msk [vmem:[#allocation2 + $0x58] sm:$0xff] %vm1024, %v1781
        %1814 = vst.msk [vmem:[#allocation2 + $0x60] sm:$0xff] %vm1024, %v1782
        %1815 = vst.msk [vmem:[#allocation2 + $0x68] sm:$0xff] %vm1024, %v1783
        %1816 = vst.msk [vmem:[#allocation2 + $0x70] sm:$0xff] %vm1024, %v1784
        %1817 = vst.msk [vmem:[#allocation2 + $0x78] sm:$0xff] %vm1024, %v1785
        %1818 = vst.msk [vmem:[#allocation2 + $0x80] sm:$0xff] %vm1024, %v1786
        %1819 = vst.msk [vmem:[#allocation2 + $0x88] sm:$0xff] %vm1024, %v1787
        %1820 = vst.msk [vmem:[#allocation2 + $0x90] sm:$0xff] %vm1024, %v1788
        %1821 = vst.msk [vmem:[#allocation2 + $0x98] sm:$0xff] %vm1024, %v1789
        %1822 = vst.msk [vmem:[#allocation2 + $0xa0] sm:$0xff] %vm1024, %v1790
        %1823 = vst.msk [vmem:[#allocation2 + $0xa8] sm:$0xff] %vm1024, %v1791
        %1824 = vst.msk [vmem:[#allocation2 + $0xb0] sm:$0xff] %vm1024, %v1792
        %1825 = vst.msk [vmem:[#allocation2 + $0xb8] sm:$0xff] %vm1024, %v1793
        %1826 = vst.msk [vmem:[#allocation2 + $0xc0] sm:$0xff] %vm1024, %v1794
        %1827 = vst.msk [vmem:[#allocation2 + $0xc8] sm:$0xff] %vm1024, %v1795
        %1828 = vst.msk [vmem:[#allocation2 + $0xd0] sm:$0xff] %vm1024, %v1796
        %1829 = vst.msk [vmem:[#allocation2 + $0xd8] sm:$0xff] %vm1024, %v1797
        %1830 = vst.msk [vmem:[#allocation2 + $0xe0] sm:$0xff] %vm1024, %v1798
        %1831 = vst.msk [vmem:[#allocation2 + $0xe8] sm:$0xff] %vm1024, %v1799
        %1832 = vst.msk [vmem:[#allocation2 + $0xf0] sm:$0xff] %vm1024, %v1800
        %1833 = vst.msk [vmem:[#allocation2 + $0xf8] sm:$0xff] %vm1024, %v1801
        %1834 = vst.msk [vmem:[#allocation2 + $0x100] sm:$0xff] %vm1024, %v1802
        %1835 = vst.msk [vmem:[#allocation2 + $0x108] sm:$0xff] %vm1024, %v1803
        %v1836 = vld [vmem:[#allocation2] sm:$0xff]
        %v1837 = vld [vmem:[#allocation2 + $0x8] sm:$0xff]
        %v1838 = vld [vmem:[#allocation2 + $0x10] sm:$0xff]
        %v1839 = vld [vmem:[#allocation2 + $0x18] sm:$0xff]
        %v1840 = vld [vmem:[#allocation2 + $0x20] sm:$0xff]
        %v1841 = vld [vmem:[#allocation2 + $0x28] sm:$0xff]
        %v1842 = vld [vmem:[#allocation2 + $0x30] sm:$0xff]
        %v1843 = vld [vmem:[#allocation2 + $0x38] sm:$0xff]
        %v1844 = vld [vmem:[#allocation2 + $0x40] sm:$0xff]
        %v1845 = vld [vmem:[#allocation2 + $0x48] sm:$0xff]
        %v1846 = vld [vmem:[#allocation2 + $0x50] sm:$0xff]
        %v1847 = vld [vmem:[#allocation2 + $0x58] sm:$0xff]
        %v1848 = vld [vmem:[#allocation2 + $0x60] sm:$0xff]
        %v1849 = vld [vmem:[#allocation2 + $0x68] sm:$0xff]
        %v1850 = vld [vmem:[#allocation2 + $0x70] sm:$0xff]
        %v1851 = vld [vmem:[#allocation2 + $0x78] sm:$0xff]
        %v1852 = vld [vmem:[#allocation2 + $0x80] sm:$0xff]
        %v1853 = vld [vmem:[#allocation2 + $0x88] sm:$0xff]
        %v1854 = vld [vmem:[#allocation2 + $0x90] sm:$0xff]
        %v1855 = vld [vmem:[#allocation2 + $0x98] sm:$0xff]
        %v1856 = vld [vmem:[#allocation2 + $0xa0] sm:$0xff]
        %v1857 = vld [vmem:[#allocation2 + $0xa8] sm:$0xff]
        %v1858 = vld [vmem:[#allocation2 + $0xb0] sm:$0xff]
        %v1859 = vld [vmem:[#allocation2 + $0xb8] sm:$0xff]
        %v1860 = vld [vmem:[#allocation2 + $0xc0] sm:$0xff]
        %v1861 = vld [vmem:[#allocation2 + $0xc8] sm:$0xff]
        %v1862 = vld [vmem:[#allocation2 + $0xd0] sm:$0xff]
        %v1863 = vld [vmem:[#allocation2 + $0xd8] sm:$0xff]
        %v1864 = vld [vmem:[#allocation2 + $0xe0] sm:$0xff]
        %v1865 = vld [vmem:[#allocation2 + $0xe8] sm:$0xff]
        %v1866 = vld [vmem:[#allocation2 + $0xf0] sm:$0xff]
        %v1867 = vld [vmem:[#allocation2 + $0xf8] sm:$0xff]
        %v1868 = vld [vmem:[#allocation2 + $0x100] sm:$0xff]
        %v1869 = vld [vmem:[#allocation2 + $0x108] sm:$0xff]
        %v1870 = vld [vmem:[#allocation2 + $0x110] sm:$0xff]
        %v1871 = vld [vmem:[#allocation2 + $0x118] sm:$0xff]
        %v1872 = vpack.c.bf16 %v1837, %v1836
        %v1873 = vpack.c.bf16 %v1839, %v1838
        %v1874 = vpack.c.bf16 %v1841, %v1840
        %v1875 = vpack.c.bf16 %v1843, %v1842
        %v1876 = vpack.c.bf16 %v1845, %v1844
        %v1877 = vpack.c.bf16 %v1847, %v1846
        %v1878 = vpack.c.bf16 %v1849, %v1848
        %v1879 = vpack.c.bf16 %v1851, %v1850
        %v1880 = vpack.c.bf16 %v1853, %v1852
        %v1881 = vpack.c.bf16 %v1855, %v1854
        %v1882 = vpack.c.bf16 %v1857, %v1856
        %v1883 = vpack.c.bf16 %v1859, %v1858
        %v1884 = vpack.c.bf16 %v1861, %v1860
        %v1885 = vpack.c.bf16 %v1863, %v1862
        %v1886 = vpack.c.bf16 %v1865, %v1864
        %v1887 = vpack.c.bf16 %v1867, %v1866
        %v1888 = vpack.c.bf16 %v1869, %v1868
        %v1889 = vpack.c.bf16 %v1871, %v1870
        %v1890 = vrot.slane %v1836, 7
        %v1891 = vrot.slane %v1837, 7
        %v1892 = vrot.slane %v1838, 7
        %v1893 = vrot.slane %v1839, 7
        %v1894 = vrot.slane %v1840, 7
        %v1895 = vrot.slane %v1841, 7
        %v1896 = vrot.slane %v1842, 7
        %v1897 = vrot.slane %v1843, 7
        %v1898 = vrot.slane %v1844, 7
        %v1899 = vrot.slane %v1845, 7
        %v1900 = vrot.slane %v1846, 7
        %v1901 = vrot.slane %v1847, 7
        %v1902 = vrot.slane %v1848, 7
        %v1903 = vrot.slane %v1849, 7
        %v1904 = vrot.slane %v1850, 7
        %v1905 = vrot.slane %v1851, 7
        %v1906 = vrot.slane %v1852, 7
        %v1907 = vrot.slane %v1853, 7
        %v1908 = vrot.slane %v1854, 7
        %v1909 = vrot.slane %v1855, 7
        %v1910 = vrot.slane %v1856, 7
        %v1911 = vrot.slane %v1857, 7
        %v1912 = vrot.slane %v1858, 7
        %v1913 = vrot.slane %v1859, 7
        %v1914 = vrot.slane %v1860, 7
        %v1915 = vrot.slane %v1861, 7
        %v1916 = vrot.slane %v1862, 7
        %v1917 = vrot.slane %v1863, 7
        %v1918 = vrot.slane %v1864, 7
        %v1919 = vrot.slane %v1865, 7
        %v1920 = vrot.slane %v1866, 7
        %v1921 = vrot.slane %v1867, 7
        %v1922 = vrot.slane %v1868, 7
        %v1923 = vrot.slane %v1869, 7
        %v1924 = vrot.slane %v1870, 7
        %v1925 = vrot.slane %v1871, 7
        %v1926 = vsel %vm500, %v1924, %v1925
        %v1927 = vsel %vm500, %v1923, %v1924
        %v1928 = vsel %vm500, %v1922, %v1923
        %v1929 = vsel %vm500, %v1921, %v1922
        %v1930 = vsel %vm500, %v1920, %v1921
        %v1931 = vsel %vm500, %v1919, %v1920
        %v1932 = vsel %vm500, %v1918, %v1919
        %v1933 = vsel %vm500, %v1917, %v1918
        %v1934 = vsel %vm500, %v1916, %v1917
        %v1935 = vsel %vm500, %v1915, %v1916
        %v1936 = vsel %vm500, %v1914, %v1915
        %v1937 = vsel %vm500, %v1913, %v1914
        %v1938 = vsel %vm500, %v1912, %v1913
        %v1939 = vsel %vm500, %v1911, %v1912
        %v1940 = vsel %vm500, %v1910, %v1911
        %v1941 = vsel %vm500, %v1909, %v1910
        %v1942 = vsel %vm500, %v1908, %v1909
        %v1943 = vsel %vm500, %v1907, %v1908
        %v1944 = vsel %vm500, %v1906, %v1907
        %v1945 = vsel %vm500, %v1905, %v1906
        %v1946 = vsel %vm500, %v1904, %v1905
        %v1947 = vsel %vm500, %v1903, %v1904
        %v1948 = vsel %vm500, %v1902, %v1903
        %v1949 = vsel %vm500, %v1901, %v1902
        %v1950 = vsel %vm500, %v1900, %v1901
        %v1951 = vsel %vm500, %v1899, %v1900
        %v1952 = vsel %vm500, %v1898, %v1899
        %v1953 = vsel %vm500, %v1897, %v1898
        %v1954 = vsel %vm500, %v1896, %v1897
        %v1955 = vsel %vm500, %v1895, %v1896
        %v1956 = vsel %vm500, %v1894, %v1895
        %v1957 = vsel %vm500, %v1893, %v1894
        %v1958 = vsel %vm500, %v1892, %v1893
        %v1959 = vsel %vm500, %v1891, %v1892
        %v1960 = vsel %vm500, %v1890, %v1891
        %v1961 = vsel %vm500, %v1925, %v1890
        %v1962 = vpack.c.bf16 %v1960, %v1961
        %v1963 = vpack.c.bf16 %v1958, %v1959
        %v1964 = vpack.c.bf16 %v1956, %v1957
        %v1965 = vpack.c.bf16 %v1954, %v1955
        %v1966 = vpack.c.bf16 %v1952, %v1953
        %v1967 = vpack.c.bf16 %v1950, %v1951
        %v1968 = vpack.c.bf16 %v1948, %v1949
        %v1969 = vpack.c.bf16 %v1946, %v1947
        %v1970 = vpack.c.bf16 %v1944, %v1945
        %v1971 = vpack.c.bf16 %v1942, %v1943
        %v1972 = vpack.c.bf16 %v1940, %v1941
        %v1973 = vpack.c.bf16 %v1938, %v1939
        %v1974 = vpack.c.bf16 %v1936, %v1937
        %v1975 = vpack.c.bf16 %v1934, %v1935
        %v1976 = vpack.c.bf16 %v1932, %v1933
        %v1977 = vpack.c.bf16 %v1930, %v1931
        %v1978 = vpack.c.bf16 %v1928, %v1929
        %v1979 = vpack.c.bf16 %v1926, %v1927
        %v1980 = vsel %vm681, %v1962, 0
        %v1981 = vsel %vm682, %v1963, 0
        %v1982 = vsel %vm683, %v1964, 0
        %v1983 = vsel %vm684, %v1965, 0
        %v1984 = vsel %vm685, %v1966, 0
        %v1985 = vsel %vm686, %v1967, 0
        %v1986 = vsel %vm687, %v1968, 0
        %v1987 = vsel %vm688, %v1969, 0
        %v1988 = vsel %vm689, %v1970, 0
        %v1989 = vsel %vm690, %v1971, 0
        %v1990 = vsel %vm691, %v1972, 0
        %v1991 = vsel %vm692, %v1973, 0
        %v1992 = vsel %vm693, %v1974, 0
        %v1993 = vsel %vm694, %v1975, 0
        %v1994 = vsel %vm695, %v1976, 0
        %v1995 = vsel %vm696, %v1977, 0
        %v1996 = vsel %vm697, %v1978, 0
        %v1997 = vsel %vm698, %v1979, 0
        %v1998 = vrot.slane %v1836, 1
        %v1999 = vrot.slane %v1837, 1
        %v2000 = vrot.slane %v1838, 1
        %v2001 = vrot.slane %v1839, 1
        %v2002 = vrot.slane %v1840, 1
        %v2003 = vrot.slane %v1841, 1
        %v2004 = vrot.slane %v1842, 1
        %v2005 = vrot.slane %v1843, 1
        %v2006 = vrot.slane %v1844, 1
        %v2007 = vrot.slane %v1845, 1
        %v2008 = vrot.slane %v1846, 1
        %v2009 = vrot.slane %v1847, 1
        %v2010 = vrot.slane %v1848, 1
        %v2011 = vrot.slane %v1849, 1
        %v2012 = vrot.slane %v1850, 1
        %v2013 = vrot.slane %v1851, 1
        %v2014 = vrot.slane %v1852, 1
        %v2015 = vrot.slane %v1853, 1
        %v2016 = vrot.slane %v1854, 1
        %v2017 = vrot.slane %v1855, 1
        %v2018 = vrot.slane %v1856, 1
        %v2019 = vrot.slane %v1857, 1
        %v2020 = vrot.slane %v1858, 1
        %v2021 = vrot.slane %v1859, 1
        %v2022 = vrot.slane %v1860, 1
        %v2023 = vrot.slane %v1861, 1
        %v2024 = vrot.slane %v1862, 1
        %v2025 = vrot.slane %v1863, 1
        %v2026 = vrot.slane %v1864, 1
        %v2027 = vrot.slane %v1865, 1
        %v2028 = vrot.slane %v1866, 1
        %v2029 = vrot.slane %v1867, 1
        %v2030 = vrot.slane %v1868, 1
        %v2031 = vrot.slane %v1869, 1
        %v2032 = vrot.slane %v1870, 1
        %v2033 = vrot.slane %v1871, 1
        %v2034 = vsel %vm753, %v2032, %v2033
        %v2035 = vsel %vm753, %v2031, %v2032
        %v2036 = vsel %vm753, %v2030, %v2031
        %v2037 = vsel %vm753, %v2029, %v2030
        %v2038 = vsel %vm753, %v2028, %v2029
        %v2039 = vsel %vm753, %v2027, %v2028
        %v2040 = vsel %vm753, %v2026, %v2027
        %v2041 = vsel %vm753, %v2025, %v2026
        %v2042 = vsel %vm753, %v2024, %v2025
        %v2043 = vsel %vm753, %v2023, %v2024
        %v2044 = vsel %vm753, %v2022, %v2023
        %v2045 = vsel %vm753, %v2021, %v2022
        %v2046 = vsel %vm753, %v2020, %v2021
        %v2047 = vsel %vm753, %v2019, %v2020
        %v2048 = vsel %vm753, %v2018, %v2019
        %v2049 = vsel %vm753, %v2017, %v2018
        %v2050 = vsel %vm753, %v2016, %v2017
        %v2051 = vsel %vm753, %v2015, %v2016
        %v2052 = vsel %vm753, %v2014, %v2015
        %v2053 = vsel %vm753, %v2013, %v2014
        %v2054 = vsel %vm753, %v2012, %v2013
        %v2055 = vsel %vm753, %v2011, %v2012
        %v2056 = vsel %vm753, %v2010, %v2011
        %v2057 = vsel %vm753, %v2009, %v2010
        %v2058 = vsel %vm753, %v2008, %v2009
        %v2059 = vsel %vm753, %v2007, %v2008
        %v2060 = vsel %vm753, %v2006, %v2007
        %v2061 = vsel %vm753, %v2005, %v2006
        %v2062 = vsel %vm753, %v2004, %v2005
        %v2063 = vsel %vm753, %v2003, %v2004
        %v2064 = vsel %vm753, %v2002, %v2003
        %v2065 = vsel %vm753, %v2001, %v2002
        %v2066 = vsel %vm753, %v2000, %v2001
        %v2067 = vsel %vm753, %v1999, %v2000
        %v2068 = vsel %vm753, %v1998, %v1999
        %v2069 = vsel %vm753, %v2033, %v1998
        %v2070 = vpack.c.bf16 %v2067, %v2068
        %v2071 = vpack.c.bf16 %v2065, %v2066
        %v2072 = vpack.c.bf16 %v2063, %v2064
        %v2073 = vpack.c.bf16 %v2061, %v2062
        %v2074 = vpack.c.bf16 %v2059, %v2060
        %v2075 = vpack.c.bf16 %v2057, %v2058
        %v2076 = vpack.c.bf16 %v2055, %v2056
        %v2077 = vpack.c.bf16 %v2053, %v2054
        %v2078 = vpack.c.bf16 %v2051, %v2052
        %v2079 = vpack.c.bf16 %v2049, %v2050
        %v2080 = vpack.c.bf16 %v2047, %v2048
        %v2081 = vpack.c.bf16 %v2045, %v2046
        %v2082 = vpack.c.bf16 %v2043, %v2044
        %v2083 = vpack.c.bf16 %v2041, %v2042
        %v2084 = vpack.c.bf16 %v2039, %v2040
        %v2085 = vpack.c.bf16 %v2037, %v2038
        %v2086 = vpack.c.bf16 %v2035, %v2036
        %v2087 = vpack.c.bf16 %v2069, %v2034
        %v2088 = vsel %vm934, %v2070, 0
        %v2089 = vsel %vm935, %v2071, 0
        %v2090 = vsel %vm936, %v2072, 0
        %v2091 = vsel %vm937, %v2073, 0
        %v2092 = vsel %vm938, %v2074, 0
        %v2093 = vsel %vm939, %v2075, 0
        %v2094 = vsel %vm940, %v2076, 0
        %v2095 = vsel %vm941, %v2077, 0
        %v2096 = vsel %vm942, %v2078, 0
        %v2097 = vsel %vm943, %v2079, 0
        %v2098 = vsel %vm944, %v2080, 0
        %v2099 = vsel %vm945, %v2081, 0
        %v2100 = vsel %vm946, %v2082, 0
        %v2101 = vsel %vm947, %v2083, 0
        %v2102 = vsel %vm948, %v2084, 0
        %v2103 = vsel %vm949, %v2085, 0
        %v2104 = vsel %vm950, %v2086, 0
        %v2105 = vsel %vm951, %v2087, 0
        %2124 = vrot.lane.b32.xlu0 %v1872, 64
        %v2125 = vpop.permute.xlu0 %2124
        %2126 = vrot.lane.b32.xlu0 %v1873, 64
        %v2127 = vpop.permute.xlu0 %2126
        %2128 = vrot.lane.b32.xlu0 %v1874, 64
        %v2129 = vpop.permute.xlu0 %2128
        %2130 = vrot.lane.b32.xlu0 %v1875, 64
        %v2131 = vpop.permute.xlu0 %2130
        %2132 = vrot.lane.b32.xlu0 %v1876, 64
        %v2133 = vpop.permute.xlu0 %2132
        %2134 = vrot.lane.b32.xlu0 %v1877, 64
        %v2135 = vpop.permute.xlu0 %2134
        %2136 = vrot.lane.b32.xlu0 %v1878, 64
        %v2137 = vpop.permute.xlu0 %2136
        %2138 = vrot.lane.b32.xlu0 %v1879, 64
        %v2139 = vpop.permute.xlu0 %2138
        %2140 = vrot.lane.b32.xlu0 %v1880, 64
        %v2141 = vpop.permute.xlu0 %2140
        %2142 = vrot.lane.b32.xlu0 %v1881, 64
        %v2143 = vpop.permute.xlu0 %2142
        %2144 = vrot.lane.b32.xlu0 %v1882, 64
        %v2145 = vpop.permute.xlu0 %2144
        %2146 = vrot.lane.b32.xlu0 %v1883, 64
        %v2147 = vpop.permute.xlu0 %2146
        %2148 = vrot.lane.b32.xlu0 %v1884, 64
        %v2149 = vpop.permute.xlu0 %2148
        %2150 = vrot.lane.b32.xlu0 %v1885, 64
        %v2151 = vpop.permute.xlu0 %2150
        %2152 = vrot.lane.b32.xlu0 %v1886, 64
        %v2153 = vpop.permute.xlu0 %2152
        %2154 = vrot.lane.b32.xlu0 %v1887, 64
        %v2155 = vpop.permute.xlu0 %2154
        %2156 = vrot.lane.b32.xlu0 %v1888, 64
        %v2157 = vpop.permute.xlu0 %2156
        %2158 = vrot.lane.b32.xlu0 %v1889, 64
        %v2159 = vpop.permute.xlu0 %2158
        %v2162 = vsel %vm1024, %v1980, %v2125
        %v2166 = vsel %vm1024, %v1981, %v2127
        %v2170 = vsel %vm1024, %v1982, %v2129
        %v2174 = vsel %vm1024, %v1983, %v2131
        %v2178 = vsel %vm1024, %v1984, %v2133
        %v2182 = vsel %vm1024, %v1985, %v2135
        %v2186 = vsel %vm1024, %v1986, %v2137
        %v2190 = vsel %vm1024, %v1987, %v2139
        %v2194 = vsel %vm1024, %v1988, %v2141
        %v2198 = vsel %vm1024, %v1989, %v2143
        %v2202 = vsel %vm1024, %v1990, %v2145
        %v2206 = vsel %vm1024, %v1991, %v2147
        %v2210 = vsel %vm1024, %v1992, %v2149
        %v2214 = vsel %vm1024, %v1993, %v2151
        %v2218 = vsel %vm1024, %v1994, %v2153
        %v2222 = vsel %vm1024, %v1995, %v2155
        %v2226 = vsel %vm1024, %v1996, %v2157
        %v2230 = vsel %vm1024, %v1997, %v2159
        %s2232 = scalar_lea.vmem %s1, 192
        %v2233 = vld [vmem:[%s2232] sm:$0xff]
        %v2234 = vld [vmem:[%s2232 + $0x8] sm:$0xff]
        %v2235 = vld [vmem:[%s2232 + $0x10] sm:$0xff]
        %v2236 = vld [vmem:[%s2232 + $0x18] sm:$0xff]
        %v2237 = vld [vmem:[%s2232 + $0x20] sm:$0xff]
        %v2238 = vld [vmem:[%s2232 + $0x28] sm:$0xff]
        %v2239 = vld [vmem:[%s2232 + $0x30] sm:$0xff]
        %v2240 = vld [vmem:[%s2232 + $0x38] sm:$0xff]
        %v2241 = vld [vmem:[%s2232 + $0x40] sm:$0xff]
        %v2242 = vld [vmem:[%s2232 + $0x48] sm:$0xff]
        %v2243 = vld [vmem:[%s2232 + $0x50] sm:$0xff]
        %v2244 = vld [vmem:[%s2232 + $0x58] sm:$0xff]
        %v2245 = vld [vmem:[%s2232 + $0x60] sm:$0xff]
        %v2246 = vld [vmem:[%s2232 + $0x68] sm:$0xff]
        %v2247 = vld [vmem:[%s2232 + $0x70] sm:$0xff]
        %v2248 = vld [vmem:[%s2232 + $0x78] sm:$0xff]
        %v2249 = vld [vmem:[%s2232 + $0x80] sm:$0xff]
        %v2250 = vld [vmem:[%s2232 + $0x88] sm:$0xff]
        %v2251 = vld [vmem:[%s2232 + $0x90] sm:$0xff]
        %v2252 = vld [vmem:[%s2232 + $0x98] sm:$0xff]
        %v2253 = vld [vmem:[%s2232 + $0xa0] sm:$0xff]
        %v2254 = vld [vmem:[%s2232 + $0xa8] sm:$0xff]
        %v2255 = vld [vmem:[%s2232 + $0xb0] sm:$0xff]
        %v2256 = vld [vmem:[%s2232 + $0xb8] sm:$0xff]
        %v2281 = vunpack.c.l.b16 %v2233
        %v2282 = vunpack.c.h.b16 %v2233
        %v2283 = vunpack.c.l.b16 %v2234
        %v2284 = vunpack.c.h.b16 %v2234
        %v2285 = vunpack.c.l.b16 %v2235
        %v2286 = vunpack.c.h.b16 %v2235
        %v2287 = vunpack.c.l.b16 %v2236
        %v2288 = vunpack.c.h.b16 %v2236
        %v2289 = vunpack.c.l.b16 %v2237
        %v2290 = vunpack.c.h.b16 %v2237
        %v2291 = vunpack.c.l.b16 %v2238
        %v2292 = vunpack.c.h.b16 %v2238
        %v2293 = vunpack.c.l.b16 %v2239
        %v2294 = vunpack.c.h.b16 %v2239
        %v2295 = vunpack.c.l.b16 %v2240
        %v2296 = vunpack.c.h.b16 %v2240
        %v2297 = vunpack.c.l.b16 %v2241
        %v2298 = vunpack.c.h.b16 %v2241
        %v2299 = vunpack.c.l.b16 %v2242
        %v2300 = vunpack.c.h.b16 %v2242
        %v2301 = vunpack.c.l.b16 %v2243
        %v2302 = vunpack.c.h.b16 %v2243
        %v2303 = vunpack.c.l.b16 %v2244
        %v2304 = vunpack.c.h.b16 %v2244
        %v2305 = vunpack.c.l.b16 %v2245
        %v2306 = vunpack.c.h.b16 %v2245
        %v2307 = vunpack.c.l.b16 %v2246
        %v2308 = vunpack.c.h.b16 %v2246
        %v2309 = vunpack.c.l.b16 %v2247
        %v2310 = vunpack.c.h.b16 %v2247
        %v2311 = vunpack.c.l.b16 %v2248
        %v2312 = vunpack.c.h.b16 %v2248
        %v2313 = vunpack.c.l.b16 %v2249
        %v2314 = vunpack.c.h.b16 %v2249
        %v2315 = vunpack.c.l.b16 %v2250
        %v2316 = vunpack.c.h.b16 %v2250
        %v2317 = vunpack.c.l.b16 %v2251
        %v2318 = vunpack.c.h.b16 %v2251
        %v2319 = vunpack.c.l.b16 %v2252
        %v2320 = vunpack.c.h.b16 %v2252
        %v2321 = vunpack.c.l.b16 %v2253
        %v2322 = vunpack.c.h.b16 %v2253
        %v2323 = vunpack.c.l.b16 %v2254
        %v2324 = vunpack.c.h.b16 %v2254
        %v2325 = vunpack.c.l.b16 %v2255
        %v2326 = vunpack.c.h.b16 %v2255
        %v2327 = vunpack.c.l.b16 %v2256
        %v2328 = vunpack.c.h.b16 %v2256
        %v2329 = vpack.c.b16 %v2283, %v2281
        %v2330 = vpack.c.b16 %v2284, %v2282
        %v2331 = vpack.c.b16 %v2287, %v2285
        %v2332 = vpack.c.b16 %v2288, %v2286
        %v2333 = vpack.c.b16 %v2291, %v2289
        %v2334 = vpack.c.b16 %v2292, %v2290
        %v2335 = vpack.c.b16 %v2295, %v2293
        %v2336 = vpack.c.b16 %v2296, %v2294
        %v2337 = vpack.c.b16 %v2299, %v2297
        %v2338 = vpack.c.b16 %v2300, %v2298
        %v2339 = vpack.c.b16 %v2303, %v2301
        %v2340 = vpack.c.b16 %v2304, %v2302
        %v2341 = vpack.c.b16 %v2307, %v2305
        %v2342 = vpack.c.b16 %v2308, %v2306
        %v2343 = vpack.c.b16 %v2311, %v2309
        %v2344 = vpack.c.b16 %v2312, %v2310
        %v2345 = vpack.c.b16 %v2315, %v2313
        %v2346 = vpack.c.b16 %v2316, %v2314
        %v2347 = vpack.c.b16 %v2319, %v2317
        %v2348 = vpack.c.b16 %v2320, %v2318
        %v2349 = vpack.c.b16 %v2323, %v2321
        %v2350 = vpack.c.b16 %v2324, %v2322
        %v2351 = vpack.c.b16 %v2327, %v2325
        %v2352 = vpack.c.b16 %v2328, %v2326
        %v2378 = vsel %vm1024, %v2088, 0
        %v2381 = vsel %vm1024, %v2089, 0
        %v2384 = vsel %vm1024, %v2090, 0
        %v2387 = vsel %vm1024, %v2091, 0
        %v2390 = vsel %vm1024, %v2092, 0
        %v2393 = vsel %vm1024, %v2093, 0
        %v2396 = vsel %vm1024, %v2094, 0
        %v2399 = vsel %vm1024, %v2095, 0
        %v2402 = vsel %vm1024, %v2096, 0
        %v2405 = vsel %vm1024, %v2097, 0
        %v2408 = vsel %vm1024, %v2098, 0
        %v2411 = vsel %vm1024, %v2099, 0
        %v2414 = vsel %vm1024, %v2100, 0
        %v2417 = vsel %vm1024, %v2101, 0
        %v2420 = vsel %vm1024, %v2102, 0
        %v2423 = vsel %vm1024, %v2103, 0
        %v2426 = vsel %vm1024, %v2104, 0
        %v2429 = vsel %vm1024, %v2105, 0
        %2431 = vmatprep.subr.bf16.mxu0 %v2330
        %2432 = vmatpush1.bf16.msra.mxu0 %v2329
        %2433 = vmatprep.subr.bf16.mxu0 %v2332
        %2434 = vmatpush1.bf16.msra.mxu0 %v2331
        %2435 = vmatprep.subr.bf16.mxu0 %v2334
        %2436 = vmatpush1.bf16.msra.mxu0 %v2333
        %2437 = vmatprep.subr.bf16.mxu0 %v2336
        %2438 = vmatpush1.bf16.msra.mxu0 %v2335
        %2439 = vmatprep.subr.bf16.mxu0 %v2338
        %2440 = vmatpush1.bf16.msra.mxu0 %v2337
        %2441 = vmatprep.subr.bf16.mxu0 %v2340
        %2442 = vmatpush1.bf16.msra.mxu0 %v2339
        %2443 = vmatprep.subr.bf16.mxu0 %v2342
        %2444 = vmatpush1.bf16.msra.mxu0 %v2341
        %2445 = vmatprep.subr.bf16.mxu0 %v2344
        %2446 = vmatpush1.bf16.msra.mxu0 %v2343
        %2447 = vmatprep.subr.bf16.mxu0 %v2346
        %2448 = vmatpush1.bf16.msra.mxu0 %v2345
        %2449 = vmatprep.subr.bf16.mxu0 %v2348
        %2450 = vmatpush1.bf16.msra.mxu0 %v2347
        %2451 = vmatprep.subr.bf16.mxu0 %v2350
        %2452 = vmatpush1.bf16.msra.mxu0 %v2349
        %2453 = vmatprep.subr.bf16.mxu0 %v2352
        %2454 = vmatpush1.bf16.msra.mxu0 %v2351
        %2455 = vmatprep.subr.bf16.mxu0 0
        %2456 = vmatpush1.bf16.msra.mxu0 0
        %2457 = vmatprep.subr.bf16.mxu0 0
        %2458 = vmatpush1.bf16.msra.mxu0 0
        %2459 = vmatprep.subr.bf16.mxu0 0
        %2460 = vmatpush1.bf16.msra.mxu0 0
        %2461 = vmatprep.subr.bf16.mxu0 0
        %2462 = vmatpush1.bf16.msra.mxu0 0
        %2463 = vmatprep.mubr.bf16.mxu0 %v2378
        %2464 = vmatmul.mubr.bf16.gmra.mrb[0].mxu0 %v2162
        %v2465 = vpop.f32.mrb[0].mxu0
        %v2466 = vadd.f32 0.0, %v2465
        %v2467 = vpop.f32.mrb[0].mxu0
        %v2468 = vpop.f32.mrb[0].mxu0
        %v2469 = vadd.f32 0.0, %v2468
        %v2470 = vpop.f32.mrb[0].mxu0
        %2471 = vmatprep.mubr.bf16.mxu0 %v2381
        %2472 = vmatmul.mubr.bf16.gmra.mrb[0].mxu0 %v2166
        %v2473 = vpop.f32.mrb[0].mxu0
        %v2474 = vadd.f32 0.0, %v2473
        %v2475 = vpop.f32.mrb[0].mxu0
        %v2476 = vpop.f32.mrb[0].mxu0
        %v2477 = vadd.f32 0.0, %v2476
        %v2478 = vpop.f32.mrb[0].mxu0
        %2479 = vmatprep.mubr.bf16.mxu0 %v2384
        %2480 = vmatmul.mubr.bf16.gmra.mrb[0].mxu0 %v2170
        %v2481 = vpop.f32.mrb[0].mxu0
        %v2482 = vadd.f32 0.0, %v2481
        %v2483 = vpop.f32.mrb[0].mxu0
        %v2484 = vadd.f32 0.0, %v2483
        %v2485 = vpop.f32.mrb[0].mxu0
        %v2486 = vadd.f32 0.0, %v2485
        %v2487 = vpop.f32.mrb[0].mxu0
        %v2488 = vadd.f32 0.0, %v2487
        %2489 = vmatprep.mubr.bf16.mxu0 %v2387
        %2490 = vmatmul.mubr.bf16.gmra.mrb[0].mxu0 %v2174
        %v2491 = vpop.f32.mrb[0].mxu0
        %v2492 = vadd.f32 0.0, %v2491
        %v2493 = vpop.f32.mrb[0].mxu0
        %v2494 = vadd.f32 0.0, %v2493
        %v2495 = vpop.f32.mrb[0].mxu0
        %v2496 = vadd.f32 0.0, %v2495
        %v2497 = vpop.f32.mrb[0].mxu0
        %v2498 = vadd.f32 0.0, %v2497
        %2499 = vmatprep.mubr.bf16.mxu0 %v2390
        %2500 = vmatmul.mubr.bf16.gmra.mrb[0].mxu0 %v2178
        %v2501 = vpop.f32.mrb[0].mxu0
        %v2502 = vadd.f32 0.0, %v2501
        %v2503 = vpop.f32.mrb[0].mxu0
        %v2504 = vadd.f32 0.0, %v2503
        %v2505 = vpop.f32.mrb[0].mxu0
        %v2506 = vadd.f32 0.0, %v2505
        %v2507 = vpop.f32.mrb[0].mxu0
        %v2508 = vadd.f32 0.0, %v2507
        %2509 = vmatprep.mubr.bf16.mxu0 %v2393
        %2510 = vmatmul.mubr.bf16.gmra.mrb[0].mxu0 %v2182
        %v2511 = vpop.f32.mrb[0].mxu0
        %v2512 = vadd.f32 0.0, %v2511
        %v2513 = vpop.f32.mrb[0].mxu0
        %v2514 = vadd.f32 0.0, %v2513
        %v2515 = vpop.f32.mrb[0].mxu0
        %v2516 = vadd.f32 0.0, %v2515
        %v2517 = vpop.f32.mrb[0].mxu0
        %v2518 = vadd.f32 0.0, %v2517
        %2519 = vmatprep.mubr.bf16.mxu0 %v2396
        %2520 = vmatmul.mubr.bf16.gmra.mrb[0].mxu0 %v2186
        %v2521 = vpop.f32.mrb[0].mxu0
        %v2522 = vadd.f32 0.0, %v2521
        %v2523 = vpop.f32.mrb[0].mxu0
        %v2524 = vadd.f32 0.0, %v2523
        %v2525 = vpop.f32.mrb[0].mxu0
        %v2526 = vadd.f32 0.0, %v2525
        %v2527 = vpop.f32.mrb[0].mxu0
        %v2528 = vadd.f32 0.0, %v2527
        %2529 = vmatprep.mubr.bf16.mxu0 %v2399
        %2530 = vmatmul.mubr.bf16.gmra.mrb[0].mxu0 %v2190
        %v2531 = vpop.f32.mrb[0].mxu0
        %v2532 = vadd.f32 0.0, %v2531
        %v2533 = vpop.f32.mrb[0].mxu0
        %v2534 = vadd.f32 0.0, %v2533
        %v2535 = vpop.f32.mrb[0].mxu0
        %v2536 = vadd.f32 0.0, %v2535
        %v2537 = vpop.f32.mrb[0].mxu0
        %v2538 = vadd.f32 0.0, %v2537
        %2539 = vmatprep.mubr.bf16.mxu0 %v2402
        %2540 = vmatmul.mubr.bf16.gmra.mrb[0].mxu0 %v2194
        %v2541 = vpop.f32.mrb[0].mxu0
        %v2542 = vadd.f32 0.0, %v2541
        %v2543 = vpop.f32.mrb[0].mxu0
        %v2544 = vadd.f32 0.0, %v2543
        %v2545 = vpop.f32.mrb[0].mxu0
        %v2546 = vadd.f32 0.0, %v2545
        %v2547 = vpop.f32.mrb[0].mxu0
        %v2548 = vadd.f32 0.0, %v2547
        %2549 = vmatprep.mubr.bf16.mxu0 %v2405
        %2550 = vmatmul.mubr.bf16.gmra.mrb[0].mxu0 %v2198
        %v2551 = vpop.f32.mrb[0].mxu0
        %v2552 = vadd.f32 0.0, %v2551
        %v2553 = vpop.f32.mrb[0].mxu0
        %v2554 = vadd.f32 0.0, %v2553
        %v2555 = vpop.f32.mrb[0].mxu0
        %v2556 = vadd.f32 0.0, %v2555
        %v2557 = vpop.f32.mrb[0].mxu0
        %v2558 = vadd.f32 0.0, %v2557
        %2559 = vmatprep.mubr.bf16.mxu0 %v2408
        %2560 = vmatmul.mubr.bf16.gmra.mrb[0].mxu0 %v2202
        %v2561 = vpop.f32.mrb[0].mxu0
        %v2562 = vadd.f32 0.0, %v2561
        %v2563 = vpop.f32.mrb[0].mxu0
        %v2564 = vadd.f32 0.0, %v2563
        %v2565 = vpop.f32.mrb[0].mxu0
        %v2566 = vadd.f32 0.0, %v2565
        %v2567 = vpop.f32.mrb[0].mxu0
        %v2568 = vadd.f32 0.0, %v2567
        %2569 = vmatprep.mubr.bf16.mxu0 %v2411
        %2570 = vmatmul.mubr.bf16.gmra.mrb[0].mxu0 %v2206
        %v2571 = vpop.f32.mrb[0].mxu0
        %v2572 = vadd.f32 0.0, %v2571
        %v2573 = vpop.f32.mrb[0].mxu0
        %v2574 = vadd.f32 0.0, %v2573
        %v2575 = vpop.f32.mrb[0].mxu0
        %v2576 = vadd.f32 0.0, %v2575
        %v2577 = vpop.f32.mrb[0].mxu0
        %v2578 = vadd.f32 0.0, %v2577
        %2579 = vmatprep.mubr.bf16.mxu0 %v2414
        %2580 = vmatmul.mubr.bf16.gmra.mrb[0].mxu0 %v2210
        %v2581 = vpop.f32.mrb[0].mxu0
        %v2582 = vadd.f32 0.0, %v2581
        %v2583 = vpop.f32.mrb[0].mxu0
        %v2584 = vadd.f32 0.0, %v2583
        %v2585 = vpop.f32.mrb[0].mxu0
        %v2586 = vadd.f32 0.0, %v2585
        %v2587 = vpop.f32.mrb[0].mxu0
        %v2588 = vadd.f32 0.0, %v2587
        %2589 = vmatprep.mubr.bf16.mxu0 %v2417
        %2590 = vmatmul.mubr.bf16.gmra.mrb[0].mxu0 %v2214
        %v2591 = vpop.f32.mrb[0].mxu0
        %v2592 = vadd.f32 0.0, %v2591
        %v2593 = vpop.f32.mrb[0].mxu0
        %v2594 = vadd.f32 0.0, %v2593
        %v2595 = vpop.f32.mrb[0].mxu0
        %v2596 = vadd.f32 0.0, %v2595
        %v2597 = vpop.f32.mrb[0].mxu0
        %v2598 = vadd.f32 0.0, %v2597
        %2599 = vmatprep.mubr.bf16.mxu0 %v2420
        %2600 = vmatmul.mubr.bf16.gmra.mrb[0].mxu0 %v2218
        %v2601 = vpop.f32.mrb[0].mxu0
        %v2602 = vadd.f32 0.0, %v2601
        %v2603 = vpop.f32.mrb[0].mxu0
        %v2604 = vadd.f32 0.0, %v2603
        %v2605 = vpop.f32.mrb[0].mxu0
        %v2606 = vadd.f32 0.0, %v2605
        %v2607 = vpop.f32.mrb[0].mxu0
        %v2608 = vadd.f32 0.0, %v2607
        %2609 = vmatprep.mubr.bf16.mxu0 %v2423
        %2610 = vmatmul.mubr.bf16.gmra.mrb[0].mxu0 %v2222
        %v2611 = vpop.f32.mrb[0].mxu0
        %v2612 = vadd.f32 0.0, %v2611
        %v2613 = vpop.f32.mrb[0].mxu0
        %v2614 = vadd.f32 0.0, %v2613
        %v2615 = vpop.f32.mrb[0].mxu0
        %v2616 = vadd.f32 0.0, %v2615
        %v2617 = vpop.f32.mrb[0].mxu0
        %v2618 = vadd.f32 0.0, %v2617
        %2619 = vmatprep.mubr.bf16.mxu0 %v2426
        %2620 = vmatmul.mubr.bf16.gmra.mrb[0].mxu0 %v2226
        %v2621 = vpop.f32.mrb[0].mxu0
        %v2622 = vadd.f32 0.0, %v2621
        %v2623 = vpop.f32.mrb[0].mxu0
        %v2624 = vadd.f32 0.0, %v2623
        %v2625 = vpop.f32.mrb[0].mxu0
        %v2626 = vadd.f32 0.0, %v2625
        %v2627 = vpop.f32.mrb[0].mxu0
        %v2628 = vadd.f32 0.0, %v2627
        %2629 = vmatprep.mubr.bf16.mxu0 %v2429
        %2630 = vmatmul.mubr.bf16.gmra.mrb[0].mxu0 %v2230
        %v2631 = vpop.f32.mrb[0].mxu0
        %v2632 = vpop.f32.mrb[0].mxu0
        %v2633 = vadd.f32 0.0, %v2632
        %v2634 = vpop.f32.mrb[0].mxu0
        %v2635 = vpop.f32.mrb[0].mxu0
        %v2636 = vadd.f32 0.0, %v2635
        %2637 = vdwg.mxu0
        %2670 = vrot.lane.b32.xlu0 %v2474, 64
        %v2671 = vpop.permute.xlu0 %2670
        %2672 = vrot.lane.b32.xlu0 %v2477, 64
        %v2673 = vpop.permute.xlu0 %2672
        %2674 = vrot.lane.b32.xlu0 %v2482, 64
        %v2675 = vpop.permute.xlu0 %2674
        %2676 = vrot.lane.b32.xlu0 %v2486, 64
        %v2677 = vpop.permute.xlu0 %2676
        %2678 = vrot.lane.b32.xlu0 %v2492, 64
        %v2679 = vpop.permute.xlu0 %2678
        %2680 = vrot.lane.b32.xlu0 %v2496, 64
        %v2681 = vpop.permute.xlu0 %2680
        %2682 = vrot.lane.b32.xlu0 %v2502, 64
        %v2683 = vpop.permute.xlu0 %2682
        %2684 = vrot.lane.b32.xlu0 %v2506, 64
        %v2685 = vpop.permute.xlu0 %2684
        %2686 = vrot.lane.b32.xlu0 %v2512, 64
        %v2687 = vpop.permute.xlu0 %2686
        %2688 = vrot.lane.b32.xlu0 %v2516, 64
        %v2689 = vpop.permute.xlu0 %2688
        %2690 = vrot.lane.b32.xlu0 %v2522, 64
        %v2691 = vpop.permute.xlu0 %2690
        %2692 = vrot.lane.b32.xlu0 %v2526, 64
        %v2693 = vpop.permute.xlu0 %2692
        %2694 = vrot.lane.b32.xlu0 %v2532, 64
        %v2695 = vpop.permute.xlu0 %2694
        %2696 = vrot.lane.b32.xlu0 %v2536, 64
        %v2697 = vpop.permute.xlu0 %2696
        %2698 = vrot.lane.b32.xlu0 %v2542, 64
        %v2699 = vpop.permute.xlu0 %2698
        %2700 = vrot.lane.b32.xlu0 %v2546, 64
        %v2701 = vpop.permute.xlu0 %2700
        %2702 = vrot.lane.b32.xlu0 %v2552, 64
        %v2703 = vpop.permute.xlu0 %2702
        %2704 = vrot.lane.b32.xlu0 %v2556, 64
        %v2705 = vpop.permute.xlu0 %2704
        %2706 = vrot.lane.b32.xlu0 %v2562, 64
        %v2707 = vpop.permute.xlu0 %2706
        %2708 = vrot.lane.b32.xlu0 %v2566, 64
        %v2709 = vpop.permute.xlu0 %2708
        %2710 = vrot.lane.b32.xlu0 %v2572, 64
        %v2711 = vpop.permute.xlu0 %2710
        %2712 = vrot.lane.b32.xlu0 %v2576, 64
        %v2713 = vpop.permute.xlu0 %2712
        %2714 = vrot.lane.b32.xlu0 %v2582, 64
        %v2715 = vpop.permute.xlu0 %2714
        %2716 = vrot.lane.b32.xlu0 %v2586, 64
        %v2717 = vpop.permute.xlu0 %2716
        %2718 = vrot.lane.b32.xlu0 %v2592, 64
        %v2719 = vpop.permute.xlu0 %2718
        %2720 = vrot.lane.b32.xlu0 %v2596, 64
        %v2721 = vpop.permute.xlu0 %2720
        %2722 = vrot.lane.b32.xlu0 %v2602, 64
        %v2723 = vpop.permute.xlu0 %2722
        %2724 = vrot.lane.b32.xlu0 %v2606, 64
        %v2725 = vpop.permute.xlu0 %2724
        %2726 = vrot.lane.b32.xlu0 %v2612, 64
        %v2727 = vpop.permute.xlu0 %2726
        %2728 = vrot.lane.b32.xlu0 %v2616, 64
        %v2729 = vpop.permute.xlu0 %2728
        %2730 = vrot.lane.b32.xlu0 %v2622, 64
        %v2731 = vpop.permute.xlu0 %2730
        %2732 = vrot.lane.b32.xlu0 %v2626, 64
        %v2733 = vpop.permute.xlu0 %2732
        %v2766 = vadd.f32 %v2466, %v2671
        %v2767 = vadd.f32 %v2469, %v2673
        %v2768 = vadd.f32 %v2474, %v2675
        %v2769 = vadd.f32 %v2477, %v2677
        %v2770 = vadd.f32 %v2482, %v2679
        %v2771 = vadd.f32 %v2486, %v2681
        %v2772 = vadd.f32 %v2492, %v2683
        %v2773 = vadd.f32 %v2496, %v2685
        %v2774 = vadd.f32 %v2502, %v2687
        %v2775 = vadd.f32 %v2506, %v2689
        %v2776 = vadd.f32 %v2512, %v2691
        %v2777 = vadd.f32 %v2516, %v2693
        %v2778 = vadd.f32 %v2522, %v2695
        %v2779 = vadd.f32 %v2526, %v2697
        %v2780 = vadd.f32 %v2532, %v2699
        %v2781 = vadd.f32 %v2536, %v2701
        %v2782 = vadd.f32 %v2542, %v2703
        %v2783 = vadd.f32 %v2546, %v2705
        %v2784 = vadd.f32 %v2552, %v2707
        %v2785 = vadd.f32 %v2556, %v2709
        %v2786 = vadd.f32 %v2562, %v2711
        %v2787 = vadd.f32 %v2566, %v2713
        %v2788 = vadd.f32 %v2572, %v2715
        %v2789 = vadd.f32 %v2576, %v2717
        %v2790 = vadd.f32 %v2582, %v2719
        %v2791 = vadd.f32 %v2586, %v2721
        %v2792 = vadd.f32 %v2592, %v2723
        %v2793 = vadd.f32 %v2596, %v2725
        %v2794 = vadd.f32 %v2602, %v2727
        %v2795 = vadd.f32 %v2606, %v2729
        %v2796 = vadd.f32 %v2612, %v2731
        %v2797 = vadd.f32 %v2616, %v2733
        %v2798 = vadd.f32 %v2766, %v2484
        %v2799 = vadd.f32 %v2767, %v2488
        %v2800 = vadd.f32 %v2768, %v2494
        %v2801 = vadd.f32 %v2769, %v2498
        %v2802 = vadd.f32 %v2770, %v2504
        %v2803 = vadd.f32 %v2771, %v2508
        %v2804 = vadd.f32 %v2772, %v2514
        %v2805 = vadd.f32 %v2773, %v2518
        %v2806 = vadd.f32 %v2774, %v2524
        %v2807 = vadd.f32 %v2775, %v2528
        %v2808 = vadd.f32 %v2776, %v2534
        %v2809 = vadd.f32 %v2777, %v2538
        %v2810 = vadd.f32 %v2778, %v2544
        %v2811 = vadd.f32 %v2779, %v2548
        %v2812 = vadd.f32 %v2780, %v2554
        %v2813 = vadd.f32 %v2781, %v2558
        %v2814 = vadd.f32 %v2782, %v2564
        %v2815 = vadd.f32 %v2783, %v2568
        %v2816 = vadd.f32 %v2784, %v2574
        %v2817 = vadd.f32 %v2785, %v2578
        %v2818 = vadd.f32 %v2786, %v2584
        %v2819 = vadd.f32 %v2787, %v2588
        %v2820 = vadd.f32 %v2788, %v2594
        %v2821 = vadd.f32 %v2789, %v2598
        %v2822 = vadd.f32 %v2790, %v2604
        %v2823 = vadd.f32 %v2791, %v2608
        %v2824 = vadd.f32 %v2792, %v2614
        %v2825 = vadd.f32 %v2793, %v2618
        %v2826 = vadd.f32 %v2794, %v2624
        %v2827 = vadd.f32 %v2795, %v2628
        %v2828 = vadd.f32 %v2796, %v2633
        %v2829 = vadd.f32 %v2797, %v2636
        %s2830 = scalar_lea.vmem %s2, 1
        %v2831 = vld [vmem:[%s2830] sm:$0x1]
        %v2833 = vlaneseq
        %v2834 = vshrl.u32 %v2833, 7
        %v2835 = vsub.s32 0, %v2834
        %v2836 = vrot.slane %v2831, %v2835
        %v2838 = vmul.f32 %v2798, %v2836
        %v2839 = vmul.f32 %v2799, %v2836
        %v2840 = vmul.f32 %v2800, %v2836
        %v2841 = vmul.f32 %v2801, %v2836
        %v2842 = vmul.f32 %v2802, %v2836
        %v2843 = vmul.f32 %v2803, %v2836
        %v2844 = vmul.f32 %v2804, %v2836
        %v2845 = vmul.f32 %v2805, %v2836
        %v2846 = vmul.f32 %v2806, %v2836
        %v2847 = vmul.f32 %v2807, %v2836
        %v2848 = vmul.f32 %v2808, %v2836
        %v2849 = vmul.f32 %v2809, %v2836
        %v2850 = vmul.f32 %v2810, %v2836
        %v2851 = vmul.f32 %v2811, %v2836
        %v2852 = vmul.f32 %v2812, %v2836
        %v2853 = vmul.f32 %v2813, %v2836
        %v2854 = vmul.f32 %v2814, %v2836
        %v2855 = vmul.f32 %v2815, %v2836
        %v2856 = vmul.f32 %v2816, %v2836
        %v2857 = vmul.f32 %v2817, %v2836
        %v2858 = vmul.f32 %v2818, %v2836
        %v2859 = vmul.f32 %v2819, %v2836
        %v2860 = vmul.f32 %v2820, %v2836
        %v2861 = vmul.f32 %v2821, %v2836
        %v2862 = vmul.f32 %v2822, %v2836
        %v2863 = vmul.f32 %v2823, %v2836
        %v2864 = vmul.f32 %v2824, %v2836
        %v2865 = vmul.f32 %v2825, %v2836
        %v2866 = vmul.f32 %v2826, %v2836
        %v2867 = vmul.f32 %v2827, %v2836
        %v2868 = vmul.f32 %v2828, %v2836
        %v2869 = vmul.f32 %v2829, %v2836
        %s2870 = scalar_lea.vmem %s3, 1
        %v2871 = vld [vmem:[%s2870] sm:$0x1]
        %v2873 = vlaneseq
        %v2874 = vshrl.u32 %v2873, 7
        %v2875 = vsub.s32 0, %v2874
        %v2876 = vrot.slane %v2871, %v2875
        %v2878 = vadd.f32 %v2838, %v2876
        %v2879 = vadd.f32 %v2839, %v2876
        %v2880 = vadd.f32 %v2840, %v2876
        %v2881 = vadd.f32 %v2841, %v2876
        %v2882 = vadd.f32 %v2842, %v2876
        %v2883 = vadd.f32 %v2843, %v2876
        %v2884 = vadd.f32 %v2844, %v2876
        %v2885 = vadd.f32 %v2845, %v2876
        %v2886 = vadd.f32 %v2846, %v2876
        %v2887 = vadd.f32 %v2847, %v2876
        %v2888 = vadd.f32 %v2848, %v2876
        %v2889 = vadd.f32 %v2849, %v2876
        %v2890 = vadd.f32 %v2850, %v2876
        %v2891 = vadd.f32 %v2851, %v2876
        %v2892 = vadd.f32 %v2852, %v2876
        %v2893 = vadd.f32 %v2853, %v2876
        %v2894 = vadd.f32 %v2854, %v2876
        %v2895 = vadd.f32 %v2855, %v2876
        %v2896 = vadd.f32 %v2856, %v2876
        %v2897 = vadd.f32 %v2857, %v2876
        %v2898 = vadd.f32 %v2858, %v2876
        %v2899 = vadd.f32 %v2859, %v2876
        %v2900 = vadd.f32 %v2860, %v2876
        %v2901 = vadd.f32 %v2861, %v2876
        %v2902 = vadd.f32 %v2862, %v2876
        %v2903 = vadd.f32 %v2863, %v2876
        %v2904 = vadd.f32 %v2864, %v2876
        %v2905 = vadd.f32 %v2865, %v2876
        %v2906 = vadd.f32 %v2866, %v2876
        %v2907 = vadd.f32 %v2867, %v2876
        %v2908 = vadd.f32 %v2868, %v2876
        %v2909 = vadd.f32 %v2869, %v2876
        %v2910 = vmax.f32 %v2878, 0.0
        %v2911 = vmax.f32 %v2879, 0.0
        %v2912 = vmax.f32 %v2880, 0.0
        %v2913 = vmax.f32 %v2881, 0.0
        %v2914 = vmax.f32 %v2882, 0.0
        %v2915 = vmax.f32 %v2883, 0.0
        %v2916 = vmax.f32 %v2884, 0.0
        %v2917 = vmax.f32 %v2885, 0.0
        %v2918 = vmax.f32 %v2886, 0.0
        %v2919 = vmax.f32 %v2887, 0.0
        %v2920 = vmax.f32 %v2888, 0.0
        %v2921 = vmax.f32 %v2889, 0.0
        %v2922 = vmax.f32 %v2890, 0.0
        %v2923 = vmax.f32 %v2891, 0.0
        %v2924 = vmax.f32 %v2892, 0.0
        %v2925 = vmax.f32 %v2893, 0.0
        %v2926 = vmax.f32 %v2894, 0.0
        %v2927 = vmax.f32 %v2895, 0.0
        %v2928 = vmax.f32 %v2896, 0.0
        %v2929 = vmax.f32 %v2897, 0.0
        %v2930 = vmax.f32 %v2898, 0.0
        %v2931 = vmax.f32 %v2899, 0.0
        %v2932 = vmax.f32 %v2900, 0.0
        %v2933 = vmax.f32 %v2901, 0.0
        %v2934 = vmax.f32 %v2902, 0.0
        %v2935 = vmax.f32 %v2903, 0.0
        %v2936 = vmax.f32 %v2904, 0.0
        %v2937 = vmax.f32 %v2905, 0.0
        %v2938 = vmax.f32 %v2906, 0.0
        %v2939 = vmax.f32 %v2907, 0.0
        %v2940 = vmax.f32 %v2908, 0.0
        %v2941 = vmax.f32 %v2909, 0.0
        %2942 = vst.msk [vmem:[#allocation3 + $0x10] sm:$0xff] %vm1024, %v2910
        %2943 = vst.msk [vmem:[#allocation3 + $0x18] sm:$0xff] %vm1024, %v2911
        %2944 = vst.msk [vmem:[#allocation3 + $0x20] sm:$0xff] %vm1024, %v2912
        %2945 = vst.msk [vmem:[#allocation3 + $0x28] sm:$0xff] %vm1024, %v2913
        %2946 = vst.msk [vmem:[#allocation3 + $0x30] sm:$0xff] %vm1024, %v2914
        %2947 = vst.msk [vmem:[#allocation3 + $0x38] sm:$0xff] %vm1024, %v2915
        %2948 = vst.msk [vmem:[#allocation3 + $0x40] sm:$0xff] %vm1024, %v2916
        %2949 = vst.msk [vmem:[#allocation3 + $0x48] sm:$0xff] %vm1024, %v2917
        %2950 = vst.msk [vmem:[#allocation3 + $0x50] sm:$0xff] %vm1024, %v2918
        %2951 = vst.msk [vmem:[#allocation3 + $0x58] sm:$0xff] %vm1024, %v2919
        %2952 = vst.msk [vmem:[#allocation3 + $0x60] sm:$0xff] %vm1024, %v2920
        %2953 = vst.msk [vmem:[#allocation3 + $0x68] sm:$0xff] %vm1024, %v2921
        %2954 = vst.msk [vmem:[#allocation3 + $0x70] sm:$0xff] %vm1024, %v2922
        %2955 = vst.msk [vmem:[#allocation3 + $0x78] sm:$0xff] %vm1024, %v2923
        %2956 = vst.msk [vmem:[#allocation3 + $0x80] sm:$0xff] %vm1024, %v2924
        %2957 = vst.msk [vmem:[#allocation3 + $0x88] sm:$0xff] %vm1024, %v2925
        %2958 = vst.msk [vmem:[#allocation3 + $0x90] sm:$0xff] %vm1024, %v2926
        %2959 = vst.msk [vmem:[#allocation3 + $0x98] sm:$0xff] %vm1024, %v2927
        %2960 = vst.msk [vmem:[#allocation3 + $0xa0] sm:$0xff] %vm1024, %v2928
        %2961 = vst.msk [vmem:[#allocation3 + $0xa8] sm:$0xff] %vm1024, %v2929
        %2962 = vst.msk [vmem:[#allocation3 + $0xb0] sm:$0xff] %vm1024, %v2930
        %2963 = vst.msk [vmem:[#allocation3 + $0xb8] sm:$0xff] %vm1024, %v2931
        %2964 = vst.msk [vmem:[#allocation3 + $0xc0] sm:$0xff] %vm1024, %v2932
        %2965 = vst.msk [vmem:[#allocation3 + $0xc8] sm:$0xff] %vm1024, %v2933
        %2966 = vst.msk [vmem:[#allocation3 + $0xd0] sm:$0xff] %vm1024, %v2934
        %2967 = vst.msk [vmem:[#allocation3 + $0xd8] sm:$0xff] %vm1024, %v2935
        %2968 = vst.msk [vmem:[#allocation3 + $0xe0] sm:$0xff] %vm1024, %v2936
        %2969 = vst.msk [vmem:[#allocation3 + $0xe8] sm:$0xff] %vm1024, %v2937
        %2970 = vst.msk [vmem:[#allocation3 + $0xf0] sm:$0xff] %vm1024, %v2938
        %2971 = vst.msk [vmem:[#allocation3 + $0xf8] sm:$0xff] %vm1024, %v2939
        %2972 = vst.msk [vmem:[#allocation3 + $0x100] sm:$0xff] %vm1024, %v2940
        %2973 = vst.msk [vmem:[#allocation3 + $0x108] sm:$0xff] %vm1024, %v2941
        %v2974 = vld [vmem:[#allocation3] sm:$0xff]
        %v2975 = vld [vmem:[#allocation3 + $0x8] sm:$0xff]
        %v2976 = vld [vmem:[#allocation3 + $0x10] sm:$0xff]
        %v2977 = vld [vmem:[#allocation3 + $0x18] sm:$0xff]
        %v2978 = vld [vmem:[#allocation3 + $0x20] sm:$0xff]
        %v2979 = vld [vmem:[#allocation3 + $0x28] sm:$0xff]
        %v2980 = vld [vmem:[#allocation3 + $0x30] sm:$0xff]
        %v2981 = vld [vmem:[#allocation3 + $0x38] sm:$0xff]
        %v2982 = vld [vmem:[#allocation3 + $0x40] sm:$0xff]
        %v2983 = vld [vmem:[#allocation3 + $0x48] sm:$0xff]
        %v2984 = vld [vmem:[#allocation3 + $0x50] sm:$0xff]
        %v2985 = vld [vmem:[#allocation3 + $0x58] sm:$0xff]
        %v2986 = vld [vmem:[#allocation3 + $0x60] sm:$0xff]
        %v2987 = vld [vmem:[#allocation3 + $0x68] sm:$0xff]
        %v2988 = vld [vmem:[#allocation3 + $0x70] sm:$0xff]
        %v2989 = vld [vmem:[#allocation3 + $0x78] sm:$0xff]
        %v2990 = vld [vmem:[#allocation3 + $0x80] sm:$0xff]
        %v2991 = vld [vmem:[#allocation3 + $0x88] sm:$0xff]
        %v2992 = vld [vmem:[#allocation3 + $0x90] sm:$0xff]
        %v2993 = vld [vmem:[#allocation3 + $0x98] sm:$0xff]
        %v2994 = vld [vmem:[#allocation3 + $0xa0] sm:$0xff]
        %v2995 = vld [vmem:[#allocation3 + $0xa8] sm:$0xff]
        %v2996 = vld [vmem:[#allocation3 + $0xb0] sm:$0xff]
        %v2997 = vld [vmem:[#allocation3 + $0xb8] sm:$0xff]
        %v2998 = vld [vmem:[#allocation3 + $0xc0] sm:$0xff]
        %v2999 = vld [vmem:[#allocation3 + $0xc8] sm:$0xff]
        %v3000 = vld [vmem:[#allocation3 + $0xd0] sm:$0xff]
        %v3001 = vld [vmem:[#allocation3 + $0xd8] sm:$0xff]
        %v3002 = vld [vmem:[#allocation3 + $0xe0] sm:$0xff]
        %v3003 = vld [vmem:[#allocation3 + $0xe8] sm:$0xff]
        %v3004 = vld [vmem:[#allocation3 + $0xf0] sm:$0xff]
        %v3005 = vld [vmem:[#allocation3 + $0xf8] sm:$0xff]
        %v3006 = vld [vmem:[#allocation3 + $0x100] sm:$0xff]
        %v3007 = vld [vmem:[#allocation3 + $0x108] sm:$0xff]
        %v3008 = vld [vmem:[#allocation3 + $0x110] sm:$0xff]
        %v3009 = vld [vmem:[#allocation3 + $0x118] sm:$0xff]
        %v3010 = vpack.c.bf16 %v2975, %v2974
        %v3011 = vpack.c.bf16 %v2977, %v2976
        %v3012 = vpack.c.bf16 %v2979, %v2978
        %v3013 = vpack.c.bf16 %v2981, %v2980
        %v3014 = vpack.c.bf16 %v2983, %v2982
        %v3015 = vpack.c.bf16 %v2985, %v2984
        %v3016 = vpack.c.bf16 %v2987, %v2986
        %v3017 = vpack.c.bf16 %v2989, %v2988
        %v3018 = vpack.c.bf16 %v2991, %v2990
        %v3019 = vpack.c.bf16 %v2993, %v2992
        %v3020 = vpack.c.bf16 %v2995, %v2994
        %v3021 = vpack.c.bf16 %v2997, %v2996
        %v3022 = vpack.c.bf16 %v2999, %v2998
        %v3023 = vpack.c.bf16 %v3001, %v3000
        %v3024 = vpack.c.bf16 %v3003, %v3002
        %v3025 = vpack.c.bf16 %v3005, %v3004
        %v3026 = vpack.c.bf16 %v3007, %v3006
        %v3027 = vpack.c.bf16 %v3009, %v3008
        %v3028 = vrot.slane %v2974, 7
        %v3029 = vrot.slane %v2975, 7
        %v3030 = vrot.slane %v2976, 7
        %v3031 = vrot.slane %v2977, 7
        %v3032 = vrot.slane %v2978, 7
        %v3033 = vrot.slane %v2979, 7
        %v3034 = vrot.slane %v2980, 7
        %v3035 = vrot.slane %v2981, 7
        %v3036 = vrot.slane %v2982, 7
        %v3037 = vrot.slane %v2983, 7
        %v3038 = vrot.slane %v2984, 7
        %v3039 = vrot.slane %v2985, 7
        %v3040 = vrot.slane %v2986, 7
        %v3041 = vrot.slane %v2987, 7
        %v3042 = vrot.slane %v2988, 7
        %v3043 = vrot.slane %v2989, 7
        %v3044 = vrot.slane %v2990, 7
        %v3045 = vrot.slane %v2991, 7
        %v3046 = vrot.slane %v2992, 7
        %v3047 = vrot.slane %v2993, 7
        %v3048 = vrot.slane %v2994, 7
        %v3049 = vrot.slane %v2995, 7
        %v3050 = vrot.slane %v2996, 7
        %v3051 = vrot.slane %v2997, 7
        %v3052 = vrot.slane %v2998, 7
        %v3053 = vrot.slane %v2999, 7
        %v3054 = vrot.slane %v3000, 7
        %v3055 = vrot.slane %v3001, 7
        %v3056 = vrot.slane %v3002, 7
        %v3057 = vrot.slane %v3003, 7
        %v3058 = vrot.slane %v3004, 7
        %v3059 = vrot.slane %v3005, 7
        %v3060 = vrot.slane %v3006, 7
        %v3061 = vrot.slane %v3007, 7
        %v3062 = vrot.slane %v3008, 7
        %v3063 = vrot.slane %v3009, 7
        %v3064 = vsel %vm500, %v3062, %v3063
        %v3065 = vsel %vm500, %v3061, %v3062
        %v3066 = vsel %vm500, %v3060, %v3061
        %v3067 = vsel %vm500, %v3059, %v3060
        %v3068 = vsel %vm500, %v3058, %v3059
        %v3069 = vsel %vm500, %v3057, %v3058
        %v3070 = vsel %vm500, %v3056, %v3057
        %v3071 = vsel %vm500, %v3055, %v3056
        %v3072 = vsel %vm500, %v3054, %v3055
        %v3073 = vsel %vm500, %v3053, %v3054
        %v3074 = vsel %vm500, %v3052, %v3053
        %v3075 = vsel %vm500, %v3051, %v3052
        %v3076 = vsel %vm500, %v3050, %v3051
        %v3077 = vsel %vm500, %v3049, %v3050
        %v3078 = vsel %vm500, %v3048, %v3049
        %v3079 = vsel %vm500, %v3047, %v3048
        %v3080 = vsel %vm500, %v3046, %v3047
        %v3081 = vsel %vm500, %v3045, %v3046
        %v3082 = vsel %vm500, %v3044, %v3045
        %v3083 = vsel %vm500, %v3043, %v3044
        %v3084 = vsel %vm500, %v3042, %v3043
        %v3085 = vsel %vm500, %v3041, %v3042
        %v3086 = vsel %vm500, %v3040, %v3041
        %v3087 = vsel %vm500, %v3039, %v3040
        %v3088 = vsel %vm500, %v3038, %v3039
        %v3089 = vsel %vm500, %v3037, %v3038
        %v3090 = vsel %vm500, %v3036, %v3037
        %v3091 = vsel %vm500, %v3035, %v3036
        %v3092 = vsel %vm500, %v3034, %v3035
        %v3093 = vsel %vm500, %v3033, %v3034
        %v3094 = vsel %vm500, %v3032, %v3033
        %v3095 = vsel %vm500, %v3031, %v3032
        %v3096 = vsel %vm500, %v3030, %v3031
        %v3097 = vsel %vm500, %v3029, %v3030
        %v3098 = vsel %vm500, %v3028, %v3029
        %v3099 = vsel %vm500, %v3063, %v3028
        %v3100 = vpack.c.bf16 %v3098, %v3099
        %v3101 = vpack.c.bf16 %v3096, %v3097
        %v3102 = vpack.c.bf16 %v3094, %v3095
        %v3103 = vpack.c.bf16 %v3092, %v3093
        %v3104 = vpack.c.bf16 %v3090, %v3091
        %v3105 = vpack.c.bf16 %v3088, %v3089
        %v3106 = vpack.c.bf16 %v3086, %v3087
        %v3107 = vpack.c.bf16 %v3084, %v3085
        %v3108 = vpack.c.bf16 %v3082, %v3083
        %v3109 = vpack.c.bf16 %v3080, %v3081
        %v3110 = vpack.c.bf16 %v3078, %v3079
        %v3111 = vpack.c.bf16 %v3076, %v3077
        %v3112 = vpack.c.bf16 %v3074, %v3075
        %v3113 = vpack.c.bf16 %v3072, %v3073
        %v3114 = vpack.c.bf16 %v3070, %v3071
        %v3115 = vpack.c.bf16 %v3068, %v3069
        %v3116 = vpack.c.bf16 %v3066, %v3067
        %v3117 = vpack.c.bf16 %v3064, %v3065
        %v3118 = vsel %vm681, %v3100, 0
        %v3119 = vsel %vm682, %v3101, 0
        %v3120 = vsel %vm683, %v3102, 0
        %v3121 = vsel %vm684, %v3103, 0
        %v3122 = vsel %vm685, %v3104, 0
        %v3123 = vsel %vm686, %v3105, 0
        %v3124 = vsel %vm687, %v3106, 0
        %v3125 = vsel %vm688, %v3107, 0
        %v3126 = vsel %vm689, %v3108, 0
        %v3127 = vsel %vm690, %v3109, 0
        %v3128 = vsel %vm691, %v3110, 0
        %v3129 = vsel %vm692, %v3111, 0
        %v3130 = vsel %vm693, %v3112, 0
        %v3131 = vsel %vm694, %v3113, 0
        %v3132 = vsel %vm695, %v3114, 0
        %v3133 = vsel %vm696, %v3115, 0
        %v3134 = vsel %vm697, %v3116, 0
        %v3135 = vsel %vm698, %v3117, 0
        %v3136 = vrot.slane %v2974, 1
        %v3137 = vrot.slane %v2975, 1
        %v3138 = vrot.slane %v2976, 1
        %v3139 = vrot.slane %v2977, 1
        %v3140 = vrot.slane %v2978, 1
        %v3141 = vrot.slane %v2979, 1
        %v3142 = vrot.slane %v2980, 1
        %v3143 = vrot.slane %v2981, 1
        %v3144 = vrot.slane %v2982, 1
        %v3145 = vrot.slane %v2983, 1
        %v3146 = vrot.slane %v2984, 1
        %v3147 = vrot.slane %v2985, 1
        %v3148 = vrot.slane %v2986, 1
        %v3149 = vrot.slane %v2987, 1
        %v3150 = vrot.slane %v2988, 1
        %v3151 = vrot.slane %v2989, 1
        %v3152 = vrot.slane %v2990, 1
        %v3153 = vrot.slane %v2991, 1
        %v3154 = vrot.slane %v2992, 1
        %v3155 = vrot.slane %v2993, 1
        %v3156 = vrot.slane %v2994, 1
        %v3157 = vrot.slane %v2995, 1
        %v3158 = vrot.slane %v2996, 1
        %v3159 = vrot.slane %v2997, 1
        %v3160 = vrot.slane %v2998, 1
        %v3161 = vrot.slane %v2999, 1
        %v3162 = vrot.slane %v3000, 1
        %v3163 = vrot.slane %v3001, 1
        %v3164 = vrot.slane %v3002, 1
        %v3165 = vrot.slane %v3003, 1
        %v3166 = vrot.slane %v3004, 1
        %v3167 = vrot.slane %v3005, 1
        %v3168 = vrot.slane %v3006, 1
        %v3169 = vrot.slane %v3007, 1
        %v3170 = vrot.slane %v3008, 1
        %v3171 = vrot.slane %v3009, 1
        %v3172 = vsel %vm753, %v3170, %v3171
        %v3173 = vsel %vm753, %v3169, %v3170
        %v3174 = vsel %vm753, %v3168, %v3169
        %v3175 = vsel %vm753, %v3167, %v3168
        %v3176 = vsel %vm753, %v3166, %v3167
        %v3177 = vsel %vm753, %v3165, %v3166
        %v3178 = vsel %vm753, %v3164, %v3165
        %v3179 = vsel %vm753, %v3163, %v3164
        %v3180 = vsel %vm753, %v3162, %v3163
        %v3181 = vsel %vm753, %v3161, %v3162
        %v3182 = vsel %vm753, %v3160, %v3161
        %v3183 = vsel %vm753, %v3159, %v3160
        %v3184 = vsel %vm753, %v3158, %v3159
        %v3185 = vsel %vm753, %v3157, %v3158
        %v3186 = vsel %vm753, %v3156, %v3157
        %v3187 = vsel %vm753, %v3155, %v3156
        %v3188 = vsel %vm753, %v3154, %v3155
        %v3189 = vsel %vm753, %v3153, %v3154
        %v3190 = vsel %vm753, %v3152, %v3153
        %v3191 = vsel %vm753, %v3151, %v3152
        %v3192 = vsel %vm753, %v3150, %v3151
        %v3193 = vsel %vm753, %v3149, %v3150
        %v3194 = vsel %vm753, %v3148, %v3149
        %v3195 = vsel %vm753, %v3147, %v3148
        %v3196 = vsel %vm753, %v3146, %v3147
        %v3197 = vsel %vm753, %v3145, %v3146
        %v3198 = vsel %vm753, %v3144, %v3145
        %v3199 = vsel %vm753, %v3143, %v3144
        %v3200 = vsel %vm753, %v3142, %v3143
        %v3201 = vsel %vm753, %v3141, %v3142
        %v3202 = vsel %vm753, %v3140, %v3141
        %v3203 = vsel %vm753, %v3139, %v3140
        %v3204 = vsel %vm753, %v3138, %v3139
        %v3205 = vsel %vm753, %v3137, %v3138
        %v3206 = vsel %vm753, %v3136, %v3137
        %v3207 = vsel %vm753, %v3171, %v3136
        %v3208 = vpack.c.bf16 %v3205, %v3206
        %v3209 = vpack.c.bf16 %v3203, %v3204
        %v3210 = vpack.c.bf16 %v3201, %v3202
        %v3211 = vpack.c.bf16 %v3199, %v3200
        %v3212 = vpack.c.bf16 %v3197, %v3198
        %v3213 = vpack.c.bf16 %v3195, %v3196
        %v3214 = vpack.c.bf16 %v3193, %v3194
        %v3215 = vpack.c.bf16 %v3191, %v3192
        %v3216 = vpack.c.bf16 %v3189, %v3190
        %v3217 = vpack.c.bf16 %v3187, %v3188
        %v3218 = vpack.c.bf16 %v3185, %v3186
        %v3219 = vpack.c.bf16 %v3183, %v3184
        %v3220 = vpack.c.bf16 %v3181, %v3182
        %v3221 = vpack.c.bf16 %v3179, %v3180
        %v3222 = vpack.c.bf16 %v3177, %v3178
        %v3223 = vpack.c.bf16 %v3175, %v3176
        %v3224 = vpack.c.bf16 %v3173, %v3174
        %v3225 = vpack.c.bf16 %v3207, %v3172
        %v3226 = vsel %vm934, %v3208, 0
        %v3227 = vsel %vm935, %v3209, 0
        %v3228 = vsel %vm936, %v3210, 0
        %v3229 = vsel %vm937, %v3211, 0
        %v3230 = vsel %vm938, %v3212, 0
        %v3231 = vsel %vm939, %v3213, 0
        %v3232 = vsel %vm940, %v3214, 0
        %v3233 = vsel %vm941, %v3215, 0
        %v3234 = vsel %vm942, %v3216, 0
        %v3235 = vsel %vm943, %v3217, 0
        %v3236 = vsel %vm944, %v3218, 0
        %v3237 = vsel %vm945, %v3219, 0
        %v3238 = vsel %vm946, %v3220, 0
        %v3239 = vsel %vm947, %v3221, 0
        %v3240 = vsel %vm948, %v3222, 0
        %v3241 = vsel %vm949, %v3223, 0
        %v3242 = vsel %vm950, %v3224, 0
        %v3243 = vsel %vm951, %v3225, 0
        %3262 = vrot.lane.b32.xlu0 %v3010, 64
        %v3263 = vpop.permute.xlu0 %3262
        %3264 = vrot.lane.b32.xlu0 %v3011, 64
        %v3265 = vpop.permute.xlu0 %3264
        %3266 = vrot.lane.b32.xlu0 %v3012, 64
        %v3267 = vpop.permute.xlu0 %3266
        %3268 = vrot.lane.b32.xlu0 %v3013, 64
        %v3269 = vpop.permute.xlu0 %3268
        %3270 = vrot.lane.b32.xlu0 %v3014, 64
        %v3271 = vpop.permute.xlu0 %3270
        %3272 = vrot.lane.b32.xlu0 %v3015, 64
        %v3273 = vpop.permute.xlu0 %3272
        %3274 = vrot.lane.b32.xlu0 %v3016, 64
        %v3275 = vpop.permute.xlu0 %3274
        %3276 = vrot.lane.b32.xlu0 %v3017, 64
        %v3277 = vpop.permute.xlu0 %3276
        %3278 = vrot.lane.b32.xlu0 %v3018, 64
        %v3279 = vpop.permute.xlu0 %3278
        %3280 = vrot.lane.b32.xlu0 %v3019, 64
        %v3281 = vpop.permute.xlu0 %3280
        %3282 = vrot.lane.b32.xlu0 %v3020, 64
        %v3283 = vpop.permute.xlu0 %3282
        %3284 = vrot.lane.b32.xlu0 %v3021, 64
        %v3285 = vpop.permute.xlu0 %3284
        %3286 = vrot.lane.b32.xlu0 %v3022, 64
        %v3287 = vpop.permute.xlu0 %3286
        %3288 = vrot.lane.b32.xlu0 %v3023, 64
        %v3289 = vpop.permute.xlu0 %3288
        %3290 = vrot.lane.b32.xlu0 %v3024, 64
        %v3291 = vpop.permute.xlu0 %3290
        %3292 = vrot.lane.b32.xlu0 %v3025, 64
        %v3293 = vpop.permute.xlu0 %3292
        %3294 = vrot.lane.b32.xlu0 %v3026, 64
        %v3295 = vpop.permute.xlu0 %3294
        %3296 = vrot.lane.b32.xlu0 %v3027, 64
        %v3297 = vpop.permute.xlu0 %3296
        %v3300 = vsel %vm1024, %v3118, %v3263
        %v3304 = vsel %vm1024, %v3119, %v3265
        %v3308 = vsel %vm1024, %v3120, %v3267
        %v3312 = vsel %vm1024, %v3121, %v3269
        %v3316 = vsel %vm1024, %v3122, %v3271
        %v3320 = vsel %vm1024, %v3123, %v3273
        %v3324 = vsel %vm1024, %v3124, %v3275
        %v3328 = vsel %vm1024, %v3125, %v3277
        %v3332 = vsel %vm1024, %v3126, %v3279
        %v3336 = vsel %vm1024, %v3127, %v3281
        %v3340 = vsel %vm1024, %v3128, %v3283
        %v3344 = vsel %vm1024, %v3129, %v3285
        %v3348 = vsel %vm1024, %v3130, %v3287
        %v3352 = vsel %vm1024, %v3131, %v3289
        %v3356 = vsel %vm1024, %v3132, %v3291
        %v3360 = vsel %vm1024, %v3133, %v3293
        %v3364 = vsel %vm1024, %v3134, %v3295
        %v3368 = vsel %vm1024, %v3135, %v3297
        %s3370 = scalar_lea.vmem %s1, 384
        %v3371 = vld [vmem:[%s3370] sm:$0xff]
        %v3372 = vld [vmem:[%s3370 + $0x8] sm:$0xff]
        %v3373 = vld [vmem:[%s3370 + $0x10] sm:$0xff]
        %v3374 = vld [vmem:[%s3370 + $0x18] sm:$0xff]
        %v3375 = vld [vmem:[%s3370 + $0x20] sm:$0xff]
        %v3376 = vld [vmem:[%s3370 + $0x28] sm:$0xff]
        %v3377 = vld [vmem:[%s3370 + $0x30] sm:$0xff]
        %v3378 = vld [vmem:[%s3370 + $0x38] sm:$0xff]
        %v3379 = vld [vmem:[%s3370 + $0x40] sm:$0xff]
        %v3380 = vld [vmem:[%s3370 + $0x48] sm:$0xff]
        %v3381 = vld [vmem:[%s3370 + $0x50] sm:$0xff]
        %v3382 = vld [vmem:[%s3370 + $0x58] sm:$0xff]
        %v3383 = vld [vmem:[%s3370 + $0x60] sm:$0xff]
        %v3384 = vld [vmem:[%s3370 + $0x68] sm:$0xff]
        %v3385 = vld [vmem:[%s3370 + $0x70] sm:$0xff]
        %v3386 = vld [vmem:[%s3370 + $0x78] sm:$0xff]
        %v3387 = vld [vmem:[%s3370 + $0x80] sm:$0xff]
        %v3388 = vld [vmem:[%s3370 + $0x88] sm:$0xff]
        %v3389 = vld [vmem:[%s3370 + $0x90] sm:$0xff]
        %v3390 = vld [vmem:[%s3370 + $0x98] sm:$0xff]
        %v3391 = vld [vmem:[%s3370 + $0xa0] sm:$0xff]
        %v3392 = vld [vmem:[%s3370 + $0xa8] sm:$0xff]
        %v3393 = vld [vmem:[%s3370 + $0xb0] sm:$0xff]
        %v3394 = vld [vmem:[%s3370 + $0xb8] sm:$0xff]
        %v3419 = vunpack.c.l.b16 %v3371
        %v3420 = vunpack.c.h.b16 %v3371
        %v3421 = vunpack.c.l.b16 %v3372
        %v3422 = vunpack.c.h.b16 %v3372
        %v3423 = vunpack.c.l.b16 %v3373
        %v3424 = vunpack.c.h.b16 %v3373
        %v3425 = vunpack.c.l.b16 %v3374
        %v3426 = vunpack.c.h.b16 %v3374
        %v3427 = vunpack.c.l.b16 %v3375
        %v3428 = vunpack.c.h.b16 %v3375
        %v3429 = vunpack.c.l.b16 %v3376
        %v3430 = vunpack.c.h.b16 %v3376
        %v3431 = vunpack.c.l.b16 %v3377
        %v3432 = vunpack.c.h.b16 %v3377
        %v3433 = vunpack.c.l.b16 %v3378
        %v3434 = vunpack.c.h.b16 %v3378
        %v3435 = vunpack.c.l.b16 %v3379
        %v3436 = vunpack.c.h.b16 %v3379
        %v3437 = vunpack.c.l.b16 %v3380
        %v3438 = vunpack.c.h.b16 %v3380
        %v3439 = vunpack.c.l.b16 %v3381
        %v3440 = vunpack.c.h.b16 %v3381
        %v3441 = vunpack.c.l.b16 %v3382
        %v3442 = vunpack.c.h.b16 %v3382
        %v3443 = vunpack.c.l.b16 %v3383
        %v3444 = vunpack.c.h.b16 %v3383
        %v3445 = vunpack.c.l.b16 %v3384
        %v3446 = vunpack.c.h.b16 %v3384
        %v3447 = vunpack.c.l.b16 %v3385
        %v3448 = vunpack.c.h.b16 %v3385
        %v3449 = vunpack.c.l.b16 %v3386
        %v3450 = vunpack.c.h.b16 %v3386
        %v3451 = vunpack.c.l.b16 %v3387
        %v3452 = vunpack.c.h.b16 %v3387
        %v3453 = vunpack.c.l.b16 %v3388
        %v3454 = vunpack.c.h.b16 %v3388
        %v3455 = vunpack.c.l.b16 %v3389
        %v3456 = vunpack.c.h.b16 %v3389
        %v3457 = vunpack.c.l.b16 %v3390
        %v3458 = vunpack.c.h.b16 %v3390
        %v3459 = vunpack.c.l.b16 %v3391
        %v3460 = vunpack.c.h.b16 %v3391
        %v3461 = vunpack.c.l.b16 %v3392
        %v3462 = vunpack.c.h.b16 %v3392
        %v3463 = vunpack.c.l.b16 %v3393
        %v3464 = vunpack.c.h.b16 %v3393
        %v3465 = vunpack.c.l.b16 %v3394
        %v3466 = vunpack.c.h.b16 %v3394
        %v3467 = vpack.c.b16 %v3421, %v3419
        %v3468 = vpack.c.b16 %v3422, %v3420
        %v3469 = vpack.c.b16 %v3425, %v3423
        %v3470 = vpack.c.b16 %v3426, %v3424
        %v3471 = vpack.c.b16 %v3429, %v3427
        %v3472 = vpack.c.b16 %v3430, %v3428
        %v3473 = vpack.c.b16 %v3433, %v3431
        %v3474 = vpack.c.b16 %v3434, %v3432
        %v3475 = vpack.c.b16 %v3437, %v3435
        %v3476 = vpack.c.b16 %v3438, %v3436
        %v3477 = vpack.c.b16 %v3441, %v3439
        %v3478 = vpack.c.b16 %v3442, %v3440
        %v3479 = vpack.c.b16 %v3445, %v3443
        %v3480 = vpack.c.b16 %v3446, %v3444
        %v3481 = vpack.c.b16 %v3449, %v3447
        %v3482 = vpack.c.b16 %v3450, %v3448
        %v3483 = vpack.c.b16 %v3453, %v3451
        %v3484 = vpack.c.b16 %v3454, %v3452
        %v3485 = vpack.c.b16 %v3457, %v3455
        %v3486 = vpack.c.b16 %v3458, %v3456
        %v3487 = vpack.c.b16 %v3461, %v3459
        %v3488 = vpack.c.b16 %v3462, %v3460
        %v3489 = vpack.c.b16 %v3465, %v3463
        %v3490 = vpack.c.b16 %v3466, %v3464
        %v3516 = vsel %vm1024, %v3226, 0
        %v3519 = vsel %vm1024, %v3227, 0
        %v3522 = vsel %vm1024, %v3228, 0
        %v3525 = vsel %vm1024, %v3229, 0
        %v3528 = vsel %vm1024, %v3230, 0
        %v3531 = vsel %vm1024, %v3231, 0
        %v3534 = vsel %vm1024, %v3232, 0
        %v3537 = vsel %vm1024, %v3233, 0
        %v3540 = vsel %vm1024, %v3234, 0
        %v3543 = vsel %vm1024, %v3235, 0
        %v3546 = vsel %vm1024, %v3236, 0
        %v3549 = vsel %vm1024, %v3237, 0
        %v3552 = vsel %vm1024, %v3238, 0
        %v3555 = vsel %vm1024, %v3239, 0
        %v3558 = vsel %vm1024, %v3240, 0
        %v3561 = vsel %vm1024, %v3241, 0
        %v3564 = vsel %vm1024, %v3242, 0
        %v3567 = vsel %vm1024, %v3243, 0
        %3569 = vmatprep.subr.bf16.mxu0 %v3468
        %3570 = vmatpush1.bf16.msra.mxu0 %v3467
        %3571 = vmatprep.subr.bf16.mxu0 %v3470
        %3572 = vmatpush1.bf16.msra.mxu0 %v3469
        %3573 = vmatprep.subr.bf16.mxu0 %v3472
        %3574 = vmatpush1.bf16.msra.mxu0 %v3471
        %3575 = vmatprep.subr.bf16.mxu0 %v3474
        %3576 = vmatpush1.bf16.msra.mxu0 %v3473
        %3577 = vmatprep.subr.bf16.mxu0 %v3476
        %3578 = vmatpush1.bf16.msra.mxu0 %v3475
        %3579 = vmatprep.subr.bf16.mxu0 %v3478
        %3580 = vmatpush1.bf16.msra.mxu0 %v3477
        %3581 = vmatprep.subr.bf16.mxu0 %v3480
        %3582 = vmatpush1.bf16.msra.mxu0 %v3479
        %3583 = vmatprep.subr.bf16.mxu0 %v3482
        %3584 = vmatpush1.bf16.msra.mxu0 %v3481
        %3585 = vmatprep.subr.bf16.mxu0 %v3484
        %3586 = vmatpush1.bf16.msra.mxu0 %v3483
        %3587 = vmatprep.subr.bf16.mxu0 %v3486
        %3588 = vmatpush1.bf16.msra.mxu0 %v3485
        %3589 = vmatprep.subr.bf16.mxu0 %v3488
        %3590 = vmatpush1.bf16.msra.mxu0 %v3487
        %3591 = vmatprep.subr.bf16.mxu0 %v3490
        %3592 = vmatpush1.bf16.msra.mxu0 %v3489
        %3593 = vmatprep.subr.bf16.mxu0 0
        %3594 = vmatpush1.bf16.msra.mxu0 0
        %3595 = vmatprep.subr.bf16.mxu0 0
        %3596 = vmatpush1.bf16.msra.mxu0 0
        %3597 = vmatprep.subr.bf16.mxu0 0
        %3598 = vmatpush1.bf16.msra.mxu0 0
        %3599 = vmatprep.subr.bf16.mxu0 0
        %3600 = vmatpush1.bf16.msra.mxu0 0
        %3601 = vmatprep.mubr.bf16.mxu0 %v3516
        %3602 = vmatmul.mubr.bf16.gmra.mrb[0].mxu0 %v3300
        %v3603 = vpop.f32.mrb[0].mxu0
        %v3604 = vadd.f32 0.0, %v3603
        %v3605 = vpop.f32.mrb[0].mxu0
        %v3606 = vpop.f32.mrb[0].mxu0
        %v3607 = vadd.f32 0.0, %v3606
        %v3608 = vpop.f32.mrb[0].mxu0
        %3609 = vmatprep.mubr.bf16.mxu0 %v3519
        %3610 = vmatmul.mubr.bf16.gmra.mrb[0].mxu0 %v3304
        %v3611 = vpop.f32.mrb[0].mxu0
        %v3612 = vadd.f32 0.0, %v3611
        %v3613 = vpop.f32.mrb[0].mxu0
        %v3614 = vpop.f32.mrb[0].mxu0
        %v3615 = vadd.f32 0.0, %v3614
        %v3616 = vpop.f32.mrb[0].mxu0
        %3617 = vmatprep.mubr.bf16.mxu0 %v3522
        %3618 = vmatmul.mubr.bf16.gmra.mrb[0].mxu0 %v3308
        %v3619 = vpop.f32.mrb[0].mxu0
        %v3620 = vadd.f32 0.0, %v3619
        %v3621 = vpop.f32.mrb[0].mxu0
        %v3622 = vadd.f32 0.0, %v3621
        %v3623 = vpop.f32.mrb[0].mxu0
        %v3624 = vadd.f32 0.0, %v3623
        %v3625 = vpop.f32.mrb[0].mxu0
        %v3626 = vadd.f32 0.0, %v3625
        %3627 = vmatprep.mubr.bf16.mxu0 %v3525
        %3628 = vmatmul.mubr.bf16.gmra.mrb[0].mxu0 %v3312
        %v3629 = vpop.f32.mrb[0].mxu0
        %v3630 = vadd.f32 0.0, %v3629
        %v3631 = vpop.f32.mrb[0].mxu0
        %v3632 = vadd.f32 0.0, %v3631
        %v3633 = vpop.f32.mrb[0].mxu0
        %v3634 = vadd.f32 0.0, %v3633
        %v3635 = vpop.f32.mrb[0].mxu0
        %v3636 = vadd.f32 0.0, %v3635
        %3637 = vmatprep.mubr.bf16.mxu0 %v3528
        %3638 = vmatmul.mubr.bf16.gmra.mrb[0].mxu0 %v3316
        %v3639 = vpop.f32.mrb[0].mxu0
        %v3640 = vadd.f32 0.0, %v3639
        %v3641 = vpop.f32.mrb[0].mxu0
        %v3642 = vadd.f32 0.0, %v3641
        %v3643 = vpop.f32.mrb[0].mxu0
        %v3644 = vadd.f32 0.0, %v3643
        %v3645 = vpop.f32.mrb[0].mxu0
        %v3646 = vadd.f32 0.0, %v3645
        %3647 = vmatprep.mubr.bf16.mxu0 %v3531
        %3648 = vmatmul.mubr.bf16.gmra.mrb[0].mxu0 %v3320
        %v3649 = vpop.f32.mrb[0].mxu0
        %v3650 = vadd.f32 0.0, %v3649
        %v3651 = vpop.f32.mrb[0].mxu0
        %v3652 = vadd.f32 0.0, %v3651
        %v3653 = vpop.f32.mrb[0].mxu0
        %v3654 = vadd.f32 0.0, %v3653
        %v3655 = vpop.f32.mrb[0].mxu0
        %v3656 = vadd.f32 0.0, %v3655
        %3657 = vmatprep.mubr.bf16.mxu0 %v3534
        %3658 = vmatmul.mubr.bf16.gmra.mrb[0].mxu0 %v3324
        %v3659 = vpop.f32.mrb[0].mxu0
        %v3660 = vadd.f32 0.0, %v3659
        %v3661 = vpop.f32.mrb[0].mxu0
        %v3662 = vadd.f32 0.0, %v3661
        %v3663 = vpop.f32.mrb[0].mxu0
        %v3664 = vadd.f32 0.0, %v3663
        %v3665 = vpop.f32.mrb[0].mxu0
        %v3666 = vadd.f32 0.0, %v3665
        %3667 = vmatprep.mubr.bf16.mxu0 %v3537
        %3668 = vmatmul.mubr.bf16.gmra.mrb[0].mxu0 %v3328
        %v3669 = vpop.f32.mrb[0].mxu0
        %v3670 = vadd.f32 0.0, %v3669
        %v3671 = vpop.f32.mrb[0].mxu0
        %v3672 = vadd.f32 0.0, %v3671
        %v3673 = vpop.f32.mrb[0].mxu0
        %v3674 = vadd.f32 0.0, %v3673
        %v3675 = vpop.f32.mrb[0].mxu0
        %v3676 = vadd.f32 0.0, %v3675
        %3677 = vmatprep.mubr.bf16.mxu0 %v3540
        %3678 = vmatmul.mubr.bf16.gmra.mrb[0].mxu0 %v3332
        %v3679 = vpop.f32.mrb[0].mxu0
        %v3680 = vadd.f32 0.0, %v3679
        %v3681 = vpop.f32.mrb[0].mxu0
        %v3682 = vadd.f32 0.0, %v3681
        %v3683 = vpop.f32.mrb[0].mxu0
        %v3684 = vadd.f32 0.0, %v3683
        %v3685 = vpop.f32.mrb[0].mxu0
        %v3686 = vadd.f32 0.0, %v3685
        %3687 = vmatprep.mubr.bf16.mxu0 %v3543
        %3688 = vmatmul.mubr.bf16.gmra.mrb[0].mxu0 %v3336
        %v3689 = vpop.f32.mrb[0].mxu0
        %v3690 = vadd.f32 0.0, %v3689
        %v3691 = vpop.f32.mrb[0].mxu0
        %v3692 = vadd.f32 0.0, %v3691
        %v3693 = vpop.f32.mrb[0].mxu0
        %v3694 = vadd.f32 0.0, %v3693
        %v3695 = vpop.f32.mrb[0].mxu0
        %v3696 = vadd.f32 0.0, %v3695
        %3697 = vmatprep.mubr.bf16.mxu0 %v3546
        %3698 = vmatmul.mubr.bf16.gmra.mrb[0].mxu0 %v3340
        %v3699 = vpop.f32.mrb[0].mxu0
        %v3700 = vadd.f32 0.0, %v3699
        %v3701 = vpop.f32.mrb[0].mxu0
        %v3702 = vadd.f32 0.0, %v3701
        %v3703 = vpop.f32.mrb[0].mxu0
        %v3704 = vadd.f32 0.0, %v3703
        %v3705 = vpop.f32.mrb[0].mxu0
        %v3706 = vadd.f32 0.0, %v3705
        %3707 = vmatprep.mubr.bf16.mxu0 %v3549
        %3708 = vmatmul.mubr.bf16.gmra.mrb[0].mxu0 %v3344
        %v3709 = vpop.f32.mrb[0].mxu0
        %v3710 = vadd.f32 0.0, %v3709
        %v3711 = vpop.f32.mrb[0].mxu0
        %v3712 = vadd.f32 0.0, %v3711
        %v3713 = vpop.f32.mrb[0].mxu0
        %v3714 = vadd.f32 0.0, %v3713
        %v3715 = vpop.f32.mrb[0].mxu0
        %v3716 = vadd.f32 0.0, %v3715
        %3717 = vmatprep.mubr.bf16.mxu0 %v3552
        %3718 = vmatmul.mubr.bf16.gmra.mrb[0].mxu0 %v3348
        %v3719 = vpop.f32.mrb[0].mxu0
        %v3720 = vadd.f32 0.0, %v3719
        %v3721 = vpop.f32.mrb[0].mxu0
        %v3722 = vadd.f32 0.0, %v3721
        %v3723 = vpop.f32.mrb[0].mxu0
        %v3724 = vadd.f32 0.0, %v3723
        %v3725 = vpop.f32.mrb[0].mxu0
        %v3726 = vadd.f32 0.0, %v3725
        %3727 = vmatprep.mubr.bf16.mxu0 %v3555
        %3728 = vmatmul.mubr.bf16.gmra.mrb[0].mxu0 %v3352
        %v3729 = vpop.f32.mrb[0].mxu0
        %v3730 = vadd.f32 0.0, %v3729
        %v3731 = vpop.f32.mrb[0].mxu0
        %v3732 = vadd.f32 0.0, %v3731
        %v3733 = vpop.f32.mrb[0].mxu0
        %v3734 = vadd.f32 0.0, %v3733
        %v3735 = vpop.f32.mrb[0].mxu0
        %v3736 = vadd.f32 0.0, %v3735
        %3737 = vmatprep.mubr.bf16.mxu0 %v3558
        %3738 = vmatmul.mubr.bf16.gmra.mrb[0].mxu0 %v3356
        %v3739 = vpop.f32.mrb[0].mxu0
        %v3740 = vadd.f32 0.0, %v3739
        %v3741 = vpop.f32.mrb[0].mxu0
        %v3742 = vadd.f32 0.0, %v3741
        %v3743 = vpop.f32.mrb[0].mxu0
        %v3744 = vadd.f32 0.0, %v3743
        %v3745 = vpop.f32.mrb[0].mxu0
        %v3746 = vadd.f32 0.0, %v3745
        %3747 = vmatprep.mubr.bf16.mxu0 %v3561
        %3748 = vmatmul.mubr.bf16.gmra.mrb[0].mxu0 %v3360
        %v3749 = vpop.f32.mrb[0].mxu0
        %v3750 = vadd.f32 0.0, %v3749
        %v3751 = vpop.f32.mrb[0].mxu0
        %v3752 = vadd.f32 0.0, %v3751
        %v3753 = vpop.f32.mrb[0].mxu0
        %v3754 = vadd.f32 0.0, %v3753
        %v3755 = vpop.f32.mrb[0].mxu0
        %v3756 = vadd.f32 0.0, %v3755
        %3757 = vmatprep.mubr.bf16.mxu0 %v3564
        %3758 = vmatmul.mubr.bf16.gmra.mrb[0].mxu0 %v3364
        %v3759 = vpop.f32.mrb[0].mxu0
        %v3760 = vadd.f32 0.0, %v3759
        %v3761 = vpop.f32.mrb[0].mxu0
        %v3762 = vadd.f32 0.0, %v3761
        %v3763 = vpop.f32.mrb[0].mxu0
        %v3764 = vadd.f32 0.0, %v3763
        %v3765 = vpop.f32.mrb[0].mxu0
        %v3766 = vadd.f32 0.0, %v3765
        %3767 = vmatprep.mubr.bf16.mxu0 %v3567
        %3768 = vmatmul.mubr.bf16.gmra.mrb[0].mxu0 %v3368
        %v3769 = vpop.f32.mrb[0].mxu0
        %v3770 = vpop.f32.mrb[0].mxu0
        %v3771 = vadd.f32 0.0, %v3770
        %v3772 = vpop.f32.mrb[0].mxu0
        %v3773 = vpop.f32.mrb[0].mxu0
        %v3774 = vadd.f32 0.0, %v3773
        %3775 = vdwg.mxu0
        %3808 = vrot.lane.b32.xlu0 %v3612, 64
        %v3809 = vpop.permute.xlu0 %3808
        %3810 = vrot.lane.b32.xlu0 %v3615, 64
        %v3811 = vpop.permute.xlu0 %3810
        %3812 = vrot.lane.b32.xlu0 %v3620, 64
        %v3813 = vpop.permute.xlu0 %3812
        %3814 = vrot.lane.b32.xlu0 %v3624, 64
        %v3815 = vpop.permute.xlu0 %3814
        %3816 = vrot.lane.b32.xlu0 %v3630, 64
        %v3817 = vpop.permute.xlu0 %3816
        %3818 = vrot.lane.b32.xlu0 %v3634, 64
        %v3819 = vpop.permute.xlu0 %3818
        %3820 = vrot.lane.b32.xlu0 %v3640, 64
        %v3821 = vpop.permute.xlu0 %3820
        %3822 = vrot.lane.b32.xlu0 %v3644, 64
        %v3823 = vpop.permute.xlu0 %3822
        %3824 = vrot.lane.b32.xlu0 %v3650, 64
        %v3825 = vpop.permute.xlu0 %3824
        %3826 = vrot.lane.b32.xlu0 %v3654, 64
        %v3827 = vpop.permute.xlu0 %3826
        %3828 = vrot.lane.b32.xlu0 %v3660, 64
        %v3829 = vpop.permute.xlu0 %3828
        %3830 = vrot.lane.b32.xlu0 %v3664, 64
        %v3831 = vpop.permute.xlu0 %3830
        %3832 = vrot.lane.b32.xlu0 %v3670, 64
        %v3833 = vpop.permute.xlu0 %3832
        %3834 = vrot.lane.b32.xlu0 %v3674, 64
        %v3835 = vpop.permute.xlu0 %3834
        %3836 = vrot.lane.b32.xlu0 %v3680, 64
        %v3837 = vpop.permute.xlu0 %3836
        %3838 = vrot.lane.b32.xlu0 %v3684, 64
        %v3839 = vpop.permute.xlu0 %3838
        %3840 = vrot.lane.b32.xlu0 %v3690, 64
        %v3841 = vpop.permute.xlu0 %3840
        %3842 = vrot.lane.b32.xlu0 %v3694, 64
        %v3843 = vpop.permute.xlu0 %3842
        %3844 = vrot.lane.b32.xlu0 %v3700, 64
        %v3845 = vpop.permute.xlu0 %3844
        %3846 = vrot.lane.b32.xlu0 %v3704, 64
        %v3847 = vpop.permute.xlu0 %3846
        %3848 = vrot.lane.b32.xlu0 %v3710, 64
        %v3849 = vpop.permute.xlu0 %3848
        %3850 = vrot.lane.b32.xlu0 %v3714, 64
        %v3851 = vpop.permute.xlu0 %3850
        %3852 = vrot.lane.b32.xlu0 %v3720, 64
        %v3853 = vpop.permute.xlu0 %3852
        %3854 = vrot.lane.b32.xlu0 %v3724, 64
        %v3855 = vpop.permute.xlu0 %3854
        %3856 = vrot.lane.b32.xlu0 %v3730, 64
        %v3857 = vpop.permute.xlu0 %3856
        %3858 = vrot.lane.b32.xlu0 %v3734, 64
        %v3859 = vpop.permute.xlu0 %3858
        %3860 = vrot.lane.b32.xlu0 %v3740, 64
        %v3861 = vpop.permute.xlu0 %3860
        %3862 = vrot.lane.b32.xlu0 %v3744, 64
        %v3863 = vpop.permute.xlu0 %3862
        %3864 = vrot.lane.b32.xlu0 %v3750, 64
        %v3865 = vpop.permute.xlu0 %3864
        %3866 = vrot.lane.b32.xlu0 %v3754, 64
        %v3867 = vpop.permute.xlu0 %3866
        %3868 = vrot.lane.b32.xlu0 %v3760, 64
        %v3869 = vpop.permute.xlu0 %3868
        %3870 = vrot.lane.b32.xlu0 %v3764, 64
        %v3871 = vpop.permute.xlu0 %3870
        %v3904 = vadd.f32 %v3604, %v3809
        %v3905 = vadd.f32 %v3607, %v3811
        %v3906 = vadd.f32 %v3612, %v3813
        %v3907 = vadd.f32 %v3615, %v3815
        %v3908 = vadd.f32 %v3620, %v3817
        %v3909 = vadd.f32 %v3624, %v3819
        %v3910 = vadd.f32 %v3630, %v3821
        %v3911 = vadd.f32 %v3634, %v3823
        %v3912 = vadd.f32 %v3640, %v3825
        %v3913 = vadd.f32 %v3644, %v3827
        %v3914 = vadd.f32 %v3650, %v3829
        %v3915 = vadd.f32 %v3654, %v3831
        %v3916 = vadd.f32 %v3660, %v3833
        %v3917 = vadd.f32 %v3664, %v3835
        %v3918 = vadd.f32 %v3670, %v3837
        %v3919 = vadd.f32 %v3674, %v3839
        %v3920 = vadd.f32 %v3680, %v3841
        %v3921 = vadd.f32 %v3684, %v3843
        %v3922 = vadd.f32 %v3690, %v3845
        %v3923 = vadd.f32 %v3694, %v3847
        %v3924 = vadd.f32 %v3700, %v3849
        %v3925 = vadd.f32 %v3704, %v3851
        %v3926 = vadd.f32 %v3710, %v3853
        %v3927 = vadd.f32 %v3714, %v3855
        %v3928 = vadd.f32 %v3720, %v3857
        %v3929 = vadd.f32 %v3724, %v3859
        %v3930 = vadd.f32 %v3730, %v3861
        %v3931 = vadd.f32 %v3734, %v3863
        %v3932 = vadd.f32 %v3740, %v3865
        %v3933 = vadd.f32 %v3744, %v3867
        %v3934 = vadd.f32 %v3750, %v3869
        %v3935 = vadd.f32 %v3754, %v3871
        %v3936 = vadd.f32 %v3904, %v3622
        %v3937 = vadd.f32 %v3905, %v3626
        %v3938 = vadd.f32 %v3906, %v3632
        %v3939 = vadd.f32 %v3907, %v3636
        %v3940 = vadd.f32 %v3908, %v3642
        %v3941 = vadd.f32 %v3909, %v3646
        %v3942 = vadd.f32 %v3910, %v3652
        %v3943 = vadd.f32 %v3911, %v3656
        %v3944 = vadd.f32 %v3912, %v3662
        %v3945 = vadd.f32 %v3913, %v3666
        %v3946 = vadd.f32 %v3914, %v3672
        %v3947 = vadd.f32 %v3915, %v3676
        %v3948 = vadd.f32 %v3916, %v3682
        %v3949 = vadd.f32 %v3917, %v3686
        %v3950 = vadd.f32 %v3918, %v3692
        %v3951 = vadd.f32 %v3919, %v3696
        %v3952 = vadd.f32 %v3920, %v3702
        %v3953 = vadd.f32 %v3921, %v3706
        %v3954 = vadd.f32 %v3922, %v3712
        %v3955 = vadd.f32 %v3923, %v3716
        %v3956 = vadd.f32 %v3924, %v3722
        %v3957 = vadd.f32 %v3925, %v3726
        %v3958 = vadd.f32 %v3926, %v3732
        %v3959 = vadd.f32 %v3927, %v3736
        %v3960 = vadd.f32 %v3928, %v3742
        %v3961 = vadd.f32 %v3929, %v3746
        %v3962 = vadd.f32 %v3930, %v3752
        %v3963 = vadd.f32 %v3931, %v3756
        %v3964 = vadd.f32 %v3932, %v3762
        %v3965 = vadd.f32 %v3933, %v3766
        %v3966 = vadd.f32 %v3934, %v3771
        %v3967 = vadd.f32 %v3935, %v3774
        %s3968 = scalar_lea.vmem %s2, 2
        %v3969 = vld [vmem:[%s3968] sm:$0x1]
        %v3971 = vlaneseq
        %v3972 = vshrl.u32 %v3971, 7
        %v3973 = vsub.s32 0, %v3972
        %v3974 = vrot.slane %v3969, %v3973
        %v3976 = vmul.f32 %v3936, %v3974
        %v3977 = vmul.f32 %v3937, %v3974
        %v3978 = vmul.f32 %v3938, %v3974
        %v3979 = vmul.f32 %v3939, %v3974
        %v3980 = vmul.f32 %v3940, %v3974
        %v3981 = vmul.f32 %v3941, %v3974
        %v3982 = vmul.f32 %v3942, %v3974
        %v3983 = vmul.f32 %v3943, %v3974
        %v3984 = vmul.f32 %v3944, %v3974
        %v3985 = vmul.f32 %v3945, %v3974
        %v3986 = vmul.f32 %v3946, %v3974
        %v3987 = vmul.f32 %v3947, %v3974
        %v3988 = vmul.f32 %v3948, %v3974
        %v3989 = vmul.f32 %v3949, %v3974
        %v3990 = vmul.f32 %v3950, %v3974
        %v3991 = vmul.f32 %v3951, %v3974
        %v3992 = vmul.f32 %v3952, %v3974
        %v3993 = vmul.f32 %v3953, %v3974
        %v3994 = vmul.f32 %v3954, %v3974
        %v3995 = vmul.f32 %v3955, %v3974
        %v3996 = vmul.f32 %v3956, %v3974
        %v3997 = vmul.f32 %v3957, %v3974
        %v3998 = vmul.f32 %v3958, %v3974
        %v3999 = vmul.f32 %v3959, %v3974
        %v4000 = vmul.f32 %v3960, %v3974
        %v4001 = vmul.f32 %v3961, %v3974
        %v4002 = vmul.f32 %v3962, %v3974
        %v4003 = vmul.f32 %v3963, %v3974
        %v4004 = vmul.f32 %v3964, %v3974
        %v4005 = vmul.f32 %v3965, %v3974
        %v4006 = vmul.f32 %v3966, %v3974
        %v4007 = vmul.f32 %v3967, %v3974
        %s4008 = scalar_lea.vmem %s3, 2
        %v4009 = vld [vmem:[%s4008] sm:$0x1]
        %v4011 = vlaneseq
        %v4012 = vshrl.u32 %v4011, 7
        %v4013 = vsub.s32 0, %v4012
        %v4014 = vrot.slane %v4009, %v4013
        %v4016 = vadd.f32 %v3976, %v4014
        %v4017 = vadd.f32 %v3977, %v4014
        %v4018 = vadd.f32 %v3978, %v4014
        %v4019 = vadd.f32 %v3979, %v4014
        %v4020 = vadd.f32 %v3980, %v4014
        %v4021 = vadd.f32 %v3981, %v4014
        %v4022 = vadd.f32 %v3982, %v4014
        %v4023 = vadd.f32 %v3983, %v4014
        %v4024 = vadd.f32 %v3984, %v4014
        %v4025 = vadd.f32 %v3985, %v4014
        %v4026 = vadd.f32 %v3986, %v4014
        %v4027 = vadd.f32 %v3987, %v4014
        %v4028 = vadd.f32 %v3988, %v4014
        %v4029 = vadd.f32 %v3989, %v4014
        %v4030 = vadd.f32 %v3990, %v4014
        %v4031 = vadd.f32 %v3991, %v4014
        %v4032 = vadd.f32 %v3992, %v4014
        %v4033 = vadd.f32 %v3993, %v4014
        %v4034 = vadd.f32 %v3994, %v4014
        %v4035 = vadd.f32 %v3995, %v4014
        %v4036 = vadd.f32 %v3996, %v4014
        %v4037 = vadd.f32 %v3997, %v4014
        %v4038 = vadd.f32 %v3998, %v4014
        %v4039 = vadd.f32 %v3999, %v4014
        %v4040 = vadd.f32 %v4000, %v4014
        %v4041 = vadd.f32 %v4001, %v4014
        %v4042 = vadd.f32 %v4002, %v4014
        %v4043 = vadd.f32 %v4003, %v4014
        %v4044 = vadd.f32 %v4004, %v4014
        %v4045 = vadd.f32 %v4005, %v4014
        %v4046 = vadd.f32 %v4006, %v4014
        %v4047 = vadd.f32 %v4007, %v4014
        %v4048 = vmax.f32 %v4016, 0.0
        %v4049 = vmax.f32 %v4017, 0.0
        %v4050 = vmax.f32 %v4018, 0.0
        %v4051 = vmax.f32 %v4019, 0.0
        %v4052 = vmax.f32 %v4020, 0.0
        %v4053 = vmax.f32 %v4021, 0.0
        %v4054 = vmax.f32 %v4022, 0.0
        %v4055 = vmax.f32 %v4023, 0.0
        %v4056 = vmax.f32 %v4024, 0.0
        %v4057 = vmax.f32 %v4025, 0.0
        %v4058 = vmax.f32 %v4026, 0.0
        %v4059 = vmax.f32 %v4027, 0.0
        %v4060 = vmax.f32 %v4028, 0.0
        %v4061 = vmax.f32 %v4029, 0.0
        %v4062 = vmax.f32 %v4030, 0.0
        %v4063 = vmax.f32 %v4031, 0.0
        %v4064 = vmax.f32 %v4032, 0.0
        %v4065 = vmax.f32 %v4033, 0.0
        %v4066 = vmax.f32 %v4034, 0.0
        %v4067 = vmax.f32 %v4035, 0.0
        %v4068 = vmax.f32 %v4036, 0.0
        %v4069 = vmax.f32 %v4037, 0.0
        %v4070 = vmax.f32 %v4038, 0.0
        %v4071 = vmax.f32 %v4039, 0.0
        %v4072 = vmax.f32 %v4040, 0.0
        %v4073 = vmax.f32 %v4041, 0.0
        %v4074 = vmax.f32 %v4042, 0.0
        %v4075 = vmax.f32 %v4043, 0.0
        %v4076 = vmax.f32 %v4044, 0.0
        %v4077 = vmax.f32 %v4045, 0.0
        %v4078 = vmax.f32 %v4046, 0.0
        %v4079 = vmax.f32 %v4047, 0.0
        %4080 = vst.msk [vmem:[#allocation2 + $0x10] sm:$0xff] %vm1024, %v4048
        %4081 = vst.msk [vmem:[#allocation2 + $0x18] sm:$0xff] %vm1024, %v4049
        %4082 = vst.msk [vmem:[#allocation2 + $0x20] sm:$0xff] %vm1024, %v4050
        %4083 = vst.msk [vmem:[#allocation2 + $0x28] sm:$0xff] %vm1024, %v4051
        %4084 = vst.msk [vmem:[#allocation2 + $0x30] sm:$0xff] %vm1024, %v4052
        %4085 = vst.msk [vmem:[#allocation2 + $0x38] sm:$0xff] %vm1024, %v4053
        %4086 = vst.msk [vmem:[#allocation2 + $0x40] sm:$0xff] %vm1024, %v4054
        %4087 = vst.msk [vmem:[#allocation2 + $0x48] sm:$0xff] %vm1024, %v4055
        %4088 = vst.msk [vmem:[#allocation2 + $0x50] sm:$0xff] %vm1024, %v4056
        %4089 = vst.msk [vmem:[#allocation2 + $0x58] sm:$0xff] %vm1024, %v4057
        %4090 = vst.msk [vmem:[#allocation2 + $0x60] sm:$0xff] %vm1024, %v4058
        %4091 = vst.msk [vmem:[#allocation2 + $0x68] sm:$0xff] %vm1024, %v4059
        %4092 = vst.msk [vmem:[#allocation2 + $0x70] sm:$0xff] %vm1024, %v4060
        %4093 = vst.msk [vmem:[#allocation2 + $0x78] sm:$0xff] %vm1024, %v4061
        %4094 = vst.msk [vmem:[#allocation2 + $0x80] sm:$0xff] %vm1024, %v4062
        %4095 = vst.msk [vmem:[#allocation2 + $0x88] sm:$0xff] %vm1024, %v4063
        %4096 = vst.msk [vmem:[#allocation2 + $0x90] sm:$0xff] %vm1024, %v4064
        %4097 = vst.msk [vmem:[#allocation2 + $0x98] sm:$0xff] %vm1024, %v4065
        %4098 = vst.msk [vmem:[#allocation2 + $0xa0] sm:$0xff] %vm1024, %v4066
        %4099 = vst.msk [vmem:[#allocation2 + $0xa8] sm:$0xff] %vm1024, %v4067
        %4100 = vst.msk [vmem:[#allocation2 + $0xb0] sm:$0xff] %vm1024, %v4068
        %4101 = vst.msk [vmem:[#allocation2 + $0xb8] sm:$0xff] %vm1024, %v4069
        %4102 = vst.msk [vmem:[#allocation2 + $0xc0] sm:$0xff] %vm1024, %v4070
        %4103 = vst.msk [vmem:[#allocation2 + $0xc8] sm:$0xff] %vm1024, %v4071
        %4104 = vst.msk [vmem:[#allocation2 + $0xd0] sm:$0xff] %vm1024, %v4072
        %4105 = vst.msk [vmem:[#allocation2 + $0xd8] sm:$0xff] %vm1024, %v4073
        %4106 = vst.msk [vmem:[#allocation2 + $0xe0] sm:$0xff] %vm1024, %v4074
        %4107 = vst.msk [vmem:[#allocation2 + $0xe8] sm:$0xff] %vm1024, %v4075
        %4108 = vst.msk [vmem:[#allocation2 + $0xf0] sm:$0xff] %vm1024, %v4076
        %4109 = vst.msk [vmem:[#allocation2 + $0xf8] sm:$0xff] %vm1024, %v4077
        %4110 = vst.msk [vmem:[#allocation2 + $0x100] sm:$0xff] %vm1024, %v4078
        %4111 = vst.msk [vmem:[#allocation2 + $0x108] sm:$0xff] %vm1024, %v4079
        %v4112 = vld [vmem:[#allocation2] sm:$0xff]
        %v4113 = vld [vmem:[#allocation2 + $0x8] sm:$0xff]
        %v4114 = vld [vmem:[#allocation2 + $0x10] sm:$0xff]
        %v4115 = vld [vmem:[#allocation2 + $0x18] sm:$0xff]
        %v4116 = vld [vmem:[#allocation2 + $0x20] sm:$0xff]
        %v4117 = vld [vmem:[#allocation2 + $0x28] sm:$0xff]
        %v4118 = vld [vmem:[#allocation2 + $0x30] sm:$0xff]
        %v4119 = vld [vmem:[#allocation2 + $0x38] sm:$0xff]
        %v4120 = vld [vmem:[#allocation2 + $0x40] sm:$0xff]
        %v4121 = vld [vmem:[#allocation2 + $0x48] sm:$0xff]
        %v4122 = vld [vmem:[#allocation2 + $0x50] sm:$0xff]
        %v4123 = vld [vmem:[#allocation2 + $0x58] sm:$0xff]
        %v4124 = vld [vmem:[#allocation2 + $0x60] sm:$0xff]
        %v4125 = vld [vmem:[#allocation2 + $0x68] sm:$0xff]
        %v4126 = vld [vmem:[#allocation2 + $0x70] sm:$0xff]
        %v4127 = vld [vmem:[#allocation2 + $0x78] sm:$0xff]
        %v4128 = vld [vmem:[#allocation2 + $0x80] sm:$0xff]
        %v4129 = vld [vmem:[#allocation2 + $0x88] sm:$0xff]
        %v4130 = vld [vmem:[#allocation2 + $0x90] sm:$0xff]
        %v4131 = vld [vmem:[#allocation2 + $0x98] sm:$0xff]
        %v4132 = vld [vmem:[#allocation2 + $0xa0] sm:$0xff]
        %v4133 = vld [vmem:[#allocation2 + $0xa8] sm:$0xff]
        %v4134 = vld [vmem:[#allocation2 + $0xb0] sm:$0xff]
        %v4135 = vld [vmem:[#allocation2 + $0xb8] sm:$0xff]
        %v4136 = vld [vmem:[#allocation2 + $0xc0] sm:$0xff]
        %v4137 = vld [vmem:[#allocation2 + $0xc8] sm:$0xff]
        %v4138 = vld [vmem:[#allocation2 + $0xd0] sm:$0xff]
        %v4139 = vld [vmem:[#allocation2 + $0xd8] sm:$0xff]
        %v4140 = vld [vmem:[#allocation2 + $0xe0] sm:$0xff]
        %v4141 = vld [vmem:[#allocation2 + $0xe8] sm:$0xff]
        %v4142 = vld [vmem:[#allocation2 + $0xf0] sm:$0xff]
        %v4143 = vld [vmem:[#allocation2 + $0xf8] sm:$0xff]
        %v4144 = vld [vmem:[#allocation2 + $0x100] sm:$0xff]
        %v4145 = vld [vmem:[#allocation2 + $0x108] sm:$0xff]
        %v4146 = vld [vmem:[#allocation2 + $0x110] sm:$0xff]
        %v4147 = vld [vmem:[#allocation2 + $0x118] sm:$0xff]
        %v4148 = vpack.c.bf16 %v4113, %v4112
        %v4149 = vpack.c.bf16 %v4115, %v4114
        %v4150 = vpack.c.bf16 %v4117, %v4116
        %v4151 = vpack.c.bf16 %v4119, %v4118
        %v4152 = vpack.c.bf16 %v4121, %v4120
        %v4153 = vpack.c.bf16 %v4123, %v4122
        %v4154 = vpack.c.bf16 %v4125, %v4124
        %v4155 = vpack.c.bf16 %v4127, %v4126
        %v4156 = vpack.c.bf16 %v4129, %v4128
        %v4157 = vpack.c.bf16 %v4131, %v4130
        %v4158 = vpack.c.bf16 %v4133, %v4132
        %v4159 = vpack.c.bf16 %v4135, %v4134
        %v4160 = vpack.c.bf16 %v4137, %v4136
        %v4161 = vpack.c.bf16 %v4139, %v4138
        %v4162 = vpack.c.bf16 %v4141, %v4140
        %v4163 = vpack.c.bf16 %v4143, %v4142
        %v4164 = vpack.c.bf16 %v4145, %v4144
        %v4165 = vpack.c.bf16 %v4147, %v4146
        %v4166 = vrot.slane %v4112, 7
        %v4167 = vrot.slane %v4113, 7
        %v4168 = vrot.slane %v4114, 7
        %v4169 = vrot.slane %v4115, 7
        %v4170 = vrot.slane %v4116, 7
        %v4171 = vrot.slane %v4117, 7
        %v4172 = vrot.slane %v4118, 7
        %v4173 = vrot.slane %v4119, 7
        %v4174 = vrot.slane %v4120, 7
        %v4175 = vrot.slane %v4121, 7
        %v4176 = vrot.slane %v4122, 7
        %v4177 = vrot.slane %v4123, 7
        %v4178 = vrot.slane %v4124, 7
        %v4179 = vrot.slane %v4125, 7
        %v4180 = vrot.slane %v4126, 7
        %v4181 = vrot.slane %v4127, 7
        %v4182 = vrot.slane %v4128, 7
        %v4183 = vrot.slane %v4129, 7
        %v4184 = vrot.slane %v4130, 7
        %v4185 = vrot.slane %v4131, 7
        %v4186 = vrot.slane %v4132, 7
        %v4187 = vrot.slane %v4133, 7
        %v4188 = vrot.slane %v4134, 7
        %v4189 = vrot.slane %v4135, 7
        %v4190 = vrot.slane %v4136, 7
        %v4191 = vrot.slane %v4137, 7
        %v4192 = vrot.slane %v4138, 7
        %v4193 = vrot.slane %v4139, 7
        %v4194 = vrot.slane %v4140, 7
        %v4195 = vrot.slane %v4141, 7
        %v4196 = vrot.slane %v4142, 7
        %v4197 = vrot.slane %v4143, 7
        %v4198 = vrot.slane %v4144, 7
        %v4199 = vrot.slane %v4145, 7
        %v4200 = vrot.slane %v4146, 7
        %v4201 = vrot.slane %v4147, 7
        %v4202 = vsel %vm500, %v4200, %v4201
        %v4203 = vsel %vm500, %v4199, %v4200
        %v4204 = vsel %vm500, %v4198, %v4199
        %v4205 = vsel %vm500, %v4197, %v4198
        %v4206 = vsel %vm500, %v4196, %v4197
        %v4207 = vsel %vm500, %v4195, %v4196
        %v4208 = vsel %vm500, %v4194, %v4195
        %v4209 = vsel %vm500, %v4193, %v4194
        %v4210 = vsel %vm500, %v4192, %v4193
        %v4211 = vsel %vm500, %v4191, %v4192
        %v4212 = vsel %vm500, %v4190, %v4191
        %v4213 = vsel %vm500, %v4189, %v4190
        %v4214 = vsel %vm500, %v4188, %v4189
        %v4215 = vsel %vm500, %v4187, %v4188
        %v4216 = vsel %vm500, %v4186, %v4187
        %v4217 = vsel %vm500, %v4185, %v4186
        %v4218 = vsel %vm500, %v4184, %v4185
        %v4219 = vsel %vm500, %v4183, %v4184
        %v4220 = vsel %vm500, %v4182, %v4183
        %v4221 = vsel %vm500, %v4181, %v4182
        %v4222 = vsel %vm500, %v4180, %v4181
        %v4223 = vsel %vm500, %v4179, %v4180
        %v4224 = vsel %vm500, %v4178, %v4179
        %v4225 = vsel %vm500, %v4177, %v4178
        %v4226 = vsel %vm500, %v4176, %v4177
        %v4227 = vsel %vm500, %v4175, %v4176
        %v4228 = vsel %vm500, %v4174, %v4175
        %v4229 = vsel %vm500, %v4173, %v4174
        %v4230 = vsel %vm500, %v4172, %v4173
        %v4231 = vsel %vm500, %v4171, %v4172
        %v4232 = vsel %vm500, %v4170, %v4171
        %v4233 = vsel %vm500, %v4169, %v4170
        %v4234 = vsel %vm500, %v4168, %v4169
        %v4235 = vsel %vm500, %v4167, %v4168
        %v4236 = vsel %vm500, %v4166, %v4167
        %v4237 = vsel %vm500, %v4201, %v4166
        %v4238 = vpack.c.bf16 %v4236, %v4237
        %v4239 = vpack.c.bf16 %v4234, %v4235
        %v4240 = vpack.c.bf16 %v4232, %v4233
        %v4241 = vpack.c.bf16 %v4230, %v4231
        %v4242 = vpack.c.bf16 %v4228, %v4229
        %v4243 = vpack.c.bf16 %v4226, %v4227
        %v4244 = vpack.c.bf16 %v4224, %v4225
        %v4245 = vpack.c.bf16 %v4222, %v4223
        %v4246 = vpack.c.bf16 %v4220, %v4221
        %v4247 = vpack.c.bf16 %v4218, %v4219
        %v4248 = vpack.c.bf16 %v4216, %v4217
        %v4249 = vpack.c.bf16 %v4214, %v4215
        %v4250 = vpack.c.bf16 %v4212, %v4213
        %v4251 = vpack.c.bf16 %v4210, %v4211
        %v4252 = vpack.c.bf16 %v4208, %v4209
        %v4253 = vpack.c.bf16 %v4206, %v4207
        %v4254 = vpack.c.bf16 %v4204, %v4205
        %v4255 = vpack.c.bf16 %v4202, %v4203
        %v4256 = vsel %vm681, %v4238, 0
        %v4257 = vsel %vm682, %v4239, 0
        %v4258 = vsel %vm683, %v4240, 0
        %v4259 = vsel %vm684, %v4241, 0
        %v4260 = vsel %vm685, %v4242, 0
        %v4261 = vsel %vm686, %v4243, 0
        %v4262 = vsel %vm687, %v4244, 0
        %v4263 = vsel %vm688, %v4245, 0
        %v4264 = vsel %vm689, %v4246, 0
        %v4265 = vsel %vm690, %v4247, 0
        %v4266 = vsel %vm691, %v4248, 0
        %v4267 = vsel %vm692, %v4249, 0
        %v4268 = vsel %vm693, %v4250, 0
        %v4269 = vsel %vm694, %v4251, 0
        %v4270 = vsel %vm695, %v4252, 0
        %v4271 = vsel %vm696, %v4253, 0
        %v4272 = vsel %vm697, %v4254, 0
        %v4273 = vsel %vm698, %v4255, 0
        %v4274 = vrot.slane %v4112, 1
        %v4275 = vrot.slane %v4113, 1
        %v4276 = vrot.slane %v4114, 1
        %v4277 = vrot.slane %v4115, 1
        %v4278 = vrot.slane %v4116, 1
        %v4279 = vrot.slane %v4117, 1
        %v4280 = vrot.slane %v4118, 1
        %v4281 = vrot.slane %v4119, 1
        %v4282 = vrot.slane %v4120, 1
        %v4283 = vrot.slane %v4121, 1
        %v4284 = vrot.slane %v4122, 1
        %v4285 = vrot.slane %v4123, 1
        %v4286 = vrot.slane %v4124, 1
        %v4287 = vrot.slane %v4125, 1
        %v4288 = vrot.slane %v4126, 1
        %v4289 = vrot.slane %v4127, 1
        %v4290 = vrot.slane %v4128, 1
        %v4291 = vrot.slane %v4129, 1
        %v4292 = vrot.slane %v4130, 1
        %v4293 = vrot.slane %v4131, 1
        %v4294 = vrot.slane %v4132, 1
        %v4295 = vrot.slane %v4133, 1
        %v4296 = vrot.slane %v4134, 1
        %v4297 = vrot.slane %v4135, 1
        %v4298 = vrot.slane %v4136, 1
        %v4299 = vrot.slane %v4137, 1
        %v4300 = vrot.slane %v4138, 1
        %v4301 = vrot.slane %v4139, 1
        %v4302 = vrot.slane %v4140, 1
        %v4303 = vrot.slane %v4141, 1
        %v4304 = vrot.slane %v4142, 1
        %v4305 = vrot.slane %v4143, 1
        %v4306 = vrot.slane %v4144, 1
        %v4307 = vrot.slane %v4145, 1
        %v4308 = vrot.slane %v4146, 1
        %v4309 = vrot.slane %v4147, 1
        %v4310 = vsel %vm753, %v4308, %v4309
        %v4311 = vsel %vm753, %v4307, %v4308
        %v4312 = vsel %vm753, %v4306, %v4307
        %v4313 = vsel %vm753, %v4305, %v4306
        %v4314 = vsel %vm753, %v4304, %v4305
        %v4315 = vsel %vm753, %v4303, %v4304
        %v4316 = vsel %vm753, %v4302, %v4303
        %v4317 = vsel %vm753, %v4301, %v4302
        %v4318 = vsel %vm753, %v4300, %v4301
        %v4319 = vsel %vm753, %v4299, %v4300
        %v4320 = vsel %vm753, %v4298, %v4299
        %v4321 = vsel %vm753, %v4297, %v4298
        %v4322 = vsel %vm753, %v4296, %v4297
        %v4323 = vsel %vm753, %v4295, %v4296
        %v4324 = vsel %vm753, %v4294, %v4295
        %v4325 = vsel %vm753, %v4293, %v4294
        %v4326 = vsel %vm753, %v4292, %v4293
        %v4327 = vsel %vm753, %v4291, %v4292
        %v4328 = vsel %vm753, %v4290, %v4291
        %v4329 = vsel %vm753, %v4289, %v4290
        %v4330 = vsel %vm753, %v4288, %v4289
        %v4331 = vsel %vm753, %v4287, %v4288
        %v4332 = vsel %vm753, %v4286, %v4287
        %v4333 = vsel %vm753, %v4285, %v4286
        %v4334 = vsel %vm753, %v4284, %v4285
        %v4335 = vsel %vm753, %v4283, %v4284
        %v4336 = vsel %vm753, %v4282, %v4283
        %v4337 = vsel %vm753, %v4281, %v4282
        %v4338 = vsel %vm753, %v4280, %v4281
        %v4339 = vsel %vm753, %v4279, %v4280
        %v4340 = vsel %vm753, %v4278, %v4279
        %v4341 = vsel %vm753, %v4277, %v4278
        %v4342 = vsel %vm753, %v4276, %v4277
        %v4343 = vsel %vm753, %v4275, %v4276
        %v4344 = vsel %vm753, %v4274, %v4275
        %v4345 = vsel %vm753, %v4309, %v4274
        %v4346 = vpack.c.bf16 %v4343, %v4344
        %v4347 = vpack.c.bf16 %v4341, %v4342
        %v4348 = vpack.c.bf16 %v4339, %v4340
        %v4349 = vpack.c.bf16 %v4337, %v4338
        %v4350 = vpack.c.bf16 %v4335, %v4336
        %v4351 = vpack.c.bf16 %v4333, %v4334
        %v4352 = vpack.c.bf16 %v4331, %v4332
        %v4353 = vpack.c.bf16 %v4329, %v4330
        %v4354 = vpack.c.bf16 %v4327, %v4328
        %v4355 = vpack.c.bf16 %v4325, %v4326
        %v4356 = vpack.c.bf16 %v4323, %v4324
        %v4357 = vpack.c.bf16 %v4321, %v4322
        %v4358 = vpack.c.bf16 %v4319, %v4320
        %v4359 = vpack.c.bf16 %v4317, %v4318
        %v4360 = vpack.c.bf16 %v4315, %v4316
        %v4361 = vpack.c.bf16 %v4313, %v4314
        %v4362 = vpack.c.bf16 %v4311, %v4312
        %v4363 = vpack.c.bf16 %v4345, %v4310
        %v4364 = vsel %vm934, %v4346, 0
        %v4365 = vsel %vm935, %v4347, 0
        %v4366 = vsel %vm936, %v4348, 0
        %v4367 = vsel %vm937, %v4349, 0
        %v4368 = vsel %vm938, %v4350, 0
        %v4369 = vsel %vm939, %v4351, 0
        %v4370 = vsel %vm940, %v4352, 0
        %v4371 = vsel %vm941, %v4353, 0
        %v4372 = vsel %vm942, %v4354, 0
        %v4373 = vsel %vm943, %v4355, 0
        %v4374 = vsel %vm944, %v4356, 0
        %v4375 = vsel %vm945, %v4357, 0
        %v4376 = vsel %vm946, %v4358, 0
        %v4377 = vsel %vm947, %v4359, 0
        %v4378 = vsel %vm948, %v4360, 0
        %v4379 = vsel %vm949, %v4361, 0
        %v4380 = vsel %vm950, %v4362, 0
        %v4381 = vsel %vm951, %v4363, 0
        %4400 = vrot.lane.b32.xlu0 %v4148, 64
        %v4401 = vpop.permute.xlu0 %4400
        %4402 = vrot.lane.b32.xlu0 %v4149, 64
        %v4403 = vpop.permute.xlu0 %4402
        %4404 = vrot.lane.b32.xlu0 %v4150, 64
        %v4405 = vpop.permute.xlu0 %4404
        %4406 = vrot.lane.b32.xlu0 %v4151, 64
        %v4407 = vpop.permute.xlu0 %4406
        %4408 = vrot.lane.b32.xlu0 %v4152, 64
        %v4409 = vpop.permute.xlu0 %4408
        %4410 = vrot.lane.b32.xlu0 %v4153, 64
        %v4411 = vpop.permute.xlu0 %4410
        %4412 = vrot.lane.b32.xlu0 %v4154, 64
        %v4413 = vpop.permute.xlu0 %4412
        %4414 = vrot.lane.b32.xlu0 %v4155, 64
        %v4415 = vpop.permute.xlu0 %4414
        %4416 = vrot.lane.b32.xlu0 %v4156, 64
        %v4417 = vpop.permute.xlu0 %4416
        %4418 = vrot.lane.b32.xlu0 %v4157, 64
        %v4419 = vpop.permute.xlu0 %4418
        %4420 = vrot.lane.b32.xlu0 %v4158, 64
        %v4421 = vpop.permute.xlu0 %4420
        %4422 = vrot.lane.b32.xlu0 %v4159, 64
        %v4423 = vpop.permute.xlu0 %4422
        %4424 = vrot.lane.b32.xlu0 %v4160, 64
        %v4425 = vpop.permute.xlu0 %4424
        %4426 = vrot.lane.b32.xlu0 %v4161, 64
        %v4427 = vpop.permute.xlu0 %4426
        %4428 = vrot.lane.b32.xlu0 %v4162, 64
        %v4429 = vpop.permute.xlu0 %4428
        %4430 = vrot.lane.b32.xlu0 %v4163, 64
        %v4431 = vpop.permute.xlu0 %4430
        %4432 = vrot.lane.b32.xlu0 %v4164, 64
        %v4433 = vpop.permute.xlu0 %4432
        %4434 = vrot.lane.b32.xlu0 %v4165, 64
        %v4435 = vpop.permute.xlu0 %4434
        %v4438 = vsel %vm1024, %v4256, %v4401
        %v4442 = vsel %vm1024, %v4257, %v4403
        %v4446 = vsel %vm1024, %v4258, %v4405
        %v4450 = vsel %vm1024, %v4259, %v4407
        %v4454 = vsel %vm1024, %v4260, %v4409
        %v4458 = vsel %vm1024, %v4261, %v4411
        %v4462 = vsel %vm1024, %v4262, %v4413
        %v4466 = vsel %vm1024, %v4263, %v4415
        %v4470 = vsel %vm1024, %v4264, %v4417
        %v4474 = vsel %vm1024, %v4265, %v4419
        %v4478 = vsel %vm1024, %v4266, %v4421
        %v4482 = vsel %vm1024, %v4267, %v4423
        %v4486 = vsel %vm1024, %v4268, %v4425
        %v4490 = vsel %vm1024, %v4269, %v4427
        %v4494 = vsel %vm1024, %v4270, %v4429
        %v4498 = vsel %vm1024, %v4271, %v4431
        %v4502 = vsel %vm1024, %v4272, %v4433
        %v4506 = vsel %vm1024, %v4273, %v4435
        %s4508 = scalar_lea.vmem %s1, 576
        %v4509 = vld [vmem:[%s4508] sm:$0xff]
        %v4510 = vld [vmem:[%s4508 + $0x8] sm:$0xff]
        %v4511 = vld [vmem:[%s4508 + $0x10] sm:$0xff]
        %v4512 = vld [vmem:[%s4508 + $0x18] sm:$0xff]
        %v4513 = vld [vmem:[%s4508 + $0x20] sm:$0xff]
        %v4514 = vld [vmem:[%s4508 + $0x28] sm:$0xff]
        %v4515 = vld [vmem:[%s4508 + $0x30] sm:$0xff]
        %v4516 = vld [vmem:[%s4508 + $0x38] sm:$0xff]
        %v4517 = vld [vmem:[%s4508 + $0x40] sm:$0xff]
        %v4518 = vld [vmem:[%s4508 + $0x48] sm:$0xff]
        %v4519 = vld [vmem:[%s4508 + $0x50] sm:$0xff]
        %v4520 = vld [vmem:[%s4508 + $0x58] sm:$0xff]
        %v4521 = vld [vmem:[%s4508 + $0x60] sm:$0xff]
        %v4522 = vld [vmem:[%s4508 + $0x68] sm:$0xff]
        %v4523 = vld [vmem:[%s4508 + $0x70] sm:$0xff]
        %v4524 = vld [vmem:[%s4508 + $0x78] sm:$0xff]
        %v4525 = vld [vmem:[%s4508 + $0x80] sm:$0xff]
        %v4526 = vld [vmem:[%s4508 + $0x88] sm:$0xff]
        %v4527 = vld [vmem:[%s4508 + $0x90] sm:$0xff]
        %v4528 = vld [vmem:[%s4508 + $0x98] sm:$0xff]
        %v4529 = vld [vmem:[%s4508 + $0xa0] sm:$0xff]
        %v4530 = vld [vmem:[%s4508 + $0xa8] sm:$0xff]
        %v4531 = vld [vmem:[%s4508 + $0xb0] sm:$0xff]
        %v4532 = vld [vmem:[%s4508 + $0xb8] sm:$0xff]
        %v4557 = vunpack.c.l.b16 %v4509
        %v4558 = vunpack.c.h.b16 %v4509
        %v4559 = vunpack.c.l.b16 %v4510
        %v4560 = vunpack.c.h.b16 %v4510
        %v4561 = vunpack.c.l.b16 %v4511
        %v4562 = vunpack.c.h.b16 %v4511
        %v4563 = vunpack.c.l.b16 %v4512
        %v4564 = vunpack.c.h.b16 %v4512
        %v4565 = vunpack.c.l.b16 %v4513
        %v4566 = vunpack.c.h.b16 %v4513
        %v4567 = vunpack.c.l.b16 %v4514
        %v4568 = vunpack.c.h.b16 %v4514
        %v4569 = vunpack.c.l.b16 %v4515
        %v4570 = vunpack.c.h.b16 %v4515
        %v4571 = vunpack.c.l.b16 %v4516
        %v4572 = vunpack.c.h.b16 %v4516
        %v4573 = vunpack.c.l.b16 %v4517
        %v4574 = vunpack.c.h.b16 %v4517
        %v4575 = vunpack.c.l.b16 %v4518
        %v4576 = vunpack.c.h.b16 %v4518
        %v4577 = vunpack.c.l.b16 %v4519
        %v4578 = vunpack.c.h.b16 %v4519
        %v4579 = vunpack.c.l.b16 %v4520
        %v4580 = vunpack.c.h.b16 %v4520
        %v4581 = vunpack.c.l.b16 %v4521
        %v4582 = vunpack.c.h.b16 %v4521
        %v4583 = vunpack.c.l.b16 %v4522
        %v4584 = vunpack.c.h.b16 %v4522
        %v4585 = vunpack.c.l.b16 %v4523
        %v4586 = vunpack.c.h.b16 %v4523
        %v4587 = vunpack.c.l.b16 %v4524
        %v4588 = vunpack.c.h.b16 %v4524
        %v4589 = vunpack.c.l.b16 %v4525
        %v4590 = vunpack.c.h.b16 %v4525
        %v4591 = vunpack.c.l.b16 %v4526
        %v4592 = vunpack.c.h.b16 %v4526
        %v4593 = vunpack.c.l.b16 %v4527
        %v4594 = vunpack.c.h.b16 %v4527
        %v4595 = vunpack.c.l.b16 %v4528
        %v4596 = vunpack.c.h.b16 %v4528
        %v4597 = vunpack.c.l.b16 %v4529
        %v4598 = vunpack.c.h.b16 %v4529
        %v4599 = vunpack.c.l.b16 %v4530
        %v4600 = vunpack.c.h.b16 %v4530
        %v4601 = vunpack.c.l.b16 %v4531
        %v4602 = vunpack.c.h.b16 %v4531
        %v4603 = vunpack.c.l.b16 %v4532
        %v4604 = vunpack.c.h.b16 %v4532
        %v4605 = vpack.c.b16 %v4559, %v4557
        %v4606 = vpack.c.b16 %v4560, %v4558
        %v4607 = vpack.c.b16 %v4563, %v4561
        %v4608 = vpack.c.b16 %v4564, %v4562
        %v4609 = vpack.c.b16 %v4567, %v4565
        %v4610 = vpack.c.b16 %v4568, %v4566
        %v4611 = vpack.c.b16 %v4571, %v4569
        %v4612 = vpack.c.b16 %v4572, %v4570
        %v4613 = vpack.c.b16 %v4575, %v4573
        %v4614 = vpack.c.b16 %v4576, %v4574
        %v4615 = vpack.c.b16 %v4579, %v4577
        %v4616 = vpack.c.b16 %v4580, %v4578
        %v4617 = vpack.c.b16 %v4583, %v4581
        %v4618 = vpack.c.b16 %v4584, %v4582
        %v4619 = vpack.c.b16 %v4587, %v4585
        %v4620 = vpack.c.b16 %v4588, %v4586
        %v4621 = vpack.c.b16 %v4591, %v4589
        %v4622 = vpack.c.b16 %v4592, %v4590
        %v4623 = vpack.c.b16 %v4595, %v4593
        %v4624 = vpack.c.b16 %v4596, %v4594
        %v4625 = vpack.c.b16 %v4599, %v4597
        %v4626 = vpack.c.b16 %v4600, %v4598
        %v4627 = vpack.c.b16 %v4603, %v4601
        %v4628 = vpack.c.b16 %v4604, %v4602
        %v4654 = vsel %vm1024, %v4364, 0
        %v4657 = vsel %vm1024, %v4365, 0
        %v4660 = vsel %vm1024, %v4366, 0
        %v4663 = vsel %vm1024, %v4367, 0
        %v4666 = vsel %vm1024, %v4368, 0
        %v4669 = vsel %vm1024, %v4369, 0
        %v4672 = vsel %vm1024, %v4370, 0
        %v4675 = vsel %vm1024, %v4371, 0
        %v4678 = vsel %vm1024, %v4372, 0
        %v4681 = vsel %vm1024, %v4373, 0
        %v4684 = vsel %vm1024, %v4374, 0
        %v4687 = vsel %vm1024, %v4375, 0
        %v4690 = vsel %vm1024, %v4376, 0
        %v4693 = vsel %vm1024, %v4377, 0
        %v4696 = vsel %vm1024, %v4378, 0
        %v4699 = vsel %vm1024, %v4379, 0
        %v4702 = vsel %vm1024, %v4380, 0
        %v4705 = vsel %vm1024, %v4381, 0
        %4707 = vmatprep.subr.bf16.mxu0 %v4606
        %4708 = vmatpush1.bf16.msra.mxu0 %v4605
        %4709 = vmatprep.subr.bf16.mxu0 %v4608
        %4710 = vmatpush1.bf16.msra.mxu0 %v4607
        %4711 = vmatprep.subr.bf16.mxu0 %v4610
        %4712 = vmatpush1.bf16.msra.mxu0 %v4609
        %4713 = vmatprep.subr.bf16.mxu0 %v4612
        %4714 = vmatpush1.bf16.msra.mxu0 %v4611
        %4715 = vmatprep.subr.bf16.mxu0 %v4614
        %4716 = vmatpush1.bf16.msra.mxu0 %v4613
        %4717 = vmatprep.subr.bf16.mxu0 %v4616
        %4718 = vmatpush1.bf16.msra.mxu0 %v4615
        %4719 = vmatprep.subr.bf16.mxu0 %v4618
        %4720 = vmatpush1.bf16.msra.mxu0 %v4617
        %4721 = vmatprep.subr.bf16.mxu0 %v4620
        %4722 = vmatpush1.bf16.msra.mxu0 %v4619
        %4723 = vmatprep.subr.bf16.mxu0 %v4622
        %4724 = vmatpush1.bf16.msra.mxu0 %v4621
        %4725 = vmatprep.subr.bf16.mxu0 %v4624
        %4726 = vmatpush1.bf16.msra.mxu0 %v4623
        %4727 = vmatprep.subr.bf16.mxu0 %v4626
        %4728 = vmatpush1.bf16.msra.mxu0 %v4625
        %4729 = vmatprep.subr.bf16.mxu0 %v4628
        %4730 = vmatpush1.bf16.msra.mxu0 %v4627
        %4731 = vmatprep.subr.bf16.mxu0 0
        %4732 = vmatpush1.bf16.msra.mxu0 0
        %4733 = vmatprep.subr.bf16.mxu0 0
        %4734 = vmatpush1.bf16.msra.mxu0 0
        %4735 = vmatprep.subr.bf16.mxu0 0
        %4736 = vmatpush1.bf16.msra.mxu0 0
        %4737 = vmatprep.subr.bf16.mxu0 0
        %4738 = vmatpush1.bf16.msra.mxu0 0
        %4739 = vmatprep.mubr.bf16.mxu0 %v4654
        %4740 = vmatmul.mubr.bf16.gmra.mrb[0].mxu0 %v4438
        %v4741 = vpop.f32.mrb[0].mxu0
        %v4742 = vadd.f32 0.0, %v4741
        %v4743 = vpop.f32.mrb[0].mxu0
        %v4744 = vpop.f32.mrb[0].mxu0
        %v4745 = vadd.f32 0.0, %v4744
        %v4746 = vpop.f32.mrb[0].mxu0
        %4747 = vmatprep.mubr.bf16.mxu0 %v4657
        %4748 = vmatmul.mubr.bf16.gmra.mrb[0].mxu0 %v4442
        %v4749 = vpop.f32.mrb[0].mxu0
        %v4750 = vadd.f32 0.0, %v4749
        %v4751 = vpop.f32.mrb[0].mxu0
        %v4752 = vpop.f32.mrb[0].mxu0
        %v4753 = vadd.f32 0.0, %v4752
        %v4754 = vpop.f32.mrb[0].mxu0
        %4755 = vmatprep.mubr.bf16.mxu0 %v4660
        %4756 = vmatmul.mubr.bf16.gmra.mrb[0].mxu0 %v4446
        %v4757 = vpop.f32.mrb[0].mxu0
        %v4758 = vadd.f32 0.0, %v4757
        %v4759 = vpop.f32.mrb[0].mxu0
        %v4760 = vadd.f32 0.0, %v4759
        %v4761 = vpop.f32.mrb[0].mxu0
        %v4762 = vadd.f32 0.0, %v4761
        %v4763 = vpop.f32.mrb[0].mxu0
        %v4764 = vadd.f32 0.0, %v4763
        %4765 = vmatprep.mubr.bf16.mxu0 %v4663
        %4766 = vmatmul.mubr.bf16.gmra.mrb[0].mxu0 %v4450
        %v4767 = vpop.f32.mrb[0].mxu0
        %v4768 = vadd.f32 0.0, %v4767
        %v4769 = vpop.f32.mrb[0].mxu0
        %v4770 = vadd.f32 0.0, %v4769
        %v4771 = vpop.f32.mrb[0].mxu0
        %v4772 = vadd.f32 0.0, %v4771
        %v4773 = vpop.f32.mrb[0].mxu0
        %v4774 = vadd.f32 0.0, %v4773
        %4775 = vmatprep.mubr.bf16.mxu0 %v4666
        %4776 = vmatmul.mubr.bf16.gmra.mrb[0].mxu0 %v4454
        %v4777 = vpop.f32.mrb[0].mxu0
        %v4778 = vadd.f32 0.0, %v4777
        %v4779 = vpop.f32.mrb[0].mxu0
        %v4780 = vadd.f32 0.0, %v4779
        %v4781 = vpop.f32.mrb[0].mxu0
        %v4782 = vadd.f32 0.0, %v4781
        %v4783 = vpop.f32.mrb[0].mxu0
        %v4784 = vadd.f32 0.0, %v4783
        %4785 = vmatprep.mubr.bf16.mxu0 %v4669
        %4786 = vmatmul.mubr.bf16.gmra.mrb[0].mxu0 %v4458
        %v4787 = vpop.f32.mrb[0].mxu0
        %v4788 = vadd.f32 0.0, %v4787
        %v4789 = vpop.f32.mrb[0].mxu0
        %v4790 = vadd.f32 0.0, %v4789
        %v4791 = vpop.f32.mrb[0].mxu0
        %v4792 = vadd.f32 0.0, %v4791
        %v4793 = vpop.f32.mrb[0].mxu0
        %v4794 = vadd.f32 0.0, %v4793
        %4795 = vmatprep.mubr.bf16.mxu0 %v4672
        %4796 = vmatmul.mubr.bf16.gmra.mrb[0].mxu0 %v4462
        %v4797 = vpop.f32.mrb[0].mxu0
        %v4798 = vadd.f32 0.0, %v4797
        %v4799 = vpop.f32.mrb[0].mxu0
        %v4800 = vadd.f32 0.0, %v4799
        %v4801 = vpop.f32.mrb[0].mxu0
        %v4802 = vadd.f32 0.0, %v4801
        %v4803 = vpop.f32.mrb[0].mxu0
        %v4804 = vadd.f32 0.0, %v4803
        %4805 = vmatprep.mubr.bf16.mxu0 %v4675
        %4806 = vmatmul.mubr.bf16.gmra.mrb[0].mxu0 %v4466
        %v4807 = vpop.f32.mrb[0].mxu0
        %v4808 = vadd.f32 0.0, %v4807
        %v4809 = vpop.f32.mrb[0].mxu0
        %v4810 = vadd.f32 0.0, %v4809
        %v4811 = vpop.f32.mrb[0].mxu0
        %v4812 = vadd.f32 0.0, %v4811
        %v4813 = vpop.f32.mrb[0].mxu0
        %v4814 = vadd.f32 0.0, %v4813
        %4815 = vmatprep.mubr.bf16.mxu0 %v4678
        %4816 = vmatmul.mubr.bf16.gmra.mrb[0].mxu0 %v4470
        %v4817 = vpop.f32.mrb[0].mxu0
        %v4818 = vadd.f32 0.0, %v4817
        %v4819 = vpop.f32.mrb[0].mxu0
        %v4820 = vadd.f32 0.0, %v4819
        %v4821 = vpop.f32.mrb[0].mxu0
        %v4822 = vadd.f32 0.0, %v4821
        %v4823 = vpop.f32.mrb[0].mxu0
        %v4824 = vadd.f32 0.0, %v4823
        %4825 = vmatprep.mubr.bf16.mxu0 %v4681
        %4826 = vmatmul.mubr.bf16.gmra.mrb[0].mxu0 %v4474
        %v4827 = vpop.f32.mrb[0].mxu0
        %v4828 = vadd.f32 0.0, %v4827
        %v4829 = vpop.f32.mrb[0].mxu0
        %v4830 = vadd.f32 0.0, %v4829
        %v4831 = vpop.f32.mrb[0].mxu0
        %v4832 = vadd.f32 0.0, %v4831
        %v4833 = vpop.f32.mrb[0].mxu0
        %v4834 = vadd.f32 0.0, %v4833
        %4835 = vmatprep.mubr.bf16.mxu0 %v4684
        %4836 = vmatmul.mubr.bf16.gmra.mrb[0].mxu0 %v4478
        %v4837 = vpop.f32.mrb[0].mxu0
        %v4838 = vadd.f32 0.0, %v4837
        %v4839 = vpop.f32.mrb[0].mxu0
        %v4840 = vadd.f32 0.0, %v4839
        %v4841 = vpop.f32.mrb[0].mxu0
        %v4842 = vadd.f32 0.0, %v4841
        %v4843 = vpop.f32.mrb[0].mxu0
        %v4844 = vadd.f32 0.0, %v4843
        %4845 = vmatprep.mubr.bf16.mxu0 %v4687
        %4846 = vmatmul.mubr.bf16.gmra.mrb[0].mxu0 %v4482
        %v4847 = vpop.f32.mrb[0].mxu0
        %v4848 = vadd.f32 0.0, %v4847
        %v4849 = vpop.f32.mrb[0].mxu0
        %v4850 = vadd.f32 0.0, %v4849
        %v4851 = vpop.f32.mrb[0].mxu0
        %v4852 = vadd.f32 0.0, %v4851
        %v4853 = vpop.f32.mrb[0].mxu0
        %v4854 = vadd.f32 0.0, %v4853
        %4855 = vmatprep.mubr.bf16.mxu0 %v4690
        %4856 = vmatmul.mubr.bf16.gmra.mrb[0].mxu0 %v4486
        %v4857 = vpop.f32.mrb[0].mxu0
        %v4858 = vadd.f32 0.0, %v4857
        %v4859 = vpop.f32.mrb[0].mxu0
        %v4860 = vadd.f32 0.0, %v4859
        %v4861 = vpop.f32.mrb[0].mxu0
        %v4862 = vadd.f32 0.0, %v4861
        %v4863 = vpop.f32.mrb[0].mxu0
        %v4864 = vadd.f32 0.0, %v4863
        %4865 = vmatprep.mubr.bf16.mxu0 %v4693
        %4866 = vmatmul.mubr.bf16.gmra.mrb[0].mxu0 %v4490
        %v4867 = vpop.f32.mrb[0].mxu0
        %v4868 = vadd.f32 0.0, %v4867
        %v4869 = vpop.f32.mrb[0].mxu0
        %v4870 = vadd.f32 0.0, %v4869
        %v4871 = vpop.f32.mrb[0].mxu0
        %v4872 = vadd.f32 0.0, %v4871
        %v4873 = vpop.f32.mrb[0].mxu0
        %v4874 = vadd.f32 0.0, %v4873
        %4875 = vmatprep.mubr.bf16.mxu0 %v4696
        %4876 = vmatmul.mubr.bf16.gmra.mrb[0].mxu0 %v4494
        %v4877 = vpop.f32.mrb[0].mxu0
        %v4878 = vadd.f32 0.0, %v4877
        %v4879 = vpop.f32.mrb[0].mxu0
        %v4880 = vadd.f32 0.0, %v4879
        %v4881 = vpop.f32.mrb[0].mxu0
        %v4882 = vadd.f32 0.0, %v4881
        %v4883 = vpop.f32.mrb[0].mxu0
        %v4884 = vadd.f32 0.0, %v4883
        %4885 = vmatprep.mubr.bf16.mxu0 %v4699
        %4886 = vmatmul.mubr.bf16.gmra.mrb[0].mxu0 %v4498
        %v4887 = vpop.f32.mrb[0].mxu0
        %v4888 = vadd.f32 0.0, %v4887
        %v4889 = vpop.f32.mrb[0].mxu0
        %v4890 = vadd.f32 0.0, %v4889
        %v4891 = vpop.f32.mrb[0].mxu0
        %v4892 = vadd.f32 0.0, %v4891
        %v4893 = vpop.f32.mrb[0].mxu0
        %v4894 = vadd.f32 0.0, %v4893
        %4895 = vmatprep.mubr.bf16.mxu0 %v4702
        %4896 = vmatmul.mubr.bf16.gmra.mrb[0].mxu0 %v4502
        %v4897 = vpop.f32.mrb[0].mxu0
        %v4898 = vadd.f32 0.0, %v4897
        %v4899 = vpop.f32.mrb[0].mxu0
        %v4900 = vadd.f32 0.0, %v4899
        %v4901 = vpop.f32.mrb[0].mxu0
        %v4902 = vadd.f32 0.0, %v4901
        %v4903 = vpop.f32.mrb[0].mxu0
        %v4904 = vadd.f32 0.0, %v4903
        %4905 = vmatprep.mubr.bf16.mxu0 %v4705
        %4906 = vmatmul.mubr.bf16.gmra.mrb[0].mxu0 %v4506
        %v4907 = vpop.f32.mrb[0].mxu0
        %v4908 = vpop.f32.mrb[0].mxu0
        %v4909 = vadd.f32 0.0, %v4908
        %v4910 = vpop.f32.mrb[0].mxu0
        %v4911 = vpop.f32.mrb[0].mxu0
        %v4912 = vadd.f32 0.0, %v4911
        %4913 = vdwg.mxu0
        %4946 = vrot.lane.b32.xlu0 %v4750, 64
        %v4947 = vpop.permute.xlu0 %4946
        %4948 = vrot.lane.b32.xlu0 %v4753, 64
        %v4949 = vpop.permute.xlu0 %4948
        %4950 = vrot.lane.b32.xlu0 %v4758, 64
        %v4951 = vpop.permute.xlu0 %4950
        %4952 = vrot.lane.b32.xlu0 %v4762, 64
        %v4953 = vpop.permute.xlu0 %4952
        %4954 = vrot.lane.b32.xlu0 %v4768, 64
        %v4955 = vpop.permute.xlu0 %4954
        %4956 = vrot.lane.b32.xlu0 %v4772, 64
        %v4957 = vpop.permute.xlu0 %4956
        %4958 = vrot.lane.b32.xlu0 %v4778, 64
        %v4959 = vpop.permute.xlu0 %4958
        %4960 = vrot.lane.b32.xlu0 %v4782, 64
        %v4961 = vpop.permute.xlu0 %4960
        %4962 = vrot.lane.b32.xlu0 %v4788, 64
        %v4963 = vpop.permute.xlu0 %4962
        %4964 = vrot.lane.b32.xlu0 %v4792, 64
        %v4965 = vpop.permute.xlu0 %4964
        %4966 = vrot.lane.b32.xlu0 %v4798, 64
        %v4967 = vpop.permute.xlu0 %4966
        %4968 = vrot.lane.b32.xlu0 %v4802, 64
        %v4969 = vpop.permute.xlu0 %4968
        %4970 = vrot.lane.b32.xlu0 %v4808, 64
        %v4971 = vpop.permute.xlu0 %4970
        %4972 = vrot.lane.b32.xlu0 %v4812, 64
        %v4973 = vpop.permute.xlu0 %4972
        %4974 = vrot.lane.b32.xlu0 %v4818, 64
        %v4975 = vpop.permute.xlu0 %4974
        %4976 = vrot.lane.b32.xlu0 %v4822, 64
        %v4977 = vpop.permute.xlu0 %4976
        %4978 = vrot.lane.b32.xlu0 %v4828, 64
        %v4979 = vpop.permute.xlu0 %4978
        %4980 = vrot.lane.b32.xlu0 %v4832, 64
        %v4981 = vpop.permute.xlu0 %4980
        %4982 = vrot.lane.b32.xlu0 %v4838, 64
        %v4983 = vpop.permute.xlu0 %4982
        %4984 = vrot.lane.b32.xlu0 %v4842, 64
        %v4985 = vpop.permute.xlu0 %4984
        %4986 = vrot.lane.b32.xlu0 %v4848, 64
        %v4987 = vpop.permute.xlu0 %4986
        %4988 = vrot.lane.b32.xlu0 %v4852, 64
        %v4989 = vpop.permute.xlu0 %4988
        %4990 = vrot.lane.b32.xlu0 %v4858, 64
        %v4991 = vpop.permute.xlu0 %4990
        %4992 = vrot.lane.b32.xlu0 %v4862, 64
        %v4993 = vpop.permute.xlu0 %4992
        %4994 = vrot.lane.b32.xlu0 %v4868, 64
        %v4995 = vpop.permute.xlu0 %4994
        %4996 = vrot.lane.b32.xlu0 %v4872, 64
        %v4997 = vpop.permute.xlu0 %4996
        %4998 = vrot.lane.b32.xlu0 %v4878, 64
        %v4999 = vpop.permute.xlu0 %4998
        %5000 = vrot.lane.b32.xlu0 %v4882, 64
        %v5001 = vpop.permute.xlu0 %5000
        %5002 = vrot.lane.b32.xlu0 %v4888, 64
        %v5003 = vpop.permute.xlu0 %5002
        %5004 = vrot.lane.b32.xlu0 %v4892, 64
        %v5005 = vpop.permute.xlu0 %5004
        %5006 = vrot.lane.b32.xlu0 %v4898, 64
        %v5007 = vpop.permute.xlu0 %5006
        %5008 = vrot.lane.b32.xlu0 %v4902, 64
        %v5009 = vpop.permute.xlu0 %5008
        %v5042 = vadd.f32 %v4742, %v4947
        %v5043 = vadd.f32 %v4745, %v4949
        %v5044 = vadd.f32 %v4750, %v4951
        %v5045 = vadd.f32 %v4753, %v4953
        %v5046 = vadd.f32 %v4758, %v4955
        %v5047 = vadd.f32 %v4762, %v4957
        %v5048 = vadd.f32 %v4768, %v4959
        %v5049 = vadd.f32 %v4772, %v4961
        %v5050 = vadd.f32 %v4778, %v4963
        %v5051 = vadd.f32 %v4782, %v4965
        %v5052 = vadd.f32 %v4788, %v4967
        %v5053 = vadd.f32 %v4792, %v4969
        %v5054 = vadd.f32 %v4798, %v4971
        %v5055 = vadd.f32 %v4802, %v4973
        %v5056 = vadd.f32 %v4808, %v4975
        %v5057 = vadd.f32 %v4812, %v4977
        %v5058 = vadd.f32 %v4818, %v4979
        %v5059 = vadd.f32 %v4822, %v4981
        %v5060 = vadd.f32 %v4828, %v4983
        %v5061 = vadd.f32 %v4832, %v4985
        %v5062 = vadd.f32 %v4838, %v4987
        %v5063 = vadd.f32 %v4842, %v4989
        %v5064 = vadd.f32 %v4848, %v4991
        %v5065 = vadd.f32 %v4852, %v4993
        %v5066 = vadd.f32 %v4858, %v4995
        %v5067 = vadd.f32 %v4862, %v4997
        %v5068 = vadd.f32 %v4868, %v4999
        %v5069 = vadd.f32 %v4872, %v5001
        %v5070 = vadd.f32 %v4878, %v5003
        %v5071 = vadd.f32 %v4882, %v5005
        %v5072 = vadd.f32 %v4888, %v5007
        %v5073 = vadd.f32 %v4892, %v5009
        %v5074 = vadd.f32 %v5042, %v4760
        %v5075 = vadd.f32 %v5043, %v4764
        %v5076 = vadd.f32 %v5044, %v4770
        %v5077 = vadd.f32 %v5045, %v4774
        %v5078 = vadd.f32 %v5046, %v4780
        %v5079 = vadd.f32 %v5047, %v4784
        %v5080 = vadd.f32 %v5048, %v4790
        %v5081 = vadd.f32 %v5049, %v4794
        %v5082 = vadd.f32 %v5050, %v4800
        %v5083 = vadd.f32 %v5051, %v4804
        %v5084 = vadd.f32 %v5052, %v4810
        %v5085 = vadd.f32 %v5053, %v4814
        %v5086 = vadd.f32 %v5054, %v4820
        %v5087 = vadd.f32 %v5055, %v4824
        %v5088 = vadd.f32 %v5056, %v4830
        %v5089 = vadd.f32 %v5057, %v4834
        %v5090 = vadd.f32 %v5058, %v4840
        %v5091 = vadd.f32 %v5059, %v4844
        %v5092 = vadd.f32 %v5060, %v4850
        %v5093 = vadd.f32 %v5061, %v4854
        %v5094 = vadd.f32 %v5062, %v4860
        %v5095 = vadd.f32 %v5063, %v4864
        %v5096 = vadd.f32 %v5064, %v4870
        %v5097 = vadd.f32 %v5065, %v4874
        %v5098 = vadd.f32 %v5066, %v4880
        %v5099 = vadd.f32 %v5067, %v4884
        %v5100 = vadd.f32 %v5068, %v4890
        %v5101 = vadd.f32 %v5069, %v4894
        %v5102 = vadd.f32 %v5070, %v4900
        %v5103 = vadd.f32 %v5071, %v4904
        %v5104 = vadd.f32 %v5072, %v4909
        %v5105 = vadd.f32 %v5073, %v4912
        %s5106 = scalar_lea.vmem %s2, 3
        %v5107 = vld [vmem:[%s5106] sm:$0x1]
        %v5109 = vlaneseq
        %v5110 = vshrl.u32 %v5109, 7
        %v5111 = vsub.s32 0, %v5110
        %v5112 = vrot.slane %v5107, %v5111
        %v5114 = vmul.f32 %v5074, %v5112
        %v5115 = vmul.f32 %v5075, %v5112
        %v5116 = vmul.f32 %v5076, %v5112
        %v5117 = vmul.f32 %v5077, %v5112
        %v5118 = vmul.f32 %v5078, %v5112
        %v5119 = vmul.f32 %v5079, %v5112
        %v5120 = vmul.f32 %v5080, %v5112
        %v5121 = vmul.f32 %v5081, %v5112
        %v5122 = vmul.f32 %v5082, %v5112
        %v5123 = vmul.f32 %v5083, %v5112
        %v5124 = vmul.f32 %v5084, %v5112
        %v5125 = vmul.f32 %v5085, %v5112
        %v5126 = vmul.f32 %v5086, %v5112
        %v5127 = vmul.f32 %v5087, %v5112
        %v5128 = vmul.f32 %v5088, %v5112
        %v5129 = vmul.f32 %v5089, %v5112
        %v5130 = vmul.f32 %v5090, %v5112
        %v5131 = vmul.f32 %v5091, %v5112
        %v5132 = vmul.f32 %v5092, %v5112
        %v5133 = vmul.f32 %v5093, %v5112
        %v5134 = vmul.f32 %v5094, %v5112
        %v5135 = vmul.f32 %v5095, %v5112
        %v5136 = vmul.f32 %v5096, %v5112
        %v5137 = vmul.f32 %v5097, %v5112
        %v5138 = vmul.f32 %v5098, %v5112
        %v5139 = vmul.f32 %v5099, %v5112
        %v5140 = vmul.f32 %v5100, %v5112
        %v5141 = vmul.f32 %v5101, %v5112
        %v5142 = vmul.f32 %v5102, %v5112
        %v5143 = vmul.f32 %v5103, %v5112
        %v5144 = vmul.f32 %v5104, %v5112
        %v5145 = vmul.f32 %v5105, %v5112
        %s5146 = scalar_lea.vmem %s3, 3
        %v5147 = vld [vmem:[%s5146] sm:$0x1]
        %v5149 = vlaneseq
        %v5150 = vshrl.u32 %v5149, 7
        %v5151 = vsub.s32 0, %v5150
        %v5152 = vrot.slane %v5147, %v5151
        %v5154 = vadd.f32 %v5114, %v5152
        %v5155 = vadd.f32 %v5115, %v5152
        %v5156 = vadd.f32 %v5116, %v5152
        %v5157 = vadd.f32 %v5117, %v5152
        %v5158 = vadd.f32 %v5118, %v5152
        %v5159 = vadd.f32 %v5119, %v5152
        %v5160 = vadd.f32 %v5120, %v5152
        %v5161 = vadd.f32 %v5121, %v5152
        %v5162 = vadd.f32 %v5122, %v5152
        %v5163 = vadd.f32 %v5123, %v5152
        %v5164 = vadd.f32 %v5124, %v5152
        %v5165 = vadd.f32 %v5125, %v5152
        %v5166 = vadd.f32 %v5126, %v5152
        %v5167 = vadd.f32 %v5127, %v5152
        %v5168 = vadd.f32 %v5128, %v5152
        %v5169 = vadd.f32 %v5129, %v5152
        %v5170 = vadd.f32 %v5130, %v5152
        %v5171 = vadd.f32 %v5131, %v5152
        %v5172 = vadd.f32 %v5132, %v5152
        %v5173 = vadd.f32 %v5133, %v5152
        %v5174 = vadd.f32 %v5134, %v5152
        %v5175 = vadd.f32 %v5135, %v5152
        %v5176 = vadd.f32 %v5136, %v5152
        %v5177 = vadd.f32 %v5137, %v5152
        %v5178 = vadd.f32 %v5138, %v5152
        %v5179 = vadd.f32 %v5139, %v5152
        %v5180 = vadd.f32 %v5140, %v5152
        %v5181 = vadd.f32 %v5141, %v5152
        %v5182 = vadd.f32 %v5142, %v5152
        %v5183 = vadd.f32 %v5143, %v5152
        %v5184 = vadd.f32 %v5144, %v5152
        %v5185 = vadd.f32 %v5145, %v5152
        %v5186 = vmax.f32 %v5154, 0.0
        %v5187 = vmax.f32 %v5155, 0.0
        %v5188 = vmax.f32 %v5156, 0.0
        %v5189 = vmax.f32 %v5157, 0.0
        %v5190 = vmax.f32 %v5158, 0.0
        %v5191 = vmax.f32 %v5159, 0.0
        %v5192 = vmax.f32 %v5160, 0.0
        %v5193 = vmax.f32 %v5161, 0.0
        %v5194 = vmax.f32 %v5162, 0.0
        %v5195 = vmax.f32 %v5163, 0.0
        %v5196 = vmax.f32 %v5164, 0.0
        %v5197 = vmax.f32 %v5165, 0.0
        %v5198 = vmax.f32 %v5166, 0.0
        %v5199 = vmax.f32 %v5167, 0.0
        %v5200 = vmax.f32 %v5168, 0.0
        %v5201 = vmax.f32 %v5169, 0.0
        %v5202 = vmax.f32 %v5170, 0.0
        %v5203 = vmax.f32 %v5171, 0.0
        %v5204 = vmax.f32 %v5172, 0.0
        %v5205 = vmax.f32 %v5173, 0.0
        %v5206 = vmax.f32 %v5174, 0.0
        %v5207 = vmax.f32 %v5175, 0.0
        %v5208 = vmax.f32 %v5176, 0.0
        %v5209 = vmax.f32 %v5177, 0.0
        %v5210 = vmax.f32 %v5178, 0.0
        %v5211 = vmax.f32 %v5179, 0.0
        %v5212 = vmax.f32 %v5180, 0.0
        %v5213 = vmax.f32 %v5181, 0.0
        %v5214 = vmax.f32 %v5182, 0.0
        %v5215 = vmax.f32 %v5183, 0.0
        %v5216 = vmax.f32 %v5184, 0.0
        %v5217 = vmax.f32 %v5185, 0.0
        %5218 = vst.msk [vmem:[#allocation3 + $0x10] sm:$0xff] %vm1024, %v5186
        %5219 = vst.msk [vmem:[#allocation3 + $0x18] sm:$0xff] %vm1024, %v5187
        %5220 = vst.msk [vmem:[#allocation3 + $0x20] sm:$0xff] %vm1024, %v5188
        %5221 = vst.msk [vmem:[#allocation3 + $0x28] sm:$0xff] %vm1024, %v5189
        %5222 = vst.msk [vmem:[#allocation3 + $0x30] sm:$0xff] %vm1024, %v5190
        %5223 = vst.msk [vmem:[#allocation3 + $0x38] sm:$0xff] %vm1024, %v5191
        %5224 = vst.msk [vmem:[#allocation3 + $0x40] sm:$0xff] %vm1024, %v5192
        %5225 = vst.msk [vmem:[#allocation3 + $0x48] sm:$0xff] %vm1024, %v5193
        %5226 = vst.msk [vmem:[#allocation3 + $0x50] sm:$0xff] %vm1024, %v5194
        %5227 = vst.msk [vmem:[#allocation3 + $0x58] sm:$0xff] %vm1024, %v5195
        %5228 = vst.msk [vmem:[#allocation3 + $0x60] sm:$0xff] %vm1024, %v5196
        %5229 = vst.msk [vmem:[#allocation3 + $0x68] sm:$0xff] %vm1024, %v5197
        %5230 = vst.msk [vmem:[#allocation3 + $0x70] sm:$0xff] %vm1024, %v5198
        %5231 = vst.msk [vmem:[#allocation3 + $0x78] sm:$0xff] %vm1024, %v5199
        %5232 = vst.msk [vmem:[#allocation3 + $0x80] sm:$0xff] %vm1024, %v5200
        %5233 = vst.msk [vmem:[#allocation3 + $0x88] sm:$0xff] %vm1024, %v5201
        %5234 = vst.msk [vmem:[#allocation3 + $0x90] sm:$0xff] %vm1024, %v5202
        %5235 = vst.msk [vmem:[#allocation3 + $0x98] sm:$0xff] %vm1024, %v5203
        %5236 = vst.msk [vmem:[#allocation3 + $0xa0] sm:$0xff] %vm1024, %v5204
        %5237 = vst.msk [vmem:[#allocation3 + $0xa8] sm:$0xff] %vm1024, %v5205
        %5238 = vst.msk [vmem:[#allocation3 + $0xb0] sm:$0xff] %vm1024, %v5206
        %5239 = vst.msk [vmem:[#allocation3 + $0xb8] sm:$0xff] %vm1024, %v5207
        %5240 = vst.msk [vmem:[#allocation3 + $0xc0] sm:$0xff] %vm1024, %v5208
        %5241 = vst.msk [vmem:[#allocation3 + $0xc8] sm:$0xff] %vm1024, %v5209
        %5242 = vst.msk [vmem:[#allocation3 + $0xd0] sm:$0xff] %vm1024, %v5210
        %5243 = vst.msk [vmem:[#allocation3 + $0xd8] sm:$0xff] %vm1024, %v5211
        %5244 = vst.msk [vmem:[#allocation3 + $0xe0] sm:$0xff] %vm1024, %v5212
        %5245 = vst.msk [vmem:[#allocation3 + $0xe8] sm:$0xff] %vm1024, %v5213
        %5246 = vst.msk [vmem:[#allocation3 + $0xf0] sm:$0xff] %vm1024, %v5214
        %5247 = vst.msk [vmem:[#allocation3 + $0xf8] sm:$0xff] %vm1024, %v5215
        %5248 = vst.msk [vmem:[#allocation3 + $0x100] sm:$0xff] %vm1024, %v5216
        %5249 = vst.msk [vmem:[#allocation3 + $0x108] sm:$0xff] %vm1024, %v5217
        %v5250 = vld [vmem:[#allocation3] sm:$0xff]
        %v5251 = vld [vmem:[#allocation3 + $0x8] sm:$0xff]
        %v5252 = vld [vmem:[#allocation3 + $0x10] sm:$0xff]
        %v5253 = vld [vmem:[#allocation3 + $0x18] sm:$0xff]
        %v5254 = vld [vmem:[#allocation3 + $0x20] sm:$0xff]
        %v5255 = vld [vmem:[#allocation3 + $0x28] sm:$0xff]
        %v5256 = vld [vmem:[#allocation3 + $0x30] sm:$0xff]
        %v5257 = vld [vmem:[#allocation3 + $0x38] sm:$0xff]
        %v5258 = vld [vmem:[#allocation3 + $0x40] sm:$0xff]
        %v5259 = vld [vmem:[#allocation3 + $0x48] sm:$0xff]
        %v5260 = vld [vmem:[#allocation3 + $0x50] sm:$0xff]
        %v5261 = vld [vmem:[#allocation3 + $0x58] sm:$0xff]
        %v5262 = vld [vmem:[#allocation3 + $0x60] sm:$0xff]
        %v5263 = vld [vmem:[#allocation3 + $0x68] sm:$0xff]
        %v5264 = vld [vmem:[#allocation3 + $0x70] sm:$0xff]
        %v5265 = vld [vmem:[#allocation3 + $0x78] sm:$0xff]
        %v5266 = vld [vmem:[#allocation3 + $0x80] sm:$0xff]
        %v5267 = vld [vmem:[#allocation3 + $0x88] sm:$0xff]
        %v5268 = vld [vmem:[#allocation3 + $0x90] sm:$0xff]
        %v5269 = vld [vmem:[#allocation3 + $0x98] sm:$0xff]
        %v5270 = vld [vmem:[#allocation3 + $0xa0] sm:$0xff]
        %v5271 = vld [vmem:[#allocation3 + $0xa8] sm:$0xff]
        %v5272 = vld [vmem:[#allocation3 + $0xb0] sm:$0xff]
        %v5273 = vld [vmem:[#allocation3 + $0xb8] sm:$0xff]
        %v5274 = vld [vmem:[#allocation3 + $0xc0] sm:$0xff]
        %v5275 = vld [vmem:[#allocation3 + $0xc8] sm:$0xff]
        %v5276 = vld [vmem:[#allocation3 + $0xd0] sm:$0xff]
        %v5277 = vld [vmem:[#allocation3 + $0xd8] sm:$0xff]
        %v5278 = vld [vmem:[#allocation3 + $0xe0] sm:$0xff]
        %v5279 = vld [vmem:[#allocation3 + $0xe8] sm:$0xff]
        %v5280 = vld [vmem:[#allocation3 + $0xf0] sm:$0xff]
        %v5281 = vld [vmem:[#allocation3 + $0xf8] sm:$0xff]
        %v5282 = vld [vmem:[#allocation3 + $0x100] sm:$0xff]
        %v5283 = vld [vmem:[#allocation3 + $0x108] sm:$0xff]
        %v5284 = vld [vmem:[#allocation3 + $0x110] sm:$0xff]
        %v5285 = vld [vmem:[#allocation3 + $0x118] sm:$0xff]
        %v5286 = vpack.c.bf16 %v5251, %v5250
        %v5287 = vpack.c.bf16 %v5253, %v5252
        %v5288 = vpack.c.bf16 %v5255, %v5254
        %v5289 = vpack.c.bf16 %v5257, %v5256
        %v5290 = vpack.c.bf16 %v5259, %v5258
        %v5291 = vpack.c.bf16 %v5261, %v5260
        %v5292 = vpack.c.bf16 %v5263, %v5262
        %v5293 = vpack.c.bf16 %v5265, %v5264
        %v5294 = vpack.c.bf16 %v5267, %v5266
        %v5295 = vpack.c.bf16 %v5269, %v5268
        %v5296 = vpack.c.bf16 %v5271, %v5270
        %v5297 = vpack.c.bf16 %v5273, %v5272
        %v5298 = vpack.c.bf16 %v5275, %v5274
        %v5299 = vpack.c.bf16 %v5277, %v5276
        %v5300 = vpack.c.bf16 %v5279, %v5278
        %v5301 = vpack.c.bf16 %v5281, %v5280
        %v5302 = vpack.c.bf16 %v5283, %v5282
        %v5303 = vpack.c.bf16 %v5285, %v5284
        %v5304 = vrot.slane %v5250, 7
        %v5305 = vrot.slane %v5251, 7
        %v5306 = vrot.slane %v5252, 7
        %v5307 = vrot.slane %v5253, 7
        %v5308 = vrot.slane %v5254, 7
        %v5309 = vrot.slane %v5255, 7
        %v5310 = vrot.slane %v5256, 7
        %v5311 = vrot.slane %v5257, 7
        %v5312 = vrot.slane %v5258, 7
        %v5313 = vrot.slane %v5259, 7
        %v5314 = vrot.slane %v5260, 7
        %v5315 = vrot.slane %v5261, 7
        %v5316 = vrot.slane %v5262, 7
        %v5317 = vrot.slane %v5263, 7
        %v5318 = vrot.slane %v5264, 7
        %v5319 = vrot.slane %v5265, 7
        %v5320 = vrot.slane %v5266, 7
        %v5321 = vrot.slane %v5267, 7
        %v5322 = vrot.slane %v5268, 7
        %v5323 = vrot.slane %v5269, 7
        %v5324 = vrot.slane %v5270, 7
        %v5325 = vrot.slane %v5271, 7
        %v5326 = vrot.slane %v5272, 7
        %v5327 = vrot.slane %v5273, 7
        %v5328 = vrot.slane %v5274, 7
        %v5329 = vrot.slane %v5275, 7
        %v5330 = vrot.slane %v5276, 7
        %v5331 = vrot.slane %v5277, 7
        %v5332 = vrot.slane %v5278, 7
        %v5333 = vrot.slane %v5279, 7
        %v5334 = vrot.slane %v5280, 7
        %v5335 = vrot.slane %v5281, 7
        %v5336 = vrot.slane %v5282, 7
        %v5337 = vrot.slane %v5283, 7
        %v5338 = vrot.slane %v5284, 7
        %v5339 = vrot.slane %v5285, 7
        %v5340 = vsel %vm500, %v5338, %v5339
        %v5341 = vsel %vm500, %v5337, %v5338
        %v5342 = vsel %vm500, %v5336, %v5337
        %v5343 = vsel %vm500, %v5335, %v5336
        %v5344 = vsel %vm500, %v5334, %v5335
        %v5345 = vsel %vm500, %v5333, %v5334
        %v5346 = vsel %vm500, %v5332, %v5333
        %v5347 = vsel %vm500, %v5331, %v5332
        %v5348 = vsel %vm500, %v5330, %v5331
        %v5349 = vsel %vm500, %v5329, %v5330
        %v5350 = vsel %vm500, %v5328, %v5329
        %v5351 = vsel %vm500, %v5327, %v5328
        %v5352 = vsel %vm500, %v5326, %v5327
        %v5353 = vsel %vm500, %v5325, %v5326
        %v5354 = vsel %vm500, %v5324, %v5325
        %v5355 = vsel %vm500, %v5323, %v5324
        %v5356 = vsel %vm500, %v5322, %v5323
        %v5357 = vsel %vm500, %v5321, %v5322
        %v5358 = vsel %vm500, %v5320, %v5321
        %v5359 = vsel %vm500, %v5319, %v5320
        %v5360 = vsel %vm500, %v5318, %v5319
        %v5361 = vsel %vm500, %v5317, %v5318
        %v5362 = vsel %vm500, %v5316, %v5317
        %v5363 = vsel %vm500, %v5315, %v5316
        %v5364 = vsel %vm500, %v5314, %v5315
        %v5365 = vsel %vm500, %v5313, %v5314
        %v5366 = vsel %vm500, %v5312, %v5313
        %v5367 = vsel %vm500, %v5311, %v5312
        %v5368 = vsel %vm500, %v5310, %v5311
        %v5369 = vsel %vm500, %v5309, %v5310
        %v5370 = vsel %vm500, %v5308, %v5309
        %v5371 = vsel %vm500, %v5307, %v5308
        %v5372 = vsel %vm500, %v5306, %v5307
        %v5373 = vsel %vm500, %v5305, %v5306
        %v5374 = vsel %vm500, %v5304, %v5305
        %v5375 = vsel %vm500, %v5339, %v5304
        %v5376 = vpack.c.bf16 %v5374, %v5375
        %v5377 = vpack.c.bf16 %v5372, %v5373
        %v5378 = vpack.c.bf16 %v5370, %v5371
        %v5379 = vpack.c.bf16 %v5368, %v5369
        %v5380 = vpack.c.bf16 %v5366, %v5367
        %v5381 = vpack.c.bf16 %v5364, %v5365
        %v5382 = vpack.c.bf16 %v5362, %v5363
        %v5383 = vpack.c.bf16 %v5360, %v5361
        %v5384 = vpack.c.bf16 %v5358, %v5359
        %v5385 = vpack.c.bf16 %v5356, %v5357
        %v5386 = vpack.c.bf16 %v5354, %v5355
        %v5387 = vpack.c.bf16 %v5352, %v5353
        %v5388 = vpack.c.bf16 %v5350, %v5351
        %v5389 = vpack.c.bf16 %v5348, %v5349
        %v5390 = vpack.c.bf16 %v5346, %v5347
        %v5391 = vpack.c.bf16 %v5344, %v5345
        %v5392 = vpack.c.bf16 %v5342, %v5343
        %v5393 = vpack.c.bf16 %v5340, %v5341
        %v5394 = vsel %vm681, %v5376, 0
        %v5395 = vsel %vm682, %v5377, 0
        %v5396 = vsel %vm683, %v5378, 0
        %v5397 = vsel %vm684, %v5379, 0
        %v5398 = vsel %vm685, %v5380, 0
        %v5399 = vsel %vm686, %v5381, 0
        %v5400 = vsel %vm687, %v5382, 0
        %v5401 = vsel %vm688, %v5383, 0
        %v5402 = vsel %vm689, %v5384, 0
        %v5403 = vsel %vm690, %v5385, 0
        %v5404 = vsel %vm691, %v5386, 0
        %v5405 = vsel %vm692, %v5387, 0
        %v5406 = vsel %vm693, %v5388, 0
        %v5407 = vsel %vm694, %v5389, 0
        %v5408 = vsel %vm695, %v5390, 0
        %v5409 = vsel %vm696, %v5391, 0
        %v5410 = vsel %vm697, %v5392, 0
        %v5411 = vsel %vm698, %v5393, 0
        %v5412 = vrot.slane %v5250, 1
        %v5413 = vrot.slane %v5251, 1
        %v5414 = vrot.slane %v5252, 1
        %v5415 = vrot.slane %v5253, 1
        %v5416 = vrot.slane %v5254, 1
        %v5417 = vrot.slane %v5255, 1
        %v5418 = vrot.slane %v5256, 1
        %v5419 = vrot.slane %v5257, 1
        %v5420 = vrot.slane %v5258, 1
        %v5421 = vrot.slane %v5259, 1
        %v5422 = vrot.slane %v5260, 1
        %v5423 = vrot.slane %v5261, 1
        %v5424 = vrot.slane %v5262, 1
        %v5425 = vrot.slane %v5263, 1
        %v5426 = vrot.slane %v5264, 1
        %v5427 = vrot.slane %v5265, 1
        %v5428 = vrot.slane %v5266, 1
        %v5429 = vrot.slane %v5267, 1
        %v5430 = vrot.slane %v5268, 1
        %v5431 = vrot.slane %v5269, 1
        %v5432 = vrot.slane %v5270, 1
        %v5433 = vrot.slane %v5271, 1
        %v5434 = vrot.slane %v5272, 1
        %v5435 = vrot.slane %v5273, 1
        %v5436 = vrot.slane %v5274, 1
        %v5437 = vrot.slane %v5275, 1
        %v5438 = vrot.slane %v5276, 1
        %v5439 = vrot.slane %v5277, 1
        %v5440 = vrot.slane %v5278, 1
        %v5441 = vrot.slane %v5279, 1
        %v5442 = vrot.slane %v5280, 1
        %v5443 = vrot.slane %v5281, 1
        %v5444 = vrot.slane %v5282, 1
        %v5445 = vrot.slane %v5283, 1
        %v5446 = vrot.slane %v5284, 1
        %v5447 = vrot.slane %v5285, 1
        %v5448 = vsel %vm753, %v5446, %v5447
        %v5449 = vsel %vm753, %v5445, %v5446
        %v5450 = vsel %vm753, %v5444, %v5445
        %v5451 = vsel %vm753, %v5443, %v5444
        %v5452 = vsel %vm753, %v5442, %v5443
        %v5453 = vsel %vm753, %v5441, %v5442
        %v5454 = vsel %vm753, %v5440, %v5441
        %v5455 = vsel %vm753, %v5439, %v5440
        %v5456 = vsel %vm753, %v5438, %v5439
        %v5457 = vsel %vm753, %v5437, %v5438
        %v5458 = vsel %vm753, %v5436, %v5437
        %v5459 = vsel %vm753, %v5435, %v5436
        %v5460 = vsel %vm753, %v5434, %v5435
        %v5461 = vsel %vm753, %v5433, %v5434
        %v5462 = vsel %vm753, %v5432, %v5433
        %v5463 = vsel %vm753, %v5431, %v5432
        %v5464 = vsel %vm753, %v5430, %v5431
        %v5465 = vsel %vm753, %v5429, %v5430
        %v5466 = vsel %vm753, %v5428, %v5429
        %v5467 = vsel %vm753, %v5427, %v5428
        %v5468 = vsel %vm753, %v5426, %v5427
        %v5469 = vsel %vm753, %v5425, %v5426
        %v5470 = vsel %vm753, %v5424, %v5425
        %v5471 = vsel %vm753, %v5423, %v5424
        %v5472 = vsel %vm753, %v5422, %v5423
        %v5473 = vsel %vm753, %v5421, %v5422
        %v5474 = vsel %vm753, %v5420, %v5421
        %v5475 = vsel %vm753, %v5419, %v5420
        %v5476 = vsel %vm753, %v5418, %v5419
        %v5477 = vsel %vm753, %v5417, %v5418
        %v5478 = vsel %vm753, %v5416, %v5417
        %v5479 = vsel %vm753, %v5415, %v5416
        %v5480 = vsel %vm753, %v5414, %v5415
        %v5481 = vsel %vm753, %v5413, %v5414
        %v5482 = vsel %vm753, %v5412, %v5413
        %v5483 = vsel %vm753, %v5447, %v5412
        %v5484 = vpack.c.bf16 %v5481, %v5482
        %v5485 = vpack.c.bf16 %v5479, %v5480
        %v5486 = vpack.c.bf16 %v5477, %v5478
        %v5487 = vpack.c.bf16 %v5475, %v5476
        %v5488 = vpack.c.bf16 %v5473, %v5474
        %v5489 = vpack.c.bf16 %v5471, %v5472
        %v5490 = vpack.c.bf16 %v5469, %v5470
        %v5491 = vpack.c.bf16 %v5467, %v5468
        %v5492 = vpack.c.bf16 %v5465, %v5466
        %v5493 = vpack.c.bf16 %v5463, %v5464
        %v5494 = vpack.c.bf16 %v5461, %v5462
        %v5495 = vpack.c.bf16 %v5459, %v5460
        %v5496 = vpack.c.bf16 %v5457, %v5458
        %v5497 = vpack.c.bf16 %v5455, %v5456
        %v5498 = vpack.c.bf16 %v5453, %v5454
        %v5499 = vpack.c.bf16 %v5451, %v5452
        %v5500 = vpack.c.bf16 %v5449, %v5450
        %v5501 = vpack.c.bf16 %v5483, %v5448
        %v5502 = vsel %vm934, %v5484, 0
        %v5503 = vsel %vm935, %v5485, 0
        %v5504 = vsel %vm936, %v5486, 0
        %v5505 = vsel %vm937, %v5487, 0
        %v5506 = vsel %vm938, %v5488, 0
        %v5507 = vsel %vm939, %v5489, 0
        %v5508 = vsel %vm940, %v5490, 0
        %v5509 = vsel %vm941, %v5491, 0
        %v5510 = vsel %vm942, %v5492, 0
        %v5511 = vsel %vm943, %v5493, 0
        %v5512 = vsel %vm944, %v5494, 0
        %v5513 = vsel %vm945, %v5495, 0
        %v5514 = vsel %vm946, %v5496, 0
        %v5515 = vsel %vm947, %v5497, 0
        %v5516 = vsel %vm948, %v5498, 0
        %v5517 = vsel %vm949, %v5499, 0
        %v5518 = vsel %vm950, %v5500, 0
        %v5519 = vsel %vm951, %v5501, 0
        %5538 = vrot.lane.b32.xlu0 %v5286, 64
        %v5539 = vpop.permute.xlu0 %5538
        %5540 = vrot.lane.b32.xlu0 %v5287, 64
        %v5541 = vpop.permute.xlu0 %5540
        %5542 = vrot.lane.b32.xlu0 %v5288, 64
        %v5543 = vpop.permute.xlu0 %5542
        %5544 = vrot.lane.b32.xlu0 %v5289, 64
        %v5545 = vpop.permute.xlu0 %5544
        %5546 = vrot.lane.b32.xlu0 %v5290, 64
        %v5547 = vpop.permute.xlu0 %5546
        %5548 = vrot.lane.b32.xlu0 %v5291, 64
        %v5549 = vpop.permute.xlu0 %5548
        %5550 = vrot.lane.b32.xlu0 %v5292, 64
        %v5551 = vpop.permute.xlu0 %5550
        %5552 = vrot.lane.b32.xlu0 %v5293, 64
        %v5553 = vpop.permute.xlu0 %5552
        %5554 = vrot.lane.b32.xlu0 %v5294, 64
        %v5555 = vpop.permute.xlu0 %5554
        %5556 = vrot.lane.b32.xlu0 %v5295, 64
        %v5557 = vpop.permute.xlu0 %5556
        %5558 = vrot.lane.b32.xlu0 %v5296, 64
        %v5559 = vpop.permute.xlu0 %5558
        %5560 = vrot.lane.b32.xlu0 %v5297, 64
        %v5561 = vpop.permute.xlu0 %5560
        %5562 = vrot.lane.b32.xlu0 %v5298, 64
        %v5563 = vpop.permute.xlu0 %5562
        %5564 = vrot.lane.b32.xlu0 %v5299, 64
        %v5565 = vpop.permute.xlu0 %5564
        %5566 = vrot.lane.b32.xlu0 %v5300, 64
        %v5567 = vpop.permute.xlu0 %5566
        %5568 = vrot.lane.b32.xlu0 %v5301, 64
        %v5569 = vpop.permute.xlu0 %5568
        %5570 = vrot.lane.b32.xlu0 %v5302, 64
        %v5571 = vpop.permute.xlu0 %5570
        %5572 = vrot.lane.b32.xlu0 %v5303, 64
        %v5573 = vpop.permute.xlu0 %5572
        %v5576 = vsel %vm1024, %v5394, %v5539
        %v5580 = vsel %vm1024, %v5395, %v5541
        %v5584 = vsel %vm1024, %v5396, %v5543
        %v5588 = vsel %vm1024, %v5397, %v5545
        %v5592 = vsel %vm1024, %v5398, %v5547
        %v5596 = vsel %vm1024, %v5399, %v5549
        %v5600 = vsel %vm1024, %v5400, %v5551
        %v5604 = vsel %vm1024, %v5401, %v5553
        %v5608 = vsel %vm1024, %v5402, %v5555
        %v5612 = vsel %vm1024, %v5403, %v5557
        %v5616 = vsel %vm1024, %v5404, %v5559
        %v5620 = vsel %vm1024, %v5405, %v5561
        %v5624 = vsel %vm1024, %v5406, %v5563
        %v5628 = vsel %vm1024, %v5407, %v5565
        %v5632 = vsel %vm1024, %v5408, %v5567
        %v5636 = vsel %vm1024, %v5409, %v5569
        %v5640 = vsel %vm1024, %v5410, %v5571
        %v5644 = vsel %vm1024, %v5411, %v5573
        %s5646 = scalar_lea.vmem %s1, 768
        %v5647 = vld [vmem:[%s5646] sm:$0xff]
        %v5648 = vld [vmem:[%s5646 + $0x8] sm:$0xff]
        %v5649 = vld [vmem:[%s5646 + $0x10] sm:$0xff]
        %v5650 = vld [vmem:[%s5646 + $0x18] sm:$0xff]
        %v5651 = vld [vmem:[%s5646 + $0x20] sm:$0xff]
        %v5652 = vld [vmem:[%s5646 + $0x28] sm:$0xff]
        %v5653 = vld [vmem:[%s5646 + $0x30] sm:$0xff]
        %v5654 = vld [vmem:[%s5646 + $0x38] sm:$0xff]
        %v5655 = vld [vmem:[%s5646 + $0x40] sm:$0xff]
        %v5656 = vld [vmem:[%s5646 + $0x48] sm:$0xff]
        %v5657 = vld [vmem:[%s5646 + $0x50] sm:$0xff]
        %v5658 = vld [vmem:[%s5646 + $0x58] sm:$0xff]
        %v5659 = vld [vmem:[%s5646 + $0x60] sm:$0xff]
        %v5660 = vld [vmem:[%s5646 + $0x68] sm:$0xff]
        %v5661 = vld [vmem:[%s5646 + $0x70] sm:$0xff]
        %v5662 = vld [vmem:[%s5646 + $0x78] sm:$0xff]
        %v5663 = vld [vmem:[%s5646 + $0x80] sm:$0xff]
        %v5664 = vld [vmem:[%s5646 + $0x88] sm:$0xff]
        %v5665 = vld [vmem:[%s5646 + $0x90] sm:$0xff]
        %v5666 = vld [vmem:[%s5646 + $0x98] sm:$0xff]
        %v5667 = vld [vmem:[%s5646 + $0xa0] sm:$0xff]
        %v5668 = vld [vmem:[%s5646 + $0xa8] sm:$0xff]
        %v5669 = vld [vmem:[%s5646 + $0xb0] sm:$0xff]
        %v5670 = vld [vmem:[%s5646 + $0xb8] sm:$0xff]
        %v5695 = vunpack.c.l.b16 %v5647
        %v5696 = vunpack.c.h.b16 %v5647
        %v5697 = vunpack.c.l.b16 %v5648
        %v5698 = vunpack.c.h.b16 %v5648
        %v5699 = vunpack.c.l.b16 %v5649
        %v5700 = vunpack.c.h.b16 %v5649
        %v5701 = vunpack.c.l.b16 %v5650
        %v5702 = vunpack.c.h.b16 %v5650
        %v5703 = vunpack.c.l.b16 %v5651
        %v5704 = vunpack.c.h.b16 %v5651
        %v5705 = vunpack.c.l.b16 %v5652
        %v5706 = vunpack.c.h.b16 %v5652
        %v5707 = vunpack.c.l.b16 %v5653
        %v5708 = vunpack.c.h.b16 %v5653
        %v5709 = vunpack.c.l.b16 %v5654
        %v5710 = vunpack.c.h.b16 %v5654
        %v5711 = vunpack.c.l.b16 %v5655
        %v5712 = vunpack.c.h.b16 %v5655
        %v5713 = vunpack.c.l.b16 %v5656
        %v5714 = vunpack.c.h.b16 %v5656
        %v5715 = vunpack.c.l.b16 %v5657
        %v5716 = vunpack.c.h.b16 %v5657
        %v5717 = vunpack.c.l.b16 %v5658
        %v5718 = vunpack.c.h.b16 %v5658
        %v5719 = vunpack.c.l.b16 %v5659
        %v5720 = vunpack.c.h.b16 %v5659
        %v5721 = vunpack.c.l.b16 %v5660
        %v5722 = vunpack.c.h.b16 %v5660
        %v5723 = vunpack.c.l.b16 %v5661
        %v5724 = vunpack.c.h.b16 %v5661
        %v5725 = vunpack.c.l.b16 %v5662
        %v5726 = vunpack.c.h.b16 %v5662
        %v5727 = vunpack.c.l.b16 %v5663
        %v5728 = vunpack.c.h.b16 %v5663
        %v5729 = vunpack.c.l.b16 %v5664
        %v5730 = vunpack.c.h.b16 %v5664
        %v5731 = vunpack.c.l.b16 %v5665
        %v5732 = vunpack.c.h.b16 %v5665
        %v5733 = vunpack.c.l.b16 %v5666
        %v5734 = vunpack.c.h.b16 %v5666
        %v5735 = vunpack.c.l.b16 %v5667
        %v5736 = vunpack.c.h.b16 %v5667
        %v5737 = vunpack.c.l.b16 %v5668
        %v5738 = vunpack.c.h.b16 %v5668
        %v5739 = vunpack.c.l.b16 %v5669
        %v5740 = vunpack.c.h.b16 %v5669
        %v5741 = vunpack.c.l.b16 %v5670
        %v5742 = vunpack.c.h.b16 %v5670
        %v5743 = vpack.c.b16 %v5697, %v5695
        %v5744 = vpack.c.b16 %v5698, %v5696
        %v5745 = vpack.c.b16 %v5701, %v5699
        %v5746 = vpack.c.b16 %v5702, %v5700
        %v5747 = vpack.c.b16 %v5705, %v5703
        %v5748 = vpack.c.b16 %v5706, %v5704
        %v5749 = vpack.c.b16 %v5709, %v5707
        %v5750 = vpack.c.b16 %v5710, %v5708
        %v5751 = vpack.c.b16 %v5713, %v5711
        %v5752 = vpack.c.b16 %v5714, %v5712
        %v5753 = vpack.c.b16 %v5717, %v5715
        %v5754 = vpack.c.b16 %v5718, %v5716
        %v5755 = vpack.c.b16 %v5721, %v5719
        %v5756 = vpack.c.b16 %v5722, %v5720
        %v5757 = vpack.c.b16 %v5725, %v5723
        %v5758 = vpack.c.b16 %v5726, %v5724
        %v5759 = vpack.c.b16 %v5729, %v5727
        %v5760 = vpack.c.b16 %v5730, %v5728
        %v5761 = vpack.c.b16 %v5733, %v5731
        %v5762 = vpack.c.b16 %v5734, %v5732
        %v5763 = vpack.c.b16 %v5737, %v5735
        %v5764 = vpack.c.b16 %v5738, %v5736
        %v5765 = vpack.c.b16 %v5741, %v5739
        %v5766 = vpack.c.b16 %v5742, %v5740
        %v5792 = vsel %vm1024, %v5502, 0
        %v5795 = vsel %vm1024, %v5503, 0
        %v5798 = vsel %vm1024, %v5504, 0
        %v5801 = vsel %vm1024, %v5505, 0
        %v5804 = vsel %vm1024, %v5506, 0
        %v5807 = vsel %vm1024, %v5507, 0
        %v5810 = vsel %vm1024, %v5508, 0
        %v5813 = vsel %vm1024, %v5509, 0
        %v5816 = vsel %vm1024, %v5510, 0
        %v5819 = vsel %vm1024, %v5511, 0
        %v5822 = vsel %vm1024, %v5512, 0
        %v5825 = vsel %vm1024, %v5513, 0
        %v5828 = vsel %vm1024, %v5514, 0
        %v5831 = vsel %vm1024, %v5515, 0
        %v5834 = vsel %vm1024, %v5516, 0
        %v5837 = vsel %vm1024, %v5517, 0
        %v5840 = vsel %vm1024, %v5518, 0
        %v5843 = vsel %vm1024, %v5519, 0
        %5845 = vmatprep.subr.bf16.mxu0 %v5744
        %5846 = vmatpush1.bf16.msra.mxu0 %v5743
        %5847 = vmatprep.subr.bf16.mxu0 %v5746
        %5848 = vmatpush1.bf16.msra.mxu0 %v5745
        %5849 = vmatprep.subr.bf16.mxu0 %v5748
        %5850 = vmatpush1.bf16.msra.mxu0 %v5747
        %5851 = vmatprep.subr.bf16.mxu0 %v5750
        %5852 = vmatpush1.bf16.msra.mxu0 %v5749
        %5853 = vmatprep.subr.bf16.mxu0 %v5752
        %5854 = vmatpush1.bf16.msra.mxu0 %v5751
        %5855 = vmatprep.subr.bf16.mxu0 %v5754
        %5856 = vmatpush1.bf16.msra.mxu0 %v5753
        %5857 = vmatprep.subr.bf16.mxu0 %v5756
        %5858 = vmatpush1.bf16.msra.mxu0 %v5755
        %5859 = vmatprep.subr.bf16.mxu0 %v5758
        %5860 = vmatpush1.bf16.msra.mxu0 %v5757
        %5861 = vmatprep.subr.bf16.mxu0 %v5760
        %5862 = vmatpush1.bf16.msra.mxu0 %v5759
        %5863 = vmatprep.subr.bf16.mxu0 %v5762
        %5864 = vmatpush1.bf16.msra.mxu0 %v5761
        %5865 = vmatprep.subr.bf16.mxu0 %v5764
        %5866 = vmatpush1.bf16.msra.mxu0 %v5763
        %5867 = vmatprep.subr.bf16.mxu0 %v5766
        %5868 = vmatpush1.bf16.msra.mxu0 %v5765
        %5869 = vmatprep.subr.bf16.mxu0 0
        %5870 = vmatpush1.bf16.msra.mxu0 0
        %5871 = vmatprep.subr.bf16.mxu0 0
        %5872 = vmatpush1.bf16.msra.mxu0 0
        %5873 = vmatprep.subr.bf16.mxu0 0
        %5874 = vmatpush1.bf16.msra.mxu0 0
        %5875 = vmatprep.subr.bf16.mxu0 0
        %5876 = vmatpush1.bf16.msra.mxu0 0
        %5877 = vmatprep.mubr.bf16.mxu0 %v5792
        %5878 = vmatmul.mubr.bf16.gmra.mrb[0].mxu0 %v5576
        %v5879 = vpop.f32.mrb[0].mxu0
        %v5880 = vadd.f32 0.0, %v5879
        %v5881 = vpop.f32.mrb[0].mxu0
        %v5882 = vpop.f32.mrb[0].mxu0
        %v5883 = vadd.f32 0.0, %v5882
        %v5884 = vpop.f32.mrb[0].mxu0
        %5885 = vmatprep.mubr.bf16.mxu0 %v5795
        %5886 = vmatmul.mubr.bf16.gmra.mrb[0].mxu0 %v5580
        %v5887 = vpop.f32.mrb[0].mxu0
        %v5888 = vadd.f32 0.0, %v5887
        %v5889 = vpop.f32.mrb[0].mxu0
        %v5890 = vpop.f32.mrb[0].mxu0
        %v5891 = vadd.f32 0.0, %v5890
        %v5892 = vpop.f32.mrb[0].mxu0
        %5893 = vmatprep.mubr.bf16.mxu0 %v5798
        %5894 = vmatmul.mubr.bf16.gmra.mrb[0].mxu0 %v5584
        %v5895 = vpop.f32.mrb[0].mxu0
        %v5896 = vadd.f32 0.0, %v5895
        %v5897 = vpop.f32.mrb[0].mxu0
        %v5898 = vadd.f32 0.0, %v5897
        %v5899 = vpop.f32.mrb[0].mxu0
        %v5900 = vadd.f32 0.0, %v5899
        %v5901 = vpop.f32.mrb[0].mxu0
        %v5902 = vadd.f32 0.0, %v5901
        %5903 = vmatprep.mubr.bf16.mxu0 %v5801
        %5904 = vmatmul.mubr.bf16.gmra.mrb[0].mxu0 %v5588
        %v5905 = vpop.f32.mrb[0].mxu0
        %v5906 = vadd.f32 0.0, %v5905
        %v5907 = vpop.f32.mrb[0].mxu0
        %v5908 = vadd.f32 0.0, %v5907
        %v5909 = vpop.f32.mrb[0].mxu0
        %v5910 = vadd.f32 0.0, %v5909
        %v5911 = vpop.f32.mrb[0].mxu0
        %v5912 = vadd.f32 0.0, %v5911
        %5913 = vmatprep.mubr.bf16.mxu0 %v5804
        %5914 = vmatmul.mubr.bf16.gmra.mrb[0].mxu0 %v5592
        %v5915 = vpop.f32.mrb[0].mxu0
        %v5916 = vadd.f32 0.0, %v5915
        %v5917 = vpop.f32.mrb[0].mxu0
        %v5918 = vadd.f32 0.0, %v5917
        %v5919 = vpop.f32.mrb[0].mxu0
        %v5920 = vadd.f32 0.0, %v5919
        %v5921 = vpop.f32.mrb[0].mxu0
        %v5922 = vadd.f32 0.0, %v5921
        %5923 = vmatprep.mubr.bf16.mxu0 %v5807
        %5924 = vmatmul.mubr.bf16.gmra.mrb[0].mxu0 %v5596
        %v5925 = vpop.f32.mrb[0].mxu0
        %v5926 = vadd.f32 0.0, %v5925
        %v5927 = vpop.f32.mrb[0].mxu0
        %v5928 = vadd.f32 0.0, %v5927
        %v5929 = vpop.f32.mrb[0].mxu0
        %v5930 = vadd.f32 0.0, %v5929
        %v5931 = vpop.f32.mrb[0].mxu0
        %v5932 = vadd.f32 0.0, %v5931
        %5933 = vmatprep.mubr.bf16.mxu0 %v5810
        %5934 = vmatmul.mubr.bf16.gmra.mrb[0].mxu0 %v5600
        %v5935 = vpop.f32.mrb[0].mxu0
        %v5936 = vadd.f32 0.0, %v5935
        %v5937 = vpop.f32.mrb[0].mxu0
        %v5938 = vadd.f32 0.0, %v5937
        %v5939 = vpop.f32.mrb[0].mxu0
        %v5940 = vadd.f32 0.0, %v5939
        %v5941 = vpop.f32.mrb[0].mxu0
        %v5942 = vadd.f32 0.0, %v5941
        %5943 = vmatprep.mubr.bf16.mxu0 %v5813
        %5944 = vmatmul.mubr.bf16.gmra.mrb[0].mxu0 %v5604
        %v5945 = vpop.f32.mrb[0].mxu0
        %v5946 = vadd.f32 0.0, %v5945
        %v5947 = vpop.f32.mrb[0].mxu0
        %v5948 = vadd.f32 0.0, %v5947
        %v5949 = vpop.f32.mrb[0].mxu0
        %v5950 = vadd.f32 0.0, %v5949
        %v5951 = vpop.f32.mrb[0].mxu0
        %v5952 = vadd.f32 0.0, %v5951
        %5953 = vmatprep.mubr.bf16.mxu0 %v5816
        %5954 = vmatmul.mubr.bf16.gmra.mrb[0].mxu0 %v5608
        %v5955 = vpop.f32.mrb[0].mxu0
        %v5956 = vadd.f32 0.0, %v5955
        %v5957 = vpop.f32.mrb[0].mxu0
        %v5958 = vadd.f32 0.0, %v5957
        %v5959 = vpop.f32.mrb[0].mxu0
        %v5960 = vadd.f32 0.0, %v5959
        %v5961 = vpop.f32.mrb[0].mxu0
        %v5962 = vadd.f32 0.0, %v5961
        %5963 = vmatprep.mubr.bf16.mxu0 %v5819
        %5964 = vmatmul.mubr.bf16.gmra.mrb[0].mxu0 %v5612
        %v5965 = vpop.f32.mrb[0].mxu0
        %v5966 = vadd.f32 0.0, %v5965
        %v5967 = vpop.f32.mrb[0].mxu0
        %v5968 = vadd.f32 0.0, %v5967
        %v5969 = vpop.f32.mrb[0].mxu0
        %v5970 = vadd.f32 0.0, %v5969
        %v5971 = vpop.f32.mrb[0].mxu0
        %v5972 = vadd.f32 0.0, %v5971
        %5973 = vmatprep.mubr.bf16.mxu0 %v5822
        %5974 = vmatmul.mubr.bf16.gmra.mrb[0].mxu0 %v5616
        %v5975 = vpop.f32.mrb[0].mxu0
        %v5976 = vadd.f32 0.0, %v5975
        %v5977 = vpop.f32.mrb[0].mxu0
        %v5978 = vadd.f32 0.0, %v5977
        %v5979 = vpop.f32.mrb[0].mxu0
        %v5980 = vadd.f32 0.0, %v5979
        %v5981 = vpop.f32.mrb[0].mxu0
        %v5982 = vadd.f32 0.0, %v5981
        %5983 = vmatprep.mubr.bf16.mxu0 %v5825
        %5984 = vmatmul.mubr.bf16.gmra.mrb[0].mxu0 %v5620
        %v5985 = vpop.f32.mrb[0].mxu0
        %v5986 = vadd.f32 0.0, %v5985
        %v5987 = vpop.f32.mrb[0].mxu0
        %v5988 = vadd.f32 0.0, %v5987
        %v5989 = vpop.f32.mrb[0].mxu0
        %v5990 = vadd.f32 0.0, %v5989
        %v5991 = vpop.f32.mrb[0].mxu0
        %v5992 = vadd.f32 0.0, %v5991
        %5993 = vmatprep.mubr.bf16.mxu0 %v5828
        %5994 = vmatmul.mubr.bf16.gmra.mrb[0].mxu0 %v5624
        %v5995 = vpop.f32.mrb[0].mxu0
        %v5996 = vadd.f32 0.0, %v5995
        %v5997 = vpop.f32.mrb[0].mxu0
        %v5998 = vadd.f32 0.0, %v5997
        %v5999 = vpop.f32.mrb[0].mxu0
        %v6000 = vadd.f32 0.0, %v5999
        %v6001 = vpop.f32.mrb[0].mxu0
        %v6002 = vadd.f32 0.0, %v6001
        %6003 = vmatprep.mubr.bf16.mxu0 %v5831
        %6004 = vmatmul.mubr.bf16.gmra.mrb[0].mxu0 %v5628
        %v6005 = vpop.f32.mrb[0].mxu0
        %v6006 = vadd.f32 0.0, %v6005
        %v6007 = vpop.f32.mrb[0].mxu0
        %v6008 = vadd.f32 0.0, %v6007
        %v6009 = vpop.f32.mrb[0].mxu0
        %v6010 = vadd.f32 0.0, %v6009
        %v6011 = vpop.f32.mrb[0].mxu0
        %v6012 = vadd.f32 0.0, %v6011
        %6013 = vmatprep.mubr.bf16.mxu0 %v5834
        %6014 = vmatmul.mubr.bf16.gmra.mrb[0].mxu0 %v5632
        %v6015 = vpop.f32.mrb[0].mxu0
        %v6016 = vadd.f32 0.0, %v6015
        %v6017 = vpop.f32.mrb[0].mxu0
        %v6018 = vadd.f32 0.0, %v6017
        %v6019 = vpop.f32.mrb[0].mxu0
        %v6020 = vadd.f32 0.0, %v6019
        %v6021 = vpop.f32.mrb[0].mxu0
        %v6022 = vadd.f32 0.0, %v6021
        %6023 = vmatprep.mubr.bf16.mxu0 %v5837
        %6024 = vmatmul.mubr.bf16.gmra.mrb[0].mxu0 %v5636
        %v6025 = vpop.f32.mrb[0].mxu0
        %v6026 = vadd.f32 0.0, %v6025
        %v6027 = vpop.f32.mrb[0].mxu0
        %v6028 = vadd.f32 0.0, %v6027
        %v6029 = vpop.f32.mrb[0].mxu0
        %v6030 = vadd.f32 0.0, %v6029
        %v6031 = vpop.f32.mrb[0].mxu0
        %v6032 = vadd.f32 0.0, %v6031
        %6033 = vmatprep.mubr.bf16.mxu0 %v5840
        %6034 = vmatmul.mubr.bf16.gmra.mrb[0].mxu0 %v5640
        %v6035 = vpop.f32.mrb[0].mxu0
        %v6036 = vadd.f32 0.0, %v6035
        %v6037 = vpop.f32.mrb[0].mxu0
        %v6038 = vadd.f32 0.0, %v6037
        %v6039 = vpop.f32.mrb[0].mxu0
        %v6040 = vadd.f32 0.0, %v6039
        %v6041 = vpop.f32.mrb[0].mxu0
        %v6042 = vadd.f32 0.0, %v6041
        %6043 = vmatprep.mubr.bf16.mxu0 %v5843
        %6044 = vmatmul.mubr.bf16.gmra.mrb[0].mxu0 %v5644
        %v6045 = vpop.f32.mrb[0].mxu0
        %v6046 = vpop.f32.mrb[0].mxu0
        %v6047 = vadd.f32 0.0, %v6046
        %v6048 = vpop.f32.mrb[0].mxu0
        %v6049 = vpop.f32.mrb[0].mxu0
        %v6050 = vadd.f32 0.0, %v6049
        %6051 = vdwg.mxu0
        %6084 = vrot.lane.b32.xlu0 %v5888, 64
        %v6085 = vpop.permute.xlu0 %6084
        %6086 = vrot.lane.b32.xlu0 %v5891, 64
        %v6087 = vpop.permute.xlu0 %6086
        %6088 = vrot.lane.b32.xlu0 %v5896, 64
        %v6089 = vpop.permute.xlu0 %6088
        %6090 = vrot.lane.b32.xlu0 %v5900, 64
        %v6091 = vpop.permute.xlu0 %6090
        %6092 = vrot.lane.b32.xlu0 %v5906, 64
        %v6093 = vpop.permute.xlu0 %6092
        %6094 = vrot.lane.b32.xlu0 %v5910, 64
        %v6095 = vpop.permute.xlu0 %6094
        %6096 = vrot.lane.b32.xlu0 %v5916, 64
        %v6097 = vpop.permute.xlu0 %6096
        %6098 = vrot.lane.b32.xlu0 %v5920, 64
        %v6099 = vpop.permute.xlu0 %6098
        %6100 = vrot.lane.b32.xlu0 %v5926, 64
        %v6101 = vpop.permute.xlu0 %6100
        %6102 = vrot.lane.b32.xlu0 %v5930, 64
        %v6103 = vpop.permute.xlu0 %6102
        %6104 = vrot.lane.b32.xlu0 %v5936, 64
        %v6105 = vpop.permute.xlu0 %6104
        %6106 = vrot.lane.b32.xlu0 %v5940, 64
        %v6107 = vpop.permute.xlu0 %6106
        %6108 = vrot.lane.b32.xlu0 %v5946, 64
        %v6109 = vpop.permute.xlu0 %6108
        %6110 = vrot.lane.b32.xlu0 %v5950, 64
        %v6111 = vpop.permute.xlu0 %6110
        %6112 = vrot.lane.b32.xlu0 %v5956, 64
        %v6113 = vpop.permute.xlu0 %6112
        %6114 = vrot.lane.b32.xlu0 %v5960, 64
        %v6115 = vpop.permute.xlu0 %6114
        %6116 = vrot.lane.b32.xlu0 %v5966, 64
        %v6117 = vpop.permute.xlu0 %6116
        %6118 = vrot.lane.b32.xlu0 %v5970, 64
        %v6119 = vpop.permute.xlu0 %6118
        %6120 = vrot.lane.b32.xlu0 %v5976, 64
        %v6121 = vpop.permute.xlu0 %6120
        %6122 = vrot.lane.b32.xlu0 %v5980, 64
        %v6123 = vpop.permute.xlu0 %6122
        %6124 = vrot.lane.b32.xlu0 %v5986, 64
        %v6125 = vpop.permute.xlu0 %6124
        %6126 = vrot.lane.b32.xlu0 %v5990, 64
        %v6127 = vpop.permute.xlu0 %6126
        %6128 = vrot.lane.b32.xlu0 %v5996, 64
        %v6129 = vpop.permute.xlu0 %6128
        %6130 = vrot.lane.b32.xlu0 %v6000, 64
        %v6131 = vpop.permute.xlu0 %6130
        %6132 = vrot.lane.b32.xlu0 %v6006, 64
        %v6133 = vpop.permute.xlu0 %6132
        %6134 = vrot.lane.b32.xlu0 %v6010, 64
        %v6135 = vpop.permute.xlu0 %6134
        %6136 = vrot.lane.b32.xlu0 %v6016, 64
        %v6137 = vpop.permute.xlu0 %6136
        %6138 = vrot.lane.b32.xlu0 %v6020, 64
        %v6139 = vpop.permute.xlu0 %6138
        %6140 = vrot.lane.b32.xlu0 %v6026, 64
        %v6141 = vpop.permute.xlu0 %6140
        %6142 = vrot.lane.b32.xlu0 %v6030, 64
        %v6143 = vpop.permute.xlu0 %6142
        %6144 = vrot.lane.b32.xlu0 %v6036, 64
        %v6145 = vpop.permute.xlu0 %6144
        %6146 = vrot.lane.b32.xlu0 %v6040, 64
        %v6147 = vpop.permute.xlu0 %6146
        %v6180 = vadd.f32 %v5880, %v6085
        %v6181 = vadd.f32 %v5883, %v6087
        %v6182 = vadd.f32 %v5888, %v6089
        %v6183 = vadd.f32 %v5891, %v6091
        %v6184 = vadd.f32 %v5896, %v6093
        %v6185 = vadd.f32 %v5900, %v6095
        %v6186 = vadd.f32 %v5906, %v6097
        %v6187 = vadd.f32 %v5910, %v6099
        %v6188 = vadd.f32 %v5916, %v6101
        %v6189 = vadd.f32 %v5920, %v6103
        %v6190 = vadd.f32 %v5926, %v6105
        %v6191 = vadd.f32 %v5930, %v6107
        %v6192 = vadd.f32 %v5936, %v6109
        %v6193 = vadd.f32 %v5940, %v6111
        %v6194 = vadd.f32 %v5946, %v6113
        %v6195 = vadd.f32 %v5950, %v6115
        %v6196 = vadd.f32 %v5956, %v6117
        %v6197 = vadd.f32 %v5960, %v6119
        %v6198 = vadd.f32 %v5966, %v6121
        %v6199 = vadd.f32 %v5970, %v6123
        %v6200 = vadd.f32 %v5976, %v6125
        %v6201 = vadd.f32 %v5980, %v6127
        %v6202 = vadd.f32 %v5986, %v6129
        %v6203 = vadd.f32 %v5990, %v6131
        %v6204 = vadd.f32 %v5996, %v6133
        %v6205 = vadd.f32 %v6000, %v6135
        %v6206 = vadd.f32 %v6006, %v6137
        %v6207 = vadd.f32 %v6010, %v6139
        %v6208 = vadd.f32 %v6016, %v6141
        %v6209 = vadd.f32 %v6020, %v6143
        %v6210 = vadd.f32 %v6026, %v6145
        %v6211 = vadd.f32 %v6030, %v6147
        %v6212 = vadd.f32 %v6180, %v5898
        %v6213 = vadd.f32 %v6181, %v5902
        %v6214 = vadd.f32 %v6182, %v5908
        %v6215 = vadd.f32 %v6183, %v5912
        %v6216 = vadd.f32 %v6184, %v5918
        %v6217 = vadd.f32 %v6185, %v5922
        %v6218 = vadd.f32 %v6186, %v5928
        %v6219 = vadd.f32 %v6187, %v5932
        %v6220 = vadd.f32 %v6188, %v5938
        %v6221 = vadd.f32 %v6189, %v5942
        %v6222 = vadd.f32 %v6190, %v5948
        %v6223 = vadd.f32 %v6191, %v5952
        %v6224 = vadd.f32 %v6192, %v5958
        %v6225 = vadd.f32 %v6193, %v5962
        %v6226 = vadd.f32 %v6194, %v5968
        %v6227 = vadd.f32 %v6195, %v5972
        %v6228 = vadd.f32 %v6196, %v5978
        %v6229 = vadd.f32 %v6197, %v5982
        %v6230 = vadd.f32 %v6198, %v5988
        %v6231 = vadd.f32 %v6199, %v5992
        %v6232 = vadd.f32 %v6200, %v5998
        %v6233 = vadd.f32 %v6201, %v6002
        %v6234 = vadd.f32 %v6202, %v6008
        %v6235 = vadd.f32 %v6203, %v6012
        %v6236 = vadd.f32 %v6204, %v6018
        %v6237 = vadd.f32 %v6205, %v6022
        %v6238 = vadd.f32 %v6206, %v6028
        %v6239 = vadd.f32 %v6207, %v6032
        %v6240 = vadd.f32 %v6208, %v6038
        %v6241 = vadd.f32 %v6209, %v6042
        %v6242 = vadd.f32 %v6210, %v6047
        %v6243 = vadd.f32 %v6211, %v6050
        %s6244 = scalar_lea.vmem %s2, 4
        %v6245 = vld [vmem:[%s6244] sm:$0x1]
        %v6247 = vlaneseq
        %v6248 = vshrl.u32 %v6247, 7
        %v6249 = vsub.s32 0, %v6248
        %v6250 = vrot.slane %v6245, %v6249
        %v6252 = vmul.f32 %v6212, %v6250
        %v6253 = vmul.f32 %v6213, %v6250
        %v6254 = vmul.f32 %v6214, %v6250
        %v6255 = vmul.f32 %v6215, %v6250
        %v6256 = vmul.f32 %v6216, %v6250
        %v6257 = vmul.f32 %v6217, %v6250
        %v6258 = vmul.f32 %v6218, %v6250
        %v6259 = vmul.f32 %v6219, %v6250
        %v6260 = vmul.f32 %v6220, %v6250
        %v6261 = vmul.f32 %v6221, %v6250
        %v6262 = vmul.f32 %v6222, %v6250
        %v6263 = vmul.f32 %v6223, %v6250
        %v6264 = vmul.f32 %v6224, %v6250
        %v6265 = vmul.f32 %v6225, %v6250
        %v6266 = vmul.f32 %v6226, %v6250
        %v6267 = vmul.f32 %v6227, %v6250
        %v6268 = vmul.f32 %v6228, %v6250
        %v6269 = vmul.f32 %v6229, %v6250
        %v6270 = vmul.f32 %v6230, %v6250
        %v6271 = vmul.f32 %v6231, %v6250
        %v6272 = vmul.f32 %v6232, %v6250
        %v6273 = vmul.f32 %v6233, %v6250
        %v6274 = vmul.f32 %v6234, %v6250
        %v6275 = vmul.f32 %v6235, %v6250
        %v6276 = vmul.f32 %v6236, %v6250
        %v6277 = vmul.f32 %v6237, %v6250
        %v6278 = vmul.f32 %v6238, %v6250
        %v6279 = vmul.f32 %v6239, %v6250
        %v6280 = vmul.f32 %v6240, %v6250
        %v6281 = vmul.f32 %v6241, %v6250
        %v6282 = vmul.f32 %v6242, %v6250
        %v6283 = vmul.f32 %v6243, %v6250
        %s6284 = scalar_lea.vmem %s3, 4
        %v6285 = vld [vmem:[%s6284] sm:$0x1]
        %v6287 = vlaneseq
        %v6288 = vshrl.u32 %v6287, 7
        %v6289 = vsub.s32 0, %v6288
        %v6290 = vrot.slane %v6285, %v6289
        %v6292 = vadd.f32 %v6252, %v6290
        %v6293 = vadd.f32 %v6253, %v6290
        %v6294 = vadd.f32 %v6254, %v6290
        %v6295 = vadd.f32 %v6255, %v6290
        %v6296 = vadd.f32 %v6256, %v6290
        %v6297 = vadd.f32 %v6257, %v6290
        %v6298 = vadd.f32 %v6258, %v6290
        %v6299 = vadd.f32 %v6259, %v6290
        %v6300 = vadd.f32 %v6260, %v6290
        %v6301 = vadd.f32 %v6261, %v6290
        %v6302 = vadd.f32 %v6262, %v6290
        %v6303 = vadd.f32 %v6263, %v6290
        %v6304 = vadd.f32 %v6264, %v6290
        %v6305 = vadd.f32 %v6265, %v6290
        %v6306 = vadd.f32 %v6266, %v6290
        %v6307 = vadd.f32 %v6267, %v6290
        %v6308 = vadd.f32 %v6268, %v6290
        %v6309 = vadd.f32 %v6269, %v6290
        %v6310 = vadd.f32 %v6270, %v6290
        %v6311 = vadd.f32 %v6271, %v6290
        %v6312 = vadd.f32 %v6272, %v6290
        %v6313 = vadd.f32 %v6273, %v6290
        %v6314 = vadd.f32 %v6274, %v6290
        %v6315 = vadd.f32 %v6275, %v6290
        %v6316 = vadd.f32 %v6276, %v6290
        %v6317 = vadd.f32 %v6277, %v6290
        %v6318 = vadd.f32 %v6278, %v6290
        %v6319 = vadd.f32 %v6279, %v6290
        %v6320 = vadd.f32 %v6280, %v6290
        %v6321 = vadd.f32 %v6281, %v6290
        %v6322 = vadd.f32 %v6282, %v6290
        %v6323 = vadd.f32 %v6283, %v6290
        %v6324 = vmax.f32 %v6292, 0.0
        %v6325 = vmax.f32 %v6293, 0.0
        %v6326 = vmax.f32 %v6294, 0.0
        %v6327 = vmax.f32 %v6295, 0.0
        %v6328 = vmax.f32 %v6296, 0.0
        %v6329 = vmax.f32 %v6297, 0.0
        %v6330 = vmax.f32 %v6298, 0.0
        %v6331 = vmax.f32 %v6299, 0.0
        %v6332 = vmax.f32 %v6300, 0.0
        %v6333 = vmax.f32 %v6301, 0.0
        %v6334 = vmax.f32 %v6302, 0.0
        %v6335 = vmax.f32 %v6303, 0.0
        %v6336 = vmax.f32 %v6304, 0.0
        %v6337 = vmax.f32 %v6305, 0.0
        %v6338 = vmax.f32 %v6306, 0.0
        %v6339 = vmax.f32 %v6307, 0.0
        %v6340 = vmax.f32 %v6308, 0.0
        %v6341 = vmax.f32 %v6309, 0.0
        %v6342 = vmax.f32 %v6310, 0.0
        %v6343 = vmax.f32 %v6311, 0.0
        %v6344 = vmax.f32 %v6312, 0.0
        %v6345 = vmax.f32 %v6313, 0.0
        %v6346 = vmax.f32 %v6314, 0.0
        %v6347 = vmax.f32 %v6315, 0.0
        %v6348 = vmax.f32 %v6316, 0.0
        %v6349 = vmax.f32 %v6317, 0.0
        %v6350 = vmax.f32 %v6318, 0.0
        %v6351 = vmax.f32 %v6319, 0.0
        %v6352 = vmax.f32 %v6320, 0.0
        %v6353 = vmax.f32 %v6321, 0.0
        %v6354 = vmax.f32 %v6322, 0.0
        %v6355 = vmax.f32 %v6323, 0.0
        %6356 = vst.msk [vmem:[#allocation2 + $0x10] sm:$0xff] %vm1024, %v6324
        %6357 = vst.msk [vmem:[#allocation2 + $0x18] sm:$0xff] %vm1024, %v6325
        %6358 = vst.msk [vmem:[#allocation2 + $0x20] sm:$0xff] %vm1024, %v6326
        %6359 = vst.msk [vmem:[#allocation2 + $0x28] sm:$0xff] %vm1024, %v6327
        %6360 = vst.msk [vmem:[#allocation2 + $0x30] sm:$0xff] %vm1024, %v6328
        %6361 = vst.msk [vmem:[#allocation2 + $0x38] sm:$0xff] %vm1024, %v6329
        %6362 = vst.msk [vmem:[#allocation2 + $0x40] sm:$0xff] %vm1024, %v6330
        %6363 = vst.msk [vmem:[#allocation2 + $0x48] sm:$0xff] %vm1024, %v6331
        %6364 = vst.msk [vmem:[#allocation2 + $0x50] sm:$0xff] %vm1024, %v6332
        %6365 = vst.msk [vmem:[#allocation2 + $0x58] sm:$0xff] %vm1024, %v6333
        %6366 = vst.msk [vmem:[#allocation2 + $0x60] sm:$0xff] %vm1024, %v6334
        %6367 = vst.msk [vmem:[#allocation2 + $0x68] sm:$0xff] %vm1024, %v6335
        %6368 = vst.msk [vmem:[#allocation2 + $0x70] sm:$0xff] %vm1024, %v6336
        %6369 = vst.msk [vmem:[#allocation2 + $0x78] sm:$0xff] %vm1024, %v6337
        %6370 = vst.msk [vmem:[#allocation2 + $0x80] sm:$0xff] %vm1024, %v6338
        %6371 = vst.msk [vmem:[#allocation2 + $0x88] sm:$0xff] %vm1024, %v6339
        %6372 = vst.msk [vmem:[#allocation2 + $0x90] sm:$0xff] %vm1024, %v6340
        %6373 = vst.msk [vmem:[#allocation2 + $0x98] sm:$0xff] %vm1024, %v6341
        %6374 = vst.msk [vmem:[#allocation2 + $0xa0] sm:$0xff] %vm1024, %v6342
        %6375 = vst.msk [vmem:[#allocation2 + $0xa8] sm:$0xff] %vm1024, %v6343
        %6376 = vst.msk [vmem:[#allocation2 + $0xb0] sm:$0xff] %vm1024, %v6344
        %6377 = vst.msk [vmem:[#allocation2 + $0xb8] sm:$0xff] %vm1024, %v6345
        %6378 = vst.msk [vmem:[#allocation2 + $0xc0] sm:$0xff] %vm1024, %v6346
        %6379 = vst.msk [vmem:[#allocation2 + $0xc8] sm:$0xff] %vm1024, %v6347
        %6380 = vst.msk [vmem:[#allocation2 + $0xd0] sm:$0xff] %vm1024, %v6348
        %6381 = vst.msk [vmem:[#allocation2 + $0xd8] sm:$0xff] %vm1024, %v6349
        %6382 = vst.msk [vmem:[#allocation2 + $0xe0] sm:$0xff] %vm1024, %v6350
        %6383 = vst.msk [vmem:[#allocation2 + $0xe8] sm:$0xff] %vm1024, %v6351
        %6384 = vst.msk [vmem:[#allocation2 + $0xf0] sm:$0xff] %vm1024, %v6352
        %6385 = vst.msk [vmem:[#allocation2 + $0xf8] sm:$0xff] %vm1024, %v6353
        %6386 = vst.msk [vmem:[#allocation2 + $0x100] sm:$0xff] %vm1024, %v6354
        %6387 = vst.msk [vmem:[#allocation2 + $0x108] sm:$0xff] %vm1024, %v6355
        %v6388 = vld [vmem:[#allocation2] sm:$0xff]
        %v6389 = vld [vmem:[#allocation2 + $0x8] sm:$0xff]
        %v6390 = vld [vmem:[#allocation2 + $0x10] sm:$0xff]
        %v6391 = vld [vmem:[#allocation2 + $0x18] sm:$0xff]
        %v6392 = vld [vmem:[#allocation2 + $0x20] sm:$0xff]
        %v6393 = vld [vmem:[#allocation2 + $0x28] sm:$0xff]
        %v6394 = vld [vmem:[#allocation2 + $0x30] sm:$0xff]
        %v6395 = vld [vmem:[#allocation2 + $0x38] sm:$0xff]
        %v6396 = vld [vmem:[#allocation2 + $0x40] sm:$0xff]
        %v6397 = vld [vmem:[#allocation2 + $0x48] sm:$0xff]
        %v6398 = vld [vmem:[#allocation2 + $0x50] sm:$0xff]
        %v6399 = vld [vmem:[#allocation2 + $0x58] sm:$0xff]
        %v6400 = vld [vmem:[#allocation2 + $0x60] sm:$0xff]
        %v6401 = vld [vmem:[#allocation2 + $0x68] sm:$0xff]
        %v6402 = vld [vmem:[#allocation2 + $0x70] sm:$0xff]
        %v6403 = vld [vmem:[#allocation2 + $0x78] sm:$0xff]
        %v6404 = vld [vmem:[#allocation2 + $0x80] sm:$0xff]
        %v6405 = vld [vmem:[#allocation2 + $0x88] sm:$0xff]
        %v6406 = vld [vmem:[#allocation2 + $0x90] sm:$0xff]
        %v6407 = vld [vmem:[#allocation2 + $0x98] sm:$0xff]
        %v6408 = vld [vmem:[#allocation2 + $0xa0] sm:$0xff]
        %v6409 = vld [vmem:[#allocation2 + $0xa8] sm:$0xff]
        %v6410 = vld [vmem:[#allocation2 + $0xb0] sm:$0xff]
        %v6411 = vld [vmem:[#allocation2 + $0xb8] sm:$0xff]
        %v6412 = vld [vmem:[#allocation2 + $0xc0] sm:$0xff]
        %v6413 = vld [vmem:[#allocation2 + $0xc8] sm:$0xff]
        %v6414 = vld [vmem:[#allocation2 + $0xd0] sm:$0xff]
        %v6415 = vld [vmem:[#allocation2 + $0xd8] sm:$0xff]
        %v6416 = vld [vmem:[#allocation2 + $0xe0] sm:$0xff]
        %v6417 = vld [vmem:[#allocation2 + $0xe8] sm:$0xff]
        %v6418 = vld [vmem:[#allocation2 + $0xf0] sm:$0xff]
        %v6419 = vld [vmem:[#allocation2 + $0xf8] sm:$0xff]
        %v6420 = vld [vmem:[#allocation2 + $0x100] sm:$0xff]
        %v6421 = vld [vmem:[#allocation2 + $0x108] sm:$0xff]
        %v6422 = vld [vmem:[#allocation2 + $0x110] sm:$0xff]
        %v6423 = vld [vmem:[#allocation2 + $0x118] sm:$0xff]
        %v6424 = vpack.c.bf16 %v6389, %v6388
        %v6425 = vpack.c.bf16 %v6391, %v6390
        %v6426 = vpack.c.bf16 %v6393, %v6392
        %v6427 = vpack.c.bf16 %v6395, %v6394
        %v6428 = vpack.c.bf16 %v6397, %v6396
        %v6429 = vpack.c.bf16 %v6399, %v6398
        %v6430 = vpack.c.bf16 %v6401, %v6400
        %v6431 = vpack.c.bf16 %v6403, %v6402
        %v6432 = vpack.c.bf16 %v6405, %v6404
        %v6433 = vpack.c.bf16 %v6407, %v6406
        %v6434 = vpack.c.bf16 %v6409, %v6408
        %v6435 = vpack.c.bf16 %v6411, %v6410
        %v6436 = vpack.c.bf16 %v6413, %v6412
        %v6437 = vpack.c.bf16 %v6415, %v6414
        %v6438 = vpack.c.bf16 %v6417, %v6416
        %v6439 = vpack.c.bf16 %v6419, %v6418
        %v6440 = vpack.c.bf16 %v6421, %v6420
        %v6441 = vpack.c.bf16 %v6423, %v6422
        %v6442 = vrot.slane %v6388, 7
        %v6443 = vrot.slane %v6389, 7
        %v6444 = vrot.slane %v6390, 7
        %v6445 = vrot.slane %v6391, 7
        %v6446 = vrot.slane %v6392, 7
        %v6447 = vrot.slane %v6393, 7
        %v6448 = vrot.slane %v6394, 7
        %v6449 = vrot.slane %v6395, 7
        %v6450 = vrot.slane %v6396, 7
        %v6451 = vrot.slane %v6397, 7
        %v6452 = vrot.slane %v6398, 7
        %v6453 = vrot.slane %v6399, 7
        %v6454 = vrot.slane %v6400, 7
        %v6455 = vrot.slane %v6401, 7
        %v6456 = vrot.slane %v6402, 7
        %v6457 = vrot.slane %v6403, 7
        %v6458 = vrot.slane %v6404, 7
        %v6459 = vrot.slane %v6405, 7
        %v6460 = vrot.slane %v6406, 7
        %v6461 = vrot.slane %v6407, 7
        %v6462 = vrot.slane %v6408, 7
        %v6463 = vrot.slane %v6409, 7
        %v6464 = vrot.slane %v6410, 7
        %v6465 = vrot.slane %v6411, 7
        %v6466 = vrot.slane %v6412, 7
        %v6467 = vrot.slane %v6413, 7
        %v6468 = vrot.slane %v6414, 7
        %v6469 = vrot.slane %v6415, 7
        %v6470 = vrot.slane %v6416, 7
        %v6471 = vrot.slane %v6417, 7
        %v6472 = vrot.slane %v6418, 7
        %v6473 = vrot.slane %v6419, 7
        %v6474 = vrot.slane %v6420, 7
        %v6475 = vrot.slane %v6421, 7
        %v6476 = vrot.slane %v6422, 7
        %v6477 = vrot.slane %v6423, 7
        %v6478 = vsel %vm500, %v6476, %v6477
        %v6479 = vsel %vm500, %v6475, %v6476
        %v6480 = vsel %vm500, %v6474, %v6475
        %v6481 = vsel %vm500, %v6473, %v6474
        %v6482 = vsel %vm500, %v6472, %v6473
        %v6483 = vsel %vm500, %v6471, %v6472
        %v6484 = vsel %vm500, %v6470, %v6471
        %v6485 = vsel %vm500, %v6469, %v6470
        %v6486 = vsel %vm500, %v6468, %v6469
        %v6487 = vsel %vm500, %v6467, %v6468
        %v6488 = vsel %vm500, %v6466, %v6467
        %v6489 = vsel %vm500, %v6465, %v6466
        %v6490 = vsel %vm500, %v6464, %v6465
        %v6491 = vsel %vm500, %v6463, %v6464
        %v6492 = vsel %vm500, %v6462, %v6463
        %v6493 = vsel %vm500, %v6461, %v6462
        %v6494 = vsel %vm500, %v6460, %v6461
        %v6495 = vsel %vm500, %v6459, %v6460
        %v6496 = vsel %vm500, %v6458, %v6459
        %v6497 = vsel %vm500, %v6457, %v6458
        %v6498 = vsel %vm500, %v6456, %v6457
        %v6499 = vsel %vm500, %v6455, %v6456
        %v6500 = vsel %vm500, %v6454, %v6455
        %v6501 = vsel %vm500, %v6453, %v6454
        %v6502 = vsel %vm500, %v6452, %v6453
        %v6503 = vsel %vm500, %v6451, %v6452
        %v6504 = vsel %vm500, %v6450, %v6451
        %v6505 = vsel %vm500, %v6449, %v6450
        %v6506 = vsel %vm500, %v6448, %v6449
        %v6507 = vsel %vm500, %v6447, %v6448
        %v6508 = vsel %vm500, %v6446, %v6447
        %v6509 = vsel %vm500, %v6445, %v6446
        %v6510 = vsel %vm500, %v6444, %v6445
        %v6511 = vsel %vm500, %v6443, %v6444
        %v6512 = vsel %vm500, %v6442, %v6443
        %v6513 = vsel %vm500, %v6477, %v6442
        %v6514 = vpack.c.bf16 %v6512, %v6513
        %v6515 = vpack.c.bf16 %v6510, %v6511
        %v6516 = vpack.c.bf16 %v6508, %v6509
        %v6517 = vpack.c.bf16 %v6506, %v6507
        %v6518 = vpack.c.bf16 %v6504, %v6505
        %v6519 = vpack.c.bf16 %v6502, %v6503
        %v6520 = vpack.c.bf16 %v6500, %v6501
        %v6521 = vpack.c.bf16 %v6498, %v6499
        %v6522 = vpack.c.bf16 %v6496, %v6497
        %v6523 = vpack.c.bf16 %v6494, %v6495
        %v6524 = vpack.c.bf16 %v6492, %v6493
        %v6525 = vpack.c.bf16 %v6490, %v6491
        %v6526 = vpack.c.bf16 %v6488, %v6489
        %v6527 = vpack.c.bf16 %v6486, %v6487
        %v6528 = vpack.c.bf16 %v6484, %v6485
        %v6529 = vpack.c.bf16 %v6482, %v6483
        %v6530 = vpack.c.bf16 %v6480, %v6481
        %v6531 = vpack.c.bf16 %v6478, %v6479
        %v6532 = vsel %vm681, %v6514, 0
        %v6533 = vsel %vm682, %v6515, 0
        %v6534 = vsel %vm683, %v6516, 0
        %v6535 = vsel %vm684, %v6517, 0
        %v6536 = vsel %vm685, %v6518, 0
        %v6537 = vsel %vm686, %v6519, 0
        %v6538 = vsel %vm687, %v6520, 0
        %v6539 = vsel %vm688, %v6521, 0
        %v6540 = vsel %vm689, %v6522, 0
        %v6541 = vsel %vm690, %v6523, 0
        %v6542 = vsel %vm691, %v6524, 0
        %v6543 = vsel %vm692, %v6525, 0
        %v6544 = vsel %vm693, %v6526, 0
        %v6545 = vsel %vm694, %v6527, 0
        %v6546 = vsel %vm695, %v6528, 0
        %v6547 = vsel %vm696, %v6529, 0
        %v6548 = vsel %vm697, %v6530, 0
        %v6549 = vsel %vm698, %v6531, 0
        %v6550 = vrot.slane %v6388, 1
        %v6551 = vrot.slane %v6389, 1
        %v6552 = vrot.slane %v6390, 1
        %v6553 = vrot.slane %v6391, 1
        %v6554 = vrot.slane %v6392, 1
        %v6555 = vrot.slane %v6393, 1
        %v6556 = vrot.slane %v6394, 1
        %v6557 = vrot.slane %v6395, 1
        %v6558 = vrot.slane %v6396, 1
        %v6559 = vrot.slane %v6397, 1
        %v6560 = vrot.slane %v6398, 1
        %v6561 = vrot.slane %v6399, 1
        %v6562 = vrot.slane %v6400, 1
        %v6563 = vrot.slane %v6401, 1
        %v6564 = vrot.slane %v6402, 1
        %v6565 = vrot.slane %v6403, 1
        %v6566 = vrot.slane %v6404, 1
        %v6567 = vrot.slane %v6405, 1
        %v6568 = vrot.slane %v6406, 1
        %v6569 = vrot.slane %v6407, 1
        %v6570 = vrot.slane %v6408, 1
        %v6571 = vrot.slane %v6409, 1
        %v6572 = vrot.slane %v6410, 1
        %v6573 = vrot.slane %v6411, 1
        %v6574 = vrot.slane %v6412, 1
        %v6575 = vrot.slane %v6413, 1
        %v6576 = vrot.slane %v6414, 1
        %v6577 = vrot.slane %v6415, 1
        %v6578 = vrot.slane %v6416, 1
        %v6579 = vrot.slane %v6417, 1
        %v6580 = vrot.slane %v6418, 1
        %v6581 = vrot.slane %v6419, 1
        %v6582 = vrot.slane %v6420, 1
        %v6583 = vrot.slane %v6421, 1
        %v6584 = vrot.slane %v6422, 1
        %v6585 = vrot.slane %v6423, 1
        %v6586 = vsel %vm753, %v6584, %v6585
        %v6587 = vsel %vm753, %v6583, %v6584
        %v6588 = vsel %vm753, %v6582, %v6583
        %v6589 = vsel %vm753, %v6581, %v6582
        %v6590 = vsel %vm753, %v6580, %v6581
        %v6591 = vsel %vm753, %v6579, %v6580
        %v6592 = vsel %vm753, %v6578, %v6579
        %v6593 = vsel %vm753, %v6577, %v6578
        %v6594 = vsel %vm753, %v6576, %v6577
        %v6595 = vsel %vm753, %v6575, %v6576
        %v6596 = vsel %vm753, %v6574, %v6575
        %v6597 = vsel %vm753, %v6573, %v6574
        %v6598 = vsel %vm753, %v6572, %v6573
        %v6599 = vsel %vm753, %v6571, %v6572
        %v6600 = vsel %vm753, %v6570, %v6571
        %v6601 = vsel %vm753, %v6569, %v6570
        %v6602 = vsel %vm753, %v6568, %v6569
        %v6603 = vsel %vm753, %v6567, %v6568
        %v6604 = vsel %vm753, %v6566, %v6567
        %v6605 = vsel %vm753, %v6565, %v6566
        %v6606 = vsel %vm753, %v6564, %v6565
        %v6607 = vsel %vm753, %v6563, %v6564
        %v6608 = vsel %vm753, %v6562, %v6563
        %v6609 = vsel %vm753, %v6561, %v6562
        %v6610 = vsel %vm753, %v6560, %v6561
        %v6611 = vsel %vm753, %v6559, %v6560
        %v6612 = vsel %vm753, %v6558, %v6559
        %v6613 = vsel %vm753, %v6557, %v6558
        %v6614 = vsel %vm753, %v6556, %v6557
        %v6615 = vsel %vm753, %v6555, %v6556
        %v6616 = vsel %vm753, %v6554, %v6555
        %v6617 = vsel %vm753, %v6553, %v6554
        %v6618 = vsel %vm753, %v6552, %v6553
        %v6619 = vsel %vm753, %v6551, %v6552
        %v6620 = vsel %vm753, %v6550, %v6551
        %v6621 = vsel %vm753, %v6585, %v6550
        %v6622 = vpack.c.bf16 %v6619, %v6620
        %v6623 = vpack.c.bf16 %v6617, %v6618
        %v6624 = vpack.c.bf16 %v6615, %v6616
        %v6625 = vpack.c.bf16 %v6613, %v6614
        %v6626 = vpack.c.bf16 %v6611, %v6612
        %v6627 = vpack.c.bf16 %v6609, %v6610
        %v6628 = vpack.c.bf16 %v6607, %v6608
        %v6629 = vpack.c.bf16 %v6605, %v6606
        %v6630 = vpack.c.bf16 %v6603, %v6604
        %v6631 = vpack.c.bf16 %v6601, %v6602
        %v6632 = vpack.c.bf16 %v6599, %v6600
        %v6633 = vpack.c.bf16 %v6597, %v6598
        %v6634 = vpack.c.bf16 %v6595, %v6596
        %v6635 = vpack.c.bf16 %v6593, %v6594
        %v6636 = vpack.c.bf16 %v6591, %v6592
        %v6637 = vpack.c.bf16 %v6589, %v6590
        %v6638 = vpack.c.bf16 %v6587, %v6588
        %v6639 = vpack.c.bf16 %v6621, %v6586
        %v6640 = vsel %vm934, %v6622, 0
        %v6641 = vsel %vm935, %v6623, 0
        %v6642 = vsel %vm936, %v6624, 0
        %v6643 = vsel %vm937, %v6625, 0
        %v6644 = vsel %vm938, %v6626, 0
        %v6645 = vsel %vm939, %v6627, 0
        %v6646 = vsel %vm940, %v6628, 0
        %v6647 = vsel %vm941, %v6629, 0
        %v6648 = vsel %vm942, %v6630, 0
        %v6649 = vsel %vm943, %v6631, 0
        %v6650 = vsel %vm944, %v6632, 0
        %v6651 = vsel %vm945, %v6633, 0
        %v6652 = vsel %vm946, %v6634, 0
        %v6653 = vsel %vm947, %v6635, 0
        %v6654 = vsel %vm948, %v6636, 0
        %v6655 = vsel %vm949, %v6637, 0
        %v6656 = vsel %vm950, %v6638, 0
        %v6657 = vsel %vm951, %v6639, 0
        %6676 = vrot.lane.b32.xlu0 %v6424, 64
        %v6677 = vpop.permute.xlu0 %6676
        %6678 = vrot.lane.b32.xlu0 %v6425, 64
        %v6679 = vpop.permute.xlu0 %6678
        %6680 = vrot.lane.b32.xlu0 %v6426, 64
        %v6681 = vpop.permute.xlu0 %6680
        %6682 = vrot.lane.b32.xlu0 %v6427, 64
        %v6683 = vpop.permute.xlu0 %6682
        %6684 = vrot.lane.b32.xlu0 %v6428, 64
        %v6685 = vpop.permute.xlu0 %6684
        %6686 = vrot.lane.b32.xlu0 %v6429, 64
        %v6687 = vpop.permute.xlu0 %6686
        %6688 = vrot.lane.b32.xlu0 %v6430, 64
        %v6689 = vpop.permute.xlu0 %6688
        %6690 = vrot.lane.b32.xlu0 %v6431, 64
        %v6691 = vpop.permute.xlu0 %6690
        %6692 = vrot.lane.b32.xlu0 %v6432, 64
        %v6693 = vpop.permute.xlu0 %6692
        %6694 = vrot.lane.b32.xlu0 %v6433, 64
        %v6695 = vpop.permute.xlu0 %6694
        %6696 = vrot.lane.b32.xlu0 %v6434, 64
        %v6697 = vpop.permute.xlu0 %6696
        %6698 = vrot.lane.b32.xlu0 %v6435, 64
        %v6699 = vpop.permute.xlu0 %6698
        %6700 = vrot.lane.b32.xlu0 %v6436, 64
        %v6701 = vpop.permute.xlu0 %6700
        %6702 = vrot.lane.b32.xlu0 %v6437, 64
        %v6703 = vpop.permute.xlu0 %6702
        %6704 = vrot.lane.b32.xlu0 %v6438, 64
        %v6705 = vpop.permute.xlu0 %6704
        %6706 = vrot.lane.b32.xlu0 %v6439, 64
        %v6707 = vpop.permute.xlu0 %6706
        %6708 = vrot.lane.b32.xlu0 %v6440, 64
        %v6709 = vpop.permute.xlu0 %6708
        %6710 = vrot.lane.b32.xlu0 %v6441, 64
        %v6711 = vpop.permute.xlu0 %6710
        %v6714 = vsel %vm1024, %v6532, %v6677
        %v6718 = vsel %vm1024, %v6533, %v6679
        %v6722 = vsel %vm1024, %v6534, %v6681
        %v6726 = vsel %vm1024, %v6535, %v6683
        %v6730 = vsel %vm1024, %v6536, %v6685
        %v6734 = vsel %vm1024, %v6537, %v6687
        %v6738 = vsel %vm1024, %v6538, %v6689
        %v6742 = vsel %vm1024, %v6539, %v6691
        %v6746 = vsel %vm1024, %v6540, %v6693
        %v6750 = vsel %vm1024, %v6541, %v6695
        %v6754 = vsel %vm1024, %v6542, %v6697
        %v6758 = vsel %vm1024, %v6543, %v6699
        %v6762 = vsel %vm1024, %v6544, %v6701
        %v6766 = vsel %vm1024, %v6545, %v6703
        %v6770 = vsel %vm1024, %v6546, %v6705
        %v6774 = vsel %vm1024, %v6547, %v6707
        %v6778 = vsel %vm1024, %v6548, %v6709
        %v6782 = vsel %vm1024, %v6549, %v6711
        %s6784 = scalar_lea.vmem %s1, 960
        %v6785 = vld [vmem:[%s6784] sm:$0xff]
        %v6786 = vld [vmem:[%s6784 + $0x8] sm:$0xff]
        %v6787 = vld [vmem:[%s6784 + $0x10] sm:$0xff]
        %v6788 = vld [vmem:[%s6784 + $0x18] sm:$0xff]
        %v6789 = vld [vmem:[%s6784 + $0x20] sm:$0xff]
        %v6790 = vld [vmem:[%s6784 + $0x28] sm:$0xff]
        %v6791 = vld [vmem:[%s6784 + $0x30] sm:$0xff]
        %v6792 = vld [vmem:[%s6784 + $0x38] sm:$0xff]
        %v6793 = vld [vmem:[%s6784 + $0x40] sm:$0xff]
        %v6794 = vld [vmem:[%s6784 + $0x48] sm:$0xff]
        %v6795 = vld [vmem:[%s6784 + $0x50] sm:$0xff]
        %v6796 = vld [vmem:[%s6784 + $0x58] sm:$0xff]
        %v6797 = vld [vmem:[%s6784 + $0x60] sm:$0xff]
        %v6798 = vld [vmem:[%s6784 + $0x68] sm:$0xff]
        %v6799 = vld [vmem:[%s6784 + $0x70] sm:$0xff]
        %v6800 = vld [vmem:[%s6784 + $0x78] sm:$0xff]
        %v6801 = vld [vmem:[%s6784 + $0x80] sm:$0xff]
        %v6802 = vld [vmem:[%s6784 + $0x88] sm:$0xff]
        %v6803 = vld [vmem:[%s6784 + $0x90] sm:$0xff]
        %v6804 = vld [vmem:[%s6784 + $0x98] sm:$0xff]
        %v6805 = vld [vmem:[%s6784 + $0xa0] sm:$0xff]
        %v6806 = vld [vmem:[%s6784 + $0xa8] sm:$0xff]
        %v6807 = vld [vmem:[%s6784 + $0xb0] sm:$0xff]
        %v6808 = vld [vmem:[%s6784 + $0xb8] sm:$0xff]
        %v6833 = vunpack.c.l.b16 %v6785
        %v6834 = vunpack.c.h.b16 %v6785
        %v6835 = vunpack.c.l.b16 %v6786
        %v6836 = vunpack.c.h.b16 %v6786
        %v6837 = vunpack.c.l.b16 %v6787
        %v6838 = vunpack.c.h.b16 %v6787
        %v6839 = vunpack.c.l.b16 %v6788
        %v6840 = vunpack.c.h.b16 %v6788
        %v6841 = vunpack.c.l.b16 %v6789
        %v6842 = vunpack.c.h.b16 %v6789
        %v6843 = vunpack.c.l.b16 %v6790
        %v6844 = vunpack.c.h.b16 %v6790
        %v6845 = vunpack.c.l.b16 %v6791
        %v6846 = vunpack.c.h.b16 %v6791
        %v6847 = vunpack.c.l.b16 %v6792
        %v6848 = vunpack.c.h.b16 %v6792
        %v6849 = vunpack.c.l.b16 %v6793
        %v6850 = vunpack.c.h.b16 %v6793
        %v6851 = vunpack.c.l.b16 %v6794
        %v6852 = vunpack.c.h.b16 %v6794
        %v6853 = vunpack.c.l.b16 %v6795
        %v6854 = vunpack.c.h.b16 %v6795
        %v6855 = vunpack.c.l.b16 %v6796
        %v6856 = vunpack.c.h.b16 %v6796
        %v6857 = vunpack.c.l.b16 %v6797
        %v6858 = vunpack.c.h.b16 %v6797
        %v6859 = vunpack.c.l.b16 %v6798
        %v6860 = vunpack.c.h.b16 %v6798
        %v6861 = vunpack.c.l.b16 %v6799
        %v6862 = vunpack.c.h.b16 %v6799
        %v6863 = vunpack.c.l.b16 %v6800
        %v6864 = vunpack.c.h.b16 %v6800
        %v6865 = vunpack.c.l.b16 %v6801
        %v6866 = vunpack.c.h.b16 %v6801
        %v6867 = vunpack.c.l.b16 %v6802
        %v6868 = vunpack.c.h.b16 %v6802
        %v6869 = vunpack.c.l.b16 %v6803
        %v6870 = vunpack.c.h.b16 %v6803
        %v6871 = vunpack.c.l.b16 %v6804
        %v6872 = vunpack.c.h.b16 %v6804
        %v6873 = vunpack.c.l.b16 %v6805
        %v6874 = vunpack.c.h.b16 %v6805
        %v6875 = vunpack.c.l.b16 %v6806
        %v6876 = vunpack.c.h.b16 %v6806
        %v6877 = vunpack.c.l.b16 %v6807
        %v6878 = vunpack.c.h.b16 %v6807
        %v6879 = vunpack.c.l.b16 %v6808
        %v6880 = vunpack.c.h.b16 %v6808
        %v6881 = vpack.c.b16 %v6835, %v6833
        %v6882 = vpack.c.b16 %v6836, %v6834
        %v6883 = vpack.c.b16 %v6839, %v6837
        %v6884 = vpack.c.b16 %v6840, %v6838
        %v6885 = vpack.c.b16 %v6843, %v6841
        %v6886 = vpack.c.b16 %v6844, %v6842
        %v6887 = vpack.c.b16 %v6847, %v6845
        %v6888 = vpack.c.b16 %v6848, %v6846
        %v6889 = vpack.c.b16 %v6851, %v6849
        %v6890 = vpack.c.b16 %v6852, %v6850
        %v6891 = vpack.c.b16 %v6855, %v6853
        %v6892 = vpack.c.b16 %v6856, %v6854
        %v6893 = vpack.c.b16 %v6859, %v6857
        %v6894 = vpack.c.b16 %v6860, %v6858
        %v6895 = vpack.c.b16 %v6863, %v6861
        %v6896 = vpack.c.b16 %v6864, %v6862
        %v6897 = vpack.c.b16 %v6867, %v6865
        %v6898 = vpack.c.b16 %v6868, %v6866
        %v6899 = vpack.c.b16 %v6871, %v6869
        %v6900 = vpack.c.b16 %v6872, %v6870
        %v6901 = vpack.c.b16 %v6875, %v6873
        %v6902 = vpack.c.b16 %v6876, %v6874
        %v6903 = vpack.c.b16 %v6879, %v6877
        %v6904 = vpack.c.b16 %v6880, %v6878
        %v6930 = vsel %vm1024, %v6640, 0
        %v6933 = vsel %vm1024, %v6641, 0
        %v6936 = vsel %vm1024, %v6642, 0
        %v6939 = vsel %vm1024, %v6643, 0
        %v6942 = vsel %vm1024, %v6644, 0
        %v6945 = vsel %vm1024, %v6645, 0
        %v6948 = vsel %vm1024, %v6646, 0
        %v6951 = vsel %vm1024, %v6647, 0
        %v6954 = vsel %vm1024, %v6648, 0
        %v6957 = vsel %vm1024, %v6649, 0
        %v6960 = vsel %vm1024, %v6650, 0
        %v6963 = vsel %vm1024, %v6651, 0
        %v6966 = vsel %vm1024, %v6652, 0
        %v6969 = vsel %vm1024, %v6653, 0
        %v6972 = vsel %vm1024, %v6654, 0
        %v6975 = vsel %vm1024, %v6655, 0
        %v6978 = vsel %vm1024, %v6656, 0
        %v6981 = vsel %vm1024, %v6657, 0
        %6983 = vmatprep.subr.bf16.mxu0 %v6882
        %6984 = vmatpush1.bf16.msra.mxu0 %v6881
        %6985 = vmatprep.subr.bf16.mxu0 %v6884
        %6986 = vmatpush1.bf16.msra.mxu0 %v6883
        %6987 = vmatprep.subr.bf16.mxu0 %v6886
        %6988 = vmatpush1.bf16.msra.mxu0 %v6885
        %6989 = vmatprep.subr.bf16.mxu0 %v6888
        %6990 = vmatpush1.bf16.msra.mxu0 %v6887
        %6991 = vmatprep.subr.bf16.mxu0 %v6890
        %6992 = vmatpush1.bf16.msra.mxu0 %v6889
        %6993 = vmatprep.subr.bf16.mxu0 %v6892
        %6994 = vmatpush1.bf16.msra.mxu0 %v6891
        %6995 = vmatprep.subr.bf16.mxu0 %v6894
        %6996 = vmatpush1.bf16.msra.mxu0 %v6893
        %6997 = vmatprep.subr.bf16.mxu0 %v6896
        %6998 = vmatpush1.bf16.msra.mxu0 %v6895
        %6999 = vmatprep.subr.bf16.mxu0 %v6898
        %7000 = vmatpush1.bf16.msra.mxu0 %v6897
        %7001 = vmatprep.subr.bf16.mxu0 %v6900
        %7002 = vmatpush1.bf16.msra.mxu0 %v6899
        %7003 = vmatprep.subr.bf16.mxu0 %v6902
        %7004 = vmatpush1.bf16.msra.mxu0 %v6901
        %7005 = vmatprep.subr.bf16.mxu0 %v6904
        %7006 = vmatpush1.bf16.msra.mxu0 %v6903
        %7007 = vmatprep.subr.bf16.mxu0 0
        %7008 = vmatpush1.bf16.msra.mxu0 0
        %7009 = vmatprep.subr.bf16.mxu0 0
        %7010 = vmatpush1.bf16.msra.mxu0 0
        %7011 = vmatprep.subr.bf16.mxu0 0
        %7012 = vmatpush1.bf16.msra.mxu0 0
        %7013 = vmatprep.subr.bf16.mxu0 0
        %7014 = vmatpush1.bf16.msra.mxu0 0
        %7015 = vmatprep.mubr.bf16.mxu0 %v6930
        %7016 = vmatmul.mubr.bf16.gmra.mrb[0].mxu0 %v6714
        %v7017 = vpop.f32.mrb[0].mxu0
        %v7018 = vadd.f32 0.0, %v7017
        %v7019 = vpop.f32.mrb[0].mxu0
        %v7020 = vpop.f32.mrb[0].mxu0
        %v7021 = vadd.f32 0.0, %v7020
        %v7022 = vpop.f32.mrb[0].mxu0
        %7023 = vmatprep.mubr.bf16.mxu0 %v6933
        %7024 = vmatmul.mubr.bf16.gmra.mrb[0].mxu0 %v6718
        %v7025 = vpop.f32.mrb[0].mxu0
        %v7026 = vadd.f32 0.0, %v7025
        %v7027 = vpop.f32.mrb[0].mxu0
        %v7028 = vpop.f32.mrb[0].mxu0
        %v7029 = vadd.f32 0.0, %v7028
        %v7030 = vpop.f32.mrb[0].mxu0
        %7031 = vmatprep.mubr.bf16.mxu0 %v6936
        %7032 = vmatmul.mubr.bf16.gmra.mrb[0].mxu0 %v6722
        %v7033 = vpop.f32.mrb[0].mxu0
        %v7034 = vadd.f32 0.0, %v7033
        %v7035 = vpop.f32.mrb[0].mxu0
        %v7036 = vadd.f32 0.0, %v7035
        %v7037 = vpop.f32.mrb[0].mxu0
        %v7038 = vadd.f32 0.0, %v7037
        %v7039 = vpop.f32.mrb[0].mxu0
        %v7040 = vadd.f32 0.0, %v7039
        %7041 = vmatprep.mubr.bf16.mxu0 %v6939
        %7042 = vmatmul.mubr.bf16.gmra.mrb[0].mxu0 %v6726
        %v7043 = vpop.f32.mrb[0].mxu0
        %v7044 = vadd.f32 0.0, %v7043
        %v7045 = vpop.f32.mrb[0].mxu0
        %v7046 = vadd.f32 0.0, %v7045
        %v7047 = vpop.f32.mrb[0].mxu0
        %v7048 = vadd.f32 0.0, %v7047
        %v7049 = vpop.f32.mrb[0].mxu0
        %v7050 = vadd.f32 0.0, %v7049
        %7051 = vmatprep.mubr.bf16.mxu0 %v6942
        %7052 = vmatmul.mubr.bf16.gmra.mrb[0].mxu0 %v6730
        %v7053 = vpop.f32.mrb[0].mxu0
        %v7054 = vadd.f32 0.0, %v7053
        %v7055 = vpop.f32.mrb[0].mxu0
        %v7056 = vadd.f32 0.0, %v7055
        %v7057 = vpop.f32.mrb[0].mxu0
        %v7058 = vadd.f32 0.0, %v7057
        %v7059 = vpop.f32.mrb[0].mxu0
        %v7060 = vadd.f32 0.0, %v7059
        %7061 = vmatprep.mubr.bf16.mxu0 %v6945
        %7062 = vmatmul.mubr.bf16.gmra.mrb[0].mxu0 %v6734
        %v7063 = vpop.f32.mrb[0].mxu0
        %v7064 = vadd.f32 0.0, %v7063
        %v7065 = vpop.f32.mrb[0].mxu0
        %v7066 = vadd.f32 0.0, %v7065
        %v7067 = vpop.f32.mrb[0].mxu0
        %v7068 = vadd.f32 0.0, %v7067
        %v7069 = vpop.f32.mrb[0].mxu0
        %v7070 = vadd.f32 0.0, %v7069
        %7071 = vmatprep.mubr.bf16.mxu0 %v6948
        %7072 = vmatmul.mubr.bf16.gmra.mrb[0].mxu0 %v6738
        %v7073 = vpop.f32.mrb[0].mxu0
        %v7074 = vadd.f32 0.0, %v7073
        %v7075 = vpop.f32.mrb[0].mxu0
        %v7076 = vadd.f32 0.0, %v7075
        %v7077 = vpop.f32.mrb[0].mxu0
        %v7078 = vadd.f32 0.0, %v7077
        %v7079 = vpop.f32.mrb[0].mxu0
        %v7080 = vadd.f32 0.0, %v7079
        %7081 = vmatprep.mubr.bf16.mxu0 %v6951
        %7082 = vmatmul.mubr.bf16.gmra.mrb[0].mxu0 %v6742
        %v7083 = vpop.f32.mrb[0].mxu0
        %v7084 = vadd.f32 0.0, %v7083
        %v7085 = vpop.f32.mrb[0].mxu0
        %v7086 = vadd.f32 0.0, %v7085
        %v7087 = vpop.f32.mrb[0].mxu0
        %v7088 = vadd.f32 0.0, %v7087
        %v7089 = vpop.f32.mrb[0].mxu0
        %v7090 = vadd.f32 0.0, %v7089
        %7091 = vmatprep.mubr.bf16.mxu0 %v6954
        %7092 = vmatmul.mubr.bf16.gmra.mrb[0].mxu0 %v6746
        %v7093 = vpop.f32.mrb[0].mxu0
        %v7094 = vadd.f32 0.0, %v7093
        %v7095 = vpop.f32.mrb[0].mxu0
        %v7096 = vadd.f32 0.0, %v7095
        %v7097 = vpop.f32.mrb[0].mxu0
        %v7098 = vadd.f32 0.0, %v7097
        %v7099 = vpop.f32.mrb[0].mxu0
        %v7100 = vadd.f32 0.0, %v7099
        %7101 = vmatprep.mubr.bf16.mxu0 %v6957
        %7102 = vmatmul.mubr.bf16.gmra.mrb[0].mxu0 %v6750
        %v7103 = vpop.f32.mrb[0].mxu0
        %v7104 = vadd.f32 0.0, %v7103
        %v7105 = vpop.f32.mrb[0].mxu0
        %v7106 = vadd.f32 0.0, %v7105
        %v7107 = vpop.f32.mrb[0].mxu0
        %v7108 = vadd.f32 0.0, %v7107
        %v7109 = vpop.f32.mrb[0].mxu0
        %v7110 = vadd.f32 0.0, %v7109
        %7111 = vmatprep.mubr.bf16.mxu0 %v6960
        %7112 = vmatmul.mubr.bf16.gmra.mrb[0].mxu0 %v6754
        %v7113 = vpop.f32.mrb[0].mxu0
        %v7114 = vadd.f32 0.0, %v7113
        %v7115 = vpop.f32.mrb[0].mxu0
        %v7116 = vadd.f32 0.0, %v7115
        %v7117 = vpop.f32.mrb[0].mxu0
        %v7118 = vadd.f32 0.0, %v7117
        %v7119 = vpop.f32.mrb[0].mxu0
        %v7120 = vadd.f32 0.0, %v7119
        %7121 = vmatprep.mubr.bf16.mxu0 %v6963
        %7122 = vmatmul.mubr.bf16.gmra.mrb[0].mxu0 %v6758
        %v7123 = vpop.f32.mrb[0].mxu0
        %v7124 = vadd.f32 0.0, %v7123
        %v7125 = vpop.f32.mrb[0].mxu0
        %v7126 = vadd.f32 0.0, %v7125
        %v7127 = vpop.f32.mrb[0].mxu0
        %v7128 = vadd.f32 0.0, %v7127
        %v7129 = vpop.f32.mrb[0].mxu0
        %v7130 = vadd.f32 0.0, %v7129
        %7131 = vmatprep.mubr.bf16.mxu0 %v6966
        %7132 = vmatmul.mubr.bf16.gmra.mrb[0].mxu0 %v6762
        %v7133 = vpop.f32.mrb[0].mxu0
        %v7134 = vadd.f32 0.0, %v7133
        %v7135 = vpop.f32.mrb[0].mxu0
        %v7136 = vadd.f32 0.0, %v7135
        %v7137 = vpop.f32.mrb[0].mxu0
        %v7138 = vadd.f32 0.0, %v7137
        %v7139 = vpop.f32.mrb[0].mxu0
        %v7140 = vadd.f32 0.0, %v7139
        %7141 = vmatprep.mubr.bf16.mxu0 %v6969
        %7142 = vmatmul.mubr.bf16.gmra.mrb[0].mxu0 %v6766
        %v7143 = vpop.f32.mrb[0].mxu0
        %v7144 = vadd.f32 0.0, %v7143
        %v7145 = vpop.f32.mrb[0].mxu0
        %v7146 = vadd.f32 0.0, %v7145
        %v7147 = vpop.f32.mrb[0].mxu0
        %v7148 = vadd.f32 0.0, %v7147
        %v7149 = vpop.f32.mrb[0].mxu0
        %v7150 = vadd.f32 0.0, %v7149
        %7151 = vmatprep.mubr.bf16.mxu0 %v6972
        %7152 = vmatmul.mubr.bf16.gmra.mrb[0].mxu0 %v6770
        %v7153 = vpop.f32.mrb[0].mxu0
        %v7154 = vadd.f32 0.0, %v7153
        %v7155 = vpop.f32.mrb[0].mxu0
        %v7156 = vadd.f32 0.0, %v7155
        %v7157 = vpop.f32.mrb[0].mxu0
        %v7158 = vadd.f32 0.0, %v7157
        %v7159 = vpop.f32.mrb[0].mxu0
        %v7160 = vadd.f32 0.0, %v7159
        %7161 = vmatprep.mubr.bf16.mxu0 %v6975
        %7162 = vmatmul.mubr.bf16.gmra.mrb[0].mxu0 %v6774
        %v7163 = vpop.f32.mrb[0].mxu0
        %v7164 = vadd.f32 0.0, %v7163
        %v7165 = vpop.f32.mrb[0].mxu0
        %v7166 = vadd.f32 0.0, %v7165
        %v7167 = vpop.f32.mrb[0].mxu0
        %v7168 = vadd.f32 0.0, %v7167
        %v7169 = vpop.f32.mrb[0].mxu0
        %v7170 = vadd.f32 0.0, %v7169
        %7171 = vmatprep.mubr.bf16.mxu0 %v6978
        %7172 = vmatmul.mubr.bf16.gmra.mrb[0].mxu0 %v6778
        %v7173 = vpop.f32.mrb[0].mxu0
        %v7174 = vadd.f32 0.0, %v7173
        %v7175 = vpop.f32.mrb[0].mxu0
        %v7176 = vadd.f32 0.0, %v7175
        %v7177 = vpop.f32.mrb[0].mxu0
        %v7178 = vadd.f32 0.0, %v7177
        %v7179 = vpop.f32.mrb[0].mxu0
        %v7180 = vadd.f32 0.0, %v7179
        %7181 = vmatprep.mubr.bf16.mxu0 %v6981
        %7182 = vmatmul.mubr.bf16.gmra.mrb[0].mxu0 %v6782
        %v7183 = vpop.f32.mrb[0].mxu0
        %v7184 = vpop.f32.mrb[0].mxu0
        %v7185 = vadd.f32 0.0, %v7184
        %v7186 = vpop.f32.mrb[0].mxu0
        %v7187 = vpop.f32.mrb[0].mxu0
        %v7188 = vadd.f32 0.0, %v7187
        %7189 = vdwg.mxu0
        %7222 = vrot.lane.b32.xlu0 %v7026, 64
        %v7223 = vpop.permute.xlu0 %7222
        %7224 = vrot.lane.b32.xlu0 %v7029, 64
        %v7225 = vpop.permute.xlu0 %7224
        %7226 = vrot.lane.b32.xlu0 %v7034, 64
        %v7227 = vpop.permute.xlu0 %7226
        %7228 = vrot.lane.b32.xlu0 %v7038, 64
        %v7229 = vpop.permute.xlu0 %7228
        %7230 = vrot.lane.b32.xlu0 %v7044, 64
        %v7231 = vpop.permute.xlu0 %7230
        %7232 = vrot.lane.b32.xlu0 %v7048, 64
        %v7233 = vpop.permute.xlu0 %7232
        %7234 = vrot.lane.b32.xlu0 %v7054, 64
        %v7235 = vpop.permute.xlu0 %7234
        %7236 = vrot.lane.b32.xlu0 %v7058, 64
        %v7237 = vpop.permute.xlu0 %7236
        %7238 = vrot.lane.b32.xlu0 %v7064, 64
        %v7239 = vpop.permute.xlu0 %7238
        %7240 = vrot.lane.b32.xlu0 %v7068, 64
        %v7241 = vpop.permute.xlu0 %7240
        %7242 = vrot.lane.b32.xlu0 %v7074, 64
        %v7243 = vpop.permute.xlu0 %7242
        %7244 = vrot.lane.b32.xlu0 %v7078, 64
        %v7245 = vpop.permute.xlu0 %7244
        %7246 = vrot.lane.b32.xlu0 %v7084, 64
        %v7247 = vpop.permute.xlu0 %7246
        %7248 = vrot.lane.b32.xlu0 %v7088, 64
        %v7249 = vpop.permute.xlu0 %7248
        %7250 = vrot.lane.b32.xlu0 %v7094, 64
        %v7251 = vpop.permute.xlu0 %7250
        %7252 = vrot.lane.b32.xlu0 %v7098, 64
        %v7253 = vpop.permute.xlu0 %7252
        %7254 = vrot.lane.b32.xlu0 %v7104, 64
        %v7255 = vpop.permute.xlu0 %7254
        %7256 = vrot.lane.b32.xlu0 %v7108, 64
        %v7257 = vpop.permute.xlu0 %7256
        %7258 = vrot.lane.b32.xlu0 %v7114, 64
        %v7259 = vpop.permute.xlu0 %7258
        %7260 = vrot.lane.b32.xlu0 %v7118, 64
        %v7261 = vpop.permute.xlu0 %7260
        %7262 = vrot.lane.b32.xlu0 %v7124, 64
        %v7263 = vpop.permute.xlu0 %7262
        %7264 = vrot.lane.b32.xlu0 %v7128, 64
        %v7265 = vpop.permute.xlu0 %7264
        %7266 = vrot.lane.b32.xlu0 %v7134, 64
        %v7267 = vpop.permute.xlu0 %7266
        %7268 = vrot.lane.b32.xlu0 %v7138, 64
        %v7269 = vpop.permute.xlu0 %7268
        %7270 = vrot.lane.b32.xlu0 %v7144, 64
        %v7271 = vpop.permute.xlu0 %7270
        %7272 = vrot.lane.b32.xlu0 %v7148, 64
        %v7273 = vpop.permute.xlu0 %7272
        %7274 = vrot.lane.b32.xlu0 %v7154, 64
        %v7275 = vpop.permute.xlu0 %7274
        %7276 = vrot.lane.b32.xlu0 %v7158, 64
        %v7277 = vpop.permute.xlu0 %7276
        %7278 = vrot.lane.b32.xlu0 %v7164, 64
        %v7279 = vpop.permute.xlu0 %7278
        %7280 = vrot.lane.b32.xlu0 %v7168, 64
        %v7281 = vpop.permute.xlu0 %7280
        %7282 = vrot.lane.b32.xlu0 %v7174, 64
        %v7283 = vpop.permute.xlu0 %7282
        %7284 = vrot.lane.b32.xlu0 %v7178, 64
        %v7285 = vpop.permute.xlu0 %7284
        %v7318 = vadd.f32 %v7018, %v7223
        %v7319 = vadd.f32 %v7021, %v7225
        %v7320 = vadd.f32 %v7026, %v7227
        %v7321 = vadd.f32 %v7029, %v7229
        %v7322 = vadd.f32 %v7034, %v7231
        %v7323 = vadd.f32 %v7038, %v7233
        %v7324 = vadd.f32 %v7044, %v7235
        %v7325 = vadd.f32 %v7048, %v7237
        %v7326 = vadd.f32 %v7054, %v7239
        %v7327 = vadd.f32 %v7058, %v7241
        %v7328 = vadd.f32 %v7064, %v7243
        %v7329 = vadd.f32 %v7068, %v7245
        %v7330 = vadd.f32 %v7074, %v7247
        %v7331 = vadd.f32 %v7078, %v7249
        %v7332 = vadd.f32 %v7084, %v7251
        %v7333 = vadd.f32 %v7088, %v7253
        %v7334 = vadd.f32 %v7094, %v7255
        %v7335 = vadd.f32 %v7098, %v7257
        %v7336 = vadd.f32 %v7104, %v7259
        %v7337 = vadd.f32 %v7108, %v7261
        %v7338 = vadd.f32 %v7114, %v7263
        %v7339 = vadd.f32 %v7118, %v7265
        %v7340 = vadd.f32 %v7124, %v7267
        %v7341 = vadd.f32 %v7128, %v7269
        %v7342 = vadd.f32 %v7134, %v7271
        %v7343 = vadd.f32 %v7138, %v7273
        %v7344 = vadd.f32 %v7144, %v7275
        %v7345 = vadd.f32 %v7148, %v7277
        %v7346 = vadd.f32 %v7154, %v7279
        %v7347 = vadd.f32 %v7158, %v7281
        %v7348 = vadd.f32 %v7164, %v7283
        %v7349 = vadd.f32 %v7168, %v7285
        %v7350 = vadd.f32 %v7318, %v7036
        %v7351 = vadd.f32 %v7319, %v7040
        %v7352 = vadd.f32 %v7320, %v7046
        %v7353 = vadd.f32 %v7321, %v7050
        %v7354 = vadd.f32 %v7322, %v7056
        %v7355 = vadd.f32 %v7323, %v7060
        %v7356 = vadd.f32 %v7324, %v7066
        %v7357 = vadd.f32 %v7325, %v7070
        %v7358 = vadd.f32 %v7326, %v7076
        %v7359 = vadd.f32 %v7327, %v7080
        %v7360 = vadd.f32 %v7328, %v7086
        %v7361 = vadd.f32 %v7329, %v7090
        %v7362 = vadd.f32 %v7330, %v7096
        %v7363 = vadd.f32 %v7331, %v7100
        %v7364 = vadd.f32 %v7332, %v7106
        %v7365 = vadd.f32 %v7333, %v7110
        %v7366 = vadd.f32 %v7334, %v7116
        %v7367 = vadd.f32 %v7335, %v7120
        %v7368 = vadd.f32 %v7336, %v7126
        %v7369 = vadd.f32 %v7337, %v7130
        %v7370 = vadd.f32 %v7338, %v7136
        %v7371 = vadd.f32 %v7339, %v7140
        %v7372 = vadd.f32 %v7340, %v7146
        %v7373 = vadd.f32 %v7341, %v7150
        %v7374 = vadd.f32 %v7342, %v7156
        %v7375 = vadd.f32 %v7343, %v7160
        %v7376 = vadd.f32 %v7344, %v7166
        %v7377 = vadd.f32 %v7345, %v7170
        %v7378 = vadd.f32 %v7346, %v7176
        %v7379 = vadd.f32 %v7347, %v7180
        %v7380 = vadd.f32 %v7348, %v7185
        %v7381 = vadd.f32 %v7349, %v7188
        %s7382 = scalar_lea.vmem %s2, 5
        %v7383 = vld [vmem:[%s7382] sm:$0x1]
        %v7385 = vlaneseq
        %v7386 = vshrl.u32 %v7385, 7
        %v7387 = vsub.s32 0, %v7386
        %v7388 = vrot.slane %v7383, %v7387
        %v7390 = vmul.f32 %v7350, %v7388
        %v7391 = vmul.f32 %v7351, %v7388
        %v7392 = vmul.f32 %v7352, %v7388
        %v7393 = vmul.f32 %v7353, %v7388
        %v7394 = vmul.f32 %v7354, %v7388
        %v7395 = vmul.f32 %v7355, %v7388
        %v7396 = vmul.f32 %v7356, %v7388
        %v7397 = vmul.f32 %v7357, %v7388
        %v7398 = vmul.f32 %v7358, %v7388
        %v7399 = vmul.f32 %v7359, %v7388
        %v7400 = vmul.f32 %v7360, %v7388
        %v7401 = vmul.f32 %v7361, %v7388
        %v7402 = vmul.f32 %v7362, %v7388
        %v7403 = vmul.f32 %v7363, %v7388
        %v7404 = vmul.f32 %v7364, %v7388
        %v7405 = vmul.f32 %v7365, %v7388
        %v7406 = vmul.f32 %v7366, %v7388
        %v7407 = vmul.f32 %v7367, %v7388
        %v7408 = vmul.f32 %v7368, %v7388
        %v7409 = vmul.f32 %v7369, %v7388
        %v7410 = vmul.f32 %v7370, %v7388
        %v7411 = vmul.f32 %v7371, %v7388
        %v7412 = vmul.f32 %v7372, %v7388
        %v7413 = vmul.f32 %v7373, %v7388
        %v7414 = vmul.f32 %v7374, %v7388
        %v7415 = vmul.f32 %v7375, %v7388
        %v7416 = vmul.f32 %v7376, %v7388
        %v7417 = vmul.f32 %v7377, %v7388
        %v7418 = vmul.f32 %v7378, %v7388
        %v7419 = vmul.f32 %v7379, %v7388
        %v7420 = vmul.f32 %v7380, %v7388
        %v7421 = vmul.f32 %v7381, %v7388
        %s7422 = scalar_lea.vmem %s3, 5
        %v7423 = vld [vmem:[%s7422] sm:$0x1]
        %v7425 = vlaneseq
        %v7426 = vshrl.u32 %v7425, 7
        %v7427 = vsub.s32 0, %v7426
        %v7428 = vrot.slane %v7423, %v7427
        %v7430 = vadd.f32 %v7390, %v7428
        %v7431 = vadd.f32 %v7391, %v7428
        %v7432 = vadd.f32 %v7392, %v7428
        %v7433 = vadd.f32 %v7393, %v7428
        %v7434 = vadd.f32 %v7394, %v7428
        %v7435 = vadd.f32 %v7395, %v7428
        %v7436 = vadd.f32 %v7396, %v7428
        %v7437 = vadd.f32 %v7397, %v7428
        %v7438 = vadd.f32 %v7398, %v7428
        %v7439 = vadd.f32 %v7399, %v7428
        %v7440 = vadd.f32 %v7400, %v7428
        %v7441 = vadd.f32 %v7401, %v7428
        %v7442 = vadd.f32 %v7402, %v7428
        %v7443 = vadd.f32 %v7403, %v7428
        %v7444 = vadd.f32 %v7404, %v7428
        %v7445 = vadd.f32 %v7405, %v7428
        %v7446 = vadd.f32 %v7406, %v7428
        %v7447 = vadd.f32 %v7407, %v7428
        %v7448 = vadd.f32 %v7408, %v7428
        %v7449 = vadd.f32 %v7409, %v7428
        %v7450 = vadd.f32 %v7410, %v7428
        %v7451 = vadd.f32 %v7411, %v7428
        %v7452 = vadd.f32 %v7412, %v7428
        %v7453 = vadd.f32 %v7413, %v7428
        %v7454 = vadd.f32 %v7414, %v7428
        %v7455 = vadd.f32 %v7415, %v7428
        %v7456 = vadd.f32 %v7416, %v7428
        %v7457 = vadd.f32 %v7417, %v7428
        %v7458 = vadd.f32 %v7418, %v7428
        %v7459 = vadd.f32 %v7419, %v7428
        %v7460 = vadd.f32 %v7420, %v7428
        %v7461 = vadd.f32 %v7421, %v7428
        %v7462 = vmax.f32 %v7430, 0.0
        %v7463 = vmax.f32 %v7431, 0.0
        %v7464 = vmax.f32 %v7432, 0.0
        %v7465 = vmax.f32 %v7433, 0.0
        %v7466 = vmax.f32 %v7434, 0.0
        %v7467 = vmax.f32 %v7435, 0.0
        %v7468 = vmax.f32 %v7436, 0.0
        %v7469 = vmax.f32 %v7437, 0.0
        %v7470 = vmax.f32 %v7438, 0.0
        %v7471 = vmax.f32 %v7439, 0.0
        %v7472 = vmax.f32 %v7440, 0.0
        %v7473 = vmax.f32 %v7441, 0.0
        %v7474 = vmax.f32 %v7442, 0.0
        %v7475 = vmax.f32 %v7443, 0.0
        %v7476 = vmax.f32 %v7444, 0.0
        %v7477 = vmax.f32 %v7445, 0.0
        %v7478 = vmax.f32 %v7446, 0.0
        %v7479 = vmax.f32 %v7447, 0.0
        %v7480 = vmax.f32 %v7448, 0.0
        %v7481 = vmax.f32 %v7449, 0.0
        %v7482 = vmax.f32 %v7450, 0.0
        %v7483 = vmax.f32 %v7451, 0.0
        %v7484 = vmax.f32 %v7452, 0.0
        %v7485 = vmax.f32 %v7453, 0.0
        %v7486 = vmax.f32 %v7454, 0.0
        %v7487 = vmax.f32 %v7455, 0.0
        %v7488 = vmax.f32 %v7456, 0.0
        %v7489 = vmax.f32 %v7457, 0.0
        %v7490 = vmax.f32 %v7458, 0.0
        %v7491 = vmax.f32 %v7459, 0.0
        %v7492 = vmax.f32 %v7460, 0.0
        %v7493 = vmax.f32 %v7461, 0.0
        %7494 = vst.msk [vmem:[#allocation3 + $0x10] sm:$0xff] %vm1024, %v7462
        %7495 = vst.msk [vmem:[#allocation3 + $0x18] sm:$0xff] %vm1024, %v7463
        %7496 = vst.msk [vmem:[#allocation3 + $0x20] sm:$0xff] %vm1024, %v7464
        %7497 = vst.msk [vmem:[#allocation3 + $0x28] sm:$0xff] %vm1024, %v7465
        %7498 = vst.msk [vmem:[#allocation3 + $0x30] sm:$0xff] %vm1024, %v7466
        %7499 = vst.msk [vmem:[#allocation3 + $0x38] sm:$0xff] %vm1024, %v7467
        %7500 = vst.msk [vmem:[#allocation3 + $0x40] sm:$0xff] %vm1024, %v7468
        %7501 = vst.msk [vmem:[#allocation3 + $0x48] sm:$0xff] %vm1024, %v7469
        %7502 = vst.msk [vmem:[#allocation3 + $0x50] sm:$0xff] %vm1024, %v7470
        %7503 = vst.msk [vmem:[#allocation3 + $0x58] sm:$0xff] %vm1024, %v7471
        %7504 = vst.msk [vmem:[#allocation3 + $0x60] sm:$0xff] %vm1024, %v7472
        %7505 = vst.msk [vmem:[#allocation3 + $0x68] sm:$0xff] %vm1024, %v7473
        %7506 = vst.msk [vmem:[#allocation3 + $0x70] sm:$0xff] %vm1024, %v7474
        %7507 = vst.msk [vmem:[#allocation3 + $0x78] sm:$0xff] %vm1024, %v7475
        %7508 = vst.msk [vmem:[#allocation3 + $0x80] sm:$0xff] %vm1024, %v7476
        %7509 = vst.msk [vmem:[#allocation3 + $0x88] sm:$0xff] %vm1024, %v7477
        %7510 = vst.msk [vmem:[#allocation3 + $0x90] sm:$0xff] %vm1024, %v7478
        %7511 = vst.msk [vmem:[#allocation3 + $0x98] sm:$0xff] %vm1024, %v7479
        %7512 = vst.msk [vmem:[#allocation3 + $0xa0] sm:$0xff] %vm1024, %v7480
        %7513 = vst.msk [vmem:[#allocation3 + $0xa8] sm:$0xff] %vm1024, %v7481
        %7514 = vst.msk [vmem:[#allocation3 + $0xb0] sm:$0xff] %vm1024, %v7482
        %7515 = vst.msk [vmem:[#allocation3 + $0xb8] sm:$0xff] %vm1024, %v7483
        %7516 = vst.msk [vmem:[#allocation3 + $0xc0] sm:$0xff] %vm1024, %v7484
        %7517 = vst.msk [vmem:[#allocation3 + $0xc8] sm:$0xff] %vm1024, %v7485
        %7518 = vst.msk [vmem:[#allocation3 + $0xd0] sm:$0xff] %vm1024, %v7486
        %7519 = vst.msk [vmem:[#allocation3 + $0xd8] sm:$0xff] %vm1024, %v7487
        %7520 = vst.msk [vmem:[#allocation3 + $0xe0] sm:$0xff] %vm1024, %v7488
        %7521 = vst.msk [vmem:[#allocation3 + $0xe8] sm:$0xff] %vm1024, %v7489
        %7522 = vst.msk [vmem:[#allocation3 + $0xf0] sm:$0xff] %vm1024, %v7490
        %7523 = vst.msk [vmem:[#allocation3 + $0xf8] sm:$0xff] %vm1024, %v7491
        %7524 = vst.msk [vmem:[#allocation3 + $0x100] sm:$0xff] %vm1024, %v7492
        %7525 = vst.msk [vmem:[#allocation3 + $0x108] sm:$0xff] %vm1024, %v7493
        %v7526 = vld [vmem:[#allocation3] sm:$0xff]
        %v7527 = vld [vmem:[#allocation3 + $0x8] sm:$0xff]
        %v7528 = vld [vmem:[#allocation3 + $0x10] sm:$0xff]
        %v7529 = vld [vmem:[#allocation3 + $0x18] sm:$0xff]
        %v7530 = vld [vmem:[#allocation3 + $0x20] sm:$0xff]
        %v7531 = vld [vmem:[#allocation3 + $0x28] sm:$0xff]
        %v7532 = vld [vmem:[#allocation3 + $0x30] sm:$0xff]
        %v7533 = vld [vmem:[#allocation3 + $0x38] sm:$0xff]
        %v7534 = vld [vmem:[#allocation3 + $0x40] sm:$0xff]
        %v7535 = vld [vmem:[#allocation3 + $0x48] sm:$0xff]
        %v7536 = vld [vmem:[#allocation3 + $0x50] sm:$0xff]
        %v7537 = vld [vmem:[#allocation3 + $0x58] sm:$0xff]
        %v7538 = vld [vmem:[#allocation3 + $0x60] sm:$0xff]
        %v7539 = vld [vmem:[#allocation3 + $0x68] sm:$0xff]
        %v7540 = vld [vmem:[#allocation3 + $0x70] sm:$0xff]
        %v7541 = vld [vmem:[#allocation3 + $0x78] sm:$0xff]
        %v7542 = vld [vmem:[#allocation3 + $0x80] sm:$0xff]
        %v7543 = vld [vmem:[#allocation3 + $0x88] sm:$0xff]
        %v7544 = vld [vmem:[#allocation3 + $0x90] sm:$0xff]
        %v7545 = vld [vmem:[#allocation3 + $0x98] sm:$0xff]
        %v7546 = vld [vmem:[#allocation3 + $0xa0] sm:$0xff]
        %v7547 = vld [vmem:[#allocation3 + $0xa8] sm:$0xff]
        %v7548 = vld [vmem:[#allocation3 + $0xb0] sm:$0xff]
        %v7549 = vld [vmem:[#allocation3 + $0xb8] sm:$0xff]
        %v7550 = vld [vmem:[#allocation3 + $0xc0] sm:$0xff]
        %v7551 = vld [vmem:[#allocation3 + $0xc8] sm:$0xff]
        %v7552 = vld [vmem:[#allocation3 + $0xd0] sm:$0xff]
        %v7553 = vld [vmem:[#allocation3 + $0xd8] sm:$0xff]
        %v7554 = vld [vmem:[#allocation3 + $0xe0] sm:$0xff]
        %v7555 = vld [vmem:[#allocation3 + $0xe8] sm:$0xff]
        %v7556 = vld [vmem:[#allocation3 + $0xf0] sm:$0xff]
        %v7557 = vld [vmem:[#allocation3 + $0xf8] sm:$0xff]
        %v7558 = vld [vmem:[#allocation3 + $0x100] sm:$0xff]
        %v7559 = vld [vmem:[#allocation3 + $0x108] sm:$0xff]
        %v7560 = vld [vmem:[#allocation3 + $0x110] sm:$0xff]
        %v7561 = vld [vmem:[#allocation3 + $0x118] sm:$0xff]
        %v7562 = vpack.c.bf16 %v7527, %v7526
        %v7563 = vpack.c.bf16 %v7529, %v7528
        %v7564 = vpack.c.bf16 %v7531, %v7530
        %v7565 = vpack.c.bf16 %v7533, %v7532
        %v7566 = vpack.c.bf16 %v7535, %v7534
        %v7567 = vpack.c.bf16 %v7537, %v7536
        %v7568 = vpack.c.bf16 %v7539, %v7538
        %v7569 = vpack.c.bf16 %v7541, %v7540
        %v7570 = vpack.c.bf16 %v7543, %v7542
        %v7571 = vpack.c.bf16 %v7545, %v7544
        %v7572 = vpack.c.bf16 %v7547, %v7546
        %v7573 = vpack.c.bf16 %v7549, %v7548
        %v7574 = vpack.c.bf16 %v7551, %v7550
        %v7575 = vpack.c.bf16 %v7553, %v7552
        %v7576 = vpack.c.bf16 %v7555, %v7554
        %v7577 = vpack.c.bf16 %v7557, %v7556
        %v7578 = vpack.c.bf16 %v7559, %v7558
        %v7579 = vpack.c.bf16 %v7561, %v7560
        %v7580 = vrot.slane %v7526, 7
        %v7581 = vrot.slane %v7527, 7
        %v7582 = vrot.slane %v7528, 7
        %v7583 = vrot.slane %v7529, 7
        %v7584 = vrot.slane %v7530, 7
        %v7585 = vrot.slane %v7531, 7
        %v7586 = vrot.slane %v7532, 7
        %v7587 = vrot.slane %v7533, 7
        %v7588 = vrot.slane %v7534, 7
        %v7589 = vrot.slane %v7535, 7
        %v7590 = vrot.slane %v7536, 7
        %v7591 = vrot.slane %v7537, 7
        %v7592 = vrot.slane %v7538, 7
        %v7593 = vrot.slane %v7539, 7
        %v7594 = vrot.slane %v7540, 7
        %v7595 = vrot.slane %v7541, 7
        %v7596 = vrot.slane %v7542, 7
        %v7597 = vrot.slane %v7543, 7
        %v7598 = vrot.slane %v7544, 7
        %v7599 = vrot.slane %v7545, 7
        %v7600 = vrot.slane %v7546, 7
        %v7601 = vrot.slane %v7547, 7
        %v7602 = vrot.slane %v7548, 7
        %v7603 = vrot.slane %v7549, 7
        %v7604 = vrot.slane %v7550, 7
        %v7605 = vrot.slane %v7551, 7
        %v7606 = vrot.slane %v7552, 7
        %v7607 = vrot.slane %v7553, 7
        %v7608 = vrot.slane %v7554, 7
        %v7609 = vrot.slane %v7555, 7
        %v7610 = vrot.slane %v7556, 7
        %v7611 = vrot.slane %v7557, 7
        %v7612 = vrot.slane %v7558, 7
        %v7613 = vrot.slane %v7559, 7
        %v7614 = vrot.slane %v7560, 7
        %v7615 = vrot.slane %v7561, 7
        %v7616 = vsel %vm500, %v7614, %v7615
        %v7617 = vsel %vm500, %v7613, %v7614
        %v7618 = vsel %vm500, %v7612, %v7613
        %v7619 = vsel %vm500, %v7611, %v7612
        %v7620 = vsel %vm500, %v7610, %v7611
        %v7621 = vsel %vm500, %v7609, %v7610
        %v7622 = vsel %vm500, %v7608, %v7609
        %v7623 = vsel %vm500, %v7607, %v7608
        %v7624 = vsel %vm500, %v7606, %v7607
        %v7625 = vsel %vm500, %v7605, %v7606
        %v7626 = vsel %vm500, %v7604, %v7605
        %v7627 = vsel %vm500, %v7603, %v7604
        %v7628 = vsel %vm500, %v7602, %v7603
        %v7629 = vsel %vm500, %v7601, %v7602
        %v7630 = vsel %vm500, %v7600, %v7601
        %v7631 = vsel %vm500, %v7599, %v7600
        %v7632 = vsel %vm500, %v7598, %v7599
        %v7633 = vsel %vm500, %v7597, %v7598
        %v7634 = vsel %vm500, %v7596, %v7597
        %v7635 = vsel %vm500, %v7595, %v7596
        %v7636 = vsel %vm500, %v7594, %v7595
        %v7637 = vsel %vm500, %v7593, %v7594
        %v7638 = vsel %vm500, %v7592, %v7593
        %v7639 = vsel %vm500, %v7591, %v7592
        %v7640 = vsel %vm500, %v7590, %v7591
        %v7641 = vsel %vm500, %v7589, %v7590
        %v7642 = vsel %vm500, %v7588, %v7589
        %v7643 = vsel %vm500, %v7587, %v7588
        %v7644 = vsel %vm500, %v7586, %v7587
        %v7645 = vsel %vm500, %v7585, %v7586
        %v7646 = vsel %vm500, %v7584, %v7585
        %v7647 = vsel %vm500, %v7583, %v7584
        %v7648 = vsel %vm500, %v7582, %v7583
        %v7649 = vsel %vm500, %v7581, %v7582
        %v7650 = vsel %vm500, %v7580, %v7581
        %v7651 = vsel %vm500, %v7615, %v7580
        %v7652 = vpack.c.bf16 %v7650, %v7651
        %v7653 = vpack.c.bf16 %v7648, %v7649
        %v7654 = vpack.c.bf16 %v7646, %v7647
        %v7655 = vpack.c.bf16 %v7644, %v7645
        %v7656 = vpack.c.bf16 %v7642, %v7643
        %v7657 = vpack.c.bf16 %v7640, %v7641
        %v7658 = vpack.c.bf16 %v7638, %v7639
        %v7659 = vpack.c.bf16 %v7636, %v7637
        %v7660 = vpack.c.bf16 %v7634, %v7635
        %v7661 = vpack.c.bf16 %v7632, %v7633
        %v7662 = vpack.c.bf16 %v7630, %v7631
        %v7663 = vpack.c.bf16 %v7628, %v7629
        %v7664 = vpack.c.bf16 %v7626, %v7627
        %v7665 = vpack.c.bf16 %v7624, %v7625
        %v7666 = vpack.c.bf16 %v7622, %v7623
        %v7667 = vpack.c.bf16 %v7620, %v7621
        %v7668 = vpack.c.bf16 %v7618, %v7619
        %v7669 = vpack.c.bf16 %v7616, %v7617
        %v7670 = vsel %vm681, %v7652, 0
        %v7671 = vsel %vm682, %v7653, 0
        %v7672 = vsel %vm683, %v7654, 0
        %v7673 = vsel %vm684, %v7655, 0
        %v7674 = vsel %vm685, %v7656, 0
        %v7675 = vsel %vm686, %v7657, 0
        %v7676 = vsel %vm687, %v7658, 0
        %v7677 = vsel %vm688, %v7659, 0
        %v7678 = vsel %vm689, %v7660, 0
        %v7679 = vsel %vm690, %v7661, 0
        %v7680 = vsel %vm691, %v7662, 0
        %v7681 = vsel %vm692, %v7663, 0
        %v7682 = vsel %vm693, %v7664, 0
        %v7683 = vsel %vm694, %v7665, 0
        %v7684 = vsel %vm695, %v7666, 0
        %v7685 = vsel %vm696, %v7667, 0
        %v7686 = vsel %vm697, %v7668, 0
        %v7687 = vsel %vm698, %v7669, 0
        %v7688 = vrot.slane %v7526, 1
        %v7689 = vrot.slane %v7527, 1
        %v7690 = vrot.slane %v7528, 1
        %v7691 = vrot.slane %v7529, 1
        %v7692 = vrot.slane %v7530, 1
        %v7693 = vrot.slane %v7531, 1
        %v7694 = vrot.slane %v7532, 1
        %v7695 = vrot.slane %v7533, 1
        %v7696 = vrot.slane %v7534, 1
        %v7697 = vrot.slane %v7535, 1
        %v7698 = vrot.slane %v7536, 1
        %v7699 = vrot.slane %v7537, 1
        %v7700 = vrot.slane %v7538, 1
        %v7701 = vrot.slane %v7539, 1
        %v7702 = vrot.slane %v7540, 1
        %v7703 = vrot.slane %v7541, 1
        %v7704 = vrot.slane %v7542, 1
        %v7705 = vrot.slane %v7543, 1
        %v7706 = vrot.slane %v7544, 1
        %v7707 = vrot.slane %v7545, 1
        %v7708 = vrot.slane %v7546, 1
        %v7709 = vrot.slane %v7547, 1
        %v7710 = vrot.slane %v7548, 1
        %v7711 = vrot.slane %v7549, 1
        %v7712 = vrot.slane %v7550, 1
        %v7713 = vrot.slane %v7551, 1
        %v7714 = vrot.slane %v7552, 1
        %v7715 = vrot.slane %v7553, 1
        %v7716 = vrot.slane %v7554, 1
        %v7717 = vrot.slane %v7555, 1
        %v7718 = vrot.slane %v7556, 1
        %v7719 = vrot.slane %v7557, 1
        %v7720 = vrot.slane %v7558, 1
        %v7721 = vrot.slane %v7559, 1
        %v7722 = vrot.slane %v7560, 1
        %v7723 = vrot.slane %v7561, 1
        %v7724 = vsel %vm753, %v7722, %v7723
        %v7725 = vsel %vm753, %v7721, %v7722
        %v7726 = vsel %vm753, %v7720, %v7721
        %v7727 = vsel %vm753, %v7719, %v7720
        %v7728 = vsel %vm753, %v7718, %v7719
        %v7729 = vsel %vm753, %v7717, %v7718
        %v7730 = vsel %vm753, %v7716, %v7717
        %v7731 = vsel %vm753, %v7715, %v7716
        %v7732 = vsel %vm753, %v7714, %v7715
        %v7733 = vsel %vm753, %v7713, %v7714
        %v7734 = vsel %vm753, %v7712, %v7713
        %v7735 = vsel %vm753, %v7711, %v7712
        %v7736 = vsel %vm753, %v7710, %v7711
        %v7737 = vsel %vm753, %v7709, %v7710
        %v7738 = vsel %vm753, %v7708, %v7709
        %v7739 = vsel %vm753, %v7707, %v7708
        %v7740 = vsel %vm753, %v7706, %v7707
        %v7741 = vsel %vm753, %v7705, %v7706
        %v7742 = vsel %vm753, %v7704, %v7705
        %v7743 = vsel %vm753, %v7703, %v7704
        %v7744 = vsel %vm753, %v7702, %v7703
        %v7745 = vsel %vm753, %v7701, %v7702
        %v7746 = vsel %vm753, %v7700, %v7701
        %v7747 = vsel %vm753, %v7699, %v7700
        %v7748 = vsel %vm753, %v7698, %v7699
        %v7749 = vsel %vm753, %v7697, %v7698
        %v7750 = vsel %vm753, %v7696, %v7697
        %v7751 = vsel %vm753, %v7695, %v7696
        %v7752 = vsel %vm753, %v7694, %v7695
        %v7753 = vsel %vm753, %v7693, %v7694
        %v7754 = vsel %vm753, %v7692, %v7693
        %v7755 = vsel %vm753, %v7691, %v7692
        %v7756 = vsel %vm753, %v7690, %v7691
        %v7757 = vsel %vm753, %v7689, %v7690
        %v7758 = vsel %vm753, %v7688, %v7689
        %v7759 = vsel %vm753, %v7723, %v7688
        %v7760 = vpack.c.bf16 %v7757, %v7758
        %v7761 = vpack.c.bf16 %v7755, %v7756
        %v7762 = vpack.c.bf16 %v7753, %v7754
        %v7763 = vpack.c.bf16 %v7751, %v7752
        %v7764 = vpack.c.bf16 %v7749, %v7750
        %v7765 = vpack.c.bf16 %v7747, %v7748
        %v7766 = vpack.c.bf16 %v7745, %v7746
        %v7767 = vpack.c.bf16 %v7743, %v7744
        %v7768 = vpack.c.bf16 %v7741, %v7742
        %v7769 = vpack.c.bf16 %v7739, %v7740
        %v7770 = vpack.c.bf16 %v7737, %v7738
        %v7771 = vpack.c.bf16 %v7735, %v7736
        %v7772 = vpack.c.bf16 %v7733, %v7734
        %v7773 = vpack.c.bf16 %v7731, %v7732
        %v7774 = vpack.c.bf16 %v7729, %v7730
        %v7775 = vpack.c.bf16 %v7727, %v7728
        %v7776 = vpack.c.bf16 %v7725, %v7726
        %v7777 = vpack.c.bf16 %v7759, %v7724
        %v7778 = vsel %vm934, %v7760, 0
        %v7779 = vsel %vm935, %v7761, 0
        %v7780 = vsel %vm936, %v7762, 0
        %v7781 = vsel %vm937, %v7763, 0
        %v7782 = vsel %vm938, %v7764, 0
        %v7783 = vsel %vm939, %v7765, 0
        %v7784 = vsel %vm940, %v7766, 0
        %v7785 = vsel %vm941, %v7767, 0
        %v7786 = vsel %vm942, %v7768, 0
        %v7787 = vsel %vm943, %v7769, 0
        %v7788 = vsel %vm944, %v7770, 0
        %v7789 = vsel %vm945, %v7771, 0
        %v7790 = vsel %vm946, %v7772, 0
        %v7791 = vsel %vm947, %v7773, 0
        %v7792 = vsel %vm948, %v7774, 0
        %v7793 = vsel %vm949, %v7775, 0
        %v7794 = vsel %vm950, %v7776, 0
        %v7795 = vsel %vm951, %v7777, 0
        %7814 = vrot.lane.b32.xlu0 %v7562, 64
        %v7815 = vpop.permute.xlu0 %7814
        %7816 = vrot.lane.b32.xlu0 %v7563, 64
        %v7817 = vpop.permute.xlu0 %7816
        %7818 = vrot.lane.b32.xlu0 %v7564, 64
        %v7819 = vpop.permute.xlu0 %7818
        %7820 = vrot.lane.b32.xlu0 %v7565, 64
        %v7821 = vpop.permute.xlu0 %7820
        %7822 = vrot.lane.b32.xlu0 %v7566, 64
        %v7823 = vpop.permute.xlu0 %7822
        %7824 = vrot.lane.b32.xlu0 %v7567, 64
        %v7825 = vpop.permute.xlu0 %7824
        %7826 = vrot.lane.b32.xlu0 %v7568, 64
        %v7827 = vpop.permute.xlu0 %7826
        %7828 = vrot.lane.b32.xlu0 %v7569, 64
        %v7829 = vpop.permute.xlu0 %7828
        %7830 = vrot.lane.b32.xlu0 %v7570, 64
        %v7831 = vpop.permute.xlu0 %7830
        %7832 = vrot.lane.b32.xlu0 %v7571, 64
        %v7833 = vpop.permute.xlu0 %7832
        %7834 = vrot.lane.b32.xlu0 %v7572, 64
        %v7835 = vpop.permute.xlu0 %7834
        %7836 = vrot.lane.b32.xlu0 %v7573, 64
        %v7837 = vpop.permute.xlu0 %7836
        %7838 = vrot.lane.b32.xlu0 %v7574, 64
        %v7839 = vpop.permute.xlu0 %7838
        %7840 = vrot.lane.b32.xlu0 %v7575, 64
        %v7841 = vpop.permute.xlu0 %7840
        %7842 = vrot.lane.b32.xlu0 %v7576, 64
        %v7843 = vpop.permute.xlu0 %7842
        %7844 = vrot.lane.b32.xlu0 %v7577, 64
        %v7845 = vpop.permute.xlu0 %7844
        %7846 = vrot.lane.b32.xlu0 %v7578, 64
        %v7847 = vpop.permute.xlu0 %7846
        %7848 = vrot.lane.b32.xlu0 %v7579, 64
        %v7849 = vpop.permute.xlu0 %7848
        %v7852 = vsel %vm1024, %v7670, %v7815
        %v7856 = vsel %vm1024, %v7671, %v7817
        %v7860 = vsel %vm1024, %v7672, %v7819
        %v7864 = vsel %vm1024, %v7673, %v7821
        %v7868 = vsel %vm1024, %v7674, %v7823
        %v7872 = vsel %vm1024, %v7675, %v7825
        %v7876 = vsel %vm1024, %v7676, %v7827
        %v7880 = vsel %vm1024, %v7677, %v7829
        %v7884 = vsel %vm1024, %v7678, %v7831
        %v7888 = vsel %vm1024, %v7679, %v7833
        %v7892 = vsel %vm1024, %v7680, %v7835
        %v7896 = vsel %vm1024, %v7681, %v7837
        %v7900 = vsel %vm1024, %v7682, %v7839
        %v7904 = vsel %vm1024, %v7683, %v7841
        %v7908 = vsel %vm1024, %v7684, %v7843
        %v7912 = vsel %vm1024, %v7685, %v7845
        %v7916 = vsel %vm1024, %v7686, %v7847
        %v7920 = vsel %vm1024, %v7687, %v7849
        %s7922 = scalar_lea.vmem %s1, 1152
        %v7923 = vld [vmem:[%s7922] sm:$0xff]
        %v7924 = vld [vmem:[%s7922 + $0x8] sm:$0xff]
        %v7925 = vld [vmem:[%s7922 + $0x10] sm:$0xff]
        %v7926 = vld [vmem:[%s7922 + $0x18] sm:$0xff]
        %v7927 = vld [vmem:[%s7922 + $0x20] sm:$0xff]
        %v7928 = vld [vmem:[%s7922 + $0x28] sm:$0xff]
        %v7929 = vld [vmem:[%s7922 + $0x30] sm:$0xff]
        %v7930 = vld [vmem:[%s7922 + $0x38] sm:$0xff]
        %v7931 = vld [vmem:[%s7922 + $0x40] sm:$0xff]
        %v7932 = vld [vmem:[%s7922 + $0x48] sm:$0xff]
        %v7933 = vld [vmem:[%s7922 + $0x50] sm:$0xff]
        %v7934 = vld [vmem:[%s7922 + $0x58] sm:$0xff]
        %v7935 = vld [vmem:[%s7922 + $0x60] sm:$0xff]
        %v7936 = vld [vmem:[%s7922 + $0x68] sm:$0xff]
        %v7937 = vld [vmem:[%s7922 + $0x70] sm:$0xff]
        %v7938 = vld [vmem:[%s7922 + $0x78] sm:$0xff]
        %v7939 = vld [vmem:[%s7922 + $0x80] sm:$0xff]
        %v7940 = vld [vmem:[%s7922 + $0x88] sm:$0xff]
        %v7941 = vld [vmem:[%s7922 + $0x90] sm:$0xff]
        %v7942 = vld [vmem:[%s7922 + $0x98] sm:$0xff]
        %v7943 = vld [vmem:[%s7922 + $0xa0] sm:$0xff]
        %v7944 = vld [vmem:[%s7922 + $0xa8] sm:$0xff]
        %v7945 = vld [vmem:[%s7922 + $0xb0] sm:$0xff]
        %v7946 = vld [vmem:[%s7922 + $0xb8] sm:$0xff]
        %v7971 = vunpack.c.l.b16 %v7923
        %v7972 = vunpack.c.h.b16 %v7923
        %v7973 = vunpack.c.l.b16 %v7924
        %v7974 = vunpack.c.h.b16 %v7924
        %v7975 = vunpack.c.l.b16 %v7925
        %v7976 = vunpack.c.h.b16 %v7925
        %v7977 = vunpack.c.l.b16 %v7926
        %v7978 = vunpack.c.h.b16 %v7926
        %v7979 = vunpack.c.l.b16 %v7927
        %v7980 = vunpack.c.h.b16 %v7927
        %v7981 = vunpack.c.l.b16 %v7928
        %v7982 = vunpack.c.h.b16 %v7928
        %v7983 = vunpack.c.l.b16 %v7929
        %v7984 = vunpack.c.h.b16 %v7929
        %v7985 = vunpack.c.l.b16 %v7930
        %v7986 = vunpack.c.h.b16 %v7930
        %v7987 = vunpack.c.l.b16 %v7931
        %v7988 = vunpack.c.h.b16 %v7931
        %v7989 = vunpack.c.l.b16 %v7932
        %v7990 = vunpack.c.h.b16 %v7932
        %v7991 = vunpack.c.l.b16 %v7933
        %v7992 = vunpack.c.h.b16 %v7933
        %v7993 = vunpack.c.l.b16 %v7934
        %v7994 = vunpack.c.h.b16 %v7934
        %v7995 = vunpack.c.l.b16 %v7935
        %v7996 = vunpack.c.h.b16 %v7935
        %v7997 = vunpack.c.l.b16 %v7936
        %v7998 = vunpack.c.h.b16 %v7936
        %v7999 = vunpack.c.l.b16 %v7937
        %v8000 = vunpack.c.h.b16 %v7937
        %v8001 = vunpack.c.l.b16 %v7938
        %v8002 = vunpack.c.h.b16 %v7938
        %v8003 = vunpack.c.l.b16 %v7939
        %v8004 = vunpack.c.h.b16 %v7939
        %v8005 = vunpack.c.l.b16 %v7940
        %v8006 = vunpack.c.h.b16 %v7940
        %v8007 = vunpack.c.l.b16 %v7941
        %v8008 = vunpack.c.h.b16 %v7941
        %v8009 = vunpack.c.l.b16 %v7942
        %v8010 = vunpack.c.h.b16 %v7942
        %v8011 = vunpack.c.l.b16 %v7943
        %v8012 = vunpack.c.h.b16 %v7943
        %v8013 = vunpack.c.l.b16 %v7944
        %v8014 = vunpack.c.h.b16 %v7944
        %v8015 = vunpack.c.l.b16 %v7945
        %v8016 = vunpack.c.h.b16 %v7945
        %v8017 = vunpack.c.l.b16 %v7946
        %v8018 = vunpack.c.h.b16 %v7946
        %v8019 = vpack.c.b16 %v7973, %v7971
        %v8020 = vpack.c.b16 %v7974, %v7972
        %v8021 = vpack.c.b16 %v7977, %v7975
        %v8022 = vpack.c.b16 %v7978, %v7976
        %v8023 = vpack.c.b16 %v7981, %v7979
        %v8024 = vpack.c.b16 %v7982, %v7980
        %v8025 = vpack.c.b16 %v7985, %v7983
        %v8026 = vpack.c.b16 %v7986, %v7984
        %v8027 = vpack.c.b16 %v7989, %v7987
        %v8028 = vpack.c.b16 %v7990, %v7988
        %v8029 = vpack.c.b16 %v7993, %v7991
        %v8030 = vpack.c.b16 %v7994, %v7992
        %v8031 = vpack.c.b16 %v7997, %v7995
        %v8032 = vpack.c.b16 %v7998, %v7996
        %v8033 = vpack.c.b16 %v8001, %v7999
        %v8034 = vpack.c.b16 %v8002, %v8000
        %v8035 = vpack.c.b16 %v8005, %v8003
        %v8036 = vpack.c.b16 %v8006, %v8004
        %v8037 = vpack.c.b16 %v8009, %v8007
        %v8038 = vpack.c.b16 %v8010, %v8008
        %v8039 = vpack.c.b16 %v8013, %v8011
        %v8040 = vpack.c.b16 %v8014, %v8012
        %v8041 = vpack.c.b16 %v8017, %v8015
        %v8042 = vpack.c.b16 %v8018, %v8016
        %v8068 = vsel %vm1024, %v7778, 0
        %v8071 = vsel %vm1024, %v7779, 0
        %v8074 = vsel %vm1024, %v7780, 0
        %v8077 = vsel %vm1024, %v7781, 0
        %v8080 = vsel %vm1024, %v7782, 0
        %v8083 = vsel %vm1024, %v7783, 0
        %v8086 = vsel %vm1024, %v7784, 0
        %v8089 = vsel %vm1024, %v7785, 0
        %v8092 = vsel %vm1024, %v7786, 0
        %v8095 = vsel %vm1024, %v7787, 0
        %v8098 = vsel %vm1024, %v7788, 0
        %v8101 = vsel %vm1024, %v7789, 0
        %v8104 = vsel %vm1024, %v7790, 0
        %v8107 = vsel %vm1024, %v7791, 0
        %v8110 = vsel %vm1024, %v7792, 0
        %v8113 = vsel %vm1024, %v7793, 0
        %v8116 = vsel %vm1024, %v7794, 0
        %v8119 = vsel %vm1024, %v7795, 0
        %8121 = vmatprep.subr.bf16.mxu0 %v8020
        %8122 = vmatpush1.bf16.msra.mxu0 %v8019
        %8123 = vmatprep.subr.bf16.mxu0 %v8022
        %8124 = vmatpush1.bf16.msra.mxu0 %v8021
        %8125 = vmatprep.subr.bf16.mxu0 %v8024
        %8126 = vmatpush1.bf16.msra.mxu0 %v8023
        %8127 = vmatprep.subr.bf16.mxu0 %v8026
        %8128 = vmatpush1.bf16.msra.mxu0 %v8025
        %8129 = vmatprep.subr.bf16.mxu0 %v8028
        %8130 = vmatpush1.bf16.msra.mxu0 %v8027
        %8131 = vmatprep.subr.bf16.mxu0 %v8030
        %8132 = vmatpush1.bf16.msra.mxu0 %v8029
        %8133 = vmatprep.subr.bf16.mxu0 %v8032
        %8134 = vmatpush1.bf16.msra.mxu0 %v8031
        %8135 = vmatprep.subr.bf16.mxu0 %v8034
        %8136 = vmatpush1.bf16.msra.mxu0 %v8033
        %8137 = vmatprep.subr.bf16.mxu0 %v8036
        %8138 = vmatpush1.bf16.msra.mxu0 %v8035
        %8139 = vmatprep.subr.bf16.mxu0 %v8038
        %8140 = vmatpush1.bf16.msra.mxu0 %v8037
        %8141 = vmatprep.subr.bf16.mxu0 %v8040
        %8142 = vmatpush1.bf16.msra.mxu0 %v8039
        %8143 = vmatprep.subr.bf16.mxu0 %v8042
        %8144 = vmatpush1.bf16.msra.mxu0 %v8041
        %8145 = vmatprep.subr.bf16.mxu0 0
        %8146 = vmatpush1.bf16.msra.mxu0 0
        %8147 = vmatprep.subr.bf16.mxu0 0
        %8148 = vmatpush1.bf16.msra.mxu0 0
        %8149 = vmatprep.subr.bf16.mxu0 0
        %8150 = vmatpush1.bf16.msra.mxu0 0
        %8151 = vmatprep.subr.bf16.mxu0 0
        %8152 = vmatpush1.bf16.msra.mxu0 0
        %8153 = vmatprep.mubr.bf16.mxu0 %v8068
        %8154 = vmatmul.mubr.bf16.gmra.mrb[0].mxu0 %v7852
        %v8155 = vpop.f32.mrb[0].mxu0
        %v8156 = vadd.f32 0.0, %v8155
        %v8157 = vpop.f32.mrb[0].mxu0
        %v8158 = vpop.f32.mrb[0].mxu0
        %v8159 = vadd.f32 0.0, %v8158
        %v8160 = vpop.f32.mrb[0].mxu0
        %8161 = vmatprep.mubr.bf16.mxu0 %v8071
        %8162 = vmatmul.mubr.bf16.gmra.mrb[0].mxu0 %v7856
        %v8163 = vpop.f32.mrb[0].mxu0
        %v8164 = vadd.f32 0.0, %v8163
        %v8165 = vpop.f32.mrb[0].mxu0
        %v8166 = vpop.f32.mrb[0].mxu0
        %v8167 = vadd.f32 0.0, %v8166
        %v8168 = vpop.f32.mrb[0].mxu0
        %8169 = vmatprep.mubr.bf16.mxu0 %v8074
        %8170 = vmatmul.mubr.bf16.gmra.mrb[0].mxu0 %v7860
        %v8171 = vpop.f32.mrb[0].mxu0
        %v8172 = vadd.f32 0.0, %v8171
        %v8173 = vpop.f32.mrb[0].mxu0
        %v8174 = vadd.f32 0.0, %v8173
        %v8175 = vpop.f32.mrb[0].mxu0
        %v8176 = vadd.f32 0.0, %v8175
        %v8177 = vpop.f32.mrb[0].mxu0
        %v8178 = vadd.f32 0.0, %v8177
        %8179 = vmatprep.mubr.bf16.mxu0 %v8077
        %8180 = vmatmul.mubr.bf16.gmra.mrb[0].mxu0 %v7864
        %v8181 = vpop.f32.mrb[0].mxu0
        %v8182 = vadd.f32 0.0, %v8181
        %v8183 = vpop.f32.mrb[0].mxu0
        %v8184 = vadd.f32 0.0, %v8183
        %v8185 = vpop.f32.mrb[0].mxu0
        %v8186 = vadd.f32 0.0, %v8185
        %v8187 = vpop.f32.mrb[0].mxu0
        %v8188 = vadd.f32 0.0, %v8187
        %8189 = vmatprep.mubr.bf16.mxu0 %v8080
        %8190 = vmatmul.mubr.bf16.gmra.mrb[0].mxu0 %v7868
        %v8191 = vpop.f32.mrb[0].mxu0
        %v8192 = vadd.f32 0.0, %v8191
        %v8193 = vpop.f32.mrb[0].mxu0
        %v8194 = vadd.f32 0.0, %v8193
        %v8195 = vpop.f32.mrb[0].mxu0
        %v8196 = vadd.f32 0.0, %v8195
        %v8197 = vpop.f32.mrb[0].mxu0
        %v8198 = vadd.f32 0.0, %v8197
        %8199 = vmatprep.mubr.bf16.mxu0 %v8083
        %8200 = vmatmul.mubr.bf16.gmra.mrb[0].mxu0 %v7872
        %v8201 = vpop.f32.mrb[0].mxu0
        %v8202 = vadd.f32 0.0, %v8201
        %v8203 = vpop.f32.mrb[0].mxu0
        %v8204 = vadd.f32 0.0, %v8203
        %v8205 = vpop.f32.mrb[0].mxu0
        %v8206 = vadd.f32 0.0, %v8205
        %v8207 = vpop.f32.mrb[0].mxu0
        %v8208 = vadd.f32 0.0, %v8207
        %8209 = vmatprep.mubr.bf16.mxu0 %v8086
        %8210 = vmatmul.mubr.bf16.gmra.mrb[0].mxu0 %v7876
        %v8211 = vpop.f32.mrb[0].mxu0
        %v8212 = vadd.f32 0.0, %v8211
        %v8213 = vpop.f32.mrb[0].mxu0
        %v8214 = vadd.f32 0.0, %v8213
        %v8215 = vpop.f32.mrb[0].mxu0
        %v8216 = vadd.f32 0.0, %v8215
        %v8217 = vpop.f32.mrb[0].mxu0
        %v8218 = vadd.f32 0.0, %v8217
        %8219 = vmatprep.mubr.bf16.mxu0 %v8089
        %8220 = vmatmul.mubr.bf16.gmra.mrb[0].mxu0 %v7880
        %v8221 = vpop.f32.mrb[0].mxu0
        %v8222 = vadd.f32 0.0, %v8221
        %v8223 = vpop.f32.mrb[0].mxu0
        %v8224 = vadd.f32 0.0, %v8223
        %v8225 = vpop.f32.mrb[0].mxu0
        %v8226 = vadd.f32 0.0, %v8225
        %v8227 = vpop.f32.mrb[0].mxu0
        %v8228 = vadd.f32 0.0, %v8227
        %8229 = vmatprep.mubr.bf16.mxu0 %v8092
        %8230 = vmatmul.mubr.bf16.gmra.mrb[0].mxu0 %v7884
        %v8231 = vpop.f32.mrb[0].mxu0
        %v8232 = vadd.f32 0.0, %v8231
        %v8233 = vpop.f32.mrb[0].mxu0
        %v8234 = vadd.f32 0.0, %v8233
        %v8235 = vpop.f32.mrb[0].mxu0
        %v8236 = vadd.f32 0.0, %v8235
        %v8237 = vpop.f32.mrb[0].mxu0
        %v8238 = vadd.f32 0.0, %v8237
        %8239 = vmatprep.mubr.bf16.mxu0 %v8095
        %8240 = vmatmul.mubr.bf16.gmra.mrb[0].mxu0 %v7888
        %v8241 = vpop.f32.mrb[0].mxu0
        %v8242 = vadd.f32 0.0, %v8241
        %v8243 = vpop.f32.mrb[0].mxu0
        %v8244 = vadd.f32 0.0, %v8243
        %v8245 = vpop.f32.mrb[0].mxu0
        %v8246 = vadd.f32 0.0, %v8245
        %v8247 = vpop.f32.mrb[0].mxu0
        %v8248 = vadd.f32 0.0, %v8247
        %8249 = vmatprep.mubr.bf16.mxu0 %v8098
        %8250 = vmatmul.mubr.bf16.gmra.mrb[0].mxu0 %v7892
        %v8251 = vpop.f32.mrb[0].mxu0
        %v8252 = vadd.f32 0.0, %v8251
        %v8253 = vpop.f32.mrb[0].mxu0
        %v8254 = vadd.f32 0.0, %v8253
        %v8255 = vpop.f32.mrb[0].mxu0
        %v8256 = vadd.f32 0.0, %v8255
        %v8257 = vpop.f32.mrb[0].mxu0
        %v8258 = vadd.f32 0.0, %v8257
        %8259 = vmatprep.mubr.bf16.mxu0 %v8101
        %8260 = vmatmul.mubr.bf16.gmra.mrb[0].mxu0 %v7896
        %v8261 = vpop.f32.mrb[0].mxu0
        %v8262 = vadd.f32 0.0, %v8261
        %v8263 = vpop.f32.mrb[0].mxu0
        %v8264 = vadd.f32 0.0, %v8263
        %v8265 = vpop.f32.mrb[0].mxu0
        %v8266 = vadd.f32 0.0, %v8265
        %v8267 = vpop.f32.mrb[0].mxu0
        %v8268 = vadd.f32 0.0, %v8267
        %8269 = vmatprep.mubr.bf16.mxu0 %v8104
        %8270 = vmatmul.mubr.bf16.gmra.mrb[0].mxu0 %v7900
        %v8271 = vpop.f32.mrb[0].mxu0
        %v8272 = vadd.f32 0.0, %v8271
        %v8273 = vpop.f32.mrb[0].mxu0
        %v8274 = vadd.f32 0.0, %v8273
        %v8275 = vpop.f32.mrb[0].mxu0
        %v8276 = vadd.f32 0.0, %v8275
        %v8277 = vpop.f32.mrb[0].mxu0
        %v8278 = vadd.f32 0.0, %v8277
        %8279 = vmatprep.mubr.bf16.mxu0 %v8107
        %8280 = vmatmul.mubr.bf16.gmra.mrb[0].mxu0 %v7904
        %v8281 = vpop.f32.mrb[0].mxu0
        %v8282 = vadd.f32 0.0, %v8281
        %v8283 = vpop.f32.mrb[0].mxu0
        %v8284 = vadd.f32 0.0, %v8283
        %v8285 = vpop.f32.mrb[0].mxu0
        %v8286 = vadd.f32 0.0, %v8285
        %v8287 = vpop.f32.mrb[0].mxu0
        %v8288 = vadd.f32 0.0, %v8287
        %8289 = vmatprep.mubr.bf16.mxu0 %v8110
        %8290 = vmatmul.mubr.bf16.gmra.mrb[0].mxu0 %v7908
        %v8291 = vpop.f32.mrb[0].mxu0
        %v8292 = vadd.f32 0.0, %v8291
        %v8293 = vpop.f32.mrb[0].mxu0
        %v8294 = vadd.f32 0.0, %v8293
        %v8295 = vpop.f32.mrb[0].mxu0
        %v8296 = vadd.f32 0.0, %v8295
        %v8297 = vpop.f32.mrb[0].mxu0
        %v8298 = vadd.f32 0.0, %v8297
        %8299 = vmatprep.mubr.bf16.mxu0 %v8113
        %8300 = vmatmul.mubr.bf16.gmra.mrb[0].mxu0 %v7912
        %v8301 = vpop.f32.mrb[0].mxu0
        %v8302 = vadd.f32 0.0, %v8301
        %v8303 = vpop.f32.mrb[0].mxu0
        %v8304 = vadd.f32 0.0, %v8303
        %v8305 = vpop.f32.mrb[0].mxu0
        %v8306 = vadd.f32 0.0, %v8305
        %v8307 = vpop.f32.mrb[0].mxu0
        %v8308 = vadd.f32 0.0, %v8307
        %8309 = vmatprep.mubr.bf16.mxu0 %v8116
        %8310 = vmatmul.mubr.bf16.gmra.mrb[0].mxu0 %v7916
        %v8311 = vpop.f32.mrb[0].mxu0
        %v8312 = vadd.f32 0.0, %v8311
        %v8313 = vpop.f32.mrb[0].mxu0
        %v8314 = vadd.f32 0.0, %v8313
        %v8315 = vpop.f32.mrb[0].mxu0
        %v8316 = vadd.f32 0.0, %v8315
        %v8317 = vpop.f32.mrb[0].mxu0
        %v8318 = vadd.f32 0.0, %v8317
        %8319 = vmatprep.mubr.bf16.mxu0 %v8119
        %8320 = vmatmul.mubr.bf16.gmra.mrb[0].mxu0 %v7920
        %v8321 = vpop.f32.mrb[0].mxu0
        %v8322 = vpop.f32.mrb[0].mxu0
        %v8323 = vadd.f32 0.0, %v8322
        %v8324 = vpop.f32.mrb[0].mxu0
        %v8325 = vpop.f32.mrb[0].mxu0
        %v8326 = vadd.f32 0.0, %v8325
        %8327 = vdwg.mxu0
        %8360 = vrot.lane.b32.xlu0 %v8164, 64
        %v8361 = vpop.permute.xlu0 %8360
        %8362 = vrot.lane.b32.xlu0 %v8167, 64
        %v8363 = vpop.permute.xlu0 %8362
        %8364 = vrot.lane.b32.xlu0 %v8172, 64
        %v8365 = vpop.permute.xlu0 %8364
        %8366 = vrot.lane.b32.xlu0 %v8176, 64
        %v8367 = vpop.permute.xlu0 %8366
        %8368 = vrot.lane.b32.xlu0 %v8182, 64
        %v8369 = vpop.permute.xlu0 %8368
        %8370 = vrot.lane.b32.xlu0 %v8186, 64
        %v8371 = vpop.permute.xlu0 %8370
        %8372 = vrot.lane.b32.xlu0 %v8192, 64
        %v8373 = vpop.permute.xlu0 %8372
        %8374 = vrot.lane.b32.xlu0 %v8196, 64
        %v8375 = vpop.permute.xlu0 %8374
        %8376 = vrot.lane.b32.xlu0 %v8202, 64
        %v8377 = vpop.permute.xlu0 %8376
        %8378 = vrot.lane.b32.xlu0 %v8206, 64
        %v8379 = vpop.permute.xlu0 %8378
        %8380 = vrot.lane.b32.xlu0 %v8212, 64
        %v8381 = vpop.permute.xlu0 %8380
        %8382 = vrot.lane.b32.xlu0 %v8216, 64
        %v8383 = vpop.permute.xlu0 %8382
        %8384 = vrot.lane.b32.xlu0 %v8222, 64
        %v8385 = vpop.permute.xlu0 %8384
        %8386 = vrot.lane.b32.xlu0 %v8226, 64
        %v8387 = vpop.permute.xlu0 %8386
        %8388 = vrot.lane.b32.xlu0 %v8232, 64
        %v8389 = vpop.permute.xlu0 %8388
        %8390 = vrot.lane.b32.xlu0 %v8236, 64
        %v8391 = vpop.permute.xlu0 %8390
        %8392 = vrot.lane.b32.xlu0 %v8242, 64
        %v8393 = vpop.permute.xlu0 %8392
        %8394 = vrot.lane.b32.xlu0 %v8246, 64
        %v8395 = vpop.permute.xlu0 %8394
        %8396 = vrot.lane.b32.xlu0 %v8252, 64
        %v8397 = vpop.permute.xlu0 %8396
        %8398 = vrot.lane.b32.xlu0 %v8256, 64
        %v8399 = vpop.permute.xlu0 %8398
        %8400 = vrot.lane.b32.xlu0 %v8262, 64
        %v8401 = vpop.permute.xlu0 %8400
        %8402 = vrot.lane.b32.xlu0 %v8266, 64
        %v8403 = vpop.permute.xlu0 %8402
        %8404 = vrot.lane.b32.xlu0 %v8272, 64
        %v8405 = vpop.permute.xlu0 %8404
        %8406 = vrot.lane.b32.xlu0 %v8276, 64
        %v8407 = vpop.permute.xlu0 %8406
        %8408 = vrot.lane.b32.xlu0 %v8282, 64
        %v8409 = vpop.permute.xlu0 %8408
        %8410 = vrot.lane.b32.xlu0 %v8286, 64
        %v8411 = vpop.permute.xlu0 %8410
        %8412 = vrot.lane.b32.xlu0 %v8292, 64
        %v8413 = vpop.permute.xlu0 %8412
        %8414 = vrot.lane.b32.xlu0 %v8296, 64
        %v8415 = vpop.permute.xlu0 %8414
        %8416 = vrot.lane.b32.xlu0 %v8302, 64
        %v8417 = vpop.permute.xlu0 %8416
        %8418 = vrot.lane.b32.xlu0 %v8306, 64
        %v8419 = vpop.permute.xlu0 %8418
        %8420 = vrot.lane.b32.xlu0 %v8312, 64
        %v8421 = vpop.permute.xlu0 %8420
        %8422 = vrot.lane.b32.xlu0 %v8316, 64
        %v8423 = vpop.permute.xlu0 %8422
        %v8456 = vadd.f32 %v8156, %v8361
        %v8457 = vadd.f32 %v8159, %v8363
        %v8458 = vadd.f32 %v8164, %v8365
        %v8459 = vadd.f32 %v8167, %v8367
        %v8460 = vadd.f32 %v8172, %v8369
        %v8461 = vadd.f32 %v8176, %v8371
        %v8462 = vadd.f32 %v8182, %v8373
        %v8463 = vadd.f32 %v8186, %v8375
        %v8464 = vadd.f32 %v8192, %v8377
        %v8465 = vadd.f32 %v8196, %v8379
        %v8466 = vadd.f32 %v8202, %v8381
        %v8467 = vadd.f32 %v8206, %v8383
        %v8468 = vadd.f32 %v8212, %v8385
        %v8469 = vadd.f32 %v8216, %v8387
        %v8470 = vadd.f32 %v8222, %v8389
        %v8471 = vadd.f32 %v8226, %v8391
        %v8472 = vadd.f32 %v8232, %v8393
        %v8473 = vadd.f32 %v8236, %v8395
        %v8474 = vadd.f32 %v8242, %v8397
        %v8475 = vadd.f32 %v8246, %v8399
        %v8476 = vadd.f32 %v8252, %v8401
        %v8477 = vadd.f32 %v8256, %v8403
        %v8478 = vadd.f32 %v8262, %v8405
        %v8479 = vadd.f32 %v8266, %v8407
        %v8480 = vadd.f32 %v8272, %v8409
        %v8481 = vadd.f32 %v8276, %v8411
        %v8482 = vadd.f32 %v8282, %v8413
        %v8483 = vadd.f32 %v8286, %v8415
        %v8484 = vadd.f32 %v8292, %v8417
        %v8485 = vadd.f32 %v8296, %v8419
        %v8486 = vadd.f32 %v8302, %v8421
        %v8487 = vadd.f32 %v8306, %v8423
        %v8488 = vadd.f32 %v8456, %v8174
        %v8489 = vadd.f32 %v8457, %v8178
        %v8490 = vadd.f32 %v8458, %v8184
        %v8491 = vadd.f32 %v8459, %v8188
        %v8492 = vadd.f32 %v8460, %v8194
        %v8493 = vadd.f32 %v8461, %v8198
        %v8494 = vadd.f32 %v8462, %v8204
        %v8495 = vadd.f32 %v8463, %v8208
        %v8496 = vadd.f32 %v8464, %v8214
        %v8497 = vadd.f32 %v8465, %v8218
        %v8498 = vadd.f32 %v8466, %v8224
        %v8499 = vadd.f32 %v8467, %v8228
        %v8500 = vadd.f32 %v8468, %v8234
        %v8501 = vadd.f32 %v8469, %v8238
        %v8502 = vadd.f32 %v8470, %v8244
        %v8503 = vadd.f32 %v8471, %v8248
        %v8504 = vadd.f32 %v8472, %v8254
        %v8505 = vadd.f32 %v8473, %v8258
        %v8506 = vadd.f32 %v8474, %v8264
        %v8507 = vadd.f32 %v8475, %v8268
        %v8508 = vadd.f32 %v8476, %v8274
        %v8509 = vadd.f32 %v8477, %v8278
        %v8510 = vadd.f32 %v8478, %v8284
        %v8511 = vadd.f32 %v8479, %v8288
        %v8512 = vadd.f32 %v8480, %v8294
        %v8513 = vadd.f32 %v8481, %v8298
        %v8514 = vadd.f32 %v8482, %v8304
        %v8515 = vadd.f32 %v8483, %v8308
        %v8516 = vadd.f32 %v8484, %v8314
        %v8517 = vadd.f32 %v8485, %v8318
        %v8518 = vadd.f32 %v8486, %v8323
        %v8519 = vadd.f32 %v8487, %v8326
        %s8520 = scalar_lea.vmem %s2, 6
        %v8521 = vld [vmem:[%s8520] sm:$0x1]
        %v8523 = vlaneseq
        %v8524 = vshrl.u32 %v8523, 7
        %v8525 = vsub.s32 0, %v8524
        %v8526 = vrot.slane %v8521, %v8525
        %v8528 = vmul.f32 %v8488, %v8526
        %v8529 = vmul.f32 %v8489, %v8526
        %v8530 = vmul.f32 %v8490, %v8526
        %v8531 = vmul.f32 %v8491, %v8526
        %v8532 = vmul.f32 %v8492, %v8526
        %v8533 = vmul.f32 %v8493, %v8526
        %v8534 = vmul.f32 %v8494, %v8526
        %v8535 = vmul.f32 %v8495, %v8526
        %v8536 = vmul.f32 %v8496, %v8526
        %v8537 = vmul.f32 %v8497, %v8526
        %v8538 = vmul.f32 %v8498, %v8526
        %v8539 = vmul.f32 %v8499, %v8526
        %v8540 = vmul.f32 %v8500, %v8526
        %v8541 = vmul.f32 %v8501, %v8526
        %v8542 = vmul.f32 %v8502, %v8526
        %v8543 = vmul.f32 %v8503, %v8526
        %v8544 = vmul.f32 %v8504, %v8526
        %v8545 = vmul.f32 %v8505, %v8526
        %v8546 = vmul.f32 %v8506, %v8526
        %v8547 = vmul.f32 %v8507, %v8526
        %v8548 = vmul.f32 %v8508, %v8526
        %v8549 = vmul.f32 %v8509, %v8526
        %v8550 = vmul.f32 %v8510, %v8526
        %v8551 = vmul.f32 %v8511, %v8526
        %v8552 = vmul.f32 %v8512, %v8526
        %v8553 = vmul.f32 %v8513, %v8526
        %v8554 = vmul.f32 %v8514, %v8526
        %v8555 = vmul.f32 %v8515, %v8526
        %v8556 = vmul.f32 %v8516, %v8526
        %v8557 = vmul.f32 %v8517, %v8526
        %v8558 = vmul.f32 %v8518, %v8526
        %v8559 = vmul.f32 %v8519, %v8526
        %s8560 = scalar_lea.vmem %s3, 6
        %v8561 = vld [vmem:[%s8560] sm:$0x1]
        %v8563 = vlaneseq
        %v8564 = vshrl.u32 %v8563, 7
        %v8565 = vsub.s32 0, %v8564
        %v8566 = vrot.slane %v8561, %v8565
        %v8568 = vadd.f32 %v8528, %v8566
        %v8569 = vadd.f32 %v8529, %v8566
        %v8570 = vadd.f32 %v8530, %v8566
        %v8571 = vadd.f32 %v8531, %v8566
        %v8572 = vadd.f32 %v8532, %v8566
        %v8573 = vadd.f32 %v8533, %v8566
        %v8574 = vadd.f32 %v8534, %v8566
        %v8575 = vadd.f32 %v8535, %v8566
        %v8576 = vadd.f32 %v8536, %v8566
        %v8577 = vadd.f32 %v8537, %v8566
        %v8578 = vadd.f32 %v8538, %v8566
        %v8579 = vadd.f32 %v8539, %v8566
        %v8580 = vadd.f32 %v8540, %v8566
        %v8581 = vadd.f32 %v8541, %v8566
        %v8582 = vadd.f32 %v8542, %v8566
        %v8583 = vadd.f32 %v8543, %v8566
        %v8584 = vadd.f32 %v8544, %v8566
        %v8585 = vadd.f32 %v8545, %v8566
        %v8586 = vadd.f32 %v8546, %v8566
        %v8587 = vadd.f32 %v8547, %v8566
        %v8588 = vadd.f32 %v8548, %v8566
        %v8589 = vadd.f32 %v8549, %v8566
        %v8590 = vadd.f32 %v8550, %v8566
        %v8591 = vadd.f32 %v8551, %v8566
        %v8592 = vadd.f32 %v8552, %v8566
        %v8593 = vadd.f32 %v8553, %v8566
        %v8594 = vadd.f32 %v8554, %v8566
        %v8595 = vadd.f32 %v8555, %v8566
        %v8596 = vadd.f32 %v8556, %v8566
        %v8597 = vadd.f32 %v8557, %v8566
        %v8598 = vadd.f32 %v8558, %v8566
        %v8599 = vadd.f32 %v8559, %v8566
        %v8600 = vmax.f32 %v8568, 0.0
        %v8601 = vmax.f32 %v8569, 0.0
        %v8602 = vmax.f32 %v8570, 0.0
        %v8603 = vmax.f32 %v8571, 0.0
        %v8604 = vmax.f32 %v8572, 0.0
        %v8605 = vmax.f32 %v8573, 0.0
        %v8606 = vmax.f32 %v8574, 0.0
        %v8607 = vmax.f32 %v8575, 0.0
        %v8608 = vmax.f32 %v8576, 0.0
        %v8609 = vmax.f32 %v8577, 0.0
        %v8610 = vmax.f32 %v8578, 0.0
        %v8611 = vmax.f32 %v8579, 0.0
        %v8612 = vmax.f32 %v8580, 0.0
        %v8613 = vmax.f32 %v8581, 0.0
        %v8614 = vmax.f32 %v8582, 0.0
        %v8615 = vmax.f32 %v8583, 0.0
        %v8616 = vmax.f32 %v8584, 0.0
        %v8617 = vmax.f32 %v8585, 0.0
        %v8618 = vmax.f32 %v8586, 0.0
        %v8619 = vmax.f32 %v8587, 0.0
        %v8620 = vmax.f32 %v8588, 0.0
        %v8621 = vmax.f32 %v8589, 0.0
        %v8622 = vmax.f32 %v8590, 0.0
        %v8623 = vmax.f32 %v8591, 0.0
        %v8624 = vmax.f32 %v8592, 0.0
        %v8625 = vmax.f32 %v8593, 0.0
        %v8626 = vmax.f32 %v8594, 0.0
        %v8627 = vmax.f32 %v8595, 0.0
        %v8628 = vmax.f32 %v8596, 0.0
        %v8629 = vmax.f32 %v8597, 0.0
        %v8630 = vmax.f32 %v8598, 0.0
        %v8631 = vmax.f32 %v8599, 0.0
        %8632 = vst.msk [vmem:[#allocation2 + $0x10] sm:$0xff] %vm1024, %v8600
        %8633 = vst.msk [vmem:[#allocation2 + $0x18] sm:$0xff] %vm1024, %v8601
        %8634 = vst.msk [vmem:[#allocation2 + $0x20] sm:$0xff] %vm1024, %v8602
        %8635 = vst.msk [vmem:[#allocation2 + $0x28] sm:$0xff] %vm1024, %v8603
        %8636 = vst.msk [vmem:[#allocation2 + $0x30] sm:$0xff] %vm1024, %v8604
        %8637 = vst.msk [vmem:[#allocation2 + $0x38] sm:$0xff] %vm1024, %v8605
        %8638 = vst.msk [vmem:[#allocation2 + $0x40] sm:$0xff] %vm1024, %v8606
        %8639 = vst.msk [vmem:[#allocation2 + $0x48] sm:$0xff] %vm1024, %v8607
        %8640 = vst.msk [vmem:[#allocation2 + $0x50] sm:$0xff] %vm1024, %v8608
        %8641 = vst.msk [vmem:[#allocation2 + $0x58] sm:$0xff] %vm1024, %v8609
        %8642 = vst.msk [vmem:[#allocation2 + $0x60] sm:$0xff] %vm1024, %v8610
        %8643 = vst.msk [vmem:[#allocation2 + $0x68] sm:$0xff] %vm1024, %v8611
        %8644 = vst.msk [vmem:[#allocation2 + $0x70] sm:$0xff] %vm1024, %v8612
        %8645 = vst.msk [vmem:[#allocation2 + $0x78] sm:$0xff] %vm1024, %v8613
        %8646 = vst.msk [vmem:[#allocation2 + $0x80] sm:$0xff] %vm1024, %v8614
        %8647 = vst.msk [vmem:[#allocation2 + $0x88] sm:$0xff] %vm1024, %v8615
        %8648 = vst.msk [vmem:[#allocation2 + $0x90] sm:$0xff] %vm1024, %v8616
        %8649 = vst.msk [vmem:[#allocation2 + $0x98] sm:$0xff] %vm1024, %v8617
        %8650 = vst.msk [vmem:[#allocation2 + $0xa0] sm:$0xff] %vm1024, %v8618
        %8651 = vst.msk [vmem:[#allocation2 + $0xa8] sm:$0xff] %vm1024, %v8619
        %8652 = vst.msk [vmem:[#allocation2 + $0xb0] sm:$0xff] %vm1024, %v8620
        %8653 = vst.msk [vmem:[#allocation2 + $0xb8] sm:$0xff] %vm1024, %v8621
        %8654 = vst.msk [vmem:[#allocation2 + $0xc0] sm:$0xff] %vm1024, %v8622
        %8655 = vst.msk [vmem:[#allocation2 + $0xc8] sm:$0xff] %vm1024, %v8623
        %8656 = vst.msk [vmem:[#allocation2 + $0xd0] sm:$0xff] %vm1024, %v8624
        %8657 = vst.msk [vmem:[#allocation2 + $0xd8] sm:$0xff] %vm1024, %v8625
        %8658 = vst.msk [vmem:[#allocation2 + $0xe0] sm:$0xff] %vm1024, %v8626
        %8659 = vst.msk [vmem:[#allocation2 + $0xe8] sm:$0xff] %vm1024, %v8627
        %8660 = vst.msk [vmem:[#allocation2 + $0xf0] sm:$0xff] %vm1024, %v8628
        %8661 = vst.msk [vmem:[#allocation2 + $0xf8] sm:$0xff] %vm1024, %v8629
        %8662 = vst.msk [vmem:[#allocation2 + $0x100] sm:$0xff] %vm1024, %v8630
        %8663 = vst.msk [vmem:[#allocation2 + $0x108] sm:$0xff] %vm1024, %v8631
        %v8664 = vld [vmem:[#allocation2] sm:$0xff]
        %v8665 = vld [vmem:[#allocation2 + $0x8] sm:$0xff]
        %v8666 = vld [vmem:[#allocation2 + $0x10] sm:$0xff]
        %v8667 = vld [vmem:[#allocation2 + $0x18] sm:$0xff]
        %v8668 = vld [vmem:[#allocation2 + $0x20] sm:$0xff]
        %v8669 = vld [vmem:[#allocation2 + $0x28] sm:$0xff]
        %v8670 = vld [vmem:[#allocation2 + $0x30] sm:$0xff]
        %v8671 = vld [vmem:[#allocation2 + $0x38] sm:$0xff]
        %v8672 = vld [vmem:[#allocation2 + $0x40] sm:$0xff]
        %v8673 = vld [vmem:[#allocation2 + $0x48] sm:$0xff]
        %v8674 = vld [vmem:[#allocation2 + $0x50] sm:$0xff]
        %v8675 = vld [vmem:[#allocation2 + $0x58] sm:$0xff]
        %v8676 = vld [vmem:[#allocation2 + $0x60] sm:$0xff]
        %v8677 = vld [vmem:[#allocation2 + $0x68] sm:$0xff]
        %v8678 = vld [vmem:[#allocation2 + $0x70] sm:$0xff]
        %v8679 = vld [vmem:[#allocation2 + $0x78] sm:$0xff]
        %v8680 = vld [vmem:[#allocation2 + $0x80] sm:$0xff]
        %v8681 = vld [vmem:[#allocation2 + $0x88] sm:$0xff]
        %v8682 = vld [vmem:[#allocation2 + $0x90] sm:$0xff]
        %v8683 = vld [vmem:[#allocation2 + $0x98] sm:$0xff]
        %v8684 = vld [vmem:[#allocation2 + $0xa0] sm:$0xff]
        %v8685 = vld [vmem:[#allocation2 + $0xa8] sm:$0xff]
        %v8686 = vld [vmem:[#allocation2 + $0xb0] sm:$0xff]
        %v8687 = vld [vmem:[#allocation2 + $0xb8] sm:$0xff]
        %v8688 = vld [vmem:[#allocation2 + $0xc0] sm:$0xff]
        %v8689 = vld [vmem:[#allocation2 + $0xc8] sm:$0xff]
        %v8690 = vld [vmem:[#allocation2 + $0xd0] sm:$0xff]
        %v8691 = vld [vmem:[#allocation2 + $0xd8] sm:$0xff]
        %v8692 = vld [vmem:[#allocation2 + $0xe0] sm:$0xff]
        %v8693 = vld [vmem:[#allocation2 + $0xe8] sm:$0xff]
        %v8694 = vld [vmem:[#allocation2 + $0xf0] sm:$0xff]
        %v8695 = vld [vmem:[#allocation2 + $0xf8] sm:$0xff]
        %v8696 = vld [vmem:[#allocation2 + $0x100] sm:$0xff]
        %v8697 = vld [vmem:[#allocation2 + $0x108] sm:$0xff]
        %v8698 = vld [vmem:[#allocation2 + $0x110] sm:$0xff]
        %v8699 = vld [vmem:[#allocation2 + $0x118] sm:$0xff]
        %v8700 = vpack.c.bf16 %v8665, %v8664
        %v8701 = vpack.c.bf16 %v8667, %v8666
        %v8702 = vpack.c.bf16 %v8669, %v8668
        %v8703 = vpack.c.bf16 %v8671, %v8670
        %v8704 = vpack.c.bf16 %v8673, %v8672
        %v8705 = vpack.c.bf16 %v8675, %v8674
        %v8706 = vpack.c.bf16 %v8677, %v8676
        %v8707 = vpack.c.bf16 %v8679, %v8678
        %v8708 = vpack.c.bf16 %v8681, %v8680
        %v8709 = vpack.c.bf16 %v8683, %v8682
        %v8710 = vpack.c.bf16 %v8685, %v8684
        %v8711 = vpack.c.bf16 %v8687, %v8686
        %v8712 = vpack.c.bf16 %v8689, %v8688
        %v8713 = vpack.c.bf16 %v8691, %v8690
        %v8714 = vpack.c.bf16 %v8693, %v8692
        %v8715 = vpack.c.bf16 %v8695, %v8694
        %v8716 = vpack.c.bf16 %v8697, %v8696
        %v8717 = vpack.c.bf16 %v8699, %v8698
        %v8718 = vrot.slane %v8664, 7
        %v8719 = vrot.slane %v8665, 7
        %v8720 = vrot.slane %v8666, 7
        %v8721 = vrot.slane %v8667, 7
        %v8722 = vrot.slane %v8668, 7
        %v8723 = vrot.slane %v8669, 7
        %v8724 = vrot.slane %v8670, 7
        %v8725 = vrot.slane %v8671, 7
        %v8726 = vrot.slane %v8672, 7
        %v8727 = vrot.slane %v8673, 7
        %v8728 = vrot.slane %v8674, 7
        %v8729 = vrot.slane %v8675, 7
        %v8730 = vrot.slane %v8676, 7
        %v8731 = vrot.slane %v8677, 7
        %v8732 = vrot.slane %v8678, 7
        %v8733 = vrot.slane %v8679, 7
        %v8734 = vrot.slane %v8680, 7
        %v8735 = vrot.slane %v8681, 7
        %v8736 = vrot.slane %v8682, 7
        %v8737 = vrot.slane %v8683, 7
        %v8738 = vrot.slane %v8684, 7
        %v8739 = vrot.slane %v8685, 7
        %v8740 = vrot.slane %v8686, 7
        %v8741 = vrot.slane %v8687, 7
        %v8742 = vrot.slane %v8688, 7
        %v8743 = vrot.slane %v8689, 7
        %v8744 = vrot.slane %v8690, 7
        %v8745 = vrot.slane %v8691, 7
        %v8746 = vrot.slane %v8692, 7
        %v8747 = vrot.slane %v8693, 7
        %v8748 = vrot.slane %v8694, 7
        %v8749 = vrot.slane %v8695, 7
        %v8750 = vrot.slane %v8696, 7
        %v8751 = vrot.slane %v8697, 7
        %v8752 = vrot.slane %v8698, 7
        %v8753 = vrot.slane %v8699, 7
        %v8754 = vsel %vm500, %v8752, %v8753
        %v8755 = vsel %vm500, %v8751, %v8752
        %v8756 = vsel %vm500, %v8750, %v8751
        %v8757 = vsel %vm500, %v8749, %v8750
        %v8758 = vsel %vm500, %v8748, %v8749
        %v8759 = vsel %vm500, %v8747, %v8748
        %v8760 = vsel %vm500, %v8746, %v8747
        %v8761 = vsel %vm500, %v8745, %v8746
        %v8762 = vsel %vm500, %v8744, %v8745
        %v8763 = vsel %vm500, %v8743, %v8744
        %v8764 = vsel %vm500, %v8742, %v8743
        %v8765 = vsel %vm500, %v8741, %v8742
        %v8766 = vsel %vm500, %v8740, %v8741
        %v8767 = vsel %vm500, %v8739, %v8740
        %v8768 = vsel %vm500, %v8738, %v8739
        %v8769 = vsel %vm500, %v8737, %v8738
        %v8770 = vsel %vm500, %v8736, %v8737
        %v8771 = vsel %vm500, %v8735, %v8736
        %v8772 = vsel %vm500, %v8734, %v8735
        %v8773 = vsel %vm500, %v8733, %v8734
        %v8774 = vsel %vm500, %v8732, %v8733
        %v8775 = vsel %vm500, %v8731, %v8732
        %v8776 = vsel %vm500, %v8730, %v8731
        %v8777 = vsel %vm500, %v8729, %v8730
        %v8778 = vsel %vm500, %v8728, %v8729
        %v8779 = vsel %vm500, %v8727, %v8728
        %v8780 = vsel %vm500, %v8726, %v8727
        %v8781 = vsel %vm500, %v8725, %v8726
        %v8782 = vsel %vm500, %v8724, %v8725
        %v8783 = vsel %vm500, %v8723, %v8724
        %v8784 = vsel %vm500, %v8722, %v8723
        %v8785 = vsel %vm500, %v8721, %v8722
        %v8786 = vsel %vm500, %v8720, %v8721
        %v8787 = vsel %vm500, %v8719, %v8720
        %v8788 = vsel %vm500, %v8718, %v8719
        %v8789 = vsel %vm500, %v8753, %v8718
        %v8790 = vpack.c.bf16 %v8788, %v8789
        %v8791 = vpack.c.bf16 %v8786, %v8787
        %v8792 = vpack.c.bf16 %v8784, %v8785
        %v8793 = vpack.c.bf16 %v8782, %v8783
        %v8794 = vpack.c.bf16 %v8780, %v8781
        %v8795 = vpack.c.bf16 %v8778, %v8779
        %v8796 = vpack.c.bf16 %v8776, %v8777
        %v8797 = vpack.c.bf16 %v8774, %v8775
        %v8798 = vpack.c.bf16 %v8772, %v8773
        %v8799 = vpack.c.bf16 %v8770, %v8771
        %v8800 = vpack.c.bf16 %v8768, %v8769
        %v8801 = vpack.c.bf16 %v8766, %v8767
        %v8802 = vpack.c.bf16 %v8764, %v8765
        %v8803 = vpack.c.bf16 %v8762, %v8763
        %v8804 = vpack.c.bf16 %v8760, %v8761
        %v8805 = vpack.c.bf16 %v8758, %v8759
        %v8806 = vpack.c.bf16 %v8756, %v8757
        %v8807 = vpack.c.bf16 %v8754, %v8755
        %v8808 = vsel %vm681, %v8790, 0
        %v8809 = vsel %vm682, %v8791, 0
        %v8810 = vsel %vm683, %v8792, 0
        %v8811 = vsel %vm684, %v8793, 0
        %v8812 = vsel %vm685, %v8794, 0
        %v8813 = vsel %vm686, %v8795, 0
        %v8814 = vsel %vm687, %v8796, 0
        %v8815 = vsel %vm688, %v8797, 0
        %v8816 = vsel %vm689, %v8798, 0
        %v8817 = vsel %vm690, %v8799, 0
        %v8818 = vsel %vm691, %v8800, 0
        %v8819 = vsel %vm692, %v8801, 0
        %v8820 = vsel %vm693, %v8802, 0
        %v8821 = vsel %vm694, %v8803, 0
        %v8822 = vsel %vm695, %v8804, 0
        %v8823 = vsel %vm696, %v8805, 0
        %v8824 = vsel %vm697, %v8806, 0
        %v8825 = vsel %vm698, %v8807, 0
        %v8826 = vrot.slane %v8664, 1
        %v8827 = vrot.slane %v8665, 1
        %v8828 = vrot.slane %v8666, 1
        %v8829 = vrot.slane %v8667, 1
        %v8830 = vrot.slane %v8668, 1
        %v8831 = vrot.slane %v8669, 1
        %v8832 = vrot.slane %v8670, 1
        %v8833 = vrot.slane %v8671, 1
        %v8834 = vrot.slane %v8672, 1
        %v8835 = vrot.slane %v8673, 1
        %v8836 = vrot.slane %v8674, 1
        %v8837 = vrot.slane %v8675, 1
        %v8838 = vrot.slane %v8676, 1
        %v8839 = vrot.slane %v8677, 1
        %v8840 = vrot.slane %v8678, 1
        %v8841 = vrot.slane %v8679, 1
        %v8842 = vrot.slane %v8680, 1
        %v8843 = vrot.slane %v8681, 1
        %v8844 = vrot.slane %v8682, 1
        %v8845 = vrot.slane %v8683, 1
        %v8846 = vrot.slane %v8684, 1
        %v8847 = vrot.slane %v8685, 1
        %v8848 = vrot.slane %v8686, 1
        %v8849 = vrot.slane %v8687, 1
        %v8850 = vrot.slane %v8688, 1
        %v8851 = vrot.slane %v8689, 1
        %v8852 = vrot.slane %v8690, 1
        %v8853 = vrot.slane %v8691, 1
        %v8854 = vrot.slane %v8692, 1
        %v8855 = vrot.slane %v8693, 1
        %v8856 = vrot.slane %v8694, 1
        %v8857 = vrot.slane %v8695, 1
        %v8858 = vrot.slane %v8696, 1
        %v8859 = vrot.slane %v8697, 1
        %v8860 = vrot.slane %v8698, 1
        %v8861 = vrot.slane %v8699, 1
        %v8862 = vsel %vm753, %v8860, %v8861
        %v8863 = vsel %vm753, %v8859, %v8860
        %v8864 = vsel %vm753, %v8858, %v8859
        %v8865 = vsel %vm753, %v8857, %v8858
        %v8866 = vsel %vm753, %v8856, %v8857
        %v8867 = vsel %vm753, %v8855, %v8856
        %v8868 = vsel %vm753, %v8854, %v8855
        %v8869 = vsel %vm753, %v8853, %v8854
        %v8870 = vsel %vm753, %v8852, %v8853
        %v8871 = vsel %vm753, %v8851, %v8852
        %v8872 = vsel %vm753, %v8850, %v8851
        %v8873 = vsel %vm753, %v8849, %v8850
        %v8874 = vsel %vm753, %v8848, %v8849
        %v8875 = vsel %vm753, %v8847, %v8848
        %v8876 = vsel %vm753, %v8846, %v8847
        %v8877 = vsel %vm753, %v8845, %v8846
        %v8878 = vsel %vm753, %v8844, %v8845
        %v8879 = vsel %vm753, %v8843, %v8844
        %v8880 = vsel %vm753, %v8842, %v8843
        %v8881 = vsel %vm753, %v8841, %v8842
        %v8882 = vsel %vm753, %v8840, %v8841
        %v8883 = vsel %vm753, %v8839, %v8840
        %v8884 = vsel %vm753, %v8838, %v8839
        %v8885 = vsel %vm753, %v8837, %v8838
        %v8886 = vsel %vm753, %v8836, %v8837
        %v8887 = vsel %vm753, %v8835, %v8836
        %v8888 = vsel %vm753, %v8834, %v8835
        %v8889 = vsel %vm753, %v8833, %v8834
        %v8890 = vsel %vm753, %v8832, %v8833
        %v8891 = vsel %vm753, %v8831, %v8832
        %v8892 = vsel %vm753, %v8830, %v8831
        %v8893 = vsel %vm753, %v8829, %v8830
        %v8894 = vsel %vm753, %v8828, %v8829
        %v8895 = vsel %vm753, %v8827, %v8828
        %v8896 = vsel %vm753, %v8826, %v8827
        %v8897 = vsel %vm753, %v8861, %v8826
        %v8898 = vpack.c.bf16 %v8895, %v8896
        %v8899 = vpack.c.bf16 %v8893, %v8894
        %v8900 = vpack.c.bf16 %v8891, %v8892
        %v8901 = vpack.c.bf16 %v8889, %v8890
        %v8902 = vpack.c.bf16 %v8887, %v8888
        %v8903 = vpack.c.bf16 %v8885, %v8886
        %v8904 = vpack.c.bf16 %v8883, %v8884
        %v8905 = vpack.c.bf16 %v8881, %v8882
        %v8906 = vpack.c.bf16 %v8879, %v8880
        %v8907 = vpack.c.bf16 %v8877, %v8878
        %v8908 = vpack.c.bf16 %v8875, %v8876
        %v8909 = vpack.c.bf16 %v8873, %v8874
        %v8910 = vpack.c.bf16 %v8871, %v8872
        %v8911 = vpack.c.bf16 %v8869, %v8870
        %v8912 = vpack.c.bf16 %v8867, %v8868
        %v8913 = vpack.c.bf16 %v8865, %v8866
        %v8914 = vpack.c.bf16 %v8863, %v8864
        %v8915 = vpack.c.bf16 %v8897, %v8862
        %v8916 = vsel %vm934, %v8898, 0
        %v8917 = vsel %vm935, %v8899, 0
        %v8918 = vsel %vm936, %v8900, 0
        %v8919 = vsel %vm937, %v8901, 0
        %v8920 = vsel %vm938, %v8902, 0
        %v8921 = vsel %vm939, %v8903, 0
        %v8922 = vsel %vm940, %v8904, 0
        %v8923 = vsel %vm941, %v8905, 0
        %v8924 = vsel %vm942, %v8906, 0
        %v8925 = vsel %vm943, %v8907, 0
        %v8926 = vsel %vm944, %v8908, 0
        %v8927 = vsel %vm945, %v8909, 0
        %v8928 = vsel %vm946, %v8910, 0
        %v8929 = vsel %vm947, %v8911, 0
        %v8930 = vsel %vm948, %v8912, 0
        %v8931 = vsel %vm949, %v8913, 0
        %v8932 = vsel %vm950, %v8914, 0
        %v8933 = vsel %vm951, %v8915, 0
        %8952 = vrot.lane.b32.xlu0 %v8700, 64
        %v8953 = vpop.permute.xlu0 %8952
        %8954 = vrot.lane.b32.xlu0 %v8701, 64
        %v8955 = vpop.permute.xlu0 %8954
        %8956 = vrot.lane.b32.xlu0 %v8702, 64
        %v8957 = vpop.permute.xlu0 %8956
        %8958 = vrot.lane.b32.xlu0 %v8703, 64
        %v8959 = vpop.permute.xlu0 %8958
        %8960 = vrot.lane.b32.xlu0 %v8704, 64
        %v8961 = vpop.permute.xlu0 %8960
        %8962 = vrot.lane.b32.xlu0 %v8705, 64
        %v8963 = vpop.permute.xlu0 %8962
        %8964 = vrot.lane.b32.xlu0 %v8706, 64
        %v8965 = vpop.permute.xlu0 %8964
        %8966 = vrot.lane.b32.xlu0 %v8707, 64
        %v8967 = vpop.permute.xlu0 %8966
        %8968 = vrot.lane.b32.xlu0 %v8708, 64
        %v8969 = vpop.permute.xlu0 %8968
        %8970 = vrot.lane.b32.xlu0 %v8709, 64
        %v8971 = vpop.permute.xlu0 %8970
        %8972 = vrot.lane.b32.xlu0 %v8710, 64
        %v8973 = vpop.permute.xlu0 %8972
        %8974 = vrot.lane.b32.xlu0 %v8711, 64
        %v8975 = vpop.permute.xlu0 %8974
        %8976 = vrot.lane.b32.xlu0 %v8712, 64
        %v8977 = vpop.permute.xlu0 %8976
        %8978 = vrot.lane.b32.xlu0 %v8713, 64
        %v8979 = vpop.permute.xlu0 %8978
        %8980 = vrot.lane.b32.xlu0 %v8714, 64
        %v8981 = vpop.permute.xlu0 %8980
        %8982 = vrot.lane.b32.xlu0 %v8715, 64
        %v8983 = vpop.permute.xlu0 %8982
        %8984 = vrot.lane.b32.xlu0 %v8716, 64
        %v8985 = vpop.permute.xlu0 %8984
        %8986 = vrot.lane.b32.xlu0 %v8717, 64
        %v8987 = vpop.permute.xlu0 %8986
        %v8990 = vsel %vm1024, %v8808, %v8953
        %v8994 = vsel %vm1024, %v8809, %v8955
        %v8998 = vsel %vm1024, %v8810, %v8957
        %v9002 = vsel %vm1024, %v8811, %v8959
        %v9006 = vsel %vm1024, %v8812, %v8961
        %v9010 = vsel %vm1024, %v8813, %v8963
        %v9014 = vsel %vm1024, %v8814, %v8965
        %v9018 = vsel %vm1024, %v8815, %v8967
        %v9022 = vsel %vm1024, %v8816, %v8969
        %v9026 = vsel %vm1024, %v8817, %v8971
        %v9030 = vsel %vm1024, %v8818, %v8973
        %v9034 = vsel %vm1024, %v8819, %v8975
        %v9038 = vsel %vm1024, %v8820, %v8977
        %v9042 = vsel %vm1024, %v8821, %v8979
        %v9046 = vsel %vm1024, %v8822, %v8981
        %v9050 = vsel %vm1024, %v8823, %v8983
        %v9054 = vsel %vm1024, %v8824, %v8985
        %v9058 = vsel %vm1024, %v8825, %v8987
        %s9060 = scalar_lea.vmem %s1, 1344
        %v9061 = vld [vmem:[%s9060] sm:$0xff]
        %v9062 = vld [vmem:[%s9060 + $0x8] sm:$0xff]
        %v9063 = vld [vmem:[%s9060 + $0x10] sm:$0xff]
        %v9064 = vld [vmem:[%s9060 + $0x18] sm:$0xff]
        %v9065 = vld [vmem:[%s9060 + $0x20] sm:$0xff]
        %v9066 = vld [vmem:[%s9060 + $0x28] sm:$0xff]
        %v9067 = vld [vmem:[%s9060 + $0x30] sm:$0xff]
        %v9068 = vld [vmem:[%s9060 + $0x38] sm:$0xff]
        %v9069 = vld [vmem:[%s9060 + $0x40] sm:$0xff]
        %v9070 = vld [vmem:[%s9060 + $0x48] sm:$0xff]
        %v9071 = vld [vmem:[%s9060 + $0x50] sm:$0xff]
        %v9072 = vld [vmem:[%s9060 + $0x58] sm:$0xff]
        %v9073 = vld [vmem:[%s9060 + $0x60] sm:$0xff]
        %v9074 = vld [vmem:[%s9060 + $0x68] sm:$0xff]
        %v9075 = vld [vmem:[%s9060 + $0x70] sm:$0xff]
        %v9076 = vld [vmem:[%s9060 + $0x78] sm:$0xff]
        %v9077 = vld [vmem:[%s9060 + $0x80] sm:$0xff]
        %v9078 = vld [vmem:[%s9060 + $0x88] sm:$0xff]
        %v9079 = vld [vmem:[%s9060 + $0x90] sm:$0xff]
        %v9080 = vld [vmem:[%s9060 + $0x98] sm:$0xff]
        %v9081 = vld [vmem:[%s9060 + $0xa0] sm:$0xff]
        %v9082 = vld [vmem:[%s9060 + $0xa8] sm:$0xff]
        %v9083 = vld [vmem:[%s9060 + $0xb0] sm:$0xff]
        %v9084 = vld [vmem:[%s9060 + $0xb8] sm:$0xff]
        %v9109 = vunpack.c.l.b16 %v9061
        %v9110 = vunpack.c.h.b16 %v9061
        %v9111 = vunpack.c.l.b16 %v9062
        %v9112 = vunpack.c.h.b16 %v9062
        %v9113 = vunpack.c.l.b16 %v9063
        %v9114 = vunpack.c.h.b16 %v9063
        %v9115 = vunpack.c.l.b16 %v9064
        %v9116 = vunpack.c.h.b16 %v9064
        %v9117 = vunpack.c.l.b16 %v9065
        %v9118 = vunpack.c.h.b16 %v9065
        %v9119 = vunpack.c.l.b16 %v9066
        %v9120 = vunpack.c.h.b16 %v9066
        %v9121 = vunpack.c.l.b16 %v9067
        %v9122 = vunpack.c.h.b16 %v9067
        %v9123 = vunpack.c.l.b16 %v9068
        %v9124 = vunpack.c.h.b16 %v9068
        %v9125 = vunpack.c.l.b16 %v9069
        %v9126 = vunpack.c.h.b16 %v9069
        %v9127 = vunpack.c.l.b16 %v9070
        %v9128 = vunpack.c.h.b16 %v9070
        %v9129 = vunpack.c.l.b16 %v9071
        %v9130 = vunpack.c.h.b16 %v9071
        %v9131 = vunpack.c.l.b16 %v9072
        %v9132 = vunpack.c.h.b16 %v9072
        %v9133 = vunpack.c.l.b16 %v9073
        %v9134 = vunpack.c.h.b16 %v9073
        %v9135 = vunpack.c.l.b16 %v9074
        %v9136 = vunpack.c.h.b16 %v9074
        %v9137 = vunpack.c.l.b16 %v9075
        %v9138 = vunpack.c.h.b16 %v9075
        %v9139 = vunpack.c.l.b16 %v9076
        %v9140 = vunpack.c.h.b16 %v9076
        %v9141 = vunpack.c.l.b16 %v9077
        %v9142 = vunpack.c.h.b16 %v9077
        %v9143 = vunpack.c.l.b16 %v9078
        %v9144 = vunpack.c.h.b16 %v9078
        %v9145 = vunpack.c.l.b16 %v9079
        %v9146 = vunpack.c.h.b16 %v9079
        %v9147 = vunpack.c.l.b16 %v9080
        %v9148 = vunpack.c.h.b16 %v9080
        %v9149 = vunpack.c.l.b16 %v9081
        %v9150 = vunpack.c.h.b16 %v9081
        %v9151 = vunpack.c.l.b16 %v9082
        %v9152 = vunpack.c.h.b16 %v9082
        %v9153 = vunpack.c.l.b16 %v9083
        %v9154 = vunpack.c.h.b16 %v9083
        %v9155 = vunpack.c.l.b16 %v9084
        %v9156 = vunpack.c.h.b16 %v9084
        %v9157 = vpack.c.b16 %v9111, %v9109
        %v9158 = vpack.c.b16 %v9112, %v9110
        %v9159 = vpack.c.b16 %v9115, %v9113
        %v9160 = vpack.c.b16 %v9116, %v9114
        %v9161 = vpack.c.b16 %v9119, %v9117
        %v9162 = vpack.c.b16 %v9120, %v9118
        %v9163 = vpack.c.b16 %v9123, %v9121
        %v9164 = vpack.c.b16 %v9124, %v9122
        %v9165 = vpack.c.b16 %v9127, %v9125
        %v9166 = vpack.c.b16 %v9128, %v9126
        %v9167 = vpack.c.b16 %v9131, %v9129
        %v9168 = vpack.c.b16 %v9132, %v9130
        %v9169 = vpack.c.b16 %v9135, %v9133
        %v9170 = vpack.c.b16 %v9136, %v9134
        %v9171 = vpack.c.b16 %v9139, %v9137
        %v9172 = vpack.c.b16 %v9140, %v9138
        %v9173 = vpack.c.b16 %v9143, %v9141
        %v9174 = vpack.c.b16 %v9144, %v9142
        %v9175 = vpack.c.b16 %v9147, %v9145
        %v9176 = vpack.c.b16 %v9148, %v9146
        %v9177 = vpack.c.b16 %v9151, %v9149
        %v9178 = vpack.c.b16 %v9152, %v9150
        %v9179 = vpack.c.b16 %v9155, %v9153
        %v9180 = vpack.c.b16 %v9156, %v9154
        %v9206 = vsel %vm1024, %v8916, 0
        %v9209 = vsel %vm1024, %v8917, 0
        %v9212 = vsel %vm1024, %v8918, 0
        %v9215 = vsel %vm1024, %v8919, 0
        %v9218 = vsel %vm1024, %v8920, 0
        %v9221 = vsel %vm1024, %v8921, 0
        %v9224 = vsel %vm1024, %v8922, 0
        %v9227 = vsel %vm1024, %v8923, 0
        %v9230 = vsel %vm1024, %v8924, 0
        %v9233 = vsel %vm1024, %v8925, 0
        %v9236 = vsel %vm1024, %v8926, 0
        %v9239 = vsel %vm1024, %v8927, 0
        %v9242 = vsel %vm1024, %v8928, 0
        %v9245 = vsel %vm1024, %v8929, 0
        %v9248 = vsel %vm1024, %v8930, 0
        %v9251 = vsel %vm1024, %v8931, 0
        %v9254 = vsel %vm1024, %v8932, 0
        %v9257 = vsel %vm1024, %v8933, 0
        %9259 = vmatprep.subr.bf16.mxu0 %v9158
        %9260 = vmatpush1.bf16.msra.mxu0 %v9157
        %9261 = vmatprep.subr.bf16.mxu0 %v9160
        %9262 = vmatpush1.bf16.msra.mxu0 %v9159
        %9263 = vmatprep.subr.bf16.mxu0 %v9162
        %9264 = vmatpush1.bf16.msra.mxu0 %v9161
        %9265 = vmatprep.subr.bf16.mxu0 %v9164
        %9266 = vmatpush1.bf16.msra.mxu0 %v9163
        %9267 = vmatprep.subr.bf16.mxu0 %v9166
        %9268 = vmatpush1.bf16.msra.mxu0 %v9165
        %9269 = vmatprep.subr.bf16.mxu0 %v9168
        %9270 = vmatpush1.bf16.msra.mxu0 %v9167
        %9271 = vmatprep.subr.bf16.mxu0 %v9170
        %9272 = vmatpush1.bf16.msra.mxu0 %v9169
        %9273 = vmatprep.subr.bf16.mxu0 %v9172
        %9274 = vmatpush1.bf16.msra.mxu0 %v9171
        %9275 = vmatprep.subr.bf16.mxu0 %v9174
        %9276 = vmatpush1.bf16.msra.mxu0 %v9173
        %9277 = vmatprep.subr.bf16.mxu0 %v9176
        %9278 = vmatpush1.bf16.msra.mxu0 %v9175
        %9279 = vmatprep.subr.bf16.mxu0 %v9178
        %9280 = vmatpush1.bf16.msra.mxu0 %v9177
        %9281 = vmatprep.subr.bf16.mxu0 %v9180
        %9282 = vmatpush1.bf16.msra.mxu0 %v9179
        %9283 = vmatprep.subr.bf16.mxu0 0
        %9284 = vmatpush1.bf16.msra.mxu0 0
        %9285 = vmatprep.subr.bf16.mxu0 0
        %9286 = vmatpush1.bf16.msra.mxu0 0
        %9287 = vmatprep.subr.bf16.mxu0 0
        %9288 = vmatpush1.bf16.msra.mxu0 0
        %9289 = vmatprep.subr.bf16.mxu0 0
        %9290 = vmatpush1.bf16.msra.mxu0 0
        %9291 = vmatprep.mubr.bf16.mxu0 %v9206
        %9292 = vmatmul.mubr.bf16.gmra.mrb[0].mxu0 %v8990
        %v9293 = vpop.f32.mrb[0].mxu0
        %v9294 = vadd.f32 0.0, %v9293
        %v9295 = vpop.f32.mrb[0].mxu0
        %v9296 = vpop.f32.mrb[0].mxu0
        %v9297 = vadd.f32 0.0, %v9296
        %v9298 = vpop.f32.mrb[0].mxu0
        %9299 = vmatprep.mubr.bf16.mxu0 %v9209
        %9300 = vmatmul.mubr.bf16.gmra.mrb[0].mxu0 %v8994
        %v9301 = vpop.f32.mrb[0].mxu0
        %v9302 = vadd.f32 0.0, %v9301
        %v9303 = vpop.f32.mrb[0].mxu0
        %v9304 = vpop.f32.mrb[0].mxu0
        %v9305 = vadd.f32 0.0, %v9304
        %v9306 = vpop.f32.mrb[0].mxu0
        %9307 = vmatprep.mubr.bf16.mxu0 %v9212
        %9308 = vmatmul.mubr.bf16.gmra.mrb[0].mxu0 %v8998
        %v9309 = vpop.f32.mrb[0].mxu0
        %v9310 = vadd.f32 0.0, %v9309
        %v9311 = vpop.f32.mrb[0].mxu0
        %v9312 = vadd.f32 0.0, %v9311
        %v9313 = vpop.f32.mrb[0].mxu0
        %v9314 = vadd.f32 0.0, %v9313
        %v9315 = vpop.f32.mrb[0].mxu0
        %v9316 = vadd.f32 0.0, %v9315
        %9317 = vmatprep.mubr.bf16.mxu0 %v9215
        %9318 = vmatmul.mubr.bf16.gmra.mrb[0].mxu0 %v9002
        %v9319 = vpop.f32.mrb[0].mxu0
        %v9320 = vadd.f32 0.0, %v9319
        %v9321 = vpop.f32.mrb[0].mxu0
        %v9322 = vadd.f32 0.0, %v9321
        %v9323 = vpop.f32.mrb[0].mxu0
        %v9324 = vadd.f32 0.0, %v9323
        %v9325 = vpop.f32.mrb[0].mxu0
        %v9326 = vadd.f32 0.0, %v9325
        %9327 = vmatprep.mubr.bf16.mxu0 %v9218
        %9328 = vmatmul.mubr.bf16.gmra.mrb[0].mxu0 %v9006
        %v9329 = vpop.f32.mrb[0].mxu0
        %v9330 = vadd.f32 0.0, %v9329
        %v9331 = vpop.f32.mrb[0].mxu0
        %v9332 = vadd.f32 0.0, %v9331
        %v9333 = vpop.f32.mrb[0].mxu0
        %v9334 = vadd.f32 0.0, %v9333
        %v9335 = vpop.f32.mrb[0].mxu0
        %v9336 = vadd.f32 0.0, %v9335
        %9337 = vmatprep.mubr.bf16.mxu0 %v9221
        %9338 = vmatmul.mubr.bf16.gmra.mrb[0].mxu0 %v9010
        %v9339 = vpop.f32.mrb[0].mxu0
        %v9340 = vadd.f32 0.0, %v9339
        %v9341 = vpop.f32.mrb[0].mxu0
        %v9342 = vadd.f32 0.0, %v9341
        %v9343 = vpop.f32.mrb[0].mxu0
        %v9344 = vadd.f32 0.0, %v9343
        %v9345 = vpop.f32.mrb[0].mxu0
        %v9346 = vadd.f32 0.0, %v9345
        %9347 = vmatprep.mubr.bf16.mxu0 %v9224
        %9348 = vmatmul.mubr.bf16.gmra.mrb[0].mxu0 %v9014
        %v9349 = vpop.f32.mrb[0].mxu0
        %v9350 = vadd.f32 0.0, %v9349
        %v9351 = vpop.f32.mrb[0].mxu0
        %v9352 = vadd.f32 0.0, %v9351
        %v9353 = vpop.f32.mrb[0].mxu0
        %v9354 = vadd.f32 0.0, %v9353
        %v9355 = vpop.f32.mrb[0].mxu0
        %v9356 = vadd.f32 0.0, %v9355
        %9357 = vmatprep.mubr.bf16.mxu0 %v9227
        %9358 = vmatmul.mubr.bf16.gmra.mrb[0].mxu0 %v9018
        %v9359 = vpop.f32.mrb[0].mxu0
        %v9360 = vadd.f32 0.0, %v9359
        %v9361 = vpop.f32.mrb[0].mxu0
        %v9362 = vadd.f32 0.0, %v9361
        %v9363 = vpop.f32.mrb[0].mxu0
        %v9364 = vadd.f32 0.0, %v9363
        %v9365 = vpop.f32.mrb[0].mxu0
        %v9366 = vadd.f32 0.0, %v9365
        %9367 = vmatprep.mubr.bf16.mxu0 %v9230
        %9368 = vmatmul.mubr.bf16.gmra.mrb[0].mxu0 %v9022
        %v9369 = vpop.f32.mrb[0].mxu0
        %v9370 = vadd.f32 0.0, %v9369
        %v9371 = vpop.f32.mrb[0].mxu0
        %v9372 = vadd.f32 0.0, %v9371
        %v9373 = vpop.f32.mrb[0].mxu0
        %v9374 = vadd.f32 0.0, %v9373
        %v9375 = vpop.f32.mrb[0].mxu0
        %v9376 = vadd.f32 0.0, %v9375
        %9377 = vmatprep.mubr.bf16.mxu0 %v9233
        %9378 = vmatmul.mubr.bf16.gmra.mrb[0].mxu0 %v9026
        %v9379 = vpop.f32.mrb[0].mxu0
        %v9380 = vadd.f32 0.0, %v9379
        %v9381 = vpop.f32.mrb[0].mxu0
        %v9382 = vadd.f32 0.0, %v9381
        %v9383 = vpop.f32.mrb[0].mxu0
        %v9384 = vadd.f32 0.0, %v9383
        %v9385 = vpop.f32.mrb[0].mxu0
        %v9386 = vadd.f32 0.0, %v9385
        %9387 = vmatprep.mubr.bf16.mxu0 %v9236
        %9388 = vmatmul.mubr.bf16.gmra.mrb[0].mxu0 %v9030
        %v9389 = vpop.f32.mrb[0].mxu0
        %v9390 = vadd.f32 0.0, %v9389
        %v9391 = vpop.f32.mrb[0].mxu0
        %v9392 = vadd.f32 0.0, %v9391
        %v9393 = vpop.f32.mrb[0].mxu0
        %v9394 = vadd.f32 0.0, %v9393
        %v9395 = vpop.f32.mrb[0].mxu0
        %v9396 = vadd.f32 0.0, %v9395
        %9397 = vmatprep.mubr.bf16.mxu0 %v9239
        %9398 = vmatmul.mubr.bf16.gmra.mrb[0].mxu0 %v9034
        %v9399 = vpop.f32.mrb[0].mxu0
        %v9400 = vadd.f32 0.0, %v9399
        %v9401 = vpop.f32.mrb[0].mxu0
        %v9402 = vadd.f32 0.0, %v9401
        %v9403 = vpop.f32.mrb[0].mxu0
        %v9404 = vadd.f32 0.0, %v9403
        %v9405 = vpop.f32.mrb[0].mxu0
        %v9406 = vadd.f32 0.0, %v9405
        %9407 = vmatprep.mubr.bf16.mxu0 %v9242
        %9408 = vmatmul.mubr.bf16.gmra.mrb[0].mxu0 %v9038
        %v9409 = vpop.f32.mrb[0].mxu0
        %v9410 = vadd.f32 0.0, %v9409
        %v9411 = vpop.f32.mrb[0].mxu0
        %v9412 = vadd.f32 0.0, %v9411
        %v9413 = vpop.f32.mrb[0].mxu0
        %v9414 = vadd.f32 0.0, %v9413
        %v9415 = vpop.f32.mrb[0].mxu0
        %v9416 = vadd.f32 0.0, %v9415
        %9417 = vmatprep.mubr.bf16.mxu0 %v9245
        %9418 = vmatmul.mubr.bf16.gmra.mrb[0].mxu0 %v9042
        %v9419 = vpop.f32.mrb[0].mxu0
        %v9420 = vadd.f32 0.0, %v9419
        %v9421 = vpop.f32.mrb[0].mxu0
        %v9422 = vadd.f32 0.0, %v9421
        %v9423 = vpop.f32.mrb[0].mxu0
        %v9424 = vadd.f32 0.0, %v9423
        %v9425 = vpop.f32.mrb[0].mxu0
        %v9426 = vadd.f32 0.0, %v9425
        %9427 = vmatprep.mubr.bf16.mxu0 %v9248
        %9428 = vmatmul.mubr.bf16.gmra.mrb[0].mxu0 %v9046
        %v9429 = vpop.f32.mrb[0].mxu0
        %v9430 = vadd.f32 0.0, %v9429
        %v9431 = vpop.f32.mrb[0].mxu0
        %v9432 = vadd.f32 0.0, %v9431
        %v9433 = vpop.f32.mrb[0].mxu0
        %v9434 = vadd.f32 0.0, %v9433
        %v9435 = vpop.f32.mrb[0].mxu0
        %v9436 = vadd.f32 0.0, %v9435
        %9437 = vmatprep.mubr.bf16.mxu0 %v9251
        %9438 = vmatmul.mubr.bf16.gmra.mrb[0].mxu0 %v9050
        %v9439 = vpop.f32.mrb[0].mxu0
        %v9440 = vadd.f32 0.0, %v9439
        %v9441 = vpop.f32.mrb[0].mxu0
        %v9442 = vadd.f32 0.0, %v9441
        %v9443 = vpop.f32.mrb[0].mxu0
        %v9444 = vadd.f32 0.0, %v9443
        %v9445 = vpop.f32.mrb[0].mxu0
        %v9446 = vadd.f32 0.0, %v9445
        %9447 = vmatprep.mubr.bf16.mxu0 %v9254
        %9448 = vmatmul.mubr.bf16.gmra.mrb[0].mxu0 %v9054
        %v9449 = vpop.f32.mrb[0].mxu0
        %v9450 = vadd.f32 0.0, %v9449
        %v9451 = vpop.f32.mrb[0].mxu0
        %v9452 = vadd.f32 0.0, %v9451
        %v9453 = vpop.f32.mrb[0].mxu0
        %v9454 = vadd.f32 0.0, %v9453
        %v9455 = vpop.f32.mrb[0].mxu0
        %v9456 = vadd.f32 0.0, %v9455
        %9457 = vmatprep.mubr.bf16.mxu0 %v9257
        %9458 = vmatmul.mubr.bf16.gmra.mrb[0].mxu0 %v9058
        %v9459 = vpop.f32.mrb[0].mxu0
        %v9460 = vpop.f32.mrb[0].mxu0
        %v9461 = vadd.f32 0.0, %v9460
        %v9462 = vpop.f32.mrb[0].mxu0
        %v9463 = vpop.f32.mrb[0].mxu0
        %v9464 = vadd.f32 0.0, %v9463
        %9465 = vdwg.mxu0
        %9498 = vrot.lane.b32.xlu0 %v9302, 64
        %v9499 = vpop.permute.xlu0 %9498
        %9500 = vrot.lane.b32.xlu0 %v9305, 64
        %v9501 = vpop.permute.xlu0 %9500
        %9502 = vrot.lane.b32.xlu0 %v9310, 64
        %v9503 = vpop.permute.xlu0 %9502
        %9504 = vrot.lane.b32.xlu0 %v9314, 64
        %v9505 = vpop.permute.xlu0 %9504
        %9506 = vrot.lane.b32.xlu0 %v9320, 64
        %v9507 = vpop.permute.xlu0 %9506
        %9508 = vrot.lane.b32.xlu0 %v9324, 64
        %v9509 = vpop.permute.xlu0 %9508
        %9510 = vrot.lane.b32.xlu0 %v9330, 64
        %v9511 = vpop.permute.xlu0 %9510
        %9512 = vrot.lane.b32.xlu0 %v9334, 64
        %v9513 = vpop.permute.xlu0 %9512
        %9514 = vrot.lane.b32.xlu0 %v9340, 64
        %v9515 = vpop.permute.xlu0 %9514
        %9516 = vrot.lane.b32.xlu0 %v9344, 64
        %v9517 = vpop.permute.xlu0 %9516
        %9518 = vrot.lane.b32.xlu0 %v9350, 64
        %v9519 = vpop.permute.xlu0 %9518
        %9520 = vrot.lane.b32.xlu0 %v9354, 64
        %v9521 = vpop.permute.xlu0 %9520
        %9522 = vrot.lane.b32.xlu0 %v9360, 64
        %v9523 = vpop.permute.xlu0 %9522
        %9524 = vrot.lane.b32.xlu0 %v9364, 64
        %v9525 = vpop.permute.xlu0 %9524
        %9526 = vrot.lane.b32.xlu0 %v9370, 64
        %v9527 = vpop.permute.xlu0 %9526
        %9528 = vrot.lane.b32.xlu0 %v9374, 64
        %v9529 = vpop.permute.xlu0 %9528
        %9530 = vrot.lane.b32.xlu0 %v9380, 64
        %v9531 = vpop.permute.xlu0 %9530
        %9532 = vrot.lane.b32.xlu0 %v9384, 64
        %v9533 = vpop.permute.xlu0 %9532
        %9534 = vrot.lane.b32.xlu0 %v9390, 64
        %v9535 = vpop.permute.xlu0 %9534
        %9536 = vrot.lane.b32.xlu0 %v9394, 64
        %v9537 = vpop.permute.xlu0 %9536
        %9538 = vrot.lane.b32.xlu0 %v9400, 64
        %v9539 = vpop.permute.xlu0 %9538
        %9540 = vrot.lane.b32.xlu0 %v9404, 64
        %v9541 = vpop.permute.xlu0 %9540
        %9542 = vrot.lane.b32.xlu0 %v9410, 64
        %v9543 = vpop.permute.xlu0 %9542
        %9544 = vrot.lane.b32.xlu0 %v9414, 64
        %v9545 = vpop.permute.xlu0 %9544
        %9546 = vrot.lane.b32.xlu0 %v9420, 64
        %v9547 = vpop.permute.xlu0 %9546
        %9548 = vrot.lane.b32.xlu0 %v9424, 64
        %v9549 = vpop.permute.xlu0 %9548
        %9550 = vrot.lane.b32.xlu0 %v9430, 64
        %v9551 = vpop.permute.xlu0 %9550
        %9552 = vrot.lane.b32.xlu0 %v9434, 64
        %v9553 = vpop.permute.xlu0 %9552
        %9554 = vrot.lane.b32.xlu0 %v9440, 64
        %v9555 = vpop.permute.xlu0 %9554
        %9556 = vrot.lane.b32.xlu0 %v9444, 64
        %v9557 = vpop.permute.xlu0 %9556
        %9558 = vrot.lane.b32.xlu0 %v9450, 64
        %v9559 = vpop.permute.xlu0 %9558
        %9560 = vrot.lane.b32.xlu0 %v9454, 64
        %v9561 = vpop.permute.xlu0 %9560
        %v9594 = vadd.f32 %v9294, %v9499
        %v9595 = vadd.f32 %v9297, %v9501
        %v9596 = vadd.f32 %v9302, %v9503
        %v9597 = vadd.f32 %v9305, %v9505
        %v9598 = vadd.f32 %v9310, %v9507
        %v9599 = vadd.f32 %v9314, %v9509
        %v9600 = vadd.f32 %v9320, %v9511
        %v9601 = vadd.f32 %v9324, %v9513
        %v9602 = vadd.f32 %v9330, %v9515
        %v9603 = vadd.f32 %v9334, %v9517
        %v9604 = vadd.f32 %v9340, %v9519
        %v9605 = vadd.f32 %v9344, %v9521
        %v9606 = vadd.f32 %v9350, %v9523
        %v9607 = vadd.f32 %v9354, %v9525
        %v9608 = vadd.f32 %v9360, %v9527
        %v9609 = vadd.f32 %v9364, %v9529
        %v9610 = vadd.f32 %v9370, %v9531
        %v9611 = vadd.f32 %v9374, %v9533
        %v9612 = vadd.f32 %v9380, %v9535
        %v9613 = vadd.f32 %v9384, %v9537
        %v9614 = vadd.f32 %v9390, %v9539
        %v9615 = vadd.f32 %v9394, %v9541
        %v9616 = vadd.f32 %v9400, %v9543
        %v9617 = vadd.f32 %v9404, %v9545
        %v9618 = vadd.f32 %v9410, %v9547
        %v9619 = vadd.f32 %v9414, %v9549
        %v9620 = vadd.f32 %v9420, %v9551
        %v9621 = vadd.f32 %v9424, %v9553
        %v9622 = vadd.f32 %v9430, %v9555
        %v9623 = vadd.f32 %v9434, %v9557
        %v9624 = vadd.f32 %v9440, %v9559
        %v9625 = vadd.f32 %v9444, %v9561
        %v9626 = vadd.f32 %v9594, %v9312
        %v9627 = vadd.f32 %v9595, %v9316
        %v9628 = vadd.f32 %v9596, %v9322
        %v9629 = vadd.f32 %v9597, %v9326
        %v9630 = vadd.f32 %v9598, %v9332
        %v9631 = vadd.f32 %v9599, %v9336
        %v9632 = vadd.f32 %v9600, %v9342
        %v9633 = vadd.f32 %v9601, %v9346
        %v9634 = vadd.f32 %v9602, %v9352
        %v9635 = vadd.f32 %v9603, %v9356
        %v9636 = vadd.f32 %v9604, %v9362
        %v9637 = vadd.f32 %v9605, %v9366
        %v9638 = vadd.f32 %v9606, %v9372
        %v9639 = vadd.f32 %v9607, %v9376
        %v9640 = vadd.f32 %v9608, %v9382
        %v9641 = vadd.f32 %v9609, %v9386
        %v9642 = vadd.f32 %v9610, %v9392
        %v9643 = vadd.f32 %v9611, %v9396
        %v9644 = vadd.f32 %v9612, %v9402
        %v9645 = vadd.f32 %v9613, %v9406
        %v9646 = vadd.f32 %v9614, %v9412
        %v9647 = vadd.f32 %v9615, %v9416
        %v9648 = vadd.f32 %v9616, %v9422
        %v9649 = vadd.f32 %v9617, %v9426
        %v9650 = vadd.f32 %v9618, %v9432
        %v9651 = vadd.f32 %v9619, %v9436
        %v9652 = vadd.f32 %v9620, %v9442
        %v9653 = vadd.f32 %v9621, %v9446
        %v9654 = vadd.f32 %v9622, %v9452
        %v9655 = vadd.f32 %v9623, %v9456
        %v9656 = vadd.f32 %v9624, %v9461
        %v9657 = vadd.f32 %v9625, %v9464
        %s9658 = scalar_lea.vmem %s2, 7
        %v9659 = vld [vmem:[%s9658] sm:$0x1]
        %v9661 = vlaneseq
        %v9662 = vshrl.u32 %v9661, 7
        %v9663 = vsub.s32 0, %v9662
        %v9664 = vrot.slane %v9659, %v9663
        %v9666 = vmul.f32 %v9626, %v9664
        %v9667 = vmul.f32 %v9627, %v9664
        %v9668 = vmul.f32 %v9628, %v9664
        %v9669 = vmul.f32 %v9629, %v9664
        %v9670 = vmul.f32 %v9630, %v9664
        %v9671 = vmul.f32 %v9631, %v9664
        %v9672 = vmul.f32 %v9632, %v9664
        %v9673 = vmul.f32 %v9633, %v9664
        %v9674 = vmul.f32 %v9634, %v9664
        %v9675 = vmul.f32 %v9635, %v9664
        %v9676 = vmul.f32 %v9636, %v9664
        %v9677 = vmul.f32 %v9637, %v9664
        %v9678 = vmul.f32 %v9638, %v9664
        %v9679 = vmul.f32 %v9639, %v9664
        %v9680 = vmul.f32 %v9640, %v9664
        %v9681 = vmul.f32 %v9641, %v9664
        %v9682 = vmul.f32 %v9642, %v9664
        %v9683 = vmul.f32 %v9643, %v9664
        %v9684 = vmul.f32 %v9644, %v9664
        %v9685 = vmul.f32 %v9645, %v9664
        %v9686 = vmul.f32 %v9646, %v9664
        %v9687 = vmul.f32 %v9647, %v9664
        %v9688 = vmul.f32 %v9648, %v9664
        %v9689 = vmul.f32 %v9649, %v9664
        %v9690 = vmul.f32 %v9650, %v9664
        %v9691 = vmul.f32 %v9651, %v9664
        %v9692 = vmul.f32 %v9652, %v9664
        %v9693 = vmul.f32 %v9653, %v9664
        %v9694 = vmul.f32 %v9654, %v9664
        %v9695 = vmul.f32 %v9655, %v9664
        %v9696 = vmul.f32 %v9656, %v9664
        %v9697 = vmul.f32 %v9657, %v9664
        %s9698 = scalar_lea.vmem %s3, 7
        %v9699 = vld [vmem:[%s9698] sm:$0x1]
        %v9701 = vlaneseq
        %v9702 = vshrl.u32 %v9701, 7
        %v9703 = vsub.s32 0, %v9702
        %v9704 = vrot.slane %v9699, %v9703
        %v9706 = vadd.f32 %v9666, %v9704
        %v9707 = vadd.f32 %v9667, %v9704
        %v9708 = vadd.f32 %v9668, %v9704
        %v9709 = vadd.f32 %v9669, %v9704
        %v9710 = vadd.f32 %v9670, %v9704
        %v9711 = vadd.f32 %v9671, %v9704
        %v9712 = vadd.f32 %v9672, %v9704
        %v9713 = vadd.f32 %v9673, %v9704
        %v9714 = vadd.f32 %v9674, %v9704
        %v9715 = vadd.f32 %v9675, %v9704
        %v9716 = vadd.f32 %v9676, %v9704
        %v9717 = vadd.f32 %v9677, %v9704
        %v9718 = vadd.f32 %v9678, %v9704
        %v9719 = vadd.f32 %v9679, %v9704
        %v9720 = vadd.f32 %v9680, %v9704
        %v9721 = vadd.f32 %v9681, %v9704
        %v9722 = vadd.f32 %v9682, %v9704
        %v9723 = vadd.f32 %v9683, %v9704
        %v9724 = vadd.f32 %v9684, %v9704
        %v9725 = vadd.f32 %v9685, %v9704
        %v9726 = vadd.f32 %v9686, %v9704
        %v9727 = vadd.f32 %v9687, %v9704
        %v9728 = vadd.f32 %v9688, %v9704
        %v9729 = vadd.f32 %v9689, %v9704
        %v9730 = vadd.f32 %v9690, %v9704
        %v9731 = vadd.f32 %v9691, %v9704
        %v9732 = vadd.f32 %v9692, %v9704
        %v9733 = vadd.f32 %v9693, %v9704
        %v9734 = vadd.f32 %v9694, %v9704
        %v9735 = vadd.f32 %v9695, %v9704
        %v9736 = vadd.f32 %v9696, %v9704
        %v9737 = vadd.f32 %v9697, %v9704
        %v9738 = vmax.f32 %v9706, 0.0
        %v9739 = vmax.f32 %v9707, 0.0
        %v9740 = vmax.f32 %v9708, 0.0
        %v9741 = vmax.f32 %v9709, 0.0
        %v9742 = vmax.f32 %v9710, 0.0
        %v9743 = vmax.f32 %v9711, 0.0
        %v9744 = vmax.f32 %v9712, 0.0
        %v9745 = vmax.f32 %v9713, 0.0
        %v9746 = vmax.f32 %v9714, 0.0
        %v9747 = vmax.f32 %v9715, 0.0
        %v9748 = vmax.f32 %v9716, 0.0
        %v9749 = vmax.f32 %v9717, 0.0
        %v9750 = vmax.f32 %v9718, 0.0
        %v9751 = vmax.f32 %v9719, 0.0
        %v9752 = vmax.f32 %v9720, 0.0
        %v9753 = vmax.f32 %v9721, 0.0
        %v9754 = vmax.f32 %v9722, 0.0
        %v9755 = vmax.f32 %v9723, 0.0
        %v9756 = vmax.f32 %v9724, 0.0
        %v9757 = vmax.f32 %v9725, 0.0
        %v9758 = vmax.f32 %v9726, 0.0
        %v9759 = vmax.f32 %v9727, 0.0
        %v9760 = vmax.f32 %v9728, 0.0
        %v9761 = vmax.f32 %v9729, 0.0
        %v9762 = vmax.f32 %v9730, 0.0
        %v9763 = vmax.f32 %v9731, 0.0
        %v9764 = vmax.f32 %v9732, 0.0
        %v9765 = vmax.f32 %v9733, 0.0
        %v9766 = vmax.f32 %v9734, 0.0
        %v9767 = vmax.f32 %v9735, 0.0
        %v9768 = vmax.f32 %v9736, 0.0
        %v9769 = vmax.f32 %v9737, 0.0
        %v9770 = vsel %vm1024, %v9738, 0.0
        %v9771 = vsel %vm1024, %v9739, 0.0
        %v9772 = vadd.f32 %v9770, %v9771
        %v9773 = vsel %vm1024, %v9740, 0.0
        %v9774 = vadd.f32 %v9772, %v9773
        %v9775 = vsel %vm1024, %v9741, 0.0
        %v9776 = vadd.f32 %v9774, %v9775
        %v9777 = vsel %vm1024, %v9742, 0.0
        %v9778 = vadd.f32 %v9776, %v9777
        %v9779 = vsel %vm1024, %v9743, 0.0
        %v9780 = vadd.f32 %v9778, %v9779
        %v9781 = vsel %vm1024, %v9744, 0.0
        %v9782 = vadd.f32 %v9780, %v9781
        %v9783 = vsel %vm1024, %v9745, 0.0
        %v9784 = vadd.f32 %v9782, %v9783
        %v9785 = vsel %vm1024, %v9746, 0.0
        %v9786 = vadd.f32 %v9784, %v9785
        %v9787 = vsel %vm1024, %v9747, 0.0
        %v9788 = vadd.f32 %v9786, %v9787
        %v9789 = vsel %vm1024, %v9748, 0.0
        %v9790 = vadd.f32 %v9788, %v9789
        %v9791 = vsel %vm1024, %v9749, 0.0
        %v9792 = vadd.f32 %v9790, %v9791
        %v9793 = vsel %vm1024, %v9750, 0.0
        %v9794 = vadd.f32 %v9792, %v9793
        %v9795 = vsel %vm1024, %v9751, 0.0
        %v9796 = vadd.f32 %v9794, %v9795
        %v9797 = vsel %vm1024, %v9752, 0.0
        %v9798 = vadd.f32 %v9796, %v9797
        %v9799 = vsel %vm1024, %v9753, 0.0
        %v9800 = vadd.f32 %v9798, %v9799
        %v9801 = vsel %vm1024, %v9754, 0.0
        %v9802 = vadd.f32 %v9800, %v9801
        %v9803 = vsel %vm1024, %v9755, 0.0
        %v9804 = vadd.f32 %v9802, %v9803
        %v9805 = vsel %vm1024, %v9756, 0.0
        %v9806 = vadd.f32 %v9804, %v9805
        %v9807 = vsel %vm1024, %v9757, 0.0
        %v9808 = vadd.f32 %v9806, %v9807
        %v9809 = vsel %vm1024, %v9758, 0.0
        %v9810 = vadd.f32 %v9808, %v9809
        %v9811 = vsel %vm1024, %v9759, 0.0
        %v9812 = vadd.f32 %v9810, %v9811
        %v9813 = vsel %vm1024, %v9760, 0.0
        %v9814 = vadd.f32 %v9812, %v9813
        %v9815 = vsel %vm1024, %v9761, 0.0
        %v9816 = vadd.f32 %v9814, %v9815
        %v9817 = vsel %vm1024, %v9762, 0.0
        %v9818 = vadd.f32 %v9816, %v9817
        %v9819 = vsel %vm1024, %v9763, 0.0
        %v9820 = vadd.f32 %v9818, %v9819
        %v9821 = vsel %vm1024, %v9764, 0.0
        %v9822 = vadd.f32 %v9820, %v9821
        %v9823 = vsel %vm1024, %v9765, 0.0
        %v9824 = vadd.f32 %v9822, %v9823
        %v9825 = vsel %vm1024, %v9766, 0.0
        %v9826 = vadd.f32 %v9824, %v9825
        %v9827 = vsel %vm1024, %v9767, 0.0
        %v9828 = vadd.f32 %v9826, %v9827
        %v9829 = vsel %vm1024, %v9768, 0.0
        %v9830 = vadd.f32 %v9828, %v9829
        %v9831 = vsel %vm1024, %v9769, 0.0
        %v9832 = vadd.f32 %v9830, %v9831
        %v9833 = vrot.slane %v9832, 4
        %v9834 = vadd.f32 %v9832, %v9833
        %v9835 = vrot.slane %v9834, 2
        %v9836 = vadd.f32 %v9834, %v9835
        %v9837 = vrot.slane %v9836, 1
        %v9838 = vadd.f32 %v9836, %v9837
        %v9839 = vmul.f32 %v9838, 0.00390625
        %v9840 = vld [vmem:[%s4] sm:$0xff]
        %v9841 = vld [vmem:[%s4 + $0x8] sm:$0xff]
        %v9842 = vld [vmem:[%s4 + $0x10] sm:$0xff]
        %v9843 = vld [vmem:[%s4 + $0x18] sm:$0xff]
        %v9844 = vld [vmem:[%s4 + $0x20] sm:$0xff]
        %v9845 = vld [vmem:[%s4 + $0x28] sm:$0xff]
        %v9846 = vld [vmem:[%s4 + $0x30] sm:$0xff]
        %v9847 = vld [vmem:[%s4 + $0x38] sm:$0xff]
        %v9848 = vld [vmem:[%s5] sm:$0x1]
        %v9850 = vsel %vm1024, %v9839, 0
        %9852 = vmatprep.subr.mxu0 0.0
        %9853 = vmatpush1.msra.mxu0 %v9840
        %9854 = vmatprep.subr.mxu0 0.0
        %9855 = vmatpush1.msra.mxu0 %v9841
        %9856 = vmatprep.subr.mxu0 0.0
        %9857 = vmatpush1.msra.mxu0 %v9842
        %9858 = vmatprep.subr.mxu0 0.0
        %9859 = vmatpush1.msra.mxu0 %v9843
        %9860 = vmatprep.subr.mxu0 0.0
        %9861 = vmatpush1.msra.mxu0 %v9844
        %9862 = vmatprep.subr.mxu0 0.0
        %9863 = vmatpush1.msra.mxu0 %v9845
        %9864 = vmatprep.subr.mxu0 0.0
        %9865 = vmatpush1.msra.mxu0 %v9846
        %9866 = vmatprep.subr.mxu0 0.0
        %9867 = vmatpush1.msra.mxu0 %v9847
        %9868 = vmatprep.subr.mxu0 0.0
        %9869 = vmatpush1.msra.mxu0 0.0
        %9870 = vmatprep.subr.mxu0 0.0
        %9871 = vmatpush1.msra.mxu0 0.0
        %9872 = vmatprep.subr.mxu0 0.0
        %9873 = vmatpush1.msra.mxu0 0.0
        %9874 = vmatprep.subr.mxu0 0.0
        %9875 = vmatpush1.msra.mxu0 0.0
        %9876 = vmatprep.subr.mxu0 0.0
        %9877 = vmatpush1.msra.mxu0 0.0
        %9878 = vmatprep.subr.mxu0 0.0
        %9879 = vmatpush1.msra.mxu0 0.0
        %9880 = vmatprep.subr.mxu0 0.0
        %9881 = vmatpush1.msra.mxu0 0.0
        %9882 = vmatprep.subr.mxu0 0.0
        %9883 = vmatpush1.msra.mxu0 0.0
        %9884 = vmatprep.subr.mxu0 0.0
        %9885 = vmatpush1.msra.mxu0 0.0
        %9886 = vmatprep.subr.mxu0 0.0
        %9887 = vmatpush1.msra.mxu0 0.0
        %9888 = vmatprep.subr.mxu0 0.0
        %9889 = vmatpush1.msra.mxu0 0.0
        %9890 = vmatprep.subr.mxu0 0.0
        %9891 = vmatpush1.msra.mxu0 0.0
        %9892 = vmatprep.subr.mxu0 0.0
        %9893 = vmatpush1.msra.mxu0 0.0
        %9894 = vmatprep.subr.mxu0 0.0
        %9895 = vmatpush1.msra.mxu0 0.0
        %9896 = vmatprep.subr.mxu0 0.0
        %9897 = vmatpush1.msra.mxu0 0.0
        %9898 = vmatprep.subr.mxu0 0.0
        %9899 = vmatpush1.msra.mxu0 0.0
        %9900 = vmatprep.subr.mxu0 0.0
        %9901 = vmatpush1.msra.mxu0 0.0
        %9902 = vmatprep.subr.mxu0 0.0
        %9903 = vmatpush1.msra.mxu0 0.0
        %9904 = vmatprep.subr.mxu0 0.0
        %9905 = vmatpush1.msra.mxu0 0.0
        %9906 = vmatprep.subr.mxu0 0.0
        %9907 = vmatpush1.msra.mxu0 0.0
        %9908 = vmatprep.subr.mxu0 0.0
        %9909 = vmatpush1.msra.mxu0 0.0
        %9910 = vmatprep.subr.mxu0 0.0
        %9911 = vmatpush1.msra.mxu0 0.0
        %9912 = vmatprep.subr.mxu0 0.0
        %9913 = vmatpush1.msra.mxu0 0.0
        %9914 = vmatprep.subr.mxu0 0.0
        %9915 = vmatpush1.msra.mxu0 0.0
        %9916 = vmatprep.mubr.f32.mxu0 0.0
        %9917 = vmatmul.mubr.f32.gmra.mrb[0].mxu0 %v9850
        %v9918 = vpop.f32.mrb[0].mxu0
        %v9919 = vadd.f32 %v9848, %v9918
        %v9920 = vpop.f32.mrb[0].mxu0
        %9921 = vdwg.mxu0
        %9922 = vst [vmem:[%s243] sm:$0x1] %v9919
        %s9923 = sand.u32 %s159, 1
        %s9924 = scalar_lea.sflag [#allocation5], %s9923
        %s9925 = sand.u32 %s159, 1
        %s9926 = scalar_lea.vmem [#allocation4], %s9925
        // Predicated region
        $region49: #{forward.1} parent=43 // pred_check
          %p9927 = pneg %p169
        $region50: #{forward.1} parent=43 // pred_check_branch
          %9929 = sbr.rel (%p9927) target = $region52
        $region51: #{forward.1} parent=43 // pred_region
          %s9931 = ssub.s32 16, 16
          %9932 = vsyncadd %s9924, %s9931
          %s9933 = smul.addr %s20, 16
          %s9934 = scalar_lea.hbm %s6, %s9933
          %s9936 = sshll.u32 %s9926, 4
          %s9937 = int_to_ptr.vmem [resolvable:$true] %s9936
          %9939 = dma.vmem_to_hbm [thread:$0]  %s9937, 16, %s9934, %s9924
        $region52: #{forward.1} parent=43 // pred_fallthru
          _
      $region44: #{forward.1} parent=5 // pred_fallthru
        _
      %p9940 = scmp.le.s32.totalorder 2, %s15
      // Predicated region
      $region53: #{forward.1} parent=5 // pred_check
        %p9941 = pneg %p9940
      $region54: #{forward.1} parent=5 // pred_check_branch
        %9943 = sbr.rel (%p9941) target = $region56
      $region55: #{forward.1} parent=5 // pred_region
        %s9944 = ssub.s32 %s15, 2
        // Predicated region
        $region57: #{forward.1} parent=55 // pred_check
          %p9945 = pneg %p175
        $region58: #{forward.1} parent=55 // pred_check_branch
          %9947 = sbr.rel (%p9945) target = $region60
        $region59: #{forward.1} parent=55 // pred_region
          %s9948 = sand.u32 %s160, 1
          %s9949 = scalar_lea.sflag [#allocation5], %s9948
          %s9950 = sand.u32 %s160, 1
          %s9951 = scalar_lea.vmem [#allocation4], %s9950
          %9952 = dma.done %s9949, 16
        $region60: #{forward.1} parent=55 // pred_fallthru
          _
      $region56: #{forward.1} parent=5 // pred_fallthru
        _
    $region6: #{forward.1} parent=1 // loop_footer
      %s19 = sadd.s32 1, %s15
    $region7: #{forward.1} parent=1 // loop_footer_branch
      %14 = sbr.rel target = $region3
    $region8: #{forward.1} parent=1 // loop_exit
      _
    %9953 = vsyncpa [#allocation5], 1
    %s9954 = scalar_lea.sflag [#allocation5], 1
    %9955 = vsyncpa %s9954, 1

</llo_original>
